<compile_context>
chip_gen: v5e
topology: v5e:2x2
jax: 0.10.0
libtpu: 0.0.40
codegen_flags: <defaults>
</compile_context>

<pallas_src>
import functools
import math

import jax
import jax.numpy as jnp
from jax import lax
from jax.experimental import pallas as pl
from jax.experimental.pallas import tpu as pltpu

NEG_INF = -1e9


# ---------------------------------------------------------------------------
# In-kernel helpers (pure jnp/lax on VMEM-resident values)
# ---------------------------------------------------------------------------

def _layernorm(x, g, b, eps=1e-5):
    mu = jnp.mean(x, axis=-1, keepdims=True)
    var = jnp.mean((x - mu) ** 2, axis=-1, keepdims=True)
    return (x - mu) * lax.rsqrt(var + eps) * g + b


def _ffn(x, w1, b1, w2, b2):
    h = jnp.dot(x.astype(jnp.bfloat16), w1,
                preferred_element_type=jnp.float32) + b1
    h = jnp.maximum(h, 0.0)
    return jnp.dot(h.astype(jnp.bfloat16), w2,
                   preferred_element_type=jnp.float32) + b2


def _sdpa_heads(q_all, k_all, v_all, key_bias, wo_ref, h, dk, dv, scale,
                extra_bias=None):
    """Multi-head scaled-dot-product attention + output projection.

    q_all:(Sq,h*dk) k_all:(Sk,h*dk) v_all:(Sk,h*dv) f32,
    key_bias:(1,Sk) additive, wo_ref:(h,dv,D) bf16 ref.
    Returns (Sq, D) f32 (output projection, no bias).
    """
    out = None
    for hi in range(h):
        q = (q_all[:, hi * dk:(hi + 1) * dk] * scale).astype(jnp.bfloat16)
        k = k_all[:, hi * dk:(hi + 1) * dk].astype(jnp.bfloat16)
        v = v_all[:, hi * dv:(hi + 1) * dv].astype(jnp.bfloat16)
        # scores: contract over dk without an explicit transpose
        s = lax.dot_general(q, k, (((1,), (1,)), ((), ())),
                            preferred_element_type=jnp.float32)
        s = s + key_bias
        if extra_bias is not None:
            s = s + extra_bias
        s = s - jnp.max(s, axis=-1, keepdims=True)
        p = jnp.exp(s)
        p = p * pl.reciprocal(jnp.sum(p, axis=-1, keepdims=True), approx=True)
        o_h = jnp.dot(p.astype(jnp.bfloat16), v,
                      preferred_element_type=jnp.float32)          # (Sq, dv)
        proj = jnp.dot(o_h.astype(jnp.bfloat16), wo_ref[hi],
                       preferred_element_type=jnp.float32)         # (Sq, D)
        out = proj if out is None else out + proj
    return out


# ---------------------------------------------------------------------------
# Fused kernels (one pallas_call per transformer layer)
# ---------------------------------------------------------------------------

def _encoder_layer_kernel(x_ref, bias_ref,
                          wqkv_ref, bqkv_ref, wo_ref, bo_ref,
                          g1_ref, be1_ref,
                          w1_ref, fb1_ref, w2_ref, fb2_ref,
                          g2_ref, be2_ref,
                          o_ref, *, h, dk, dv, scale):
    x = x_ref[0]                                  # (S, D)  f32
    key_bias = bias_ref[0]                        # (1, S)  additive

    qkv = jnp.dot(x.astype(jnp.bfloat16), wqkv_ref[...],
                  preferred_element_type=jnp.float32) + bqkv_ref[...]
    nq = h * dk
    attn = _sdpa_heads(qkv[:, :nq], qkv[:, nq:2 * nq], qkv[:, 2 * nq:],
                       key_bias, wo_ref, h, dk, dv, scale) + bo_ref[...]
    x1 = _layernorm(x + attn, g1_ref[...], be1_ref[...])
    f = _ffn(x1, w1_ref[...], fb1_ref[...], w2_ref[...], fb2_ref[...])
    o_ref[0] = _layernorm(x1 + f, g2_ref[...], be2_ref[...])


def _decoder_layer_kernel(x_ref, enc_ref, tbias_ref, sbias_ref,
                          wqkv_ref, bqkv_ref, wo_s_ref, bo_s_ref,
                          g1_ref, be1_ref,
                          wq_ref, bq_ref, wkv_ref, bkv_ref, wo_c_ref, bo_c_ref,
                          g2_ref, be2_ref,
                          w1_ref, fb1_ref, w2_ref, fb2_ref,
                          g3_ref, be3_ref,
                          o_ref, *, h, dk, dv, scale):
    x = x_ref[0]                                  # (St, D)
    enc = enc_ref[0]                              # (Ss, D)
    t_bias = tbias_ref[0]                         # (1, St)
    s_bias = sbias_ref[0]                         # (1, Ss)
    St = x.shape[0]
    nq = h * dk

    # causal additive bias generated in-kernel (no (B,St,St) mask DMA)
    row = lax.broadcasted_iota(jnp.int32, (St, St), 0)
    col = lax.broadcasted_iota(jnp.int32, (St, St), 1)
    causal = jnp.where(col <= row, 0.0, NEG_INF).astype(jnp.float32)

    # masked (causal) self-attention
    qkv = jnp.dot(x.astype(jnp.bfloat16), wqkv_ref[...],
                  preferred_element_type=jnp.float32) + bqkv_ref[...]
    attn = _sdpa_heads(qkv[:, :nq], qkv[:, nq:2 * nq], qkv[:, 2 * nq:],
                       t_bias, wo_s_ref, h, dk, dv, scale,
                       extra_bias=causal) + bo_s_ref[...]
    x1 = _layernorm(x + attn, g1_ref[...], be1_ref[...])

    # cross-attention (queries from decoder, keys/values from encoder output)
    q_all = jnp.dot(x1.astype(jnp.bfloat16), wq_ref[...],
                    preferred_element_type=jnp.float32) + bq_ref[...]
    kv = jnp.dot(enc.astype(jnp.bfloat16), wkv_ref[...],
                 preferred_element_type=jnp.float32) + bkv_ref[...]
    attn_c = _sdpa_heads(q_all, kv[:, :nq], kv[:, nq:],
                         s_bias, wo_c_ref, h, dk, dv, scale) + bo_c_ref[...]
    x2 = _layernorm(x1 + attn_c, g2_ref[...], be2_ref[...])

    # position-wise FFN
    f = _ffn(x2, w1_ref[...], fb1_ref[...], w2_ref[...], fb2_ref[...])
    o_ref[0] = _layernorm(x2 + f, g3_ref[...], be3_ref[...])


def _logits_kernel(x_ref, w_ref, b_ref, o_ref):
    o_ref[0] = jnp.dot(x_ref[0].astype(jnp.bfloat16), w_ref[...],
                       preferred_element_type=jnp.float32) + b_ref[...]


# ---------------------------------------------------------------------------
# pallas_call wrappers
# ---------------------------------------------------------------------------

def _wspec(arr):
    nd = arr.ndim
    return pl.BlockSpec(arr.shape, lambda b, _nd=nd: (0,) * _nd)


def run_encoder_layer(x, key_bias, p, h, dk, dv):
    B, S, D = x.shape
    kern = functools.partial(_encoder_layer_kernel, h=h, dk=dk, dv=dv,
                             scale=1.0 / math.sqrt(dk))
    weights = (p["att"]["wqkv"], p["att"]["bqkv"], p["att"]["wo"], p["att"]["bo"],
               p["ln1"]["g"], p["ln1"]["b"],
               p["ffn"]["w1"], p["ffn"]["b1"], p["ffn"]["w2"], p["ffn"]["b2"],
               p["ln2"]["g"], p["ln2"]["b"])
    in_specs = ([pl.BlockSpec((1, S, D), lambda b: (b, 0, 0)),
                 pl.BlockSpec((1, 1, S), lambda b: (b, 0, 0))]
                + [_wspec(w) for w in weights])
    return pl.pallas_call(
        kern,
        out_shape=jax.ShapeDtypeStruct((B, S, D), jnp.float32),
        grid=(B,),
        in_specs=in_specs,
        out_specs=pl.BlockSpec((1, S, D), lambda b: (b, 0, 0)),
        compiler_params=pltpu.CompilerParams(dimension_semantics=("parallel",)),
    )(x, key_bias, *weights)


def run_decoder_layer(y, enc, t_bias, s_bias, p, h, dk, dv):
    B, St, D = y.shape
    Ss = enc.shape[1]
    kern = functools.partial(_decoder_layer_kernel, h=h, dk=dk, dv=dv,
                             scale=1.0 / math.sqrt(dk))
    weights = (p["self"]["wqkv"], p["self"]["bqkv"],
               p["self"]["wo"], p["self"]["bo"],
               p["ln1"]["g"], p["ln1"]["b"],
               p["cross"]["wq"], p["cross"]["bq"],
               p["cross"]["wkv"], p["cross"]["bkv"],
               p["cross"]["wo"], p["cross"]["bo"],
               p["ln2"]["g"], p["ln2"]["b"],
               p["ffn"]["w1"], p["ffn"]["b1"], p["ffn"]["w2"], p["ffn"]["b2"],
               p["ln3"]["g"], p["ln3"]["b"])
    in_specs = ([pl.BlockSpec((1, St, D), lambda b: (b, 0, 0)),
                 pl.BlockSpec((1, Ss, D), lambda b: (b, 0, 0)),
                 pl.BlockSpec((1, 1, St), lambda b: (b, 0, 0)),
                 pl.BlockSpec((1, 1, Ss), lambda b: (b, 0, 0))]
                + [_wspec(w) for w in weights])
    return pl.pallas_call(
        kern,
        out_shape=jax.ShapeDtypeStruct((B, St, D), jnp.float32),
        grid=(B,),
        in_specs=in_specs,
        out_specs=pl.BlockSpec((1, St, D), lambda b: (b, 0, 0)),
        compiler_params=pltpu.CompilerParams(dimension_semantics=("parallel",)),
    )(y, enc, t_bias, s_bias, *weights)


def run_output_projection(y, w, b):
    B, S, D = y.shape
    V = w.shape[1]
    return pl.pallas_call(
        _logits_kernel,
        out_shape=jax.ShapeDtypeStruct((B, S, V), jnp.float32),
        grid=(B,),
        in_specs=[pl.BlockSpec((1, S, D), lambda bi: (bi, 0, 0)),
                  _wspec(w), _wspec(b)],
        out_specs=pl.BlockSpec((1, S, V), lambda bi: (bi, 0, 0)),
        compiler_params=pltpu.CompilerParams(dimension_semantics=("parallel",)),
    )(y, w, b)


# ---------------------------------------------------------------------------
# Parameter initialization (xavier-uniform like the original init_params)
# ---------------------------------------------------------------------------

class KeyGen:
    def __init__(self, key):
        self._key = key

    def __call__(self):
        self._key, sub = jax.random.split(self._key)
        return sub


def xavier(key, shape):
    limit = math.sqrt(6.0 / (shape[0] + shape[1]))
    return jax.random.uniform(key, shape, jnp.float32, -limit, limit)


def positional_encoding_table(max_len, dmodel):
    pos = jnp.arange(max_len, dtype=jnp.float32)[:, None]
    i = jnp.arange(0, dmodel, 2, dtype=jnp.float32)
    div = jnp.exp(-math.log(10000.0) * i / dmodel)
    pe = jnp.zeros((max_len, dmodel), jnp.float32)
    pe = pe.at[:, 0::2].set(jnp.sin(pos * div))
    pe = pe.at[:, 1::2].set(jnp.cos(pos * div))
    return pe


def mha_self_params(kg, dmodel, dk, dv, h):
    wq = xavier(kg(), (dmodel, h * dk))
    wk = xavier(kg(), (dmodel, h * dk))
    wv = xavier(kg(), (dmodel, h * dv))
    wo = xavier(kg(), (h * dv, dmodel))
    return dict(
        wqkv=jnp.concatenate([wq, wk, wv], axis=1).astype(jnp.bfloat16),
        bqkv=jnp.zeros((1, h * (2 * dk + dv)), jnp.float32),
        wo=wo.reshape(h, dv, dmodel).astype(jnp.bfloat16),
        bo=jnp.zeros((1, dmodel), jnp.float32),
    )


def mha_cross_params(kg, dmodel, dk, dv, h):
    wq = xavier(kg(), (dmodel, h * dk))
    wk = xavier(kg(), (dmodel, h * dk))
    wv = xavier(kg(), (dmodel, h * dv))
    wo = xavier(kg(), (h * dv, dmodel))
    return dict(
        wq=wq.astype(jnp.bfloat16),
        bq=jnp.zeros((1, h * dk), jnp.float32),
        wkv=jnp.concatenate([wk, wv], axis=1).astype(jnp.bfloat16),
        bkv=jnp.zeros((1, h * (dk + dv)), jnp.float32),
        wo=wo.reshape(h, dv, dmodel).astype(jnp.bfloat16),
        bo=jnp.zeros((1, dmodel), jnp.float32),
    )


def ln_params(dmodel):
    return dict(g=jnp.ones((1, dmodel), jnp.float32),
                b=jnp.zeros((1, dmodel), jnp.float32))


def ffn_params(kg, dmodel, dim_mult):
    dff = dmodel * dim_mult
    return dict(
        w1=xavier(kg(), (dmodel, dff)).astype(jnp.bfloat16),
        b1=jnp.zeros((1, dff), jnp.float32),
        w2=xavier(kg(), (dff, dmodel)).astype(jnp.bfloat16),
        b2=jnp.zeros((1, dmodel), jnp.float32),
    )


def init_transformer_params(key, cfg):
    dk, dv, h = cfg["dk"], cfg["dv"], cfg["h"]
    dmodel = dk * h
    kg = KeyGen(key)
    params = dict(
        src_emb=xavier(kg(), (cfg["src_vocab_size"], dmodel)),
        tgt_emb=xavier(kg(), (cfg["target_vocab_size"], dmodel)),
        src_pe=positional_encoding_table(cfg["src_vocab_size"], dmodel),
        tgt_pe=positional_encoding_table(cfg["target_vocab_size"], dmodel),
        encoder=[],
        decoder=[],
        w_out=xavier(kg(), (dmodel, cfg["target_vocab_size"])).astype(jnp.bfloat16),
        b_out=jnp.zeros((1, cfg["target_vocab_size"]), jnp.float32),
    )
    for _ in range(cfg["num_encoders"]):
        params["encoder"].append(dict(
            att=mha_self_params(kg, dmodel, dk, dv, h),
            ln1=ln_params(dmodel),
            ffn=ffn_params(kg, dmodel, cfg["dim_multiplier"]),
            ln2=ln_params(dmodel),
        ))
    for _ in range(cfg["num_decoders"]):
        params["decoder"].append(dict(
            self=mha_self_params(kg, dmodel, dk, dv, h),
            ln1=ln_params(dmodel),
            cross=mha_cross_params(kg, dmodel, dk, dv, h),
            ln2=ln_params(dmodel),
            ffn=ffn_params(kg, dmodel, cfg["dim_multiplier"]),
            ln3=ln_params(dmodel),
        ))
    return params


# ---------------------------------------------------------------------------
# Forward pass (embedding gather + tiny mask biases in XLA; rest in kernels)
# ---------------------------------------------------------------------------

def transformer_forward(params, src_ids, tgt_ids, cfg):
    dk, dv, h = cfg["dk"], cfg["dv"], cfg["h"]
    dmodel = dk * h
    B, Ss = src_ids.shape
    St = tgt_ids.shape[1]

    # additive key-padding biases (0 = attend, -1e9 = masked)
    src_bias = jnp.where(src_ids == cfg["src_pad_idx"], NEG_INF, 0.0
                         ).astype(jnp.float32)[:, None, :]      # (B, 1, Ss)
    tgt_bias = jnp.where(tgt_ids == cfg["target_pad_idx"], NEG_INF, 0.0
                         ).astype(jnp.float32)[:, None, :]      # (B, 1, St)

    # embeddings + positional encodings (dropout = identity in eval)
    scale_emb = math.sqrt(dmodel)
    src_x = jnp.take(params["src_emb"], src_ids, axis=0) * scale_emb
    src_x = src_x + params["src_pe"][:Ss][None]
    tgt_x = jnp.take(params["tgt_emb"], tgt_ids, axis=0) * scale_emb
    tgt_x = tgt_x + params["tgt_pe"][:St][None]

    x = src_x
    for lp in params["encoder"]:
        x = run_encoder_layer(x, src_bias, lp, h, dk, dv)
    enc = x

    y = tgt_x
    for lp in params["decoder"]:
        y = run_decoder_layer(y, enc, tgt_bias, src_bias, lp, h, dk, dv)

    return run_output_projection(y, params["w_out"], params["b_out"])


# ---------------------------------------------------------------------------
# Main
# ---------------------------------------------------------------------------

if __name__ == "__main__":
    cfg = dict(
        dk=8, dv=8, h=4,
        src_vocab_size=64, target_vocab_size=64,
        num_encoders=2, num_decoders=2,
        src_pad_idx=0, target_pad_idx=0,
        dim_multiplier=4,
    )
    B, S_src, S_tgt = 2, 8, 8

    root = jax.random.PRNGKey(0)
    k_params, k_src, k_tgt = jax.random.split(root, 3)
    params = init_transformer_params(k_params, cfg)

    src_ids = jax.random.randint(k_src, (B, S_src), 1, cfg["src_vocab_size"],
                                 dtype=jnp.int32)
    tgt_ids = jax.random.randint(k_tgt, (B, S_tgt), 1,
                                 cfg["target_vocab_size"], dtype=jnp.int32)
    # introduce some padding tokens so the masks are exercised
    src_ids = src_ids.at[:, -2:].set(cfg["src_pad_idx"])
    tgt_ids = tgt_ids.at[:, -1:].set(cfg["target_pad_idx"])

    fwd = jax.jit(functools.partial(transformer_forward, cfg=cfg))
    out = fwd(params, src_ids, tgt_ids)
    out = jax.block_until_ready(out)

    assert out.shape == (B, S_tgt, cfg["target_vocab_size"])
    assert bool(jnp.all(jnp.isfinite(out)))
    print("KERNEL_OK")
</pallas_src>

<mosaic_0001>
module attributes {stable_mosaic.version = 11 : i64} {
  func.func @_logits_kernel(%arg0: i32, %arg1: memref<1x8x32xf32, #tpu.memory_space<vmem>>, %arg2: memref<32x64xbf16, #tpu.memory_space<vmem>>, %arg3: memref<1x64xf32, #tpu.memory_space<vmem>>, %arg4: memref<1x8x64xf32, #tpu.memory_space<vmem>>) attributes {dimension_semantics = [#tpu.dimension_semantics<parallel>], iteration_bounds = array<i64: 2>, scalar_prefetch = 0 : i64, scratch_operands = 0 : i64, tpu.core_type = #tpu.core_type<tc>, window_params = [{transform_indices = @transform_0, window_bounds = array<i64: 1, 8, 32>}, {pipeline_mode = #tpu.pipeline_mode<synchronous>, transform_indices = @transform_1, window_bounds = array<i64: 32, 64>}, {pipeline_mode = #tpu.pipeline_mode<synchronous>, transform_indices = @transform_2, window_bounds = array<i64: 1, 64>}, {transform_indices = @transform_3, window_bounds = array<i64: 1, 8, 64>}]} {
    %c0 = arith.constant 0 : index
    %c0_0 = arith.constant 0 : index
    %c0_1 = arith.constant 0 : index
    %0 = vector.load %arg1[%c0, %c0_0, %c0_1] : memref<1x8x32xf32, #tpu.memory_space<vmem>>, vector<1x8x32xf32>
    %1 = vector.shape_cast %0 : vector<1x8x32xf32> to vector<8x32xf32>
    %2 = arith.truncf %1 : vector<8x32xf32> to vector<8x32xbf16>
    %c0_2 = arith.constant 0 : index
    %c0_3 = arith.constant 0 : index
    %3 = vector.load %arg2[%c0_2, %c0_3] : memref<32x64xbf16, #tpu.memory_space<vmem>>, vector<32x64xbf16>
    %cst = arith.constant dense<0.000000e+00> : vector<8x64xf32>
    %4 = tpu.matmul %2, %3, %cst {dimension_numbers = #tpu.dot_dimension_numbers<[1], [0], [0], [1], [0, 0, 1, 1], [], []>} : vector<8x32xbf16>, vector<32x64xbf16>, vector<8x64xf32> -> vector<8x64xf32>
    %c0_4 = arith.constant 0 : index
    %c0_5 = arith.constant 0 : index
    %5 = vector.load %arg3[%c0_4, %c0_5] : memref<1x64xf32, #tpu.memory_space<vmem>>, vector<1x64xf32>
    %6 = vector.broadcast %5 : vector<1x64xf32> to vector<8x64xf32>
    %7 = arith.addf %4, %6 : vector<8x64xf32>
    %c0_6 = arith.constant 0 : index
    %c0_7 = arith.constant 0 : index
    %c0_8 = arith.constant 0 : index
    %8 = vector.load %arg4[%c0_6, %c0_7, %c0_8] : memref<1x8x64xf32, #tpu.memory_space<vmem>>, vector<1x8x64xf32>
    %9 = vector.shape_cast %8 : vector<1x8x64xf32> to vector<8x64xf32>
    %10 = vector.shape_cast %7 : vector<8x64xf32> to vector<1x8x64xf32>
    tpu.vector_store %arg4[%c0_6, %c0_7, %c0_8], %10 {strides = array<i32>} : memref<1x8x64xf32, #tpu.memory_space<vmem>>, vector<1x8x64xf32>,
    return
  }
  func.func @transform_0(%arg0: i32) -> (i32, i32, i32) {
    %c0_i32 = arith.constant 0 : i32
    %c0_i32_0 = arith.constant 0 : i32
    %c0_i32_1 = arith.constant 0 : i32
    return %arg0, %c0_i32, %c0_i32_0 : i32, i32, i32
  }
  func.func @transform_1(%arg0: i32) -> (i32, i32) {
    %c0_i32 = arith.constant 0 : i32
    %c0_i32_0 = arith.constant 0 : i32
    %c0_i32_1 = arith.constant 0 : i32
    return %c0_i32, %c0_i32_0 : i32, i32
  }
  func.func @transform_2(%arg0: i32) -> (i32, i32) {
    %c0_i32 = arith.constant 0 : i32
    %c0_i32_0 = arith.constant 0 : i32
    %c0_i32_1 = arith.constant 0 : i32
    return %c0_i32, %c0_i32_0 : i32, i32
  }
  func.func @transform_3(%arg0: i32) -> (i32, i32, i32) {
    %c0_i32 = arith.constant 0 : i32
    %c0_i32_0 = arith.constant 0 : i32
    %c0_i32_1 = arith.constant 0 : i32
    return %arg0, %c0_i32, %c0_i32_0 : i32, i32, i32
  }
}

module attributes {stable_mosaic.version = 11 : i64} {
  func.func @_encoder_layer_kernel(%arg0: i32, %arg1: memref<1x8x32xf32, #tpu.memory_space<vmem>>, %arg2: memref<1x1x8xf32, #tpu.memory_space<vmem>>, %arg3: memref<32x96xbf16, #tpu.memory_space<vmem>>, %arg4: memref<1x96xf32, #tpu.memory_space<vmem>>, %arg5: memref<4x8x32xbf16, #tpu.memory_space<vmem>>, %arg6: memref<1x32xf32, #tpu.memory_space<vmem>>, %arg7: memref<1x32xf32, #tpu.memory_space<vmem>>, %arg8: memref<1x32xf32, #tpu.memory_space<vmem>>, %arg9: memref<32x128xbf16, #tpu.memory_space<vmem>>, %arg10: memref<1x128xf32, #tpu.memory_space<vmem>>, %arg11: memref<128x32xbf16, #tpu.memory_space<vmem>>, %arg12: memref<1x32xf32, #tpu.memory_space<vmem>>, %arg13: memref<1x32xf32, #tpu.memory_space<vmem>>, %arg14: memref<1x32xf32, #tpu.memory_space<vmem>>, %arg15: memref<1x8x32xf32, #tpu.memory_space<vmem>>) attributes {dimension_semantics = [#tpu.dimension_semantics<parallel>], iteration_bounds = array<i64: 2>, scalar_prefetch = 0 : i64, scratch_operands = 0 : i64, tpu.core_type = #tpu.core_type<tc>, window_params = [{transform_indices = @transform_0, window_bounds = array<i64: 1, 8, 32>}, {transform_indices = @transform_1, window_bounds = array<i64: 1, 1, 8>}, {pipeline_mode = #tpu.pipeline_mode<synchronous>, transform_indices = @transform_2, window_bounds = array<i64: 32, 96>}, {pipeline_mode = #tpu.pipeline_mode<synchronous>, transform_indices = @transform_3, window_bounds = array<i64: 1, 96>}, {pipeline_mode = #tpu.pipeline_mode<synchronous>, transform_indices = @transform_4, window_bounds = array<i64: 4, 8, 32>}, {pipeline_mode = #tpu.pipeline_mode<synchronous>, transform_indices = @transform_5, window_bounds = array<i64: 1, 32>}, {pipeline_mode = #tpu.pipeline_mode<synchronous>, transform_indices = @transform_6, window_bounds = array<i64: 1, 32>}, {pipeline_mode = #tpu.pipeline_mode<synchronous>, transform_indices = @transform_7, window_bounds = array<i64: 1, 32>}, {pipeline_mode = #tpu.pipeline_mode<synchronous>, transform_indices = @transform_8, window_bounds = array<i64: 32, 128>}, {pipeline_mode = #tpu.pipeline_mode<synchronous>, transform_indices = @transform_9, window_bounds = array<i64: 1, 128>}, {pipeline_mode = #tpu.pipeline_mode<synchronous>, transform_indices = @transform_10, window_bounds = array<i64: 128, 32>}, {pipeline_mode = #tpu.pipeline_mode<synchronous>, transform_indices = @transform_11, window_bounds = array<i64: 1, 32>}, {pipeline_mode = #tpu.pipeline_mode<synchronous>, transform_indices = @transform_12, window_bounds = array<i64: 1, 32>}, {pipeline_mode = #tpu.pipeline_mode<synchronous>, transform_indices = @transform_13, window_bounds = array<i64: 1, 32>}, {transform_indices = @transform_14, window_bounds = array<i64: 1, 8, 32>}]} {
    %c0 = arith.constant 0 : index
    %c0_0 = arith.constant 0 : index
    %c0_1 = arith.constant 0 : index
    %0 = vector.load %arg1[%c0, %c0_0, %c0_1] : memref<1x8x32xf32, #tpu.memory_space<vmem>>, vector<1x8x32xf32>
    %1 = vector.shape_cast %0 : vector<1x8x32xf32> to vector<8x32xf32>
    %c0_2 = arith.constant 0 : index
    %c0_3 = arith.constant 0 : index
    %c0_4 = arith.constant 0 : index
    %2 = vector.load %arg2[%c0_2, %c0_3, %c0_4] : memref<1x1x8xf32, #tpu.memory_space<vmem>>, vector<1x1x8xf32>
    %3 = vector.shape_cast %2 : vector<1x1x8xf32> to vector<1x8xf32>
    %4 = arith.truncf %1 : vector<8x32xf32> to vector<8x32xbf16>
    %c0_5 = arith.constant 0 : index
    %c0_6 = arith.constant 0 : index
    %5 = vector.load %arg3[%c0_5, %c0_6] : memref<32x96xbf16, #tpu.memory_space<vmem>>, vector<32x96xbf16>
    %cst = arith.constant dense<0.000000e+00> : vector<8x96xf32>
    %6 = tpu.matmul %4, %5, %cst {dimension_numbers = #tpu.dot_dimension_numbers<[1], [0], [0], [1], [0, 0, 1, 1], [], []>} : vector<8x32xbf16>, vector<32x96xbf16>, vector<8x96xf32> -> vector<8x96xf32>
    %c0_7 = arith.constant 0 : index
    %c0_8 = arith.constant 0 : index
    %7 = vector.load %arg4[%c0_7, %c0_8] : memref<1x96xf32, #tpu.memory_space<vmem>>, vector<1x96xf32>
    %8 = vector.broadcast %7 : vector<1x96xf32> to vector<8x96xf32>
    %9 = arith.addf %6, %8 : vector<8x96xf32>
    %10 = vector.extract_strided_slice %9 {offsets = [0, 0], sizes = [8, 32], strides = [1, 1]} : vector<8x96xf32> to vector<8x32xf32>
    %11 = vector.extract_strided_slice %9 {offsets = [0, 32], sizes = [8, 32], strides = [1, 1]} : vector<8x96xf32> to vector<8x32xf32>
    %12 = vector.extract_strided_slice %9 {offsets = [0, 64], sizes = [8, 32], strides = [1, 1]} : vector<8x96xf32> to vector<8x32xf32>
    %13 = vector.extract_strided_slice %10 {offsets = [0, 0], sizes = [8, 8], strides = [1, 1]} : vector<8x32xf32> to vector<8x8xf32>
    %cst_9 = arith.constant 0.353553385 : f32
    %14 = vector.broadcast %cst_9 : f32 to vector<8x8xf32>
    %15 = arith.mulf %13, %14 : vector<8x8xf32>
    %16 = arith.truncf %15 : vector<8x8xf32> to vector<8x8xbf16>
    %17 = vector.extract_strided_slice %11 {offsets = [0, 0], sizes = [8, 8], strides = [1, 1]} : vector<8x32xf32> to vector<8x8xf32>
    %18 = arith.truncf %17 : vector<8x8xf32> to vector<8x8xbf16>
    %19 = vector.extract_strided_slice %12 {offsets = [0, 0], sizes = [8, 8], strides = [1, 1]} : vector<8x32xf32> to vector<8x8xf32>
    %20 = arith.truncf %19 : vector<8x8xf32> to vector<8x8xbf16>
    %cst_10 = arith.constant dense<0.000000e+00> : vector<8x8xf32>
    %21 = tpu.matmul %16, %18, %cst_10 {dimension_numbers = #tpu.dot_dimension_numbers<[1], [1], [0], [0], [0, 0, 1, 0], [], []>} : vector<8x8xbf16>, vector<8x8xbf16>, vector<8x8xf32> -> vector<8x8xf32>
    %22 = vector.broadcast %3 : vector<1x8xf32> to vector<8x8xf32>
    %23 = arith.addf %21, %22 : vector<8x8xf32>
    %cst_11 = arith.constant dense<0xFF800000> : vector<8xf32>
    %24 = vector.multi_reduction <maximumf>, %23, %cst_11 [1] : vector<8x8xf32> to vector<8xf32>
    %25 = vector.shape_cast %24 : vector<8xf32> to vector<8x1xf32>
    %26 = vector.broadcast %25 : vector<8x1xf32> to vector<8x8xf32>
    %27 = arith.subf %23, %26 : vector<8x8xf32>
    %28 = math.exp %27 : vector<8x8xf32>
    %cst_12 = arith.constant dense<0.000000e+00> : vector<8xf32>
    %29 = vector.multi_reduction <add>, %28, %cst_12 [1] : vector<8x8xf32> to vector<8xf32>
    %30 = vector.shape_cast %29 : vector<8xf32> to vector<8x1xf32>
    %31 = tpu.reciprocal %30 {approx = true} : vector<8x1xf32> -> vector<8x1xf32>
    %32 = vector.broadcast %31 : vector<8x1xf32> to vector<8x8xf32>
    %33 = arith.mulf %28, %32 : vector<8x8xf32>
    %34 = arith.truncf %33 : vector<8x8xf32> to vector<8x8xbf16>
    %cst_13 = arith.constant dense<0.000000e+00> : vector<8x8xf32>
    %35 = tpu.matmul %34, %20, %cst_13 {dimension_numbers = #tpu.dot_dimension_numbers<[1], [0], [0], [1], [0, 0, 1, 1], [], []>} : vector<8x8xbf16>, vector<8x8xbf16>, vector<8x8xf32> -> vector<8x8xf32>
    %36 = arith.truncf %35 : vector<8x8xf32> to vector<8x8xbf16>
    %c0_14 = arith.constant 0 : index
    %c0_15 = arith.constant 0 : index
    %c0_16 = arith.constant 0 : index
    %37 = vector.load %arg5[%c0_14, %c0_15, %c0_16] : memref<4x8x32xbf16, #tpu.memory_space<vmem>>, vector<1x8x32xbf16>
    %38 = vector.shape_cast %37 : vector<1x8x32xbf16> to vector<8x32xbf16>
    %cst_17 = arith.constant dense<0.000000e+00> : vector<8x32xf32>
    %39 = tpu.matmul %36, %38, %cst_17 {dimension_numbers = #tpu.dot_dimension_numbers<[1], [0], [0], [1], [0, 0, 1, 1], [], []>} : vector<8x8xbf16>, vector<8x32xbf16>, vector<8x32xf32> -> vector<8x32xf32>
    %40 = vector.extract_strided_slice %10 {offsets = [0, 8], sizes = [8, 8], strides = [1, 1]} : vector<8x32xf32> to vector<8x8xf32>
    %cst_18 = arith.constant 0.353553385 : f32
    %41 = vector.broadcast %cst_18 : f32 to vector<8x8xf32>
    %42 = arith.mulf %40, %41 : vector<8x8xf32>
    %43 = arith.truncf %42 : vector<8x8xf32> to vector<8x8xbf16>
    %44 = vector.extract_strided_slice %11 {offsets = [0, 8], sizes = [8, 8], strides = [1, 1]} : vector<8x32xf32> to vector<8x8xf32>
    %45 = arith.truncf %44 : vector<8x8xf32> to vector<8x8xbf16>
    %46 = vector.extract_strided_slice %12 {offsets = [0, 8], sizes = [8, 8], strides = [1, 1]} : vector<8x32xf32> to vector<8x8xf32>
    %47 = arith.truncf %46 : vector<8x8xf32> to vector<8x8xbf16>
    %cst_19 = arith.constant dense<0.000000e+00> : vector<8x8xf32>
    %48 = tpu.matmul %43, %45, %cst_19 {dimension_numbers = #tpu.dot_dimension_numbers<[1], [1], [0], [0], [0, 0, 1, 0], [], []>} : vector<8x8xbf16>, vector<8x8xbf16>, vector<8x8xf32> -> vector<8x8xf32>
    %49 = vector.broadcast %3 : vector<1x8xf32> to vector<8x8xf32>
    %50 = arith.addf %48, %49 : vector<8x8xf32>
    %cst_20 = arith.constant dense<0xFF800000> : vector<8xf32>
    %51 = vector.multi_reduction <maximumf>, %50, %cst_20 [1] : vector<8x8xf32> to vector<8xf32>
    %52 = vector.shape_cast %51 : vector<8xf32> to vector<8x1xf32>
    %53 = vector.broadcast %52 : vector<8x1xf32> to vector<8x8xf32>
    %54 = arith.subf %50, %53 : vector<8x8xf32>
    %55 = math.exp %54 : vector<8x8xf32>
    %cst_21 = arith.constant dense<0.000000e+00> : vector<8xf32>
    %56 = vector.multi_reduction <add>, %55, %cst_21 [1] : vector<8x8xf32> to vector<8xf32>
    %57 = vector.shape_cast %56 : vector<8xf32> to vector<8x1xf32>
    %58 = tpu.reciprocal %57 {approx = true} : vector<8x1xf32> -> vector<8x1xf32>
    %59 = vector.broadcast %58 : vector<8x1xf32> to vector<8x8xf32>
    %60 = arith.mulf %55, %59 : vector<8x8xf32>
    %61 = arith.truncf %60 : vector<8x8xf32> to vector<8x8xbf16>
    %cst_22 = arith.constant dense<0.000000e+00> : vector<8x8xf32>
    %62 = tpu.matmul %61, %47, %cst_22 {dimension_numbers = #tpu.dot_dimension_numbers<[1], [0], [0], [1], [0, 0, 1, 1], [], []>} : vector<8x8xbf16>, vector<8x8xbf16>, vector<8x8xf32> -> vector<8x8xf32>
    %63 = arith.truncf %62 : vector<8x8xf32> to vector<8x8xbf16>
    %c1 = arith.constant 1 : index
    %c0_23 = arith.constant 0 : index
    %c0_24 = arith.constant 0 : index
    %64 = vector.load %arg5[%c1, %c0_23, %c0_24] : memref<4x8x32xbf16, #tpu.memory_space<vmem>>, vector<1x8x32xbf16>
    %65 = vector.shape_cast %64 : vector<1x8x32xbf16> to vector<8x32xbf16>
    %cst_25 = arith.constant dense<0.000000e+00> : vector<8x32xf32>
    %66 = tpu.matmul %63, %65, %cst_25 {dimension_numbers = #tpu.dot_dimension_numbers<[1], [0], [0], [1], [0, 0, 1, 1], [], []>} : vector<8x8xbf16>, vector<8x32xbf16>, vector<8x32xf32> -> vector<8x32xf32>
    %67 = arith.addf %39, %66 : vector<8x32xf32>
    %68 = vector.extract_strided_slice %10 {offsets = [0, 16], sizes = [8, 8], strides = [1, 1]} : vector<8x32xf32> to vector<8x8xf32>
    %cst_26 = arith.constant 0.353553385 : f32
    %69 = vector.broadcast %cst_26 : f32 to vector<8x8xf32>
    %70 = arith.mulf %68, %69 : vector<8x8xf32>
    %71 = arith.truncf %70 : vector<8x8xf32> to vector<8x8xbf16>
    %72 = vector.extract_strided_slice %11 {offsets = [0, 16], sizes = [8, 8], strides = [1, 1]} : vector<8x32xf32> to vector<8x8xf32>
    %73 = arith.truncf %72 : vector<8x8xf32> to vector<8x8xbf16>
    %74 = vector.extract_strided_slice %12 {offsets = [0, 16], sizes = [8, 8], strides = [1, 1]} : vector<8x32xf32> to vector<8x8xf32>
    %75 = arith.truncf %74 : vector<8x8xf32> to vector<8x8xbf16>
    %cst_27 = arith.constant dense<0.000000e+00> : vector<8x8xf32>
    %76 = tpu.matmul %71, %73, %cst_27 {dimension_numbers = #tpu.dot_dimension_numbers<[1], [1], [0], [0], [0, 0, 1, 0], [], []>} : vector<8x8xbf16>, vector<8x8xbf16>, vector<8x8xf32> -> vector<8x8xf32>
    %77 = vector.broadcast %3 : vector<1x8xf32> to vector<8x8xf32>
    %78 = arith.addf %76, %77 : vector<8x8xf32>
    %cst_28 = arith.constant dense<0xFF800000> : vector<8xf32>
    %79 = vector.multi_reduction <maximumf>, %78, %cst_28 [1] : vector<8x8xf32> to vector<8xf32>
    %80 = vector.shape_cast %79 : vector<8xf32> to vector<8x1xf32>
    %81 = vector.broadcast %80 : vector<8x1xf32> to vector<8x8xf32>
    %82 = arith.subf %78, %81 : vector<8x8xf32>
    %83 = math.exp %82 : vector<8x8xf32>
    %cst_29 = arith.constant dense<0.000000e+00> : vector<8xf32>
    %84 = vector.multi_reduction <add>, %83, %cst_29 [1] : vector<8x8xf32> to vector<8xf32>
    %85 = vector.shape_cast %84 : vector<8xf32> to vector<8x1xf32>
    %86 = tpu.reciprocal %85 {approx = true} : vector<8x1xf32> -> vector<8x1xf32>
    %87 = vector.broadcast %86 : vector<8x1xf32> to vector<8x8xf32>
    %88 = arith.mulf %83, %87 : vector<8x8xf32>
    %89 = arith.truncf %88 : vector<8x8xf32> to vector<8x8xbf16>
    %cst_30 = arith.constant dense<0.000000e+00> : vector<8x8xf32>
    %90 = tpu.matmul %89, %75, %cst_30 {dimension_numbers = #tpu.dot_dimension_numbers<[1], [0], [0], [1], [0, 0, 1, 1], [], []>} : vector<8x8xbf16>, vector<8x8xbf16>, vector<8x8xf32> -> vector<8x8xf32>
    %91 = arith.truncf %90 : vector<8x8xf32> to vector<8x8xbf16>
    %c2 = arith.constant 2 : index
    %c0_31 = arith.constant 0 : index
    %c0_32 = arith.constant 0 : index
    %92 = vector.load %arg5[%c2, %c0_31, %c0_32] : memref<4x8x32xbf16, #tpu.memory_space<vmem>>, vector<1x8x32xbf16>
    %93 = vector.shape_cast %92 : vector<1x8x32xbf16> to vector<8x32xbf16>
    %cst_33 = arith.constant dense<0.000000e+00> : vector<8x32xf32>
    %94 = tpu.matmul %91, %93, %cst_33 {dimension_numbers = #tpu.dot_dimension_numbers<[1], [0], [0], [1], [0, 0, 1, 1], [], []>} : vector<8x8xbf16>, vector<8x32xbf16>, vector<8x32xf32> -> vector<8x32xf32>
    %95 = arith.addf %67, %94 : vector<8x32xf32>
    %96 = vector.extract_strided_slice %10 {offsets = [0, 24], sizes = [8, 8], strides = [1, 1]} : vector<8x32xf32> to vector<8x8xf32>
    %cst_34 = arith.constant 0.353553385 : f32
    %97 = vector.broadcast %cst_34 : f32 to vector<8x8xf32>
    %98 = arith.mulf %96, %97 : vector<8x8xf32>
    %99 = arith.truncf %98 : vector<8x8xf32> to vector<8x8xbf16>
    %100 = vector.extract_strided_slice %11 {offsets = [0, 24], sizes = [8, 8], strides = [1, 1]} : vector<8x32xf32> to vector<8x8xf32>
    %101 = arith.truncf %100 : vector<8x8xf32> to vector<8x8xbf16>
    %102 = vector.extract_strided_slice %12 {offsets = [0, 24], sizes = [8, 8], strides = [1, 1]} : vector<8x32xf32> to vector<8x8xf32>
    %103 = arith.truncf %102 : vector<8x8xf32> to vector<8x8xbf16>
    %cst_35 = arith.constant dense<0.000000e+00> : vector<8x8xf32>
    %104 = tpu.matmul %99, %101, %cst_35 {dimension_numbers = #tpu.dot_dimension_numbers<[1], [1], [0], [0], [0, 0, 1, 0], [], []>} : vector<8x8xbf16>, vector<8x8xbf16>, vector<8x8xf32> -> vector<8x8xf32>
    %105 = vector.broadcast %3 : vector<1x8xf32> to vector<8x8xf32>
    %106 = arith.addf %104, %105 : vector<8x8xf32>
    %cst_36 = arith.constant dense<0xFF800000> : vector<8xf32>
    %107 = vector.multi_reduction <maximumf>, %106, %cst_36 [1] : vector<8x8xf32> to vector<8xf32>
    %108 = vector.shape_cast %107 : vector<8xf32> to vector<8x1xf32>
    %109 = vector.broadcast %108 : vector<8x1xf32> to vector<8x8xf32>
    %110 = arith.subf %106, %109 : vector<8x8xf32>
    %111 = math.exp %110 : vector<8x8xf32>
    %cst_37 = arith.constant dense<0.000000e+00> : vector<8xf32>
    %112 = vector.multi_reduction <add>, %111, %cst_37 [1] : vector<8x8xf32> to vector<8xf32>
    %113 = vector.shape_cast %112 : vector<8xf32> to vector<8x1xf32>
    %114 = tpu.reciprocal %113 {approx = true} : vector<8x1xf32> -> vector<8x1xf32>
    %115 = vector.broadcast %114 : vector<8x1xf32> to vector<8x8xf32>
    %116 = arith.mulf %111, %115 : vector<8x8xf32>
    %117 = arith.truncf %116 : vector<8x8xf32> to vector<8x8xbf16>
    %cst_38 = arith.constant dense<0.000000e+00> : vector<8x8xf32>
    %118 = tpu.matmul %117, %103, %cst_38 {dimension_numbers = #tpu.dot_dimension_numbers<[1], [0], [0], [1], [0, 0, 1, 1], [], []>} : vector<8x8xbf16>, vector<8x8xbf16>, vector<8x8xf32> -> vector<8x8xf32>
    %119 = arith.truncf %118 : vector<8x8xf32> to vector<8x8xbf16>
    %c3 = arith.constant 3 : index
    %c0_39 = arith.constant 0 : index
    %c0_40 = arith.constant 0 : index
    %120 = vector.load %arg5[%c3, %c0_39, %c0_40] : memref<4x8x32xbf16, #tpu.memory_space<vmem>>, vector<1x8x32xbf16>
    %121 = vector.shape_cast %120 : vector<1x8x32xbf16> to vector<8x32xbf16>
    %cst_41 = arith.constant dense<0.000000e+00> : vector<8x32xf32>
    %122 = tpu.matmul %119, %121, %cst_41 {dimension_numbers = #tpu.dot_dimension_numbers<[1], [0], [0], [1], [0, 0, 1, 1], [], []>} : vector<8x8xbf16>, vector<8x32xbf16>, vector<8x32xf32> -> vector<8x32xf32>
    %123 = arith.addf %95, %122 : vector<8x32xf32>
    %c0_42 = arith.constant 0 : index
    %c0_43 = arith.constant 0 : index
    %124 = vector.load %arg6[%c0_42, %c0_43] : memref<1x32xf32, #tpu.memory_space<vmem>>, vector<1x32xf32>
    %125 = vector.broadcast %124 : vector<1x32xf32> to vector<8x32xf32>
    %126 = arith.addf %123, %125 : vector<8x32xf32>
    %127 = arith.addf %1, %126 : vector<8x32xf32>
    %c0_44 = arith.constant 0 : index
    %c0_45 = arith.constant 0 : index
    %128 = vector.load %arg7[%c0_44, %c0_45] : memref<1x32xf32, #tpu.memory_space<vmem>>, vector<1x32xf32>
    %c0_46 = arith.constant 0 : index
    %c0_47 = arith.constant 0 : index
    %129 = vector.load %arg8[%c0_46, %c0_47] : memref<1x32xf32, #tpu.memory_space<vmem>>, vector<1x32xf32>
    %cst_48 = arith.constant dense<0.000000e+00> : vector<8xf32>
    %130 = vector.multi_reduction <add>, %127, %cst_48 [1] : vector<8x32xf32> to vector<8xf32>
    %131 = vector.shape_cast %130 : vector<8xf32> to vector<8x1xf32>
    %cst_49 = arith.constant 3.200000e+01 : f32
    %132 = vector.broadcast %cst_49 : f32 to vector<8x1xf32>
    %133 = arith.divf %131, %132 : vector<8x1xf32>
    %134 = vector.broadcast %133 : vector<8x1xf32> to vector<8x32xf32>
    %135 = arith.subf %127, %134 : vector<8x32xf32>
    %136 = arith.mulf %135, %135 : vector<8x32xf32>
    %cst_50 = arith.constant dense<0.000000e+00> : vector<8xf32>
    %137 = vector.multi_reduction <add>, %136, %cst_50 [1] : vector<8x32xf32> to vector<8xf32>
    %138 = vector.shape_cast %137 : vector<8xf32> to vector<8x1xf32>
    %cst_51 = arith.constant 3.200000e+01 : f32
    %139 = vector.broadcast %cst_51 : f32 to vector<8x1xf32>
    %140 = arith.divf %138, %139 : vector<8x1xf32>
    %141 = vector.broadcast %133 : vector<8x1xf32> to vector<8x32xf32>
    %142 = arith.subf %127, %141 : vector<8x32xf32>
    %cst_52 = arith.constant 9.99999974E-6 : f32
    %143 = vector.broadcast %cst_52 : f32 to vector<8x1xf32>
    %144 = arith.addf %140, %143 : vector<8x1xf32>
    %145 = math.rsqrt %144 : vector<8x1xf32>
    %146 = vector.broadcast %145 : vector<8x1xf32> to vector<8x32xf32>
    %147 = arith.mulf %142, %146 : vector<8x32xf32>
    %148 = vector.broadcast %128 : vector<1x32xf32> to vector<8x32xf32>
    %149 = arith.mulf %147, %148 : vector<8x32xf32>
    %150 = vector.broadcast %129 : vector<1x32xf32> to vector<8x32xf32>
    %151 = arith.addf %149, %150 : vector<8x32xf32>
    %c0_53 = arith.constant 0 : index
    %c0_54 = arith.constant 0 : index
    %152 = vector.load %arg9[%c0_53, %c0_54] : memref<32x128xbf16, #tpu.memory_space<vmem>>, vector<32x128xbf16>
    %c0_55 = arith.constant 0 : index
    %c0_56 = arith.constant 0 : index
    %153 = vector.load %arg10[%c0_55, %c0_56] : memref<1x128xf32, #tpu.memory_space<vmem>>, vector<1x128xf32>
    %c0_57 = arith.constant 0 : index
    %c0_58 = arith.constant 0 : index
    %154 = vector.load %arg11[%c0_57, %c0_58] : memref<128x32xbf16, #tpu.memory_space<vmem>>, vector<128x32xbf16>
    %c0_59 = arith.constant 0 : index
    %c0_60 = arith.constant 0 : index
    %155 = vector.load %arg12[%c0_59, %c0_60] : memref<1x32xf32, #tpu.memory_space<vmem>>, vector<1x32xf32>
    %156 = arith.truncf %151 : vector<8x32xf32> to vector<8x32xbf16>
    %cst_61 = arith.constant dense<0.000000e+00> : vector<8x128xf32>
    %157 = tpu.matmul %156, %152, %cst_61 {dimension_numbers = #tpu.dot_dimension_numbers<[1], [0], [0], [1], [0, 0, 1, 1], [], []>} : vector<8x32xbf16>, vector<32x128xbf16>, vector<8x128xf32> -> vector<8x128xf32>
    %158 = vector.broadcast %153 : vector<1x128xf32> to vector<8x128xf32>
    %159 = arith.addf %157, %158 : vector<8x128xf32>
    %cst_62 = arith.constant 0.000000e+00 : f32
    %160 = vector.broadcast %cst_62 : f32 to vector<8x128xf32>
    %161 = arith.maximumf %159, %160 : vector<8x128xf32>
    %162 = arith.truncf %161 : vector<8x128xf32> to vector<8x128xbf16>
    %cst_63 = arith.constant dense<0.000000e+00> : vector<8x32xf32>
    %163 = tpu.matmul %162, %154, %cst_63 {dimension_numbers = #tpu.dot_dimension_numbers<[1], [0], [0], [1], [0, 0, 1, 1], [], []>} : vector<8x128xbf16>, vector<128x32xbf16>, vector<8x32xf32> -> vector<8x32xf32>
    %164 = vector.broadcast %155 : vector<1x32xf32> to vector<8x32xf32>
    %165 = arith.addf %163, %164 : vector<8x32xf32>
    %166 = arith.addf %151, %165 : vector<8x32xf32>
    %c0_64 = arith.constant 0 : index
    %c0_65 = arith.constant 0 : index
    %167 = vector.load %arg13[%c0_64, %c0_65] : memref<1x32xf32, #tpu.memory_space<vmem>>, vector<1x32xf32>
    %c0_66 = arith.constant 0 : index
    %c0_67 = arith.constant 0 : index
    %168 = vector.load %arg14[%c0_66, %c0_67] : memref<1x32xf32, #tpu.memory_space<vmem>>, vector<1x32xf32>
    %cst_68 = arith.constant dense<0.000000e+00> : vector<8xf32>
    %169 = vector.multi_reduction <add>, %166, %cst_68 [1] : vector<8x32xf32> to vector<8xf32>
    %170 = vector.shape_cast %169 : vector<8xf32> to vector<8x1xf32>
    %cst_69 = arith.constant 3.200000e+01 : f32
    %171 = vector.broadcast %cst_69 : f32 to vector<8x1xf32>
    %172 = arith.divf %170, %171 : vector<8x1xf32>
    %173 = vector.broadcast %172 : vector<8x1xf32> to vector<8x32xf32>
    %174 = arith.subf %166, %173 : vector<8x32xf32>
    %175 = arith.mulf %174, %174 : vector<8x32xf32>
    %cst_70 = arith.constant dense<0.000000e+00> : vector<8xf32>
    %176 = vector.multi_reduction <add>, %175, %cst_70 [1] : vector<8x32xf32> to vector<8xf32>
    %177 = vector.shape_cast %176 : vector<8xf32> to vector<8x1xf32>
    %cst_71 = arith.constant 3.200000e+01 : f32
    %178 = vector.broadcast %cst_71 : f32 to vector<8x1xf32>
    %179 = arith.divf %177, %178 : vector<8x1xf32>
    %180 = vector.broadcast %172 : vector<8x1xf32> to vector<8x32xf32>
    %181 = arith.subf %166, %180 : vector<8x32xf32>
    %cst_72 = arith.constant 9.99999974E-6 : f32
    %182 = vector.broadcast %cst_72 : f32 to vector<8x1xf32>
    %183 = arith.addf %179, %182 : vector<8x1xf32>
    %184 = math.rsqrt %183 : vector<8x1xf32>
    %185 = vector.broadcast %184 : vector<8x1xf32> to vector<8x32xf32>
    %186 = arith.mulf %181, %185 : vector<8x32xf32>
    %187 = vector.broadcast %167 : vector<1x32xf32> to vector<8x32xf32>
    %188 = arith.mulf %186, %187 : vector<8x32xf32>
    %189 = vector.broadcast %168 : vector<1x32xf32> to vector<8x32xf32>
    %190 = arith.addf %188, %189 : vector<8x32xf32>
    %c0_73 = arith.constant 0 : index
    %c0_74 = arith.constant 0 : index
    %c0_75 = arith.constant 0 : index
    %191 = vector.load %arg15[%c0_73, %c0_74, %c0_75] : memref<1x8x32xf32, #tpu.memory_space<vmem>>, vector<1x8x32xf32>
    %192 = vector.shape_cast %191 : vector<1x8x32xf32> to vector<8x32xf32>
    %193 = vector.shape_cast %190 : vector<8x32xf32> to vector<1x8x32xf32>
    tpu.vector_store %arg15[%c0_73, %c0_74, %c0_75], %193 {strides = array<i32>} : memref<1x8x32xf32, #tpu.memory_space<vmem>>, vector<1x8x32xf32>,
    return
  }
  func.func @transform_0(%arg0: i32) -> (i32, i32, i32) {
    %c0_i32 = arith.constant 0 : i32
    %c0_i32_0 = arith.constant 0 : i32
    %c0_i32_1 = arith.constant 0 : i32
    return %arg0, %c0_i32, %c0_i32_0 : i32, i32, i32
  }
  func.func @transform_1(%arg0: i32) -> (i32, i32, i32) {
    %c0_i32 = arith.constant 0 : i32
    %c0_i32_0 = arith.constant 0 : i32
    %c0_i32_1 = arith.constant 0 : i32
    return %arg0, %c0_i32, %c0_i32_0 : i32, i32, i32
  }
  func.func @transform_2(%arg0: i32) -> (i32, i32) {
    %c0_i32 = arith.constant 0 : i32
    %c0_i32_0 = arith.constant 0 : i32
    %c0_i32_1 = arith.constant 0 : i32
    return %c0_i32, %c0_i32_0 : i32, i32
  }
  func.func @transform_3(%arg0: i32) -> (i32, i32) {
    %c0_i32 = arith.constant 0 : i32
    %c0_i32_0 = arith.constant 0 : i32
    %c0_i32_1 = arith.constant 0 : i32
    return %c0_i32, %c0_i32_0 : i32, i32
  }
  func.func @transform_4(%arg0: i32) -> (i32, i32, i32) {
    %c0_i32 = arith.constant 0 : i32
    %c0_i32_0 = arith.constant 0 : i32
    %c0_i32_1 = arith.constant 0 : i32
    %c0_i32_2 = arith.constant 0 : i32
    return %c0_i32, %c0_i32_0, %c0_i32_1 : i32, i32, i32
  }
  func.func @transform_5(%arg0: i32) -> (i32, i32) {
    %c0_i32 = arith.constant 0 : i32
    %c0_i32_0 = arith.constant 0 : i32
    %c0_i32_1 = arith.constant 0 : i32
    return %c0_i32, %c0_i32_0 : i32, i32
  }
  func.func @transform_6(%arg0: i32) -> (i32, i32) {
    %c0_i32 = arith.constant 0 : i32
    %c0_i32_0 = arith.constant 0 : i32
    %c0_i32_1 = arith.constant 0 : i32
    return %c0_i32, %c0_i32_0 : i32, i32
  }
  func.func @transform_7(%arg0: i32) -> (i32, i32) {
    %c0_i32 = arith.constant 0 : i32
    %c0_i32_0 = arith.constant 0 : i32
    %c0_i32_1 = arith.constant 0 : i32
    return %c0_i32, %c0_i32_0 : i32, i32
  }
  func.func @transform_8(%arg0: i32) -> (i32, i32) {
    %c0_i32 = arith.constant 0 : i32
    %c0_i32_0 = arith.constant 0 : i32
    %c0_i32_1 = arith.constant 0 : i32
    return %c0_i32, %c0_i32_0 : i32, i32
  }
  func.func @transform_9(%arg0: i32) -> (i32, i32) {
    %c0_i32 = arith.constant 0 : i32
    %c0_i32_0 = arith.constant 0 : i32
    %c0_i32_1 = arith.constant 0 : i32
    return %c0_i32, %c0_i32_0 : i32, i32
  }
  func.func @transform_10(%arg0: i32) -> (i32, i32) {
    %c0_i32 = arith.constant 0 : i32
    %c0_i32_0 = arith.constant 0 : i32
    %c0_i32_1 = arith.constant 0 : i32
    return %c0_i32, %c0_i32_0 : i32, i32
  }
  func.func @transform_11(%arg0: i32) -> (i32, i32) {
    %c0_i32 = arith.constant 0 : i32
    %c0_i32_0 = arith.constant 0 : i32
    %c0_i32_1 = arith.constant 0 : i32
    return %c0_i32, %c0_i32_0 : i32, i32
  }
  func.func @transform_12(%arg0: i32) -> (i32, i32) {
    %c0_i32 = arith.constant 0 : i32
    %c0_i32_0 = arith.constant 0 : i32
    %c0_i32_1 = arith.constant 0 : i32
    return %c0_i32, %c0_i32_0 : i32, i32
  }
  func.func @transform_13(%arg0: i32) -> (i32, i32) {
    %c0_i32 = arith.constant 0 : i32
    %c0_i32_0 = arith.constant 0 : i32
    %c0_i32_1 = arith.constant 0 : i32
    return %c0_i32, %c0_i32_0 : i32, i32
  }
  func.func @transform_14(%arg0: i32) -> (i32, i32, i32) {
    %c0_i32 = arith.constant 0 : i32
    %c0_i32_0 = arith.constant 0 : i32
    %c0_i32_1 = arith.constant 0 : i32
    return %arg0, %c0_i32, %c0_i32_0 : i32, i32, i32
  }
}

module attributes {stable_mosaic.version = 11 : i64} {
  func.func @_decoder_layer_kernel(%arg0: i32, %arg1: memref<1x8x32xf32, #tpu.memory_space<vmem>>, %arg2: memref<1x8x32xf32, #tpu.memory_space<vmem>>, %arg3: memref<1x1x8xf32, #tpu.memory_space<vmem>>, %arg4: memref<1x1x8xf32, #tpu.memory_space<vmem>>, %arg5: memref<32x96xbf16, #tpu.memory_space<vmem>>, %arg6: memref<1x96xf32, #tpu.memory_space<vmem>>, %arg7: memref<4x8x32xbf16, #tpu.memory_space<vmem>>, %arg8: memref<1x32xf32, #tpu.memory_space<vmem>>, %arg9: memref<1x32xf32, #tpu.memory_space<vmem>>, %arg10: memref<1x32xf32, #tpu.memory_space<vmem>>, %arg11: memref<32x32xbf16, #tpu.memory_space<vmem>>, %arg12: memref<1x32xf32, #tpu.memory_space<vmem>>, %arg13: memref<32x64xbf16, #tpu.memory_space<vmem>>, %arg14: memref<1x64xf32, #tpu.memory_space<vmem>>, %arg15: memref<4x8x32xbf16, #tpu.memory_space<vmem>>, %arg16: memref<1x32xf32, #tpu.memory_space<vmem>>, %arg17: memref<1x32xf32, #tpu.memory_space<vmem>>, %arg18: memref<1x32xf32, #tpu.memory_space<vmem>>, %arg19: memref<32x128xbf16, #tpu.memory_space<vmem>>, %arg20: memref<1x128xf32, #tpu.memory_space<vmem>>, %arg21: memref<128x32xbf16, #tpu.memory_space<vmem>>, %arg22: memref<1x32xf32, #tpu.memory_space<vmem>>, %arg23: memref<1x32xf32, #tpu.memory_space<vmem>>, %arg24: memref<1x32xf32, #tpu.memory_space<vmem>>, %arg25: memref<1x8x32xf32, #tpu.memory_space<vmem>>) attributes {dimension_semantics = [#tpu.dimension_semantics<parallel>], iteration_bounds = array<i64: 2>, scalar_prefetch = 0 : i64, scratch_operands = 0 : i64, tpu.core_type = #tpu.core_type<tc>, window_params = [{transform_indices = @transform_0, window_bounds = array<i64: 1, 8, 32>}, {transform_indices = @transform_1, window_bounds = array<i64: 1, 8, 32>}, {transform_indices = @transform_2, window_bounds = array<i64: 1, 1, 8>}, {transform_indices = @transform_3, window_bounds = array<i64: 1, 1, 8>}, {pipeline_mode = #tpu.pipeline_mode<synchronous>, transform_indices = @transform_4, window_bounds = array<i64: 32, 96>}, {pipeline_mode = #tpu.pipeline_mode<synchronous>, transform_indices = @transform_5, window_bounds = array<i64: 1, 96>}, {pipeline_mode = #tpu.pipeline_mode<synchronous>, transform_indices = @transform_6, window_bounds = array<i64: 4, 8, 32>}, {pipeline_mode = #tpu.pipeline_mode<synchronous>, transform_indices = @transform_7, window_bounds = array<i64: 1, 32>}, {pipeline_mode = #tpu.pipeline_mode<synchronous>, transform_indices = @transform_8, window_bounds = array<i64: 1, 32>}, {pipeline_mode = #tpu.pipeline_mode<synchronous>, transform_indices = @transform_9, window_bounds = array<i64: 1, 32>}, {pipeline_mode = #tpu.pipeline_mode<synchronous>, transform_indices = @transform_10, window_bounds = array<i64: 32, 32>}, {pipeline_mode = #tpu.pipeline_mode<synchronous>, transform_indices = @transform_11, window_bounds = array<i64: 1, 32>}, {pipeline_mode = #tpu.pipeline_mode<synchronous>, transform_indices = @transform_12, window_bounds = array<i64: 32, 64>}, {pipeline_mode = #tpu.pipeline_mode<synchronous>, transform_indices = @transform_13, window_bounds = array<i64: 1, 64>}, {pipeline_mode = #tpu.pipeline_mode<synchronous>, transform_indices = @transform_14, window_bounds = array<i64: 4, 8, 32>}, {pipeline_mode = #tpu.pipeline_mode<synchronous>, transform_indices = @transform_15, window_bounds = array<i64: 1, 32>}, {pipeline_mode = #tpu.pipeline_mode<synchronous>, transform_indices = @transform_16, window_bounds = array<i64: 1, 32>}, {pipeline_mode = #tpu.pipeline_mode<synchronous>, transform_indices = @transform_17, window_bounds = array<i64: 1, 32>}, {pipeline_mode = #tpu.pipeline_mode<synchronous>, transform_indices = @transform_18, window_bounds = array<i64: 32, 128>}, {pipeline_mode = #tpu.pipeline_mode<synchronous>, transform_indices = @transform_19, window_bounds = array<i64: 1, 128>}, {pipeline_mode = #tpu.pipeline_mode<synchronous>, transform_indices = @transform_20, window_bounds = array<i64: 128, 32>}, {pipeline_mode = #tpu.pipeline_mode<synchronous>, transform_indices = @transform_21, window_bounds = array<i64: 1, 32>}, {pipeline_mode = #tpu.pipeline_mode<synchronous>, transform_indices = @transform_22, window_bounds = array<i64: 1, 32>}, {pipeline_mode = #tpu.pipeline_mode<synchronous>, transform_indices = @transform_23, window_bounds = array<i64: 1, 32>}, {transform_indices = @transform_24, window_bounds = array<i64: 1, 8, 32>}]} {
    %c0 = arith.constant 0 : index
    %c0_0 = arith.constant 0 : index
    %c0_1 = arith.constant 0 : index
    %0 = vector.load %arg1[%c0, %c0_0, %c0_1] : memref<1x8x32xf32, #tpu.memory_space<vmem>>, vector<1x8x32xf32>
    %1 = vector.shape_cast %0 : vector<1x8x32xf32> to vector<8x32xf32>
    %c0_2 = arith.constant 0 : index
    %c0_3 = arith.constant 0 : index
    %c0_4 = arith.constant 0 : index
    %2 = vector.load %arg2[%c0_2, %c0_3, %c0_4] : memref<1x8x32xf32, #tpu.memory_space<vmem>>, vector<1x8x32xf32>
    %3 = vector.shape_cast %2 : vector<1x8x32xf32> to vector<8x32xf32>
    %c0_5 = arith.constant 0 : index
    %c0_6 = arith.constant 0 : index
    %c0_7 = arith.constant 0 : index
    %4 = vector.load %arg3[%c0_5, %c0_6, %c0_7] : memref<1x1x8xf32, #tpu.memory_space<vmem>>, vector<1x1x8xf32>
    %5 = vector.shape_cast %4 : vector<1x1x8xf32> to vector<1x8xf32>
    %c0_8 = arith.constant 0 : index
    %c0_9 = arith.constant 0 : index
    %c0_10 = arith.constant 0 : index
    %6 = vector.load %arg4[%c0_8, %c0_9, %c0_10] : memref<1x1x8xf32, #tpu.memory_space<vmem>>, vector<1x1x8xf32>
    %7 = vector.shape_cast %6 : vector<1x1x8xf32> to vector<1x8xf32>
    %8 = tpu.iota {dimensions = array<i32: 0>} : vector<8x8xi32>
    %9 = tpu.iota {dimensions = array<i32: 1>} : vector<8x8xi32>
    %10 = arith.cmpi sle, %9, %8 : vector<8x8xi32>
    %cst = arith.constant 0.000000e+00 : f32
    %cst_11 = arith.constant -1.000000e+09 : f32
    %11 = vector.broadcast %cst : f32 to vector<8x8xf32>
    %12 = vector.broadcast %cst_11 : f32 to vector<8x8xf32>
    %13 = arith.select %10, %11, %12 : vector<8x8xi1>, vector<8x8xf32>
    %14 = arith.truncf %1 : vector<8x32xf32> to vector<8x32xbf16>
    %c0_12 = arith.constant 0 : index
    %c0_13 = arith.constant 0 : index
    %15 = vector.load %arg5[%c0_12, %c0_13] : memref<32x96xbf16, #tpu.memory_space<vmem>>, vector<32x96xbf16>
    %cst_14 = arith.constant dense<0.000000e+00> : vector<8x96xf32>
    %16 = tpu.matmul %14, %15, %cst_14 {dimension_numbers = #tpu.dot_dimension_numbers<[1], [0], [0], [1], [0, 0, 1, 1], [], []>} : vector<8x32xbf16>, vector<32x96xbf16>, vector<8x96xf32> -> vector<8x96xf32>
    %c0_15 = arith.constant 0 : index
    %c0_16 = arith.constant 0 : index
    %17 = vector.load %arg6[%c0_15, %c0_16] : memref<1x96xf32, #tpu.memory_space<vmem>>, vector<1x96xf32>
    %18 = vector.broadcast %17 : vector<1x96xf32> to vector<8x96xf32>
    %19 = arith.addf %16, %18 : vector<8x96xf32>
    %20 = vector.extract_strided_slice %19 {offsets = [0, 0], sizes = [8, 32], strides = [1, 1]} : vector<8x96xf32> to vector<8x32xf32>
    %21 = vector.extract_strided_slice %19 {offsets = [0, 32], sizes = [8, 32], strides = [1, 1]} : vector<8x96xf32> to vector<8x32xf32>
    %22 = vector.extract_strided_slice %19 {offsets = [0, 64], sizes = [8, 32], strides = [1, 1]} : vector<8x96xf32> to vector<8x32xf32>
    %23 = vector.extract_strided_slice %20 {offsets = [0, 0], sizes = [8, 8], strides = [1, 1]} : vector<8x32xf32> to vector<8x8xf32>
    %cst_17 = arith.constant 0.353553385 : f32
    %24 = vector.broadcast %cst_17 : f32 to vector<8x8xf32>
    %25 = arith.mulf %23, %24 : vector<8x8xf32>
    %26 = arith.truncf %25 : vector<8x8xf32> to vector<8x8xbf16>
    %27 = vector.extract_strided_slice %21 {offsets = [0, 0], sizes = [8, 8], strides = [1, 1]} : vector<8x32xf32> to vector<8x8xf32>
    %28 = arith.truncf %27 : vector<8x8xf32> to vector<8x8xbf16>
    %29 = vector.extract_strided_slice %22 {offsets = [0, 0], sizes = [8, 8], strides = [1, 1]} : vector<8x32xf32> to vector<8x8xf32>
    %30 = arith.truncf %29 : vector<8x8xf32> to vector<8x8xbf16>
    %cst_18 = arith.constant dense<0.000000e+00> : vector<8x8xf32>
    %31 = tpu.matmul %26, %28, %cst_18 {dimension_numbers = #tpu.dot_dimension_numbers<[1], [1], [0], [0], [0, 0, 1, 0], [], []>} : vector<8x8xbf16>, vector<8x8xbf16>, vector<8x8xf32> -> vector<8x8xf32>
    %32 = vector.broadcast %5 : vector<1x8xf32> to vector<8x8xf32>
    %33 = arith.addf %31, %32 : vector<8x8xf32>
    %34 = arith.addf %33, %13 : vector<8x8xf32>
    %cst_19 = arith.constant dense<0xFF800000> : vector<8xf32>
    %35 = vector.multi_reduction <maximumf>, %34, %cst_19 [1] : vector<8x8xf32> to vector<8xf32>
    %36 = vector.shape_cast %35 : vector<8xf32> to vector<8x1xf32>
    %37 = vector.broadcast %36 : vector<8x1xf32> to vector<8x8xf32>
    %38 = arith.subf %34, %37 : vector<8x8xf32>
    %39 = math.exp %38 : vector<8x8xf32>
    %cst_20 = arith.constant dense<0.000000e+00> : vector<8xf32>
    %40 = vector.multi_reduction <add>, %39, %cst_20 [1] : vector<8x8xf32> to vector<8xf32>
    %41 = vector.shape_cast %40 : vector<8xf32> to vector<8x1xf32>
    %42 = tpu.reciprocal %41 {approx = true} : vector<8x1xf32> -> vector<8x1xf32>
    %43 = vector.broadcast %42 : vector<8x1xf32> to vector<8x8xf32>
    %44 = arith.mulf %39, %43 : vector<8x8xf32>
    %45 = arith.truncf %44 : vector<8x8xf32> to vector<8x8xbf16>
    %cst_21 = arith.constant dense<0.000000e+00> : vector<8x8xf32>
    %46 = tpu.matmul %45, %30, %cst_21 {dimension_numbers = #tpu.dot_dimension_numbers<[1], [0], [0], [1], [0, 0, 1, 1], [], []>} : vector<8x8xbf16>, vector<8x8xbf16>, vector<8x8xf32> -> vector<8x8xf32>
    %47 = arith.truncf %46 : vector<8x8xf32> to vector<8x8xbf16>
    %c0_22 = arith.constant 0 : index
    %c0_23 = arith.constant 0 : index
    %c0_24 = arith.constant 0 : index
    %48 = vector.load %arg7[%c0_22, %c0_23, %c0_24] : memref<4x8x32xbf16, #tpu.memory_space<vmem>>, vector<1x8x32xbf16>
    %49 = vector.shape_cast %48 : vector<1x8x32xbf16> to vector<8x32xbf16>
    %cst_25 = arith.constant dense<0.000000e+00> : vector<8x32xf32>
    %50 = tpu.matmul %47, %49, %cst_25 {dimension_numbers = #tpu.dot_dimension_numbers<[1], [0], [0], [1], [0, 0, 1, 1], [], []>} : vector<8x8xbf16>, vector<8x32xbf16>, vector<8x32xf32> -> vector<8x32xf32>
    %51 = vector.extract_strided_slice %20 {offsets = [0, 8], sizes = [8, 8], strides = [1, 1]} : vector<8x32xf32> to vector<8x8xf32>
    %cst_26 = arith.constant 0.353553385 : f32
    %52 = vector.broadcast %cst_26 : f32 to vector<8x8xf32>
    %53 = arith.mulf %51, %52 : vector<8x8xf32>
    %54 = arith.truncf %53 : vector<8x8xf32> to vector<8x8xbf16>
    %55 = vector.extract_strided_slice %21 {offsets = [0, 8], sizes = [8, 8], strides = [1, 1]} : vector<8x32xf32> to vector<8x8xf32>
    %56 = arith.truncf %55 : vector<8x8xf32> to vector<8x8xbf16>
    %57 = vector.extract_strided_slice %22 {offsets = [0, 8], sizes = [8, 8], strides = [1, 1]} : vector<8x32xf32> to vector<8x8xf32>
    %58 = arith.truncf %57 : vector<8x8xf32> to vector<8x8xbf16>
    %cst_27 = arith.constant dense<0.000000e+00> : vector<8x8xf32>
    %59 = tpu.matmul %54, %56, %cst_27 {dimension_numbers = #tpu.dot_dimension_numbers<[1], [1], [0], [0], [0, 0, 1, 0], [], []>} : vector<8x8xbf16>, vector<8x8xbf16>, vector<8x8xf32> -> vector<8x8xf32>
    %60 = vector.broadcast %5 : vector<1x8xf32> to vector<8x8xf32>
    %61 = arith.addf %59, %60 : vector<8x8xf32>
    %62 = arith.addf %61, %13 : vector<8x8xf32>
    %cst_28 = arith.constant dense<0xFF800000> : vector<8xf32>
    %63 = vector.multi_reduction <maximumf>, %62, %cst_28 [1] : vector<8x8xf32> to vector<8xf32>
    %64 = vector.shape_cast %63 : vector<8xf32> to vector<8x1xf32>
    %65 = vector.broadcast %64 : vector<8x1xf32> to vector<8x8xf32>
    %66 = arith.subf %62, %65 : vector<8x8xf32>
    %67 = math.exp %66 : vector<8x8xf32>
    %cst_29 = arith.constant dense<0.000000e+00> : vector<8xf32>
    %68 = vector.multi_reduction <add>, %67, %cst_29 [1] : vector<8x8xf32> to vector<8xf32>
    %69 = vector.shape_cast %68 : vector<8xf32> to vector<8x1xf32>
    %70 = tpu.reciprocal %69 {approx = true} : vector<8x1xf32> -> vector<8x1xf32>
    %71 = vector.broadcast %70 : vector<8x1xf32> to vector<8x8xf32>
    %72 = arith.mulf %67, %71 : vector<8x8xf32>
    %73 = arith.truncf %72 : vector<8x8xf32> to vector<8x8xbf16>
    %cst_30 = arith.constant dense<0.000000e+00> : vector<8x8xf32>
    %74 = tpu.matmul %73, %58, %cst_30 {dimension_numbers = #tpu.dot_dimension_numbers<[1], [0], [0], [1], [0, 0, 1, 1], [], []>} : vector<8x8xbf16>, vector<8x8xbf16>, vector<8x8xf32> -> vector<8x8xf32>
    %75 = arith.truncf %74 : vector<8x8xf32> to vector<8x8xbf16>
    %c1 = arith.constant 1 : index
    %c0_31 = arith.constant 0 : index
    %c0_32 = arith.constant 0 : index
    %76 = vector.load %arg7[%c1, %c0_31, %c0_32] : memref<4x8x32xbf16, #tpu.memory_space<vmem>>, vector<1x8x32xbf16>
    %77 = vector.shape_cast %76 : vector<1x8x32xbf16> to vector<8x32xbf16>
    %cst_33 = arith.constant dense<0.000000e+00> : vector<8x32xf32>
    %78 = tpu.matmul %75, %77, %cst_33 {dimension_numbers = #tpu.dot_dimension_numbers<[1], [0], [0], [1], [0, 0, 1, 1], [], []>} : vector<8x8xbf16>, vector<8x32xbf16>, vector<8x32xf32> -> vector<8x32xf32>
    %79 = arith.addf %50, %78 : vector<8x32xf32>
    %80 = vector.extract_strided_slice %20 {offsets = [0, 16], sizes = [8, 8], strides = [1, 1]} : vector<8x32xf32> to vector<8x8xf32>
    %cst_34 = arith.constant 0.353553385 : f32
    %81 = vector.broadcast %cst_34 : f32 to vector<8x8xf32>
    %82 = arith.mulf %80, %81 : vector<8x8xf32>
    %83 = arith.truncf %82 : vector<8x8xf32> to vector<8x8xbf16>
    %84 = vector.extract_strided_slice %21 {offsets = [0, 16], sizes = [8, 8], strides = [1, 1]} : vector<8x32xf32> to vector<8x8xf32>
    %85 = arith.truncf %84 : vector<8x8xf32> to vector<8x8xbf16>
    %86 = vector.extract_strided_slice %22 {offsets = [0, 16], sizes = [8, 8], strides = [1, 1]} : vector<8x32xf32> to vector<8x8xf32>
    %87 = arith.truncf %86 : vector<8x8xf32> to vector<8x8xbf16>
    %cst_35 = arith.constant dense<0.000000e+00> : vector<8x8xf32>
    %88 = tpu.matmul %83, %85, %cst_35 {dimension_numbers = #tpu.dot_dimension_numbers<[1], [1], [0], [0], [0, 0, 1, 0], [], []>} : vector<8x8xbf16>, vector<8x8xbf16>, vector<8x8xf32> -> vector<8x8xf32>
    %89 = vector.broadcast %5 : vector<1x8xf32> to vector<8x8xf32>
    %90 = arith.addf %88, %89 : vector<8x8xf32>
    %91 = arith.addf %90, %13 : vector<8x8xf32>
    %cst_36 = arith.constant dense<0xFF800000> : vector<8xf32>
    %92 = vector.multi_reduction <maximumf>, %91, %cst_36 [1] : vector<8x8xf32> to vector<8xf32>
    %93 = vector.shape_cast %92 : vector<8xf32> to vector<8x1xf32>
    %94 = vector.broadcast %93 : vector<8x1xf32> to vector<8x8xf32>
    %95 = arith.subf %91, %94 : vector<8x8xf32>
    %96 = math.exp %95 : vector<8x8xf32>
    %cst_37 = arith.constant dense<0.000000e+00> : vector<8xf32>
    %97 = vector.multi_reduction <add>, %96, %cst_37 [1] : vector<8x8xf32> to vector<8xf32>
    %98 = vector.shape_cast %97 : vector<8xf32> to vector<8x1xf32>
    %99 = tpu.reciprocal %98 {approx = true} : vector<8x1xf32> -> vector<8x1xf32>
    %100 = vector.broadcast %99 : vector<8x1xf32> to vector<8x8xf32>
    %101 = arith.mulf %96, %100 : vector<8x8xf32>
    %102 = arith.truncf %101 : vector<8x8xf32> to vector<8x8xbf16>
    %cst_38 = arith.constant dense<0.000000e+00> : vector<8x8xf32>
    %103 = tpu.matmul %102, %87, %cst_38 {dimension_numbers = #tpu.dot_dimension_numbers<[1], [0], [0], [1], [0, 0, 1, 1], [], []>} : vector<8x8xbf16>, vector<8x8xbf16>, vector<8x8xf32> -> vector<8x8xf32>
    %104 = arith.truncf %103 : vector<8x8xf32> to vector<8x8xbf16>
    %c2 = arith.constant 2 : index
    %c0_39 = arith.constant 0 : index
    %c0_40 = arith.constant 0 : index
    %105 = vector.load %arg7[%c2, %c0_39, %c0_40] : memref<4x8x32xbf16, #tpu.memory_space<vmem>>, vector<1x8x32xbf16>
    %106 = vector.shape_cast %105 : vector<1x8x32xbf16> to vector<8x32xbf16>
    %cst_41 = arith.constant dense<0.000000e+00> : vector<8x32xf32>
    %107 = tpu.matmul %104, %106, %cst_41 {dimension_numbers = #tpu.dot_dimension_numbers<[1], [0], [0], [1], [0, 0, 1, 1], [], []>} : vector<8x8xbf16>, vector<8x32xbf16>, vector<8x32xf32> -> vector<8x32xf32>
    %108 = arith.addf %79, %107 : vector<8x32xf32>
    %109 = vector.extract_strided_slice %20 {offsets = [0, 24], sizes = [8, 8], strides = [1, 1]} : vector<8x32xf32> to vector<8x8xf32>
    %cst_42 = arith.constant 0.353553385 : f32
    %110 = vector.broadcast %cst_42 : f32 to vector<8x8xf32>
    %111 = arith.mulf %109, %110 : vector<8x8xf32>
    %112 = arith.truncf %111 : vector<8x8xf32> to vector<8x8xbf16>
    %113 = vector.extract_strided_slice %21 {offsets = [0, 24], sizes = [8, 8], strides = [1, 1]} : vector<8x32xf32> to vector<8x8xf32>
    %114 = arith.truncf %113 : vector<8x8xf32> to vector<8x8xbf16>
    %115 = vector.extract_strided_slice %22 {offsets = [0, 24], sizes = [8, 8], strides = [1, 1]} : vector<8x32xf32> to vector<8x8xf32>
    %116 = arith.truncf %115 : vector<8x8xf32> to vector<8x8xbf16>
    %cst_43 = arith.constant dense<0.000000e+00> : vector<8x8xf32>
    %117 = tpu.matmul %112, %114, %cst_43 {dimension_numbers = #tpu.dot_dimension_numbers<[1], [1], [0], [0], [0, 0, 1, 0], [], []>} : vector<8x8xbf16>, vector<8x8xbf16>, vector<8x8xf32> -> vector<8x8xf32>
    %118 = vector.broadcast %5 : vector<1x8xf32> to vector<8x8xf32>
    %119 = arith.addf %117, %118 : vector<8x8xf32>
    %120 = arith.addf %119, %13 : vector<8x8xf32>
    %cst_44 = arith.constant dense<0xFF800000> : vector<8xf32>
    %121 = vector.multi_reduction <maximumf>, %120, %cst_44 [1] : vector<8x8xf32> to vector<8xf32>
    %122 = vector.shape_cast %121 : vector<8xf32> to vector<8x1xf32>
    %123 = vector.broadcast %122 : vector<8x1xf32> to vector<8x8xf32>
    %124 = arith.subf %120, %123 : vector<8x8xf32>
    %125 = math.exp %124 : vector<8x8xf32>
    %cst_45 = arith.constant dense<0.000000e+00> : vector<8xf32>
    %126 = vector.multi_reduction <add>, %125, %cst_45 [1] : vector<8x8xf32> to vector<8xf32>
    %127 = vector.shape_cast %126 : vector<8xf32> to vector<8x1xf32>
    %128 = tpu.reciprocal %127 {approx = true} : vector<8x1xf32> -> vector<8x1xf32>
    %129 = vector.broadcast %128 : vector<8x1xf32> to vector<8x8xf32>
    %130 = arith.mulf %125, %129 : vector<8x8xf32>
    %131 = arith.truncf %130 : vector<8x8xf32> to vector<8x8xbf16>
    %cst_46 = arith.constant dense<0.000000e+00> : vector<8x8xf32>
    %132 = tpu.matmul %131, %116, %cst_46 {dimension_numbers = #tpu.dot_dimension_numbers<[1], [0], [0], [1], [0, 0, 1, 1], [], []>} : vector<8x8xbf16>, vector<8x8xbf16>, vector<8x8xf32> -> vector<8x8xf32>
    %133 = arith.truncf %132 : vector<8x8xf32> to vector<8x8xbf16>
    %c3 = arith.constant 3 : index
    %c0_47 = arith.constant 0 : index
    %c0_48 = arith.constant 0 : index
    %134 = vector.load %arg7[%c3, %c0_47, %c0_48] : memref<4x8x32xbf16, #tpu.memory_space<vmem>>, vector<1x8x32xbf16>
    %135 = vector.shape_cast %134 : vector<1x8x32xbf16> to vector<8x32xbf16>
    %cst_49 = arith.constant dense<0.000000e+00> : vector<8x32xf32>
    %136 = tpu.matmul %133, %135, %cst_49 {dimension_numbers = #tpu.dot_dimension_numbers<[1], [0], [0], [1], [0, 0, 1, 1], [], []>} : vector<8x8xbf16>, vector<8x32xbf16>, vector<8x32xf32> -> vector<8x32xf32>
    %137 = arith.addf %108, %136 : vector<8x32xf32>
    %c0_50 = arith.constant 0 : index
    %c0_51 = arith.constant 0 : index
    %138 = vector.load %arg8[%c0_50, %c0_51] : memref<1x32xf32, #tpu.memory_space<vmem>>, vector<1x32xf32>
    %139 = vector.broadcast %138 : vector<1x32xf32> to vector<8x32xf32>
    %140 = arith.addf %137, %139 : vector<8x32xf32>
    %141 = arith.addf %1, %140 : vector<8x32xf32>
    %c0_52 = arith.constant 0 : index
    %c0_53 = arith.constant 0 : index
    %142 = vector.load %arg9[%c0_52, %c0_53] : memref<1x32xf32, #tpu.memory_space<vmem>>, vector<1x32xf32>
    %c0_54 = arith.constant 0 : index
    %c0_55 = arith.constant 0 : index
    %143 = vector.load %arg10[%c0_54, %c0_55] : memref<1x32xf32, #tpu.memory_space<vmem>>, vector<1x32xf32>
    %cst_56 = arith.constant dense<0.000000e+00> : vector<8xf32>
    %144 = vector.multi_reduction <add>, %141, %cst_56 [1] : vector<8x32xf32> to vector<8xf32>
    %145 = vector.shape_cast %144 : vector<8xf32> to vector<8x1xf32>
    %cst_57 = arith.constant 3.200000e+01 : f32
    %146 = vector.broadcast %cst_57 : f32 to vector<8x1xf32>
    %147 = arith.divf %145, %146 : vector<8x1xf32>
    %148 = vector.broadcast %147 : vector<8x1xf32> to vector<8x32xf32>
    %149 = arith.subf %141, %148 : vector<8x32xf32>
    %150 = arith.mulf %149, %149 : vector<8x32xf32>
    %cst_58 = arith.constant dense<0.000000e+00> : vector<8xf32>
    %151 = vector.multi_reduction <add>, %150, %cst_58 [1] : vector<8x32xf32> to vector<8xf32>
    %152 = vector.shape_cast %151 : vector<8xf32> to vector<8x1xf32>
    %cst_59 = arith.constant 3.200000e+01 : f32
    %153 = vector.broadcast %cst_59 : f32 to vector<8x1xf32>
    %154 = arith.divf %152, %153 : vector<8x1xf32>
    %155 = vector.broadcast %147 : vector<8x1xf32> to vector<8x32xf32>
    %156 = arith.subf %141, %155 : vector<8x32xf32>
    %cst_60 = arith.constant 9.99999974E-6 : f32
    %157 = vector.broadcast %cst_60 : f32 to vector<8x1xf32>
    %158 = arith.addf %154, %157 : vector<8x1xf32>
    %159 = math.rsqrt %158 : vector<8x1xf32>
    %160 = vector.broadcast %159 : vector<8x1xf32> to vector<8x32xf32>
    %161 = arith.mulf %156, %160 : vector<8x32xf32>
    %162 = vector.broadcast %142 : vector<1x32xf32> to vector<8x32xf32>
    %163 = arith.mulf %161, %162 : vector<8x32xf32>
    %164 = vector.broadcast %143 : vector<1x32xf32> to vector<8x32xf32>
    %165 = arith.addf %163, %164 : vector<8x32xf32>
    %166 = arith.truncf %165 : vector<8x32xf32> to vector<8x32xbf16>
    %c0_61 = arith.constant 0 : index
    %c0_62 = arith.constant 0 : index
    %167 = vector.load %arg11[%c0_61, %c0_62] : memref<32x32xbf16, #tpu.memory_space<vmem>>, vector<32x32xbf16>
    %cst_63 = arith.constant dense<0.000000e+00> : vector<8x32xf32>
    %168 = tpu.matmul %166, %167, %cst_63 {dimension_numbers = #tpu.dot_dimension_numbers<[1], [0], [0], [1], [0, 0, 1, 1], [], []>} : vector<8x32xbf16>, vector<32x32xbf16>, vector<8x32xf32> -> vector<8x32xf32>
    %c0_64 = arith.constant 0 : index
    %c0_65 = arith.constant 0 : index
    %169 = vector.load %arg12[%c0_64, %c0_65] : memref<1x32xf32, #tpu.memory_space<vmem>>, vector<1x32xf32>
    %170 = vector.broadcast %169 : vector<1x32xf32> to vector<8x32xf32>
    %171 = arith.addf %168, %170 : vector<8x32xf32>
    %172 = arith.truncf %3 : vector<8x32xf32> to vector<8x32xbf16>
    %c0_66 = arith.constant 0 : index
    %c0_67 = arith.constant 0 : index
    %173 = vector.load %arg13[%c0_66, %c0_67] : memref<32x64xbf16, #tpu.memory_space<vmem>>, vector<32x64xbf16>
    %cst_68 = arith.constant dense<0.000000e+00> : vector<8x64xf32>
    %174 = tpu.matmul %172, %173, %cst_68 {dimension_numbers = #tpu.dot_dimension_numbers<[1], [0], [0], [1], [0, 0, 1, 1], [], []>} : vector<8x32xbf16>, vector<32x64xbf16>, vector<8x64xf32> -> vector<8x64xf32>
    %c0_69 = arith.constant 0 : index
    %c0_70 = arith.constant 0 : index
    %175 = vector.load %arg14[%c0_69, %c0_70] : memref<1x64xf32, #tpu.memory_space<vmem>>, vector<1x64xf32>
    %176 = vector.broadcast %175 : vector<1x64xf32> to vector<8x64xf32>
    %177 = arith.addf %174, %176 : vector<8x64xf32>
    %178 = vector.extract_strided_slice %177 {offsets = [0, 0], sizes = [8, 32], strides = [1, 1]} : vector<8x64xf32> to vector<8x32xf32>
    %179 = vector.extract_strided_slice %177 {offsets = [0, 32], sizes = [8, 32], strides = [1, 1]} : vector<8x64xf32> to vector<8x32xf32>
    %180 = vector.extract_strided_slice %171 {offsets = [0, 0], sizes = [8, 8], strides = [1, 1]} : vector<8x32xf32> to vector<8x8xf32>
    %cst_71 = arith.constant 0.353553385 : f32
    %181 = vector.broadcast %cst_71 : f32 to vector<8x8xf32>
    %182 = arith.mulf %180, %181 : vector<8x8xf32>
    %183 = arith.truncf %182 : vector<8x8xf32> to vector<8x8xbf16>
    %184 = vector.extract_strided_slice %178 {offsets = [0, 0], sizes = [8, 8], strides = [1, 1]} : vector<8x32xf32> to vector<8x8xf32>
    %185 = arith.truncf %184 : vector<8x8xf32> to vector<8x8xbf16>
    %186 = vector.extract_strided_slice %179 {offsets = [0, 0], sizes = [8, 8], strides = [1, 1]} : vector<8x32xf32> to vector<8x8xf32>
    %187 = arith.truncf %186 : vector<8x8xf32> to vector<8x8xbf16>
    %cst_72 = arith.constant dense<0.000000e+00> : vector<8x8xf32>
    %188 = tpu.matmul %183, %185, %cst_72 {dimension_numbers = #tpu.dot_dimension_numbers<[1], [1], [0], [0], [0, 0, 1, 0], [], []>} : vector<8x8xbf16>, vector<8x8xbf16>, vector<8x8xf32> -> vector<8x8xf32>
    %189 = vector.broadcast %7 : vector<1x8xf32> to vector<8x8xf32>
    %190 = arith.addf %188, %189 : vector<8x8xf32>
    %cst_73 = arith.constant dense<0xFF800000> : vector<8xf32>
    %191 = vector.multi_reduction <maximumf>, %190, %cst_73 [1] : vector<8x8xf32> to vector<8xf32>
    %192 = vector.shape_cast %191 : vector<8xf32> to vector<8x1xf32>
    %193 = vector.broadcast %192 : vector<8x1xf32> to vector<8x8xf32>
    %194 = arith.subf %190, %193 : vector<8x8xf32>
    %195 = math.exp %194 : vector<8x8xf32>
    %cst_74 = arith.constant dense<0.000000e+00> : vector<8xf32>
    %196 = vector.multi_reduction <add>, %195, %cst_74 [1] : vector<8x8xf32> to vector<8xf32>
    %197 = vector.shape_cast %196 : vector<8xf32> to vector<8x1xf32>
    %198 = tpu.reciprocal %197 {approx = true} : vector<8x1xf32> -> vector<8x1xf32>
    %199 = vector.broadcast %198 : vector<8x1xf32> to vector<8x8xf32>
    %200 = arith.mulf %195, %199 : vector<8x8xf32>
    %201 = arith.truncf %200 : vector<8x8xf32> to vector<8x8xbf16>
    %cst_75 = arith.constant dense<0.000000e+00> : vector<8x8xf32>
    %202 = tpu.matmul %201, %187, %cst_75 {dimension_numbers = #tpu.dot_dimension_numbers<[1], [0], [0], [1], [0, 0, 1, 1], [], []>} : vector<8x8xbf16>, vector<8x8xbf16>, vector<8x8xf32> -> vector<8x8xf32>
    %203 = arith.truncf %202 : vector<8x8xf32> to vector<8x8xbf16>
    %c0_76 = arith.constant 0 : index
    %c0_77 = arith.constant 0 : index
    %c0_78 = arith.constant 0 : index
    %204 = vector.load %arg15[%c0_76, %c0_77, %c0_78] : memref<4x8x32xbf16, #tpu.memory_space<vmem>>, vector<1x8x32xbf16>
    %205 = vector.shape_cast %204 : vector<1x8x32xbf16> to vector<8x32xbf16>
    %cst_79 = arith.constant dense<0.000000e+00> : vector<8x32xf32>
    %206 = tpu.matmul %203, %205, %cst_79 {dimension_numbers = #tpu.dot_dimension_numbers<[1], [0], [0], [1], [0, 0, 1, 1], [], []>} : vector<8x8xbf16>, vector<8x32xbf16>, vector<8x32xf32> -> vector<8x32xf32>
    %207 = vector.extract_strided_slice %171 {offsets = [0, 8], sizes = [8, 8], strides = [1, 1]} : vector<8x32xf32> to vector<8x8xf32>
    %cst_80 = arith.constant 0.353553385 : f32
    %208 = vector.broadcast %cst_80 : f32 to vector<8x8xf32>
    %209 = arith.mulf %207, %208 : vector<8x8xf32>
    %210 = arith.truncf %209 : vector<8x8xf32> to vector<8x8xbf16>
    %211 = vector.extract_strided_slice %178 {offsets = [0, 8], sizes = [8, 8], strides = [1, 1]} : vector<8x32xf32> to vector<8x8xf32>
    %212 = arith.truncf %211 : vector<8x8xf32> to vector<8x8xbf16>
    %213 = vector.extract_strided_slice %179 {offsets = [0, 8], sizes = [8, 8], strides = [1, 1]} : vector<8x32xf32> to vector<8x8xf32>
    %214 = arith.truncf %213 : vector<8x8xf32> to vector<8x8xbf16>
    %cst_81 = arith.constant dense<0.000000e+00> : vector<8x8xf32>
    %215 = tpu.matmul %210, %212, %cst_81 {dimension_numbers = #tpu.dot_dimension_numbers<[1], [1], [0], [0], [0, 0, 1, 0], [], []>} : vector<8x8xbf16>, vector<8x8xbf16>, vector<8x8xf32> -> vector<8x8xf32>
    %216 = vector.broadcast %7 : vector<1x8xf32> to vector<8x8xf32>
    %217 = arith.addf %215, %216 : vector<8x8xf32>
    %cst_82 = arith.constant dense<0xFF800000> : vector<8xf32>
    %218 = vector.multi_reduction <maximumf>, %217, %cst_82 [1] : vector<8x8xf32> to vector<8xf32>
    %219 = vector.shape_cast %218 : vector<8xf32> to vector<8x1xf32>
    %220 = vector.broadcast %219 : vector<8x1xf32> to vector<8x8xf32>
    %221 = arith.subf %217, %220 : vector<8x8xf32>
    %222 = math.exp %221 : vector<8x8xf32>
    %cst_83 = arith.constant dense<0.000000e+00> : vector<8xf32>
    %223 = vector.multi_reduction <add>, %222, %cst_83 [1] : vector<8x8xf32> to vector<8xf32>
    %224 = vector.shape_cast %223 : vector<8xf32> to vector<8x1xf32>
    %225 = tpu.reciprocal %224 {approx = true} : vector<8x1xf32> -> vector<8x1xf32>
    %226 = vector.broadcast %225 : vector<8x1xf32> to vector<8x8xf32>
    %227 = arith.mulf %222, %226 : vector<8x8xf32>
    %228 = arith.truncf %227 : vector<8x8xf32> to vector<8x8xbf16>
    %cst_84 = arith.constant dense<0.000000e+00> : vector<8x8xf32>
    %229 = tpu.matmul %228, %214, %cst_84 {dimension_numbers = #tpu.dot_dimension_numbers<[1], [0], [0], [1], [0, 0, 1, 1], [], []>} : vector<8x8xbf16>, vector<8x8xbf16>, vector<8x8xf32> -> vector<8x8xf32>
    %230 = arith.truncf %229 : vector<8x8xf32> to vector<8x8xbf16>
    %c1_85 = arith.constant 1 : index
    %c0_86 = arith.constant 0 : index
    %c0_87 = arith.constant 0 : index
    %231 = vector.load %arg15[%c1_85, %c0_86, %c0_87] : memref<4x8x32xbf16, #tpu.memory_space<vmem>>, vector<1x8x32xbf16>
    %232 = vector.shape_cast %231 : vector<1x8x32xbf16> to vector<8x32xbf16>
    %cst_88 = arith.constant dense<0.000000e+00> : vector<8x32xf32>
    %233 = tpu.matmul %230, %232, %cst_88 {dimension_numbers = #tpu.dot_dimension_numbers<[1], [0], [0], [1], [0, 0, 1, 1], [], []>} : vector<8x8xbf16>, vector<8x32xbf16>, vector<8x32xf32> -> vector<8x32xf32>
    %234 = arith.addf %206, %233 : vector<8x32xf32>
    %235 = vector.extract_strided_slice %171 {offsets = [0, 16], sizes = [8, 8], strides = [1, 1]} : vector<8x32xf32> to vector<8x8xf32>
    %cst_89 = arith.constant 0.353553385 : f32
    %236 = vector.broadcast %cst_89 : f32 to vector<8x8xf32>
    %237 = arith.mulf %235, %236 : vector<8x8xf32>
    %238 = arith.truncf %237 : vector<8x8xf32> to vector<8x8xbf16>
    %239 = vector.extract_strided_slice %178 {offsets = [0, 16], sizes = [8, 8], strides = [1, 1]} : vector<8x32xf32> to vector<8x8xf32>
    %240 = arith.truncf %239 : vector<8x8xf32> to vector<8x8xbf16>
    %241 = vector.extract_strided_slice %179 {offsets = [0, 16], sizes = [8, 8], strides = [1, 1]} : vector<8x32xf32> to vector<8x8xf32>
    %242 = arith.truncf %241 : vector<8x8xf32> to vector<8x8xbf16>
    %cst_90 = arith.constant dense<0.000000e+00> : vector<8x8xf32>
    %243 = tpu.matmul %238, %240, %cst_90 {dimension_numbers = #tpu.dot_dimension_numbers<[1], [1], [0], [0], [0, 0, 1, 0], [], []>} : vector<8x8xbf16>, vector<8x8xbf16>, vector<8x8xf32> -> vector<8x8xf32>
    %244 = vector.broadcast %7 : vector<1x8xf32> to vector<8x8xf32>
    %245 = arith.addf %243, %244 : vector<8x8xf32>
    %cst_91 = arith.constant dense<0xFF800000> : vector<8xf32>
    %246 = vector.multi_reduction <maximumf>, %245, %cst_91 [1] : vector<8x8xf32> to vector<8xf32>
    %247 = vector.shape_cast %246 : vector<8xf32> to vector<8x1xf32>
    %248 = vector.broadcast %247 : vector<8x1xf32> to vector<8x8xf32>
    %249 = arith.subf %245, %248 : vector<8x8xf32>
    %250 = math.exp %249 : vector<8x8xf32>
    %cst_92 = arith.constant dense<0.000000e+00> : vector<8xf32>
    %251 = vector.multi_reduction <add>, %250, %cst_92 [1] : vector<8x8xf32> to vector<8xf32>
    %252 = vector.shape_cast %251 : vector<8xf32> to vector<8x1xf32>
    %253 = tpu.reciprocal %252 {approx = true} : vector<8x1xf32> -> vector<8x1xf32>
    %254 = vector.broadcast %253 : vector<8x1xf32> to vector<8x8xf32>
    %255 = arith.mulf %250, %254 : vector<8x8xf32>
    %256 = arith.truncf %255 : vector<8x8xf32> to vector<8x8xbf16>
    %cst_93 = arith.constant dense<0.000000e+00> : vector<8x8xf32>
    %257 = tpu.matmul %256, %242, %cst_93 {dimension_numbers = #tpu.dot_dimension_numbers<[1], [0], [0], [1], [0, 0, 1, 1], [], []>} : vector<8x8xbf16>, vector<8x8xbf16>, vector<8x8xf32> -> vector<8x8xf32>
    %258 = arith.truncf %257 : vector<8x8xf32> to vector<8x8xbf16>
    %c2_94 = arith.constant 2 : index
    %c0_95 = arith.constant 0 : index
    %c0_96 = arith.constant 0 : index
    %259 = vector.load %arg15[%c2_94, %c0_95, %c0_96] : memref<4x8x32xbf16, #tpu.memory_space<vmem>>, vector<1x8x32xbf16>
    %260 = vector.shape_cast %259 : vector<1x8x32xbf16> to vector<8x32xbf16>
    %cst_97 = arith.constant dense<0.000000e+00> : vector<8x32xf32>
    %261 = tpu.matmul %258, %260, %cst_97 {dimension_numbers = #tpu.dot_dimension_numbers<[1], [0], [0], [1], [0, 0, 1, 1], [], []>} : vector<8x8xbf16>, vector<8x32xbf16>, vector<8x32xf32> -> vector<8x32xf32>
    %262 = arith.addf %234, %261 : vector<8x32xf32>
    %263 = vector.extract_strided_slice %171 {offsets = [0, 24], sizes = [8, 8], strides = [1, 1]} : vector<8x32xf32> to vector<8x8xf32>
    %cst_98 = arith.constant 0.353553385 : f32
    %264 = vector.broadcast %cst_98 : f32 to vector<8x8xf32>
    %265 = arith.mulf %263, %264 : vector<8x8xf32>
    %266 = arith.truncf %265 : vector<8x8xf32> to vector<8x8xbf16>
    %267 = vector.extract_strided_slice %178 {offsets = [0, 24], sizes = [8, 8], strides = [1, 1]} : vector<8x32xf32> to vector<8x8xf32>
    %268 = arith.truncf %267 : vector<8x8xf32> to vector<8x8xbf16>
    %269 = vector.extract_strided_slice %179 {offsets = [0, 24], sizes = [8, 8], strides = [1, 1]} : vector<8x32xf32> to vector<8x8xf32>
    %270 = arith.truncf %269 : vector<8x8xf32> to vector<8x8xbf16>
    %cst_99 = arith.constant dense<0.000000e+00> : vector<8x8xf32>
    %271 = tpu.matmul %266, %268, %cst_99 {dimension_numbers = #tpu.dot_dimension_numbers<[1], [1], [0], [0], [0, 0, 1, 0], [], []>} : vector<8x8xbf16>, vector<8x8xbf16>, vector<8x8xf32> -> vector<8x8xf32>
    %272 = vector.broadcast %7 : vector<1x8xf32> to vector<8x8xf32>
    %273 = arith.addf %271, %272 : vector<8x8xf32>
    %cst_100 = arith.constant dense<0xFF800000> : vector<8xf32>
    %274 = vector.multi_reduction <maximumf>, %273, %cst_100 [1] : vector<8x8xf32> to vector<8xf32>
    %275 = vector.shape_cast %274 : vector<8xf32> to vector<8x1xf32>
    %276 = vector.broadcast %275 : vector<8x1xf32> to vector<8x8xf32>
    %277 = arith.subf %273, %276 : vector<8x8xf32>
    %278 = math.exp %277 : vector<8x8xf32>
    %cst_101 = arith.constant dense<0.000000e+00> : vector<8xf32>
    %279 = vector.multi_reduction <add>, %278, %cst_101 [1] : vector<8x8xf32> to vector<8xf32>
    %280 = vector.shape_cast %279 : vector<8xf32> to vector<8x1xf32>
    %281 = tpu.reciprocal %280 {approx = true} : vector<8x1xf32> -> vector<8x1xf32>
    %282 = vector.broadcast %281 : vector<8x1xf32> to vector<8x8xf32>
    %283 = arith.mulf %278, %282 : vector<8x8xf32>
    %284 = arith.truncf %283 : vector<8x8xf32> to vector<8x8xbf16>
    %cst_102 = arith.constant dense<0.000000e+00> : vector<8x8xf32>
    %285 = tpu.matmul %284, %270, %cst_102 {dimension_numbers = #tpu.dot_dimension_numbers<[1], [0], [0], [1], [0, 0, 1, 1], [], []>} : vector<8x8xbf16>, vector<8x8xbf16>, vector<8x8xf32> -> vector<8x8xf32>
    %286 = arith.truncf %285 : vector<8x8xf32> to vector<8x8xbf16>
    %c3_103 = arith.constant 3 : index
    %c0_104 = arith.constant 0 : index
    %c0_105 = arith.constant 0 : index
    %287 = vector.load %arg15[%c3_103, %c0_104, %c0_105] : memref<4x8x32xbf16, #tpu.memory_space<vmem>>, vector<1x8x32xbf16>
    %288 = vector.shape_cast %287 : vector<1x8x32xbf16> to vector<8x32xbf16>
    %cst_106 = arith.constant dense<0.000000e+00> : vector<8x32xf32>
    %289 = tpu.matmul %286, %288, %cst_106 {dimension_numbers = #tpu.dot_dimension_numbers<[1], [0], [0], [1], [0, 0, 1, 1], [], []>} : vector<8x8xbf16>, vector<8x32xbf16>, vector<8x32xf32> -> vector<8x32xf32>
    %290 = arith.addf %262, %289 : vector<8x32xf32>
    %c0_107 = arith.constant 0 : index
    %c0_108 = arith.constant 0 : index
    %291 = vector.load %arg16[%c0_107, %c0_108] : memref<1x32xf32, #tpu.memory_space<vmem>>, vector<1x32xf32>
    %292 = vector.broadcast %291 : vector<1x32xf32> to vector<8x32xf32>
    %293 = arith.addf %290, %292 : vector<8x32xf32>
    %294 = arith.addf %165, %293 : vector<8x32xf32>
    %c0_109 = arith.constant 0 : index
    %c0_110 = arith.constant 0 : index
    %295 = vector.load %arg17[%c0_109, %c0_110] : memref<1x32xf32, #tpu.memory_space<vmem>>, vector<1x32xf32>
    %c0_111 = arith.constant 0 : index
    %c0_112 = arith.constant 0 : index
    %296 = vector.load %arg18[%c0_111, %c0_112] : memref<1x32xf32, #tpu.memory_space<vmem>>, vector<1x32xf32>
    %cst_113 = arith.constant dense<0.000000e+00> : vector<8xf32>
    %297 = vector.multi_reduction <add>, %294, %cst_113 [1] : vector<8x32xf32> to vector<8xf32>
    %298 = vector.shape_cast %297 : vector<8xf32> to vector<8x1xf32>
    %cst_114 = arith.constant 3.200000e+01 : f32
    %299 = vector.broadcast %cst_114 : f32 to vector<8x1xf32>
    %300 = arith.divf %298, %299 : vector<8x1xf32>
    %301 = vector.broadcast %300 : vector<8x1xf32> to vector<8x32xf32>
    %302 = arith.subf %294, %301 : vector<8x32xf32>
    %303 = arith.mulf %302, %302 : vector<8x32xf32>
    %cst_115 = arith.constant dense<0.000000e+00> : vector<8xf32>
    %304 = vector.multi_reduction <add>, %303, %cst_115 [1] : vector<8x32xf32> to vector<8xf32>
    %305 = vector.shape_cast %304 : vector<8xf32> to vector<8x1xf32>
    %cst_116 = arith.constant 3.200000e+01 : f32
    %306 = vector.broadcast %cst_116 : f32 to vector<8x1xf32>
    %307 = arith.divf %305, %306 : vector<8x1xf32>
    %308 = vector.broadcast %300 : vector<8x1xf32> to vector<8x32xf32>
    %309 = arith.subf %294, %308 : vector<8x32xf32>
    %cst_117 = arith.constant 9.99999974E-6 : f32
    %310 = vector.broadcast %cst_117 : f32 to vector<8x1xf32>
    %311 = arith.addf %307, %310 : vector<8x1xf32>
    %312 = math.rsqrt %311 : vector<8x1xf32>
    %313 = vector.broadcast %312 : vector<8x1xf32> to vector<8x32xf32>
    %314 = arith.mulf %309, %313 : vector<8x32xf32>
    %315 = vector.broadcast %295 : vector<1x32xf32> to vector<8x32xf32>
    %316 = arith.mulf %314, %315 : vector<8x32xf32>
    %317 = vector.broadcast %296 : vector<1x32xf32> to vector<8x32xf32>
    %318 = arith.addf %316, %317 : vector<8x32xf32>
    %c0_118 = arith.constant 0 : index
    %c0_119 = arith.constant 0 : index
    %319 = vector.load %arg19[%c0_118, %c0_119] : memref<32x128xbf16, #tpu.memory_space<vmem>>, vector<32x128xbf16>
    %c0_120 = arith.constant 0 : index
    %c0_121 = arith.constant 0 : index
    %320 = vector.load %arg20[%c0_120, %c0_121] : memref<1x128xf32, #tpu.memory_space<vmem>>, vector<1x128xf32>
    %c0_122 = arith.constant 0 : index
    %c0_123 = arith.constant 0 : index
    %321 = vector.load %arg21[%c0_122, %c0_123] : memref<128x32xbf16, #tpu.memory_space<vmem>>, vector<128x32xbf16>
    %c0_124 = arith.constant 0 : index
    %c0_125 = arith.constant 0 : index
    %322 = vector.load %arg22[%c0_124, %c0_125] : memref<1x32xf32, #tpu.memory_space<vmem>>, vector<1x32xf32>
    %323 = arith.truncf %318 : vector<8x32xf32> to vector<8x32xbf16>
    %cst_126 = arith.constant dense<0.000000e+00> : vector<8x128xf32>
    %324 = tpu.matmul %323, %319, %cst_126 {dimension_numbers = #tpu.dot_dimension_numbers<[1], [0], [0], [1], [0, 0, 1, 1], [], []>} : vector<8x32xbf16>, vector<32x128xbf16>, vector<8x128xf32> -> vector<8x128xf32>
    %325 = vector.broadcast %320 : vector<1x128xf32> to vector<8x128xf32>
    %326 = arith.addf %324, %325 : vector<8x128xf32>
    %cst_127 = arith.constant 0.000000e+00 : f32
    %327 = vector.broadcast %cst_127 : f32 to vector<8x128xf32>
    %328 = arith.maximumf %326, %327 : vector<8x128xf32>
    %329 = arith.truncf %328 : vector<8x128xf32> to vector<8x128xbf16>
    %cst_128 = arith.constant dense<0.000000e+00> : vector<8x32xf32>
    %330 = tpu.matmul %329, %321, %cst_128 {dimension_numbers = #tpu.dot_dimension_numbers<[1], [0], [0], [1], [0, 0, 1, 1], [], []>} : vector<8x128xbf16>, vector<128x32xbf16>, vector<8x32xf32> -> vector<8x32xf32>
    %331 = vector.broadcast %322 : vector<1x32xf32> to vector<8x32xf32>
    %332 = arith.addf %330, %331 : vector<8x32xf32>
    %333 = arith.addf %318, %332 : vector<8x32xf32>
    %c0_129 = arith.constant 0 : index
    %c0_130 = arith.constant 0 : index
    %334 = vector.load %arg23[%c0_129, %c0_130] : memref<1x32xf32, #tpu.memory_space<vmem>>, vector<1x32xf32>
    %c0_131 = arith.constant 0 : index
    %c0_132 = arith.constant 0 : index
    %335 = vector.load %arg24[%c0_131, %c0_132] : memref<1x32xf32, #tpu.memory_space<vmem>>, vector<1x32xf32>
    %cst_133 = arith.constant dense<0.000000e+00> : vector<8xf32>
    %336 = vector.multi_reduction <add>, %333, %cst_133 [1] : vector<8x32xf32> to vector<8xf32>
    %337 = vector.shape_cast %336 : vector<8xf32> to vector<8x1xf32>
    %cst_134 = arith.constant 3.200000e+01 : f32
    %338 = vector.broadcast %cst_134 : f32 to vector<8x1xf32>
    %339 = arith.divf %337, %338 : vector<8x1xf32>
    %340 = vector.broadcast %339 : vector<8x1xf32> to vector<8x32xf32>
    %341 = arith.subf %333, %340 : vector<8x32xf32>
    %342 = arith.mulf %341, %341 : vector<8x32xf32>
    %cst_135 = arith.constant dense<0.000000e+00> : vector<8xf32>
    %343 = vector.multi_reduction <add>, %342, %cst_135 [1] : vector<8x32xf32> to vector<8xf32>
    %344 = vector.shape_cast %343 : vector<8xf32> to vector<8x1xf32>
    %cst_136 = arith.constant 3.200000e+01 : f32
    %345 = vector.broadcast %cst_136 : f32 to vector<8x1xf32>
    %346 = arith.divf %344, %345 : vector<8x1xf32>
    %347 = vector.broadcast %339 : vector<8x1xf32> to vector<8x32xf32>
    %348 = arith.subf %333, %347 : vector<8x32xf32>
    %cst_137 = arith.constant 9.99999974E-6 : f32
    %349 = vector.broadcast %cst_137 : f32 to vector<8x1xf32>
    %350 = arith.addf %346, %349 : vector<8x1xf32>
    %351 = math.rsqrt %350 : vector<8x1xf32>
    %352 = vector.broadcast %351 : vector<8x1xf32> to vector<8x32xf32>
    %353 = arith.mulf %348, %352 : vector<8x32xf32>
    %354 = vector.broadcast %334 : vector<1x32xf32> to vector<8x32xf32>
    %355 = arith.mulf %353, %354 : vector<8x32xf32>
    %356 = vector.broadcast %335 : vector<1x32xf32> to vector<8x32xf32>
    %357 = arith.addf %355, %356 : vector<8x32xf32>
    %c0_138 = arith.constant 0 : index
    %c0_139 = arith.constant 0 : index
    %c0_140 = arith.constant 0 : index
    %358 = vector.load %arg25[%c0_138, %c0_139, %c0_140] : memref<1x8x32xf32, #tpu.memory_space<vmem>>, vector<1x8x32xf32>
    %359 = vector.shape_cast %358 : vector<1x8x32xf32> to vector<8x32xf32>
    %360 = vector.shape_cast %357 : vector<8x32xf32> to vector<1x8x32xf32>
    tpu.vector_store %arg25[%c0_138, %c0_139, %c0_140], %360 {strides = array<i32>} : memref<1x8x32xf32, #tpu.memory_space<vmem>>, vector<1x8x32xf32>,
    return
  }
  func.func @transform_0(%arg0: i32) -> (i32, i32, i32) {
    %c0_i32 = arith.constant 0 : i32
    %c0_i32_0 = arith.constant 0 : i32
    %c0_i32_1 = arith.constant 0 : i32
    return %arg0, %c0_i32, %c0_i32_0 : i32, i32, i32
  }
  func.func @transform_1(%arg0: i32) -> (i32, i32, i32) {
    %c0_i32 = arith.constant 0 : i32
    %c0_i32_0 = arith.constant 0 : i32
    %c0_i32_1 = arith.constant 0 : i32
    return %arg0, %c0_i32, %c0_i32_0 : i32, i32, i32
  }
  func.func @transform_2(%arg0: i32) -> (i32, i32, i32) {
    %c0_i32 = arith.constant 0 : i32
    %c0_i32_0 = arith.constant 0 : i32
    %c0_i32_1 = arith.constant 0 : i32
    return %arg0, %c0_i32, %c0_i32_0 : i32, i32, i32
  }
  func.func @transform_3(%arg0: i32) -> (i32, i32, i32) {
    %c0_i32 = arith.constant 0 : i32
    %c0_i32_0 = arith.constant 0 : i32
    %c0_i32_1 = arith.constant 0 : i32
    return %arg0, %c0_i32, %c0_i32_0 : i32, i32, i32
  }
  func.func @transform_4(%arg0: i32) -> (i32, i32) {
    %c0_i32 = arith.constant 0 : i32
    %c0_i32_0 = arith.constant 0 : i32
    %c0_i32_1 = arith.constant 0 : i32
    return %c0_i32, %c0_i32_0 : i32, i32
  }
  func.func @transform_5(%arg0: i32) -> (i32, i32) {
    %c0_i32 = arith.constant 0 : i32
    %c0_i32_0 = arith.constant 0 : i32
    %c0_i32_1 = arith.constant 0 : i32
    return %c0_i32, %c0_i32_0 : i32, i32
  }
  func.func @transform_6(%arg0: i32) -> (i32, i32, i32) {
    %c0_i32 = arith.constant 0 : i32
    %c0_i32_0 = arith.constant 0 : i32
    %c0_i32_1 = arith.constant 0 : i32
    %c0_i32_2 = arith.constant 0 : i32
    return %c0_i32, %c0_i32_0, %c0_i32_1 : i32, i32, i32
  }
  func.func @transform_7(%arg0: i32) -> (i32, i32) {
    %c0_i32 = arith.constant 0 : i32
    %c0_i32_0 = arith.constant 0 : i32
    %c0_i32_1 = arith.constant 0 : i32
    return %c0_i32, %c0_i32_0 : i32, i32
  }
  func.func @transform_8(%arg0: i32) -> (i32, i32) {
    %c0_i32 = arith.constant 0 : i32
    %c0_i32_0 = arith.constant 0 : i32
    %c0_i32_1 = arith.constant 0 : i32
    return %c0_i32, %c0_i32_0 : i32, i32
  }
  func.func @transform_9(%arg0: i32) -> (i32, i32) {
    %c0_i32 = arith.constant 0 : i32
    %c0_i32_0 = arith.constant 0 : i32
    %c0_i32_1 = arith.constant 0 : i32
    return %c0_i32, %c0_i32_0 : i32, i32
  }
  func.func @transform_10(%arg0: i32) -> (i32, i32) {
    %c0_i32 = arith.constant 0 : i32
    %c0_i32_0 = arith.constant 0 : i32
    %c0_i32_1 = arith.constant 0 : i32
    return %c0_i32, %c0_i32_0 : i32, i32
  }
  func.func @transform_11(%arg0: i32) -> (i32, i32) {
    %c0_i32 = arith.constant 0 : i32
    %c0_i32_0 = arith.constant 0 : i32
    %c0_i32_1 = arith.constant 0 : i32
    return %c0_i32, %c0_i32_0 : i32, i32
  }
  func.func @transform_12(%arg0: i32) -> (i32, i32) {
    %c0_i32 = arith.constant 0 : i32
    %c0_i32_0 = arith.constant 0 : i32
    %c0_i32_1 = arith.constant 0 : i32
    return %c0_i32, %c0_i32_0 : i32, i32
  }
  func.func @transform_13(%arg0: i32) -> (i32, i32) {
    %c0_i32 = arith.constant 0 : i32
    %c0_i32_0 = arith.constant 0 : i32
    %c0_i32_1 = arith.constant 0 : i32
    return %c0_i32, %c0_i32_0 : i32, i32
  }
  func.func @transform_14(%arg0: i32) -> (i32, i32, i32) {
    %c0_i32 = arith.constant 0 : i32
    %c0_i32_0 = arith.constant 0 : i32
    %c0_i32_1 = arith.constant 0 : i32
    %c0_i32_2 = arith.constant 0 : i32
    return %c0_i32, %c0_i32_0, %c0_i32_1 : i32, i32, i32
  }
  func.func @transform_15(%arg0: i32) -> (i32, i32) {
    %c0_i32 = arith.constant 0 : i32
    %c0_i32_0 = arith.constant 0 : i32
    %c0_i32_1 = arith.constant 0 : i32
    return %c0_i32, %c0_i32_0 : i32, i32
  }
  func.func @transform_16(%arg0: i32) -> (i32, i32) {
    %c0_i32 = arith.constant 0 : i32
    %c0_i32_0 = arith.constant 0 : i32
    %c0_i32_1 = arith.constant 0 : i32
    return %c0_i32, %c0_i32_0 : i32, i32
  }
  func.func @transform_17(%arg0: i32) -> (i32, i32) {
    %c0_i32 = arith.constant 0 : i32
    %c0_i32_0 = arith.constant 0 : i32
    %c0_i32_1 = arith.constant 0 : i32
    return %c0_i32, %c0_i32_0 : i32, i32
  }
  func.func @transform_18(%arg0: i32) -> (i32, i32) {
    %c0_i32 = arith.constant 0 : i32
    %c0_i32_0 = arith.constant 0 : i32
    %c0_i32_1 = arith.constant 0 : i32
    return %c0_i32, %c0_i32_0 : i32, i32
  }
  func.func @transform_19(%arg0: i32) -> (i32, i32) {
    %c0_i32 = arith.constant 0 : i32
    %c0_i32_0 = arith.constant 0 : i32
    %c0_i32_1 = arith.constant 0 : i32
    return %c0_i32, %c0_i32_0 : i32, i32
  }
  func.func @transform_20(%arg0: i32) -> (i32, i32) {
    %c0_i32 = arith.constant 0 : i32
    %c0_i32_0 = arith.constant 0 : i32
    %c0_i32_1 = arith.constant 0 : i32
    return %c0_i32, %c0_i32_0 : i32, i32
  }
  func.func @transform_21(%arg0: i32) -> (i32, i32) {
    %c0_i32 = arith.constant 0 : i32
    %c0_i32_0 = arith.constant 0 : i32
    %c0_i32_1 = arith.constant 0 : i32
    return %c0_i32, %c0_i32_0 : i32, i32
  }
  func.func @transform_22(%arg0: i32) -> (i32, i32) {
    %c0_i32 = arith.constant 0 : i32
    %c0_i32_0 = arith.constant 0 : i32
    %c0_i32_1 = arith.constant 0 : i32
    return %c0_i32, %c0_i32_0 : i32, i32
  }
  func.func @transform_23(%arg0: i32) -> (i32, i32) {
    %c0_i32 = arith.constant 0 : i32
    %c0_i32_0 = arith.constant 0 : i32
    %c0_i32_1 = arith.constant 0 : i32
    return %c0_i32, %c0_i32_0 : i32, i32
  }
  func.func @transform_24(%arg0: i32) -> (i32, i32, i32) {
    %c0_i32 = arith.constant 0 : i32
    %c0_i32_0 = arith.constant 0 : i32
    %c0_i32_1 = arith.constant 0 : i32
    return %arg0, %c0_i32, %c0_i32_0 : i32, i32, i32
  }
}

module attributes {stable_mosaic.version = 11 : i64} {
  func.func @_decoder_layer_kernel(%arg0: i32, %arg1: memref<1x8x32xf32, #tpu.memory_space<vmem>>, %arg2: memref<1x8x32xf32, #tpu.memory_space<vmem>>, %arg3: memref<1x1x8xf32, #tpu.memory_space<vmem>>, %arg4: memref<1x1x8xf32, #tpu.memory_space<vmem>>, %arg5: memref<32x96xbf16, #tpu.memory_space<vmem>>, %arg6: memref<1x96xf32, #tpu.memory_space<vmem>>, %arg7: memref<4x8x32xbf16, #tpu.memory_space<vmem>>, %arg8: memref<1x32xf32, #tpu.memory_space<vmem>>, %arg9: memref<1x32xf32, #tpu.memory_space<vmem>>, %arg10: memref<1x32xf32, #tpu.memory_space<vmem>>, %arg11: memref<32x32xbf16, #tpu.memory_space<vmem>>, %arg12: memref<1x32xf32, #tpu.memory_space<vmem>>, %arg13: memref<32x64xbf16, #tpu.memory_space<vmem>>, %arg14: memref<1x64xf32, #tpu.memory_space<vmem>>, %arg15: memref<4x8x32xbf16, #tpu.memory_space<vmem>>, %arg16: memref<1x32xf32, #tpu.memory_space<vmem>>, %arg17: memref<1x32xf32, #tpu.memory_space<vmem>>, %arg18: memref<1x32xf32, #tpu.memory_space<vmem>>, %arg19: memref<32x128xbf16, #tpu.memory_space<vmem>>, %arg20: memref<1x128xf32, #tpu.memory_space<vmem>>, %arg21: memref<128x32xbf16, #tpu.memory_space<vmem>>, %arg22: memref<1x32xf32, #tpu.memory_space<vmem>>, %arg23: memref<1x32xf32, #tpu.memory_space<vmem>>, %arg24: memref<1x32xf32, #tpu.memory_space<vmem>>, %arg25: memref<1x8x32xf32, #tpu.memory_space<vmem>>) attributes {dimension_semantics = [#tpu.dimension_semantics<parallel>], iteration_bounds = array<i64: 2>, scalar_prefetch = 0 : i64, scratch_operands = 0 : i64, tpu.core_type = #tpu.core_type<tc>, window_params = [{transform_indices = @transform_0, window_bounds = array<i64: 1, 8, 32>}, {transform_indices = @transform_1, window_bounds = array<i64: 1, 8, 32>}, {transform_indices = @transform_2, window_bounds = array<i64: 1, 1, 8>}, {transform_indices = @transform_3, window_bounds = array<i64: 1, 1, 8>}, {pipeline_mode = #tpu.pipeline_mode<synchronous>, transform_indices = @transform_4, window_bounds = array<i64: 32, 96>}, {pipeline_mode = #tpu.pipeline_mode<synchronous>, transform_indices = @transform_5, window_bounds = array<i64: 1, 96>}, {pipeline_mode = #tpu.pipeline_mode<synchronous>, transform_indices = @transform_6, window_bounds = array<i64: 4, 8, 32>}, {pipeline_mode = #tpu.pipeline_mode<synchronous>, transform_indices = @transform_7, window_bounds = array<i64: 1, 32>}, {pipeline_mode = #tpu.pipeline_mode<synchronous>, transform_indices = @transform_8, window_bounds = array<i64: 1, 32>}, {pipeline_mode = #tpu.pipeline_mode<synchronous>, transform_indices = @transform_9, window_bounds = array<i64: 1, 32>}, {pipeline_mode = #tpu.pipeline_mode<synchronous>, transform_indices = @transform_10, window_bounds = array<i64: 32, 32>}, {pipeline_mode = #tpu.pipeline_mode<synchronous>, transform_indices = @transform_11, window_bounds = array<i64: 1, 32>}, {pipeline_mode = #tpu.pipeline_mode<synchronous>, transform_indices = @transform_12, window_bounds = array<i64: 32, 64>}, {pipeline_mode = #tpu.pipeline_mode<synchronous>, transform_indices = @transform_13, window_bounds = array<i64: 1, 64>}, {pipeline_mode = #tpu.pipeline_mode<synchronous>, transform_indices = @transform_14, window_bounds = array<i64: 4, 8, 32>}, {pipeline_mode = #tpu.pipeline_mode<synchronous>, transform_indices = @transform_15, window_bounds = array<i64: 1, 32>}, {pipeline_mode = #tpu.pipeline_mode<synchronous>, transform_indices = @transform_16, window_bounds = array<i64: 1, 32>}, {pipeline_mode = #tpu.pipeline_mode<synchronous>, transform_indices = @transform_17, window_bounds = array<i64: 1, 32>}, {pipeline_mode = #tpu.pipeline_mode<synchronous>, transform_indices = @transform_18, window_bounds = array<i64: 32, 128>}, {pipeline_mode = #tpu.pipeline_mode<synchronous>, transform_indices = @transform_19, window_bounds = array<i64: 1, 128>}, {pipeline_mode = #tpu.pipeline_mode<synchronous>, transform_indices = @transform_20, window_bounds = array<i64: 128, 32>}, {pipeline_mode = #tpu.pipeline_mode<synchronous>, transform_indices = @transform_21, window_bounds = array<i64: 1, 32>}, {pipeline_mode = #tpu.pipeline_mode<synchronous>, transform_indices = @transform_22, window_bounds = array<i64: 1, 32>}, {pipeline_mode = #tpu.pipeline_mode<synchronous>, transform_indices = @transform_23, window_bounds = array<i64: 1, 32>}, {transform_indices = @transform_24, window_bounds = array<i64: 1, 8, 32>}]} {
    %c0 = arith.constant 0 : index
    %c0_0 = arith.constant 0 : index
    %c0_1 = arith.constant 0 : index
    %0 = vector.load %arg1[%c0, %c0_0, %c0_1] : memref<1x8x32xf32, #tpu.memory_space<vmem>>, vector<1x8x32xf32>
    %1 = vector.shape_cast %0 : vector<1x8x32xf32> to vector<8x32xf32>
    %c0_2 = arith.constant 0 : index
    %c0_3 = arith.constant 0 : index
    %c0_4 = arith.constant 0 : index
    %2 = vector.load %arg2[%c0_2, %c0_3, %c0_4] : memref<1x8x32xf32, #tpu.memory_space<vmem>>, vector<1x8x32xf32>
    %3 = vector.shape_cast %2 : vector<1x8x32xf32> to vector<8x32xf32>
    %c0_5 = arith.constant 0 : index
    %c0_6 = arith.constant 0 : index
    %c0_7 = arith.constant 0 : index
    %4 = vector.load %arg3[%c0_5, %c0_6, %c0_7] : memref<1x1x8xf32, #tpu.memory_space<vmem>>, vector<1x1x8xf32>
    %5 = vector.shape_cast %4 : vector<1x1x8xf32> to vector<1x8xf32>
    %c0_8 = arith.constant 0 : index
    %c0_9 = arith.constant 0 : index
    %c0_10 = arith.constant 0 : index
    %6 = vector.load %arg4[%c0_8, %c0_9, %c0_10] : memref<1x1x8xf32, #tpu.memory_space<vmem>>, vector<1x1x8xf32>
    %7 = vector.shape_cast %6 : vector<1x1x8xf32> to vector<1x8xf32>
    %8 = tpu.iota {dimensions = array<i32: 0>} : vector<8x8xi32>
    %9 = tpu.iota {dimensions = array<i32: 1>} : vector<8x8xi32>
    %10 = arith.cmpi sle, %9, %8 : vector<8x8xi32>
    %cst = arith.constant 0.000000e+00 : f32
    %cst_11 = arith.constant -1.000000e+09 : f32
    %11 = vector.broadcast %cst : f32 to vector<8x8xf32>
    %12 = vector.broadcast %cst_11 : f32 to vector<8x8xf32>
    %13 = arith.select %10, %11, %12 : vector<8x8xi1>, vector<8x8xf32>
    %14 = arith.truncf %1 : vector<8x32xf32> to vector<8x32xbf16>
    %c0_12 = arith.constant 0 : index
    %c0_13 = arith.constant 0 : index
    %15 = vector.load %arg5[%c0_12, %c0_13] : memref<32x96xbf16, #tpu.memory_space<vmem>>, vector<32x96xbf16>
    %cst_14 = arith.constant dense<0.000000e+00> : vector<8x96xf32>
    %16 = tpu.matmul %14, %15, %cst_14 {dimension_numbers = #tpu.dot_dimension_numbers<[1], [0], [0], [1], [0, 0, 1, 1], [], []>} : vector<8x32xbf16>, vector<32x96xbf16>, vector<8x96xf32> -> vector<8x96xf32>
    %c0_15 = arith.constant 0 : index
    %c0_16 = arith.constant 0 : index
    %17 = vector.load %arg6[%c0_15, %c0_16] : memref<1x96xf32, #tpu.memory_space<vmem>>, vector<1x96xf32>
    %18 = vector.broadcast %17 : vector<1x96xf32> to vector<8x96xf32>
    %19 = arith.addf %16, %18 : vector<8x96xf32>
    %20 = vector.extract_strided_slice %19 {offsets = [0, 0], sizes = [8, 32], strides = [1, 1]} : vector<8x96xf32> to vector<8x32xf32>
    %21 = vector.extract_strided_slice %19 {offsets = [0, 32], sizes = [8, 32], strides = [1, 1]} : vector<8x96xf32> to vector<8x32xf32>
    %22 = vector.extract_strided_slice %19 {offsets = [0, 64], sizes = [8, 32], strides = [1, 1]} : vector<8x96xf32> to vector<8x32xf32>
    %23 = vector.extract_strided_slice %20 {offsets = [0, 0], sizes = [8, 8], strides = [1, 1]} : vector<8x32xf32> to vector<8x8xf32>
    %cst_17 = arith.constant 0.353553385 : f32
    %24 = vector.broadcast %cst_17 : f32 to vector<8x8xf32>
    %25 = arith.mulf %23, %24 : vector<8x8xf32>
    %26 = arith.truncf %25 : vector<8x8xf32> to vector<8x8xbf16>
    %27 = vector.extract_strided_slice %21 {offsets = [0, 0], sizes = [8, 8], strides = [1, 1]} : vector<8x32xf32> to vector<8x8xf32>
    %28 = arith.truncf %27 : vector<8x8xf32> to vector<8x8xbf16>
    %29 = vector.extract_strided_slice %22 {offsets = [0, 0], sizes = [8, 8], strides = [1, 1]} : vector<8x32xf32> to vector<8x8xf32>
    %30 = arith.truncf %29 : vector<8x8xf32> to vector<8x8xbf16>
    %cst_18 = arith.constant dense<0.000000e+00> : vector<8x8xf32>
    %31 = tpu.matmul %26, %28, %cst_18 {dimension_numbers = #tpu.dot_dimension_numbers<[1], [1], [0], [0], [0, 0, 1, 0], [], []>} : vector<8x8xbf16>, vector<8x8xbf16>, vector<8x8xf32> -> vector<8x8xf32>
    %32 = vector.broadcast %5 : vector<1x8xf32> to vector<8x8xf32>
    %33 = arith.addf %31, %32 : vector<8x8xf32>
    %34 = arith.addf %33, %13 : vector<8x8xf32>
    %cst_19 = arith.constant dense<0xFF800000> : vector<8xf32>
    %35 = vector.multi_reduction <maximumf>, %34, %cst_19 [1] : vector<8x8xf32> to vector<8xf32>
    %36 = vector.shape_cast %35 : vector<8xf32> to vector<8x1xf32>
    %37 = vector.broadcast %36 : vector<8x1xf32> to vector<8x8xf32>
    %38 = arith.subf %34, %37 : vector<8x8xf32>
    %39 = math.exp %38 : vector<8x8xf32>
    %cst_20 = arith.constant dense<0.000000e+00> : vector<8xf32>
    %40 = vector.multi_reduction <add>, %39, %cst_20 [1] : vector<8x8xf32> to vector<8xf32>
    %41 = vector.shape_cast %40 : vector<8xf32> to vector<8x1xf32>
    %42 = tpu.reciprocal %41 {approx = true} : vector<8x1xf32> -> vector<8x1xf32>
    %43 = vector.broadcast %42 : vector<8x1xf32> to vector<8x8xf32>
    %44 = arith.mulf %39, %43 : vector<8x8xf32>
    %45 = arith.truncf %44 : vector<8x8xf32> to vector<8x8xbf16>
    %cst_21 = arith.constant dense<0.000000e+00> : vector<8x8xf32>
    %46 = tpu.matmul %45, %30, %cst_21 {dimension_numbers = #tpu.dot_dimension_numbers<[1], [0], [0], [1], [0, 0, 1, 1], [], []>} : vector<8x8xbf16>, vector<8x8xbf16>, vector<8x8xf32> -> vector<8x8xf32>
    %47 = arith.truncf %46 : vector<8x8xf32> to vector<8x8xbf16>
    %c0_22 = arith.constant 0 : index
    %c0_23 = arith.constant 0 : index
    %c0_24 = arith.constant 0 : index
    %48 = vector.load %arg7[%c0_22, %c0_23, %c0_24] : memref<4x8x32xbf16, #tpu.memory_space<vmem>>, vector<1x8x32xbf16>
    %49 = vector.shape_cast %48 : vector<1x8x32xbf16> to vector<8x32xbf16>
    %cst_25 = arith.constant dense<0.000000e+00> : vector<8x32xf32>
    %50 = tpu.matmul %47, %49, %cst_25 {dimension_numbers = #tpu.dot_dimension_numbers<[1], [0], [0], [1], [0, 0, 1, 1], [], []>} : vector<8x8xbf16>, vector<8x32xbf16>, vector<8x32xf32> -> vector<8x32xf32>
    %51 = vector.extract_strided_slice %20 {offsets = [0, 8], sizes = [8, 8], strides = [1, 1]} : vector<8x32xf32> to vector<8x8xf32>
    %cst_26 = arith.constant 0.353553385 : f32
    %52 = vector.broadcast %cst_26 : f32 to vector<8x8xf32>
    %53 = arith.mulf %51, %52 : vector<8x8xf32>
    %54 = arith.truncf %53 : vector<8x8xf32> to vector<8x8xbf16>
    %55 = vector.extract_strided_slice %21 {offsets = [0, 8], sizes = [8, 8], strides = [1, 1]} : vector<8x32xf32> to vector<8x8xf32>
    %56 = arith.truncf %55 : vector<8x8xf32> to vector<8x8xbf16>
    %57 = vector.extract_strided_slice %22 {offsets = [0, 8], sizes = [8, 8], strides = [1, 1]} : vector<8x32xf32> to vector<8x8xf32>
    %58 = arith.truncf %57 : vector<8x8xf32> to vector<8x8xbf16>
    %cst_27 = arith.constant dense<0.000000e+00> : vector<8x8xf32>
    %59 = tpu.matmul %54, %56, %cst_27 {dimension_numbers = #tpu.dot_dimension_numbers<[1], [1], [0], [0], [0, 0, 1, 0], [], []>} : vector<8x8xbf16>, vector<8x8xbf16>, vector<8x8xf32> -> vector<8x8xf32>
    %60 = vector.broadcast %5 : vector<1x8xf32> to vector<8x8xf32>
    %61 = arith.addf %59, %60 : vector<8x8xf32>
    %62 = arith.addf %61, %13 : vector<8x8xf32>
    %cst_28 = arith.constant dense<0xFF800000> : vector<8xf32>
    %63 = vector.multi_reduction <maximumf>, %62, %cst_28 [1] : vector<8x8xf32> to vector<8xf32>
    %64 = vector.shape_cast %63 : vector<8xf32> to vector<8x1xf32>
    %65 = vector.broadcast %64 : vector<8x1xf32> to vector<8x8xf32>
    %66 = arith.subf %62, %65 : vector<8x8xf32>
    %67 = math.exp %66 : vector<8x8xf32>
    %cst_29 = arith.constant dense<0.000000e+00> : vector<8xf32>
    %68 = vector.multi_reduction <add>, %67, %cst_29 [1] : vector<8x8xf32> to vector<8xf32>
    %69 = vector.shape_cast %68 : vector<8xf32> to vector<8x1xf32>
    %70 = tpu.reciprocal %69 {approx = true} : vector<8x1xf32> -> vector<8x1xf32>
    %71 = vector.broadcast %70 : vector<8x1xf32> to vector<8x8xf32>
    %72 = arith.mulf %67, %71 : vector<8x8xf32>
    %73 = arith.truncf %72 : vector<8x8xf32> to vector<8x8xbf16>
    %cst_30 = arith.constant dense<0.000000e+00> : vector<8x8xf32>
    %74 = tpu.matmul %73, %58, %cst_30 {dimension_numbers = #tpu.dot_dimension_numbers<[1], [0], [0], [1], [0, 0, 1, 1], [], []>} : vector<8x8xbf16>, vector<8x8xbf16>, vector<8x8xf32> -> vector<8x8xf32>
    %75 = arith.truncf %74 : vector<8x8xf32> to vector<8x8xbf16>
    %c1 = arith.constant 1 : index
    %c0_31 = arith.constant 0 : index
    %c0_32 = arith.constant 0 : index
    %76 = vector.load %arg7[%c1, %c0_31, %c0_32] : memref<4x8x32xbf16, #tpu.memory_space<vmem>>, vector<1x8x32xbf16>
    %77 = vector.shape_cast %76 : vector<1x8x32xbf16> to vector<8x32xbf16>
    %cst_33 = arith.constant dense<0.000000e+00> : vector<8x32xf32>
    %78 = tpu.matmul %75, %77, %cst_33 {dimension_numbers = #tpu.dot_dimension_numbers<[1], [0], [0], [1], [0, 0, 1, 1], [], []>} : vector<8x8xbf16>, vector<8x32xbf16>, vector<8x32xf32> -> vector<8x32xf32>
    %79 = arith.addf %50, %78 : vector<8x32xf32>
    %80 = vector.extract_strided_slice %20 {offsets = [0, 16], sizes = [8, 8], strides = [1, 1]} : vector<8x32xf32> to vector<8x8xf32>
    %cst_34 = arith.constant 0.353553385 : f32
    %81 = vector.broadcast %cst_34 : f32 to vector<8x8xf32>
    %82 = arith.mulf %80, %81 : vector<8x8xf32>
    %83 = arith.truncf %82 : vector<8x8xf32> to vector<8x8xbf16>
    %84 = vector.extract_strided_slice %21 {offsets = [0, 16], sizes = [8, 8], strides = [1, 1]} : vector<8x32xf32> to vector<8x8xf32>
    %85 = arith.truncf %84 : vector<8x8xf32> to vector<8x8xbf16>
    %86 = vector.extract_strided_slice %22 {offsets = [0, 16], sizes = [8, 8], strides = [1, 1]} : vector<8x32xf32> to vector<8x8xf32>
    %87 = arith.truncf %86 : vector<8x8xf32> to vector<8x8xbf16>
    %cst_35 = arith.constant dense<0.000000e+00> : vector<8x8xf32>
    %88 = tpu.matmul %83, %85, %cst_35 {dimension_numbers = #tpu.dot_dimension_numbers<[1], [1], [0], [0], [0, 0, 1, 0], [], []>} : vector<8x8xbf16>, vector<8x8xbf16>, vector<8x8xf32> -> vector<8x8xf32>
    %89 = vector.broadcast %5 : vector<1x8xf32> to vector<8x8xf32>
    %90 = arith.addf %88, %89 : vector<8x8xf32>
    %91 = arith.addf %90, %13 : vector<8x8xf32>
    %cst_36 = arith.constant dense<0xFF800000> : vector<8xf32>
    %92 = vector.multi_reduction <maximumf>, %91, %cst_36 [1] : vector<8x8xf32> to vector<8xf32>
    %93 = vector.shape_cast %92 : vector<8xf32> to vector<8x1xf32>
    %94 = vector.broadcast %93 : vector<8x1xf32> to vector<8x8xf32>
    %95 = arith.subf %91, %94 : vector<8x8xf32>
    %96 = math.exp %95 : vector<8x8xf32>
    %cst_37 = arith.constant dense<0.000000e+00> : vector<8xf32>
    %97 = vector.multi_reduction <add>, %96, %cst_37 [1] : vector<8x8xf32> to vector<8xf32>
    %98 = vector.shape_cast %97 : vector<8xf32> to vector<8x1xf32>
    %99 = tpu.reciprocal %98 {approx = true} : vector<8x1xf32> -> vector<8x1xf32>
    %100 = vector.broadcast %99 : vector<8x1xf32> to vector<8x8xf32>
    %101 = arith.mulf %96, %100 : vector<8x8xf32>
    %102 = arith.truncf %101 : vector<8x8xf32> to vector<8x8xbf16>
    %cst_38 = arith.constant dense<0.000000e+00> : vector<8x8xf32>
    %103 = tpu.matmul %102, %87, %cst_38 {dimension_numbers = #tpu.dot_dimension_numbers<[1], [0], [0], [1], [0, 0, 1, 1], [], []>} : vector<8x8xbf16>, vector<8x8xbf16>, vector<8x8xf32> -> vector<8x8xf32>
    %104 = arith.truncf %103 : vector<8x8xf32> to vector<8x8xbf16>
    %c2 = arith.constant 2 : index
    %c0_39 = arith.constant 0 : index
    %c0_40 = arith.constant 0 : index
    %105 = vector.load %arg7[%c2, %c0_39, %c0_40] : memref<4x8x32xbf16, #tpu.memory_space<vmem>>, vector<1x8x32xbf16>
    %106 = vector.shape_cast %105 : vector<1x8x32xbf16> to vector<8x32xbf16>
    %cst_41 = arith.constant dense<0.000000e+00> : vector<8x32xf32>
    %107 = tpu.matmul %104, %106, %cst_41 {dimension_numbers = #tpu.dot_dimension_numbers<[1], [0], [0], [1], [0, 0, 1, 1], [], []>} : vector<8x8xbf16>, vector<8x32xbf16>, vector<8x32xf32> -> vector<8x32xf32>
    %108 = arith.addf %79, %107 : vector<8x32xf32>
    %109 = vector.extract_strided_slice %20 {offsets = [0, 24], sizes = [8, 8], strides = [1, 1]} : vector<8x32xf32> to vector<8x8xf32>
    %cst_42 = arith.constant 0.353553385 : f32
    %110 = vector.broadcast %cst_42 : f32 to vector<8x8xf32>
    %111 = arith.mulf %109, %110 : vector<8x8xf32>
    %112 = arith.truncf %111 : vector<8x8xf32> to vector<8x8xbf16>
    %113 = vector.extract_strided_slice %21 {offsets = [0, 24], sizes = [8, 8], strides = [1, 1]} : vector<8x32xf32> to vector<8x8xf32>
    %114 = arith.truncf %113 : vector<8x8xf32> to vector<8x8xbf16>
    %115 = vector.extract_strided_slice %22 {offsets = [0, 24], sizes = [8, 8], strides = [1, 1]} : vector<8x32xf32> to vector<8x8xf32>
    %116 = arith.truncf %115 : vector<8x8xf32> to vector<8x8xbf16>
    %cst_43 = arith.constant dense<0.000000e+00> : vector<8x8xf32>
    %117 = tpu.matmul %112, %114, %cst_43 {dimension_numbers = #tpu.dot_dimension_numbers<[1], [1], [0], [0], [0, 0, 1, 0], [], []>} : vector<8x8xbf16>, vector<8x8xbf16>, vector<8x8xf32> -> vector<8x8xf32>
    %118 = vector.broadcast %5 : vector<1x8xf32> to vector<8x8xf32>
    %119 = arith.addf %117, %118 : vector<8x8xf32>
    %120 = arith.addf %119, %13 : vector<8x8xf32>
    %cst_44 = arith.constant dense<0xFF800000> : vector<8xf32>
    %121 = vector.multi_reduction <maximumf>, %120, %cst_44 [1] : vector<8x8xf32> to vector<8xf32>
    %122 = vector.shape_cast %121 : vector<8xf32> to vector<8x1xf32>
    %123 = vector.broadcast %122 : vector<8x1xf32> to vector<8x8xf32>
    %124 = arith.subf %120, %123 : vector<8x8xf32>
    %125 = math.exp %124 : vector<8x8xf32>
    %cst_45 = arith.constant dense<0.000000e+00> : vector<8xf32>
    %126 = vector.multi_reduction <add>, %125, %cst_45 [1] : vector<8x8xf32> to vector<8xf32>
    %127 = vector.shape_cast %126 : vector<8xf32> to vector<8x1xf32>
    %128 = tpu.reciprocal %127 {approx = true} : vector<8x1xf32> -> vector<8x1xf32>
    %129 = vector.broadcast %128 : vector<8x1xf32> to vector<8x8xf32>
    %130 = arith.mulf %125, %129 : vector<8x8xf32>
    %131 = arith.truncf %130 : vector<8x8xf32> to vector<8x8xbf16>
    %cst_46 = arith.constant dense<0.000000e+00> : vector<8x8xf32>
    %132 = tpu.matmul %131, %116, %cst_46 {dimension_numbers = #tpu.dot_dimension_numbers<[1], [0], [0], [1], [0, 0, 1, 1], [], []>} : vector<8x8xbf16>, vector<8x8xbf16>, vector<8x8xf32> -> vector<8x8xf32>
    %133 = arith.truncf %132 : vector<8x8xf32> to vector<8x8xbf16>
    %c3 = arith.constant 3 : index
    %c0_47 = arith.constant 0 : index
    %c0_48 = arith.constant 0 : index
    %134 = vector.load %arg7[%c3, %c0_47, %c0_48] : memref<4x8x32xbf16, #tpu.memory_space<vmem>>, vector<1x8x32xbf16>
    %135 = vector.shape_cast %134 : vector<1x8x32xbf16> to vector<8x32xbf16>
    %cst_49 = arith.constant dense<0.000000e+00> : vector<8x32xf32>
    %136 = tpu.matmul %133, %135, %cst_49 {dimension_numbers = #tpu.dot_dimension_numbers<[1], [0], [0], [1], [0, 0, 1, 1], [], []>} : vector<8x8xbf16>, vector<8x32xbf16>, vector<8x32xf32> -> vector<8x32xf32>
    %137 = arith.addf %108, %136 : vector<8x32xf32>
    %c0_50 = arith.constant 0 : index
    %c0_51 = arith.constant 0 : index
    %138 = vector.load %arg8[%c0_50, %c0_51] : memref<1x32xf32, #tpu.memory_space<vmem>>, vector<1x32xf32>
    %139 = vector.broadcast %138 : vector<1x32xf32> to vector<8x32xf32>
    %140 = arith.addf %137, %139 : vector<8x32xf32>
    %141 = arith.addf %1, %140 : vector<8x32xf32>
    %c0_52 = arith.constant 0 : index
    %c0_53 = arith.constant 0 : index
    %142 = vector.load %arg9[%c0_52, %c0_53] : memref<1x32xf32, #tpu.memory_space<vmem>>, vector<1x32xf32>
    %c0_54 = arith.constant 0 : index
    %c0_55 = arith.constant 0 : index
    %143 = vector.load %arg10[%c0_54, %c0_55] : memref<1x32xf32, #tpu.memory_space<vmem>>, vector<1x32xf32>
    %cst_56 = arith.constant dense<0.000000e+00> : vector<8xf32>
    %144 = vector.multi_reduction <add>, %141, %cst_56 [1] : vector<8x32xf32> to vector<8xf32>
    %145 = vector.shape_cast %144 : vector<8xf32> to vector<8x1xf32>
    %cst_57 = arith.constant 3.200000e+01 : f32
    %146 = vector.broadcast %cst_57 : f32 to vector<8x1xf32>
    %147 = arith.divf %145, %146 : vector<8x1xf32>
    %148 = vector.broadcast %147 : vector<8x1xf32> to vector<8x32xf32>
    %149 = arith.subf %141, %148 : vector<8x32xf32>
    %150 = arith.mulf %149, %149 : vector<8x32xf32>
    %cst_58 = arith.constant dense<0.000000e+00> : vector<8xf32>
    %151 = vector.multi_reduction <add>, %150, %cst_58 [1] : vector<8x32xf32> to vector<8xf32>
    %152 = vector.shape_cast %151 : vector<8xf32> to vector<8x1xf32>
    %cst_59 = arith.constant 3.200000e+01 : f32
    %153 = vector.broadcast %cst_59 : f32 to vector<8x1xf32>
    %154 = arith.divf %152, %153 : vector<8x1xf32>
    %155 = vector.broadcast %147 : vector<8x1xf32> to vector<8x32xf32>
    %156 = arith.subf %141, %155 : vector<8x32xf32>
    %cst_60 = arith.constant 9.99999974E-6 : f32
    %157 = vector.broadcast %cst_60 : f32 to vector<8x1xf32>
    %158 = arith.addf %154, %157 : vector<8x1xf32>
    %159 = math.rsqrt %158 : vector<8x1xf32>
    %160 = vector.broadcast %159 : vector<8x1xf32> to vector<8x32xf32>
    %161 = arith.mulf %156, %160 : vector<8x32xf32>
    %162 = vector.broadcast %142 : vector<1x32xf32> to vector<8x32xf32>
    %163 = arith.mulf %161, %162 : vector<8x32xf32>
    %164 = vector.broadcast %143 : vector<1x32xf32> to vector<8x32xf32>
    %165 = arith.addf %163, %164 : vector<8x32xf32>
    %166 = arith.truncf %165 : vector<8x32xf32> to vector<8x32xbf16>
    %c0_61 = arith.constant 0 : index
    %c0_62 = arith.constant 0 : index
    %167 = vector.load %arg11[%c0_61, %c0_62] : memref<32x32xbf16, #tpu.memory_space<vmem>>, vector<32x32xbf16>
    %cst_63 = arith.constant dense<0.000000e+00> : vector<8x32xf32>
    %168 = tpu.matmul %166, %167, %cst_63 {dimension_numbers = #tpu.dot_dimension_numbers<[1], [0], [0], [1], [0, 0, 1, 1], [], []>} : vector<8x32xbf16>, vector<32x32xbf16>, vector<8x32xf32> -> vector<8x32xf32>
    %c0_64 = arith.constant 0 : index
    %c0_65 = arith.constant 0 : index
    %169 = vector.load %arg12[%c0_64, %c0_65] : memref<1x32xf32, #tpu.memory_space<vmem>>, vector<1x32xf32>
    %170 = vector.broadcast %169 : vector<1x32xf32> to vector<8x32xf32>
    %171 = arith.addf %168, %170 : vector<8x32xf32>
    %172 = arith.truncf %3 : vector<8x32xf32> to vector<8x32xbf16>
    %c0_66 = arith.constant 0 : index
    %c0_67 = arith.constant 0 : index
    %173 = vector.load %arg13[%c0_66, %c0_67] : memref<32x64xbf16, #tpu.memory_space<vmem>>, vector<32x64xbf16>
    %cst_68 = arith.constant dense<0.000000e+00> : vector<8x64xf32>
    %174 = tpu.matmul %172, %173, %cst_68 {dimension_numbers = #tpu.dot_dimension_numbers<[1], [0], [0], [1], [0, 0, 1, 1], [], []>} : vector<8x32xbf16>, vector<32x64xbf16>, vector<8x64xf32> -> vector<8x64xf32>
    %c0_69 = arith.constant 0 : index
    %c0_70 = arith.constant 0 : index
    %175 = vector.load %arg14[%c0_69, %c0_70] : memref<1x64xf32, #tpu.memory_space<vmem>>, vector<1x64xf32>
    %176 = vector.broadcast %175 : vector<1x64xf32> to vector<8x64xf32>
    %177 = arith.addf %174, %176 : vector<8x64xf32>
    %178 = vector.extract_strided_slice %177 {offsets = [0, 0], sizes = [8, 32], strides = [1, 1]} : vector<8x64xf32> to vector<8x32xf32>
    %179 = vector.extract_strided_slice %177 {offsets = [0, 32], sizes = [8, 32], strides = [1, 1]} : vector<8x64xf32> to vector<8x32xf32>
    %180 = vector.extract_strided_slice %171 {offsets = [0, 0], sizes = [8, 8], strides = [1, 1]} : vector<8x32xf32> to vector<8x8xf32>
    %cst_71 = arith.constant 0.353553385 : f32
    %181 = vector.broadcast %cst_71 : f32 to vector<8x8xf32>
    %182 = arith.mulf %180, %181 : vector<8x8xf32>
    %183 = arith.truncf %182 : vector<8x8xf32> to vector<8x8xbf16>
    %184 = vector.extract_strided_slice %178 {offsets = [0, 0], sizes = [8, 8], strides = [1, 1]} : vector<8x32xf32> to vector<8x8xf32>
    %185 = arith.truncf %184 : vector<8x8xf32> to vector<8x8xbf16>
    %186 = vector.extract_strided_slice %179 {offsets = [0, 0], sizes = [8, 8], strides = [1, 1]} : vector<8x32xf32> to vector<8x8xf32>
    %187 = arith.truncf %186 : vector<8x8xf32> to vector<8x8xbf16>
    %cst_72 = arith.constant dense<0.000000e+00> : vector<8x8xf32>
    %188 = tpu.matmul %183, %185, %cst_72 {dimension_numbers = #tpu.dot_dimension_numbers<[1], [1], [0], [0], [0, 0, 1, 0], [], []>} : vector<8x8xbf16>, vector<8x8xbf16>, vector<8x8xf32> -> vector<8x8xf32>
    %189 = vector.broadcast %7 : vector<1x8xf32> to vector<8x8xf32>
    %190 = arith.addf %188, %189 : vector<8x8xf32>
    %cst_73 = arith.constant dense<0xFF800000> : vector<8xf32>
    %191 = vector.multi_reduction <maximumf>, %190, %cst_73 [1] : vector<8x8xf32> to vector<8xf32>
    %192 = vector.shape_cast %191 : vector<8xf32> to vector<8x1xf32>
    %193 = vector.broadcast %192 : vector<8x1xf32> to vector<8x8xf32>
    %194 = arith.subf %190, %193 : vector<8x8xf32>
    %195 = math.exp %194 : vector<8x8xf32>
    %cst_74 = arith.constant dense<0.000000e+00> : vector<8xf32>
    %196 = vector.multi_reduction <add>, %195, %cst_74 [1] : vector<8x8xf32> to vector<8xf32>
    %197 = vector.shape_cast %196 : vector<8xf32> to vector<8x1xf32>
    %198 = tpu.reciprocal %197 {approx = true} : vector<8x1xf32> -> vector<8x1xf32>
    %199 = vector.broadcast %198 : vector<8x1xf32> to vector<8x8xf32>
    %200 = arith.mulf %195, %199 : vector<8x8xf32>
    %201 = arith.truncf %200 : vector<8x8xf32> to vector<8x8xbf16>
    %cst_75 = arith.constant dense<0.000000e+00> : vector<8x8xf32>
    %202 = tpu.matmul %201, %187, %cst_75 {dimension_numbers = #tpu.dot_dimension_numbers<[1], [0], [0], [1], [0, 0, 1, 1], [], []>} : vector<8x8xbf16>, vector<8x8xbf16>, vector<8x8xf32> -> vector<8x8xf32>
    %203 = arith.truncf %202 : vector<8x8xf32> to vector<8x8xbf16>
    %c0_76 = arith.constant 0 : index
    %c0_77 = arith.constant 0 : index
    %c0_78 = arith.constant 0 : index
    %204 = vector.load %arg15[%c0_76, %c0_77, %c0_78] : memref<4x8x32xbf16, #tpu.memory_space<vmem>>, vector<1x8x32xbf16>
    %205 = vector.shape_cast %204 : vector<1x8x32xbf16> to vector<8x32xbf16>
    %cst_79 = arith.constant dense<0.000000e+00> : vector<8x32xf32>
    %206 = tpu.matmul %203, %205, %cst_79 {dimension_numbers = #tpu.dot_dimension_numbers<[1], [0], [0], [1], [0, 0, 1, 1], [], []>} : vector<8x8xbf16>, vector<8x32xbf16>, vector<8x32xf32> -> vector<8x32xf32>
    %207 = vector.extract_strided_slice %171 {offsets = [0, 8], sizes = [8, 8], strides = [1, 1]} : vector<8x32xf32> to vector<8x8xf32>
    %cst_80 = arith.constant 0.353553385 : f32
    %208 = vector.broadcast %cst_80 : f32 to vector<8x8xf32>
    %209 = arith.mulf %207, %208 : vector<8x8xf32>
    %210 = arith.truncf %209 : vector<8x8xf32> to vector<8x8xbf16>
    %211 = vector.extract_strided_slice %178 {offsets = [0, 8], sizes = [8, 8], strides = [1, 1]} : vector<8x32xf32> to vector<8x8xf32>
    %212 = arith.truncf %211 : vector<8x8xf32> to vector<8x8xbf16>
    %213 = vector.extract_strided_slice %179 {offsets = [0, 8], sizes = [8, 8], strides = [1, 1]} : vector<8x32xf32> to vector<8x8xf32>
    %214 = arith.truncf %213 : vector<8x8xf32> to vector<8x8xbf16>
    %cst_81 = arith.constant dense<0.000000e+00> : vector<8x8xf32>
    %215 = tpu.matmul %210, %212, %cst_81 {dimension_numbers = #tpu.dot_dimension_numbers<[1], [1], [0], [0], [0, 0, 1, 0], [], []>} : vector<8x8xbf16>, vector<8x8xbf16>, vector<8x8xf32> -> vector<8x8xf32>
    %216 = vector.broadcast %7 : vector<1x8xf32> to vector<8x8xf32>
    %217 = arith.addf %215, %216 : vector<8x8xf32>
    %cst_82 = arith.constant dense<0xFF800000> : vector<8xf32>
    %218 = vector.multi_reduction <maximumf>, %217, %cst_82 [1] : vector<8x8xf32> to vector<8xf32>
    %219 = vector.shape_cast %218 : vector<8xf32> to vector<8x1xf32>
    %220 = vector.broadcast %219 : vector<8x1xf32> to vector<8x8xf32>
    %221 = arith.subf %217, %220 : vector<8x8xf32>
    %222 = math.exp %221 : vector<8x8xf32>
    %cst_83 = arith.constant dense<0.000000e+00> : vector<8xf32>
    %223 = vector.multi_reduction <add>, %222, %cst_83 [1] : vector<8x8xf32> to vector<8xf32>
    %224 = vector.shape_cast %223 : vector<8xf32> to vector<8x1xf32>
    %225 = tpu.reciprocal %224 {approx = true} : vector<8x1xf32> -> vector<8x1xf32>
    %226 = vector.broadcast %225 : vector<8x1xf32> to vector<8x8xf32>
    %227 = arith.mulf %222, %226 : vector<8x8xf32>
    %228 = arith.truncf %227 : vector<8x8xf32> to vector<8x8xbf16>
    %cst_84 = arith.constant dense<0.000000e+00> : vector<8x8xf32>
    %229 = tpu.matmul %228, %214, %cst_84 {dimension_numbers = #tpu.dot_dimension_numbers<[1], [0], [0], [1], [0, 0, 1, 1], [], []>} : vector<8x8xbf16>, vector<8x8xbf16>, vector<8x8xf32> -> vector<8x8xf32>
    %230 = arith.truncf %229 : vector<8x8xf32> to vector<8x8xbf16>
    %c1_85 = arith.constant 1 : index
    %c0_86 = arith.constant 0 : index
    %c0_87 = arith.constant 0 : index
    %231 = vector.load %arg15[%c1_85, %c0_86, %c0_87] : memref<4x8x32xbf16, #tpu.memory_space<vmem>>, vector<1x8x32xbf16>
    %232 = vector.shape_cast %231 : vector<1x8x32xbf16> to vector<8x32xbf16>
    %cst_88 = arith.constant dense<0.000000e+00> : vector<8x32xf32>
    %233 = tpu.matmul %230, %232, %cst_88 {dimension_numbers = #tpu.dot_dimension_numbers<[1], [0], [0], [1], [0, 0, 1, 1], [], []>} : vector<8x8xbf16>, vector<8x32xbf16>, vector<8x32xf32> -> vector<8x32xf32>
    %234 = arith.addf %206, %233 : vector<8x32xf32>
    %235 = vector.extract_strided_slice %171 {offsets = [0, 16], sizes = [8, 8], strides = [1, 1]} : vector<8x32xf32> to vector<8x8xf32>
    %cst_89 = arith.constant 0.353553385 : f32
    %236 = vector.broadcast %cst_89 : f32 to vector<8x8xf32>
    %237 = arith.mulf %235, %236 : vector<8x8xf32>
    %238 = arith.truncf %237 : vector<8x8xf32> to vector<8x8xbf16>
    %239 = vector.extract_strided_slice %178 {offsets = [0, 16], sizes = [8, 8], strides = [1, 1]} : vector<8x32xf32> to vector<8x8xf32>
    %240 = arith.truncf %239 : vector<8x8xf32> to vector<8x8xbf16>
    %241 = vector.extract_strided_slice %179 {offsets = [0, 16], sizes = [8, 8], strides = [1, 1]} : vector<8x32xf32> to vector<8x8xf32>
    %242 = arith.truncf %241 : vector<8x8xf32> to vector<8x8xbf16>
    %cst_90 = arith.constant dense<0.000000e+00> : vector<8x8xf32>
    %243 = tpu.matmul %238, %240, %cst_90 {dimension_numbers = #tpu.dot_dimension_numbers<[1], [1], [0], [0], [0, 0, 1, 0], [], []>} : vector<8x8xbf16>, vector<8x8xbf16>, vector<8x8xf32> -> vector<8x8xf32>
    %244 = vector.broadcast %7 : vector<1x8xf32> to vector<8x8xf32>
    %245 = arith.addf %243, %244 : vector<8x8xf32>
    %cst_91 = arith.constant dense<0xFF800000> : vector<8xf32>
    %246 = vector.multi_reduction <maximumf>, %245, %cst_91 [1] : vector<8x8xf32> to vector<8xf32>
    %247 = vector.shape_cast %246 : vector<8xf32> to vector<8x1xf32>
    %248 = vector.broadcast %247 : vector<8x1xf32> to vector<8x8xf32>
    %249 = arith.subf %245, %248 : vector<8x8xf32>
    %250 = math.exp %249 : vector<8x8xf32>
    %cst_92 = arith.constant dense<0.000000e+00> : vector<8xf32>
    %251 = vector.multi_reduction <add>, %250, %cst_92 [1] : vector<8x8xf32> to vector<8xf32>
    %252 = vector.shape_cast %251 : vector<8xf32> to vector<8x1xf32>
    %253 = tpu.reciprocal %252 {approx = true} : vector<8x1xf32> -> vector<8x1xf32>
    %254 = vector.broadcast %253 : vector<8x1xf32> to vector<8x8xf32>
    %255 = arith.mulf %250, %254 : vector<8x8xf32>
    %256 = arith.truncf %255 : vector<8x8xf32> to vector<8x8xbf16>
    %cst_93 = arith.constant dense<0.000000e+00> : vector<8x8xf32>
    %257 = tpu.matmul %256, %242, %cst_93 {dimension_numbers = #tpu.dot_dimension_numbers<[1], [0], [0], [1], [0, 0, 1, 1], [], []>} : vector<8x8xbf16>, vector<8x8xbf16>, vector<8x8xf32> -> vector<8x8xf32>
    %258 = arith.truncf %257 : vector<8x8xf32> to vector<8x8xbf16>
    %c2_94 = arith.constant 2 : index
    %c0_95 = arith.constant 0 : index
    %c0_96 = arith.constant 0 : index
    %259 = vector.load %arg15[%c2_94, %c0_95, %c0_96] : memref<4x8x32xbf16, #tpu.memory_space<vmem>>, vector<1x8x32xbf16>
    %260 = vector.shape_cast %259 : vector<1x8x32xbf16> to vector<8x32xbf16>
    %cst_97 = arith.constant dense<0.000000e+00> : vector<8x32xf32>
    %261 = tpu.matmul %258, %260, %cst_97 {dimension_numbers = #tpu.dot_dimension_numbers<[1], [0], [0], [1], [0, 0, 1, 1], [], []>} : vector<8x8xbf16>, vector<8x32xbf16>, vector<8x32xf32> -> vector<8x32xf32>
    %262 = arith.addf %234, %261 : vector<8x32xf32>
    %263 = vector.extract_strided_slice %171 {offsets = [0, 24], sizes = [8, 8], strides = [1, 1]} : vector<8x32xf32> to vector<8x8xf32>
    %cst_98 = arith.constant 0.353553385 : f32
    %264 = vector.broadcast %cst_98 : f32 to vector<8x8xf32>
    %265 = arith.mulf %263, %264 : vector<8x8xf32>
    %266 = arith.truncf %265 : vector<8x8xf32> to vector<8x8xbf16>
    %267 = vector.extract_strided_slice %178 {offsets = [0, 24], sizes = [8, 8], strides = [1, 1]} : vector<8x32xf32> to vector<8x8xf32>
    %268 = arith.truncf %267 : vector<8x8xf32> to vector<8x8xbf16>
    %269 = vector.extract_strided_slice %179 {offsets = [0, 24], sizes = [8, 8], strides = [1, 1]} : vector<8x32xf32> to vector<8x8xf32>
    %270 = arith.truncf %269 : vector<8x8xf32> to vector<8x8xbf16>
    %cst_99 = arith.constant dense<0.000000e+00> : vector<8x8xf32>
    %271 = tpu.matmul %266, %268, %cst_99 {dimension_numbers = #tpu.dot_dimension_numbers<[1], [1], [0], [0], [0, 0, 1, 0], [], []>} : vector<8x8xbf16>, vector<8x8xbf16>, vector<8x8xf32> -> vector<8x8xf32>
    %272 = vector.broadcast %7 : vector<1x8xf32> to vector<8x8xf32>
    %273 = arith.addf %271, %272 : vector<8x8xf32>
    %cst_100 = arith.constant dense<0xFF800000> : vector<8xf32>
    %274 = vector.multi_reduction <maximumf>, %273, %cst_100 [1] : vector<8x8xf32> to vector<8xf32>
    %275 = vector.shape_cast %274 : vector<8xf32> to vector<8x1xf32>
    %276 = vector.broadcast %275 : vector<8x1xf32> to vector<8x8xf32>
    %277 = arith.subf %273, %276 : vector<8x8xf32>
    %278 = math.exp %277 : vector<8x8xf32>
    %cst_101 = arith.constant dense<0.000000e+00> : vector<8xf32>
    %279 = vector.multi_reduction <add>, %278, %cst_101 [1] : vector<8x8xf32> to vector<8xf32>
    %280 = vector.shape_cast %279 : vector<8xf32> to vector<8x1xf32>
    %281 = tpu.reciprocal %280 {approx = true} : vector<8x1xf32> -> vector<8x1xf32>
    %282 = vector.broadcast %281 : vector<8x1xf32> to vector<8x8xf32>
    %283 = arith.mulf %278, %282 : vector<8x8xf32>
    %284 = arith.truncf %283 : vector<8x8xf32> to vector<8x8xbf16>
    %cst_102 = arith.constant dense<0.000000e+00> : vector<8x8xf32>
    %285 = tpu.matmul %284, %270, %cst_102 {dimension_numbers = #tpu.dot_dimension_numbers<[1], [0], [0], [1], [0, 0, 1, 1], [], []>} : vector<8x8xbf16>, vector<8x8xbf16>, vector<8x8xf32> -> vector<8x8xf32>
    %286 = arith.truncf %285 : vector<8x8xf32> to vector<8x8xbf16>
    %c3_103 = arith.constant 3 : index
    %c0_104 = arith.constant 0 : index
    %c0_105 = arith.constant 0 : index
    %287 = vector.load %arg15[%c3_103, %c0_104, %c0_105] : memref<4x8x32xbf16, #tpu.memory_space<vmem>>, vector<1x8x32xbf16>
    %288 = vector.shape_cast %287 : vector<1x8x32xbf16> to vector<8x32xbf16>
    %cst_106 = arith.constant dense<0.000000e+00> : vector<8x32xf32>
    %289 = tpu.matmul %286, %288, %cst_106 {dimension_numbers = #tpu.dot_dimension_numbers<[1], [0], [0], [1], [0, 0, 1, 1], [], []>} : vector<8x8xbf16>, vector<8x32xbf16>, vector<8x32xf32> -> vector<8x32xf32>
    %290 = arith.addf %262, %289 : vector<8x32xf32>
    %c0_107 = arith.constant 0 : index
    %c0_108 = arith.constant 0 : index
    %291 = vector.load %arg16[%c0_107, %c0_108] : memref<1x32xf32, #tpu.memory_space<vmem>>, vector<1x32xf32>
    %292 = vector.broadcast %291 : vector<1x32xf32> to vector<8x32xf32>
    %293 = arith.addf %290, %292 : vector<8x32xf32>
    %294 = arith.addf %165, %293 : vector<8x32xf32>
    %c0_109 = arith.constant 0 : index
    %c0_110 = arith.constant 0 : index
    %295 = vector.load %arg17[%c0_109, %c0_110] : memref<1x32xf32, #tpu.memory_space<vmem>>, vector<1x32xf32>
    %c0_111 = arith.constant 0 : index
    %c0_112 = arith.constant 0 : index
    %296 = vector.load %arg18[%c0_111, %c0_112] : memref<1x32xf32, #tpu.memory_space<vmem>>, vector<1x32xf32>
    %cst_113 = arith.constant dense<0.000000e+00> : vector<8xf32>
    %297 = vector.multi_reduction <add>, %294, %cst_113 [1] : vector<8x32xf32> to vector<8xf32>
    %298 = vector.shape_cast %297 : vector<8xf32> to vector<8x1xf32>
    %cst_114 = arith.constant 3.200000e+01 : f32
    %299 = vector.broadcast %cst_114 : f32 to vector<8x1xf32>
    %300 = arith.divf %298, %299 : vector<8x1xf32>
    %301 = vector.broadcast %300 : vector<8x1xf32> to vector<8x32xf32>
    %302 = arith.subf %294, %301 : vector<8x32xf32>
    %303 = arith.mulf %302, %302 : vector<8x32xf32>
    %cst_115 = arith.constant dense<0.000000e+00> : vector<8xf32>
    %304 = vector.multi_reduction <add>, %303, %cst_115 [1] : vector<8x32xf32> to vector<8xf32>
    %305 = vector.shape_cast %304 : vector<8xf32> to vector<8x1xf32>
    %cst_116 = arith.constant 3.200000e+01 : f32
    %306 = vector.broadcast %cst_116 : f32 to vector<8x1xf32>
    %307 = arith.divf %305, %306 : vector<8x1xf32>
    %308 = vector.broadcast %300 : vector<8x1xf32> to vector<8x32xf32>
    %309 = arith.subf %294, %308 : vector<8x32xf32>
    %cst_117 = arith.constant 9.99999974E-6 : f32
    %310 = vector.broadcast %cst_117 : f32 to vector<8x1xf32>
    %311 = arith.addf %307, %310 : vector<8x1xf32>
    %312 = math.rsqrt %311 : vector<8x1xf32>
    %313 = vector.broadcast %312 : vector<8x1xf32> to vector<8x32xf32>
    %314 = arith.mulf %309, %313 : vector<8x32xf32>
    %315 = vector.broadcast %295 : vector<1x32xf32> to vector<8x32xf32>
    %316 = arith.mulf %314, %315 : vector<8x32xf32>
    %317 = vector.broadcast %296 : vector<1x32xf32> to vector<8x32xf32>
    %318 = arith.addf %316, %317 : vector<8x32xf32>
    %c0_118 = arith.constant 0 : index
    %c0_119 = arith.constant 0 : index
    %319 = vector.load %arg19[%c0_118, %c0_119] : memref<32x128xbf16, #tpu.memory_space<vmem>>, vector<32x128xbf16>
    %c0_120 = arith.constant 0 : index
    %c0_121 = arith.constant 0 : index
    %320 = vector.load %arg20[%c0_120, %c0_121] : memref<1x128xf32, #tpu.memory_space<vmem>>, vector<1x128xf32>
    %c0_122 = arith.constant 0 : index
    %c0_123 = arith.constant 0 : index
    %321 = vector.load %arg21[%c0_122, %c0_123] : memref<128x32xbf16, #tpu.memory_space<vmem>>, vector<128x32xbf16>
    %c0_124 = arith.constant 0 : index
    %c0_125 = arith.constant 0 : index
    %322 = vector.load %arg22[%c0_124, %c0_125] : memref<1x32xf32, #tpu.memory_space<vmem>>, vector<1x32xf32>
    %323 = arith.truncf %318 : vector<8x32xf32> to vector<8x32xbf16>
    %cst_126 = arith.constant dense<0.000000e+00> : vector<8x128xf32>
    %324 = tpu.matmul %323, %319, %cst_126 {dimension_numbers = #tpu.dot_dimension_numbers<[1], [0], [0], [1], [0, 0, 1, 1], [], []>} : vector<8x32xbf16>, vector<32x128xbf16>, vector<8x128xf32> -> vector<8x128xf32>
    %325 = vector.broadcast %320 : vector<1x128xf32> to vector<8x128xf32>
    %326 = arith.addf %324, %325 : vector<8x128xf32>
    %cst_127 = arith.constant 0.000000e+00 : f32
    %327 = vector.broadcast %cst_127 : f32 to vector<8x128xf32>
    %328 = arith.maximumf %326, %327 : vector<8x128xf32>
    %329 = arith.truncf %328 : vector<8x128xf32> to vector<8x128xbf16>
    %cst_128 = arith.constant dense<0.000000e+00> : vector<8x32xf32>
    %330 = tpu.matmul %329, %321, %cst_128 {dimension_numbers = #tpu.dot_dimension_numbers<[1], [0], [0], [1], [0, 0, 1, 1], [], []>} : vector<8x128xbf16>, vector<128x32xbf16>, vector<8x32xf32> -> vector<8x32xf32>
    %331 = vector.broadcast %322 : vector<1x32xf32> to vector<8x32xf32>
    %332 = arith.addf %330, %331 : vector<8x32xf32>
    %333 = arith.addf %318, %332 : vector<8x32xf32>
    %c0_129 = arith.constant 0 : index
    %c0_130 = arith.constant 0 : index
    %334 = vector.load %arg23[%c0_129, %c0_130] : memref<1x32xf32, #tpu.memory_space<vmem>>, vector<1x32xf32>
    %c0_131 = arith.constant 0 : index
    %c0_132 = arith.constant 0 : index
    %335 = vector.load %arg24[%c0_131, %c0_132] : memref<1x32xf32, #tpu.memory_space<vmem>>, vector<1x32xf32>
    %cst_133 = arith.constant dense<0.000000e+00> : vector<8xf32>
    %336 = vector.multi_reduction <add>, %333, %cst_133 [1] : vector<8x32xf32> to vector<8xf32>
    %337 = vector.shape_cast %336 : vector<8xf32> to vector<8x1xf32>
    %cst_134 = arith.constant 3.200000e+01 : f32
    %338 = vector.broadcast %cst_134 : f32 to vector<8x1xf32>
    %339 = arith.divf %337, %338 : vector<8x1xf32>
    %340 = vector.broadcast %339 : vector<8x1xf32> to vector<8x32xf32>
    %341 = arith.subf %333, %340 : vector<8x32xf32>
    %342 = arith.mulf %341, %341 : vector<8x32xf32>
    %cst_135 = arith.constant dense<0.000000e+00> : vector<8xf32>
    %343 = vector.multi_reduction <add>, %342, %cst_135 [1] : vector<8x32xf32> to vector<8xf32>
    %344 = vector.shape_cast %343 : vector<8xf32> to vector<8x1xf32>
    %cst_136 = arith.constant 3.200000e+01 : f32
    %345 = vector.broadcast %cst_136 : f32 to vector<8x1xf32>
    %346 = arith.divf %344, %345 : vector<8x1xf32>
    %347 = vector.broadcast %339 : vector<8x1xf32> to vector<8x32xf32>
    %348 = arith.subf %333, %347 : vector<8x32xf32>
    %cst_137 = arith.constant 9.99999974E-6 : f32
    %349 = vector.broadcast %cst_137 : f32 to vector<8x1xf32>
    %350 = arith.addf %346, %349 : vector<8x1xf32>
    %351 = math.rsqrt %350 : vector<8x1xf32>
    %352 = vector.broadcast %351 : vector<8x1xf32> to vector<8x32xf32>
    %353 = arith.mulf %348, %352 : vector<8x32xf32>
    %354 = vector.broadcast %334 : vector<1x32xf32> to vector<8x32xf32>
    %355 = arith.mulf %353, %354 : vector<8x32xf32>
    %356 = vector.broadcast %335 : vector<1x32xf32> to vector<8x32xf32>
    %357 = arith.addf %355, %356 : vector<8x32xf32>
    %c0_138 = arith.constant 0 : index
    %c0_139 = arith.constant 0 : index
    %c0_140 = arith.constant 0 : index
    %358 = vector.load %arg25[%c0_138, %c0_139, %c0_140] : memref<1x8x32xf32, #tpu.memory_space<vmem>>, vector<1x8x32xf32>
    %359 = vector.shape_cast %358 : vector<1x8x32xf32> to vector<8x32xf32>
    %360 = vector.shape_cast %357 : vector<8x32xf32> to vector<1x8x32xf32>
    tpu.vector_store %arg25[%c0_138, %c0_139, %c0_140], %360 {strides = array<i32>} : memref<1x8x32xf32, #tpu.memory_space<vmem>>, vector<1x8x32xf32>,
    return
  }
  func.func @transform_0(%arg0: i32) -> (i32, i32, i32) {
    %c0_i32 = arith.constant 0 : i32
    %c0_i32_0 = arith.constant 0 : i32
    %c0_i32_1 = arith.constant 0 : i32
    return %arg0, %c0_i32, %c0_i32_0 : i32, i32, i32
  }
  func.func @transform_1(%arg0: i32) -> (i32, i32, i32) {
    %c0_i32 = arith.constant 0 : i32
    %c0_i32_0 = arith.constant 0 : i32
    %c0_i32_1 = arith.constant 0 : i32
    return %arg0, %c0_i32, %c0_i32_0 : i32, i32, i32
  }
  func.func @transform_2(%arg0: i32) -> (i32, i32, i32) {
    %c0_i32 = arith.constant 0 : i32
    %c0_i32_0 = arith.constant 0 : i32
    %c0_i32_1 = arith.constant 0 : i32
    return %arg0, %c0_i32, %c0_i32_0 : i32, i32, i32
  }
  func.func @transform_3(%arg0: i32) -> (i32, i32, i32) {
    %c0_i32 = arith.constant 0 : i32
    %c0_i32_0 = arith.constant 0 : i32
    %c0_i32_1 = arith.constant 0 : i32
    return %arg0, %c0_i32, %c0_i32_0 : i32, i32, i32
  }
  func.func @transform_4(%arg0: i32) -> (i32, i32) {
    %c0_i32 = arith.constant 0 : i32
    %c0_i32_0 = arith.constant 0 : i32
    %c0_i32_1 = arith.constant 0 : i32
    return %c0_i32, %c0_i32_0 : i32, i32
  }
  func.func @transform_5(%arg0: i32) -> (i32, i32) {
    %c0_i32 = arith.constant 0 : i32
    %c0_i32_0 = arith.constant 0 : i32
    %c0_i32_1 = arith.constant 0 : i32
    return %c0_i32, %c0_i32_0 : i32, i32
  }
  func.func @transform_6(%arg0: i32) -> (i32, i32, i32) {
    %c0_i32 = arith.constant 0 : i32
    %c0_i32_0 = arith.constant 0 : i32
    %c0_i32_1 = arith.constant 0 : i32
    %c0_i32_2 = arith.constant 0 : i32
    return %c0_i32, %c0_i32_0, %c0_i32_1 : i32, i32, i32
  }
  func.func @transform_7(%arg0: i32) -> (i32, i32) {
    %c0_i32 = arith.constant 0 : i32
    %c0_i32_0 = arith.constant 0 : i32
    %c0_i32_1 = arith.constant 0 : i32
    return %c0_i32, %c0_i32_0 : i32, i32
  }
  func.func @transform_8(%arg0: i32) -> (i32, i32) {
    %c0_i32 = arith.constant 0 : i32
    %c0_i32_0 = arith.constant 0 : i32
    %c0_i32_1 = arith.constant 0 : i32
    return %c0_i32, %c0_i32_0 : i32, i32
  }
  func.func @transform_9(%arg0: i32) -> (i32, i32) {
    %c0_i32 = arith.constant 0 : i32
    %c0_i32_0 = arith.constant 0 : i32
    %c0_i32_1 = arith.constant 0 : i32
    return %c0_i32, %c0_i32_0 : i32, i32
  }
  func.func @transform_10(%arg0: i32) -> (i32, i32) {
    %c0_i32 = arith.constant 0 : i32
    %c0_i32_0 = arith.constant 0 : i32
    %c0_i32_1 = arith.constant 0 : i32
    return %c0_i32, %c0_i32_0 : i32, i32
  }
  func.func @transform_11(%arg0: i32) -> (i32, i32) {
    %c0_i32 = arith.constant 0 : i32
    %c0_i32_0 = arith.constant 0 : i32
    %c0_i32_1 = arith.constant 0 : i32
    return %c0_i32, %c0_i32_0 : i32, i32
  }
  func.func @transform_12(%arg0: i32) -> (i32, i32) {
    %c0_i32 = arith.constant 0 : i32
    %c0_i32_0 = arith.constant 0 : i32
    %c0_i32_1 = arith.constant 0 : i32
    return %c0_i32, %c0_i32_0 : i32, i32
  }
  func.func @transform_13(%arg0: i32) -> (i32, i32) {
    %c0_i32 = arith.constant 0 : i32
    %c0_i32_0 = arith.constant 0 : i32
    %c0_i32_1 = arith.constant 0 : i32
    return %c0_i32, %c0_i32_0 : i32, i32
  }
  func.func @transform_14(%arg0: i32) -> (i32, i32, i32) {
    %c0_i32 = arith.constant 0 : i32
    %c0_i32_0 = arith.constant 0 : i32
    %c0_i32_1 = arith.constant 0 : i32
    %c0_i32_2 = arith.constant 0 : i32
    return %c0_i32, %c0_i32_0, %c0_i32_1 : i32, i32, i32
  }
  func.func @transform_15(%arg0: i32) -> (i32, i32) {
    %c0_i32 = arith.constant 0 : i32
    %c0_i32_0 = arith.constant 0 : i32
    %c0_i32_1 = arith.constant 0 : i32
    return %c0_i32, %c0_i32_0 : i32, i32
  }
  func.func @transform_16(%arg0: i32) -> (i32, i32) {
    %c0_i32 = arith.constant 0 : i32
    %c0_i32_0 = arith.constant 0 : i32
    %c0_i32_1 = arith.constant 0 : i32
    return %c0_i32, %c0_i32_0 : i32, i32
  }
  func.func @transform_17(%arg0: i32) -> (i32, i32) {
    %c0_i32 = arith.constant 0 : i32
    %c0_i32_0 = arith.constant 0 : i32
    %c0_i32_1 = arith.constant 0 : i32
    return %c0_i32, %c0_i32_0 : i32, i32
  }
  func.func @transform_18(%arg0: i32) -> (i32, i32) {
    %c0_i32 = arith.constant 0 : i32
    %c0_i32_0 = arith.constant 0 : i32
    %c0_i32_1 = arith.constant 0 : i32
    return %c0_i32, %c0_i32_0 : i32, i32
  }
  func.func @transform_19(%arg0: i32) -> (i32, i32) {
    %c0_i32 = arith.constant 0 : i32
    %c0_i32_0 = arith.constant 0 : i32
    %c0_i32_1 = arith.constant 0 : i32
    return %c0_i32, %c0_i32_0 : i32, i32
  }
  func.func @transform_20(%arg0: i32) -> (i32, i32) {
    %c0_i32 = arith.constant 0 : i32
    %c0_i32_0 = arith.constant 0 : i32
    %c0_i32_1 = arith.constant 0 : i32
    return %c0_i32, %c0_i32_0 : i32, i32
  }
  func.func @transform_21(%arg0: i32) -> (i32, i32) {
    %c0_i32 = arith.constant 0 : i32
    %c0_i32_0 = arith.constant 0 : i32
    %c0_i32_1 = arith.constant 0 : i32
    return %c0_i32, %c0_i32_0 : i32, i32
  }
  func.func @transform_22(%arg0: i32) -> (i32, i32) {
    %c0_i32 = arith.constant 0 : i32
    %c0_i32_0 = arith.constant 0 : i32
    %c0_i32_1 = arith.constant 0 : i32
    return %c0_i32, %c0_i32_0 : i32, i32
  }
  func.func @transform_23(%arg0: i32) -> (i32, i32) {
    %c0_i32 = arith.constant 0 : i32
    %c0_i32_0 = arith.constant 0 : i32
    %c0_i32_1 = arith.constant 0 : i32
    return %c0_i32, %c0_i32_0 : i32, i32
  }
  func.func @transform_24(%arg0: i32) -> (i32, i32, i32) {
    %c0_i32 = arith.constant 0 : i32
    %c0_i32_0 = arith.constant 0 : i32
    %c0_i32_1 = arith.constant 0 : i32
    return %arg0, %c0_i32, %c0_i32_0 : i32, i32, i32
  }
}

</mosaic_0001>

<llo_original>
// kernel: transformer_forward.9
$region0: #{transformer_forward.9}
  #allocation0 [shape = 'u32[]', space=smem, size = 0x4, offset = 0x4, fixed_abs, tag = 'smem constant byte address 0x4 - core index']
  #allocation1 [shape = 'u32[72,128]{1,0:T(1,128)}', space=vmem, size = 0x9000, scoped, tag = 'internal scratch']
  %s0 = inlined_call_operand.vmem [shape: f32[2,8,32], index: 0, kind: input, shape index: {}]
  %s1 = inlined_call_operand.vmem [shape: bf16[32,64], index: 1, kind: input, shape index: {}]
  %s2 = inlined_call_operand.hbm [shape: f32[1,64], index: 2, kind: input, shape index: {}]
  %s3 = inlined_call_operand.hbm [shape: f32[2,8,64], index: 3, kind: output, shape index: {}]
  %s4 = sld [smem:[#allocation0]]
  $region49: #{transformer_forward.9} parent=0
    _
  %s6 = ssub.s32 1, %s4
  %s7 = scalar_select 0, %s6, %s4
  $region1: #{transformer_forward.9} parent=0
    #allocation2 [shape = 'u8[512]{0}', space=vmem, size = 0x400, scoped, tag = 'input window, operand 2, single buffered']
    #allocation3 [shape = 's32[2]{0}', space=sflag, size = 0x8, scoped, tag = 'scoped memory for transformer_forward.9']
    #allocation4 [shape = 's32[2]{0}', space=sflag, size = 0x8, scoped, tag = 'scoped memory for transformer_forward.9']
    #allocation5 [shape = 'u8[8192]{0}', space=vmem, size = 0x2000, scoped, tag = 'output window, operand 0']
    %8 = vsyncpa [#allocation3], 0
    %9 = vsyncpa [#allocation4], 0
    %s10 = scalar_lea.sflag [#allocation4], 1
    %11 = vsyncpa %s10, 0
    loop: start=0, step=1, limit=4
    $region2: #{transformer_forward.9} parent=1 // loop_pre_header
      _
    $region3: #{transformer_forward.9} parent=1 // loop_header
      %s13 = sphi 0, %s17
      %p14 = scmp.ge.s32.totalorder %s13, 4
      %s23 = sphi 0, %s25
      %s26 = sphi 0, %s23
      %s27 = sphi 0, %s26
      %s43 = sphi 0, %s27
      %s47 = sphi 0, %s47
      %s49 = sphi 0, %s47
      %s50 = sphi 0, %s49
      %s64 = sphi 0, %s50
      %s68 = sphi 0, %s68
      %s70 = sphi 0, %s68
      %s71 = sphi 0, %s70
      %s85 = sphi 0, %s71
      %s91 = sphi 0, %s93
      %s94 = sphi 0, %s91
      %s95 = sphi 0, %s94
      %s111 = sphi 0, %s95
    $region4: #{transformer_forward.9} parent=1 // loop_header_branch
      %16 = sbr.rel (%p14) target = $region8
    $region5: #{transformer_forward.9} parent=1 // loop_body
      %s18 = ssub.s32 %s13, 1
      %s19 = ssub.s32 %s13, 2
      %s20 = sadd.s32 %s13, 1
      %s21 = ssub.s32 %s13, %s20
      %p22 = scmp.eq.s32.totalorder %s21, 0
      %s24 = sadd.s32 %s23, 1
      %s25 = scalar_select %p22, %s23, %s24
      %p28 = pneg %p22
      %p29 = scmp.eq.s32.totalorder %s13, 1
      %p30 = por %p28, %p29
      %p31 = scmp.ne.s32.totalorder %s23, %s26
      %p32 = scmp.eq.s32.totalorder %s13, 0
      %p33 = por %p31, %p32
      %p34 = scmp.ne.s32.totalorder %s23, %s26
      %p35 = scmp.eq.s32.totalorder %s18, 1
      %p36 = por %p34, %p35
      %p37 = scmp.ne.s32.totalorder %s26, %s27
      %p38 = scmp.eq.s32.totalorder %s18, 0
      %p39 = por %p37, %p38
      %p40 = scmp.ne.s32.totalorder %s26, %s27
      %p41 = scmp.eq.s32.totalorder %s19, 1
      %p42 = por %p40, %p41
      %p44 = scmp.ne.s32.totalorder %s27, %s43
      %p45 = scmp.eq.s32.totalorder %s19, 0
      %p46 = por %p44, %p45
      %s48 = sadd.s32 %s47, 1
      %p51 = scmp.eq.s32.totalorder %s13, 1
      %p52 = scmp.ne.s32.totalorder %s47, %s49
      %p53 = scmp.eq.s32.totalorder %s13, 0
      %p54 = por %p52, %p53
      %p55 = scmp.ne.s32.totalorder %s47, %s49
      %p56 = scmp.eq.s32.totalorder %s18, 1
      %p57 = por %p55, %p56
      %p58 = scmp.ne.s32.totalorder %s49, %s50
      %p59 = scmp.eq.s32.totalorder %s18, 0
      %p60 = por %p58, %p59
      %p61 = scmp.ne.s32.totalorder %s49, %s50
      %p62 = scmp.eq.s32.totalorder %s19, 1
      %p63 = por %p61, %p62
      %p65 = scmp.ne.s32.totalorder %s50, %s64
      %p66 = scmp.eq.s32.totalorder %s19, 0
      %p67 = por %p65, %p66
      %s69 = sadd.s32 %s68, 1
      %p72 = scmp.eq.s32.totalorder %s13, 1
      %p73 = scmp.ne.s32.totalorder %s68, %s70
      %p74 = scmp.eq.s32.totalorder %s13, 0
      %p75 = por %p73, %p74
      %p76 = scmp.ne.s32.totalorder %s68, %s70
      %p77 = scmp.eq.s32.totalorder %s18, 1
      %p78 = por %p76, %p77
      %p79 = scmp.ne.s32.totalorder %s70, %s71
      %p80 = scmp.eq.s32.totalorder %s18, 0
      %p81 = por %p79, %p80
      %p82 = scmp.ne.s32.totalorder %s70, %s71
      %p83 = scmp.eq.s32.totalorder %s19, 1
      %p84 = por %p82, %p83
      %p86 = scmp.ne.s32.totalorder %s71, %s85
      %p87 = scmp.eq.s32.totalorder %s19, 0
      %p88 = por %p86, %p87
      %s89 = ssub.s32 %s13, %s20
      %p90 = scmp.eq.s32.totalorder %s89, 0
      %s92 = sadd.s32 %s91, 1
      %s93 = scalar_select %p90, %s91, %s92
      %p96 = pneg %p90
      %p97 = scmp.eq.s32.totalorder %s13, 1
      %p98 = por %p96, %p97
      %p99 = scmp.ne.s32.totalorder %s91, %s94
      %p100 = scmp.eq.s32.totalorder %s13, 0
      %p101 = por %p99, %p100
      %p102 = scmp.ne.s32.totalorder %s91, %s94
      %p103 = scmp.eq.s32.totalorder %s18, 1
      %p104 = por %p102, %p103
      %p105 = scmp.ne.s32.totalorder %s94, %s95
      %p106 = scmp.eq.s32.totalorder %s18, 0
      %p107 = por %p105, %p106
      %p108 = scmp.ne.s32.totalorder %s94, %s95
      %p109 = scmp.eq.s32.totalorder %s19, 1
      %p110 = por %p108, %p109
      %p112 = scmp.ne.s32.totalorder %s95, %s111
      %p113 = scmp.eq.s32.totalorder %s19, 0
      %p114 = por %p112, %p113
      %p115 = scmp.le.s32.totalorder 1, %s13
      %p116 = scmp.lt.s32.totalorder %s13, 3
      %p117 = pnand %p115, %p116
      %p118 = pneg %p117
      // Predicated region
      $region9: #{transformer_forward.9} parent=5 // pred_check
        _
      $region10: #{transformer_forward.9} parent=5 // pred_check_branch
        %120 = sbr.rel (%p117) target = $region12
      $region11: #{transformer_forward.9} parent=5 // pred_region
        %s121 = ssub.s32 %s13, 1
        // Predicated region
        $region13: #{transformer_forward.9} parent=11 // pred_check
          %p122 = pneg %p60
        $region14: #{transformer_forward.9} parent=11 // pred_check_branch
          %124 = sbr.rel (%p122) target = $region16
        $region15: #{transformer_forward.9} parent=11 // pred_region
          _
        $region16: #{transformer_forward.9} parent=11 // pred_fallthru
          _
        // Predicated region
        $region17: #{transformer_forward.9} parent=11 // pred_check
          %p125 = pneg %p81
        $region18: #{transformer_forward.9} parent=11 // pred_check_branch
          %127 = sbr.rel (%p125) target = $region20
        $region19: #{transformer_forward.9} parent=11 // pred_region
          %129 = vsyncadd [#allocation3], 0
          %s131 = sshll.u32 %s2, 4
          %s132 = int_to_ptr.hbm [resolvable:$true] %s131
          %s133 = sshll.u32 [#allocation2], 4
          %s134 = int_to_ptr.vmem [resolvable:$true] %s133
          %136 = dma.hbm_to_vmem [thread:$0]  %s132, 16, %s134, [#allocation3]
        $region20: #{transformer_forward.9} parent=11 // pred_fallthru
          _
      $region12: #{transformer_forward.9} parent=5 // pred_fallthru
        _
      %p137 = scmp.lt.s32.totalorder %s13, 2
      // Predicated region
      $region21: #{transformer_forward.9} parent=5 // pred_check
        %p138 = pneg %p137
      $region22: #{transformer_forward.9} parent=5 // pred_check_branch
        %140 = sbr.rel (%p138) target = $region24
      $region23: #{transformer_forward.9} parent=5 // pred_region
        // Predicated region
        $region25: #{transformer_forward.9} parent=23 // pred_check
          %p141 = pneg %p33
        $region26: #{transformer_forward.9} parent=23 // pred_check_branch
          %143 = sbr.rel (%p141) target = $region28
        $region27: #{transformer_forward.9} parent=23 // pred_region
          %p144 = scmp.lt.s32.totalorder %s13, 1
          %s145 = scalar_select %p144, %s13, 1
          %s146 = smul.addr %s145, 8
          %s147 = scalar_lea.vmem %s0, %s146
        $region28: #{transformer_forward.9} parent=23 // pred_fallthru
          _
      $region24: #{transformer_forward.9} parent=5 // pred_fallthru
        _
      %p148 = scmp.le.s32.totalorder 1, %s13
      %p149 = scmp.lt.s32.totalorder %s13, 3
      %p150 = pnand %p148, %p149
      %p151 = pneg %p150
      // Predicated region
      $region29: #{transformer_forward.9} parent=5 // pred_check
        _
      $region30: #{transformer_forward.9} parent=5 // pred_check_branch
        %153 = sbr.rel (%p150) target = $region32
      $region31: #{transformer_forward.9} parent=5 // pred_region
        %s154 = ssub.s32 %s13, 1
        // Predicated region
        $region33: #{transformer_forward.9} parent=31 // pred_check
          %p155 = pneg %p81
        $region34: #{transformer_forward.9} parent=31 // pred_check_branch
          %157 = sbr.rel (%p155) target = $region36
        $region35: #{transformer_forward.9} parent=31 // pred_region
          %159 = dma.done [#allocation3], 16
        $region36: #{transformer_forward.9} parent=31 // pred_fallthru
          _
        %p160 = scmp.lt.s32.totalorder %s18, 1
        %s161 = scalar_select %p160, %s18, 1
        %s162 = smul.addr %s161, 8
        %s163 = scalar_lea.vmem %s0, %s162
        %p164 = pneg %p39
        %p165 = pneg %p36
        %p166 = pneg %p60
        %p167 = pneg %p57
        %p168 = pneg %p81
        %p169 = pneg %p78
        %p170 = pneg %p107
        %p171 = pneg %p104
        %s172 = sand.u32 %s94, 1
        %s173 = scalar_lea.sflag [#allocation4], %s172
        %s174 = sand.u32 %s94, 1
        %s175 = smul.addr %s174, 8
        %s176 = scalar_lea.vmem [#allocation5], %s175
        %p177 = scmp.lt.s32.totalorder %s18, 1
        %s178 = scalar_select %p177, %s18, 1
        %s179 = smul.addr %s178, 8
        %s180 = scalar_lea.vmem %s0, %s179
        %v182 = vld [vmem:[%s180] sm:$0xff]
        %v183 = vpack.c.bf16 %v182, %v182
        %v184 = vld [vmem:[%s1] sm:$0xf]
        %v185 = vld [vmem:[%s1 + $0x4] sm:$0xf]
        %v186 = vld [vmem:[%s1 + $0x8] sm:$0xf]
        %v187 = vld [vmem:[%s1 + $0xc] sm:$0xf]
        %v188 = vld [vmem:[#allocation2] sm:$0x1]
        %v190 = vperm.slane %v188, 0
        %v196 = vunpack.c.l.b16 %v184
        %v197 = vunpack.c.l.b16 %v185
        %v198 = vunpack.c.l.b16 %v186
        %v199 = vunpack.c.l.b16 %v187
        %v200 = vpack.c.b16 %v197, %v196
        %v201 = vpack.c.b16 %v199, %v198
        %vm204 = vcmask 261120
        %v206 = vsel %vm204, %v183, 0
        %208 = vmatpush.bf16.msra.mxu0 0
        %209 = vmatpush.bf16.msra.mxu0 0
        %210 = vmatpush.bf16.msra.mxu0 0
        %211 = vmatpush.bf16.msra.mxu0 0
        %212 = vmatpush.bf16.msra.mxu0 0
        %213 = vmatpush.bf16.msra.mxu0 0
        %214 = vmatpush.bf16.msra.mxu0 %v201
        %215 = vmatpush.bf16.msra.mxu0 %v200
        %216 = vmatmul.bf16.gmra.mxu0 %v206
        %v217 = vpop.f32.mrf.mxu0
        %v218 = vadd.f32 %v190, %v217
        %v219 = vpop.f32.mrf.mxu0
        %220 = vdwg.mxu0
        %vm221 = vcmask 523264
        %222 = vst.msk [vmem:[%s176] sm:$0xff] %vm221, %v218
        %s223 = sand.u32 %s94, 1
        %s224 = scalar_lea.sflag [#allocation4], %s223
        %s225 = sand.u32 %s94, 1
        %s226 = smul.addr %s225, 8
        %s227 = scalar_lea.vmem [#allocation5], %s226
        // Predicated region
        $region37: #{transformer_forward.9} parent=31 // pred_check
          %p228 = pneg %p104
        $region38: #{transformer_forward.9} parent=31 // pred_check_branch
          %230 = sbr.rel (%p228) target = $region40
        $region39: #{transformer_forward.9} parent=31 // pred_region
          %232 = vsyncadd %s224, 0
          %s233 = smul.addr %s18, 8
          %s234 = scalar_lea.hbm %s3, %s233
          %s236 = sshll.u32 %s227, 4
          %s237 = int_to_ptr.vmem [resolvable:$true] %s236
          %s238 = sshll.u32 %s234, 4
          %s239 = int_to_ptr.hbm [resolvable:$true] %s238
          %241 = dma.vmem_to_hbm [thread:$0]  %s237, 128, %s239, %s224
        $region40: #{transformer_forward.9} parent=31 // pred_fallthru
          _
      $region32: #{transformer_forward.9} parent=5 // pred_fallthru
        _
      %p242 = scmp.le.s32.totalorder 2, %s13
      // Predicated region
      $region41: #{transformer_forward.9} parent=5 // pred_check
        %p243 = pneg %p242
      $region42: #{transformer_forward.9} parent=5 // pred_check_branch
        %245 = sbr.rel (%p243) target = $region44
      $region43: #{transformer_forward.9} parent=5 // pred_region
        %s246 = ssub.s32 %s13, 2
        // Predicated region
        $region45: #{transformer_forward.9} parent=43 // pred_check
          %p247 = pneg %p110
        $region46: #{transformer_forward.9} parent=43 // pred_check_branch
          %249 = sbr.rel (%p247) target = $region48
        $region47: #{transformer_forward.9} parent=43 // pred_region
          %s250 = sand.u32 %s95, 1
          %s251 = scalar_lea.sflag [#allocation4], %s250
          %s252 = sand.u32 %s95, 1
          %s253 = smul.addr %s252, 8
          %s254 = scalar_lea.vmem [#allocation5], %s253
          %256 = dma.done %s251, 128
        $region48: #{transformer_forward.9} parent=43 // pred_fallthru
          _
      $region44: #{transformer_forward.9} parent=5 // pred_fallthru
        _
    $region6: #{transformer_forward.9} parent=1 // loop_footer
      %s17 = sadd.s32 1, %s13
    $region7: #{transformer_forward.9} parent=1 // loop_footer_branch
      %12 = sbr.rel target = $region3
    $region8: #{transformer_forward.9} parent=1 // loop_exit
      _
    %257 = vsyncpa [#allocation3], 1
    %s258 = scalar_lea.sflag [#allocation3], 1
    %259 = vsyncpa %s258, 1
    %260 = vsyncpa [#allocation4], 1
    %s261 = scalar_lea.sflag [#allocation4], 1
    %262 = vsyncpa %s261, 1

// kernel: transformer_forward.5
$region0: #{transformer_forward.5}
  #allocation0 [shape = 'u32[]', space=smem, size = 0x4, offset = 0x4, fixed_abs, tag = 'smem constant byte address 0x4 - core index']
  #allocation1 [shape = 'u32[72,128]{1,0:T(1,128)}', space=vmem, size = 0x9000, scoped, tag = 'internal scratch']
  %s0 = inlined_call_operand.vmem [shape: f32[2,8,32], index: 0, kind: input, shape index: {}]
  %s1 = inlined_call_operand.vmem [shape: f32[2,1,8], index: 1, kind: input, shape index: {}]
  %s2 = inlined_call_operand.vmem [shape: bf16[32,96], index: 2, kind: input, shape index: {}]
  %s3 = inlined_call_operand.vmem [shape: f32[1,96], index: 3, kind: input, shape index: {}]
  %s4 = inlined_call_operand.vmem [shape: bf16[4,8,32], index: 4, kind: input, shape index: {}]
  %s5 = inlined_call_operand.vmem [shape: f32[1,32], index: 5, kind: input, shape index: {}]
  %s6 = inlined_call_operand.vmem [shape: f32[1,32], index: 6, kind: input, shape index: {}]
  %s7 = inlined_call_operand.vmem [shape: f32[1,32], index: 7, kind: input, shape index: {}]
  %s8 = inlined_call_operand.vmem [shape: bf16[32,128], index: 8, kind: input, shape index: {}]
  %s9 = inlined_call_operand.vmem [shape: f32[1,128], index: 9, kind: input, shape index: {}]
  %s10 = inlined_call_operand.vmem [shape: bf16[128,32], index: 10, kind: input, shape index: {}]
  %s11 = inlined_call_operand.vmem [shape: f32[1,32], index: 11, kind: input, shape index: {}]
  %s12 = inlined_call_operand.vmem [shape: f32[1,32], index: 12, kind: input, shape index: {}]
  %s13 = inlined_call_operand.vmem [shape: f32[1,32], index: 13, kind: input, shape index: {}]
  %s14 = inlined_call_operand.vmem [shape: f32[2,8,32], index: 14, kind: output, shape index: {}]
  %s15 = sld [smem:[#allocation0]]
  $region89: #{transformer_forward.5} parent=0
    _
  %s17 = ssub.s32 1, %s15
  %s18 = scalar_select 0, %s17, %s15
  loop: start=0, step=1, limit=4
  $region2: #{transformer_forward.5} parent=0 // loop_pre_header
    _
  $region3: #{transformer_forward.5} parent=0 // loop_header
    %s20 = sphi 0, %s24
    %p21 = scmp.ge.s32.totalorder %s20, 4
    %s30 = sphi 0, %s32
    %s33 = sphi 0, %s30
    %s34 = sphi 0, %s33
    %s50 = sphi 0, %s34
    %s56 = sphi 0, %s58
    %s59 = sphi 0, %s56
    %s60 = sphi 0, %s59
    %s76 = sphi 0, %s60
    %s80 = sphi 0, %s80
    %s82 = sphi 0, %s80
    %s83 = sphi 0, %s82
    %s97 = sphi 0, %s83
    %s101 = sphi 0, %s101
    %s103 = sphi 0, %s101
    %s104 = sphi 0, %s103
    %s118 = sphi 0, %s104
    %s122 = sphi 0, %s122
    %s124 = sphi 0, %s122
    %s125 = sphi 0, %s124
    %s139 = sphi 0, %s125
    %s143 = sphi 0, %s143
    %s145 = sphi 0, %s143
    %s146 = sphi 0, %s145
    %s160 = sphi 0, %s146
    %s164 = sphi 0, %s164
    %s166 = sphi 0, %s164
    %s167 = sphi 0, %s166
    %s181 = sphi 0, %s167
    %s185 = sphi 0, %s185
    %s187 = sphi 0, %s185
    %s188 = sphi 0, %s187
    %s202 = sphi 0, %s188
    %s206 = sphi 0, %s206
    %s208 = sphi 0, %s206
    %s209 = sphi 0, %s208
    %s223 = sphi 0, %s209
    %s227 = sphi 0, %s227
    %s229 = sphi 0, %s227
    %s230 = sphi 0, %s229
    %s244 = sphi 0, %s230
    %s248 = sphi 0, %s248
    %s250 = sphi 0, %s248
    %s251 = sphi 0, %s250
    %s265 = sphi 0, %s251
    %s269 = sphi 0, %s269
    %s271 = sphi 0, %s269
    %s272 = sphi 0, %s271
    %s286 = sphi 0, %s272
    %s290 = sphi 0, %s290
    %s292 = sphi 0, %s290
    %s293 = sphi 0, %s292
    %s307 = sphi 0, %s293
    %s311 = sphi 0, %s311
    %s313 = sphi 0, %s311
    %s314 = sphi 0, %s313
    %s328 = sphi 0, %s314
    %s334 = sphi 0, %s336
    %s337 = sphi 0, %s334
    %s338 = sphi 0, %s337
    %s354 = sphi 0, %s338
  $region4: #{transformer_forward.5} parent=0 // loop_header_branch
    %23 = sbr.rel (%p21) target = $region8
  $region5: #{transformer_forward.5} parent=0 // loop_body
    %s25 = ssub.s32 %s20, 1
    %s26 = ssub.s32 %s20, 2
    %s27 = sadd.s32 %s20, 1
    %s28 = ssub.s32 %s20, %s27
    %p29 = scmp.eq.s32.totalorder %s28, 0
    %s31 = sadd.s32 %s30, 1
    %s32 = scalar_select %p29, %s30, %s31
    %p35 = pneg %p29
    %p36 = scmp.eq.s32.totalorder %s20, 1
    %p37 = por %p35, %p36
    %p38 = scmp.ne.s32.totalorder %s30, %s33
    %p39 = scmp.eq.s32.totalorder %s20, 0
    %p40 = por %p38, %p39
    %p41 = scmp.ne.s32.totalorder %s30, %s33
    %p42 = scmp.eq.s32.totalorder %s25, 1
    %p43 = por %p41, %p42
    %p44 = scmp.ne.s32.totalorder %s33, %s34
    %p45 = scmp.eq.s32.totalorder %s25, 0
    %p46 = por %p44, %p45
    %p47 = scmp.ne.s32.totalorder %s33, %s34
    %p48 = scmp.eq.s32.totalorder %s26, 1
    %p49 = por %p47, %p48
    %p51 = scmp.ne.s32.totalorder %s34, %s50
    %p52 = scmp.eq.s32.totalorder %s26, 0
    %p53 = por %p51, %p52
    %s54 = ssub.s32 %s20, %s27
    %p55 = scmp.eq.s32.totalorder %s54, 0
    %s57 = sadd.s32 %s56, 1
    %s58 = scalar_select %p55, %s56, %s57
    %p61 = pneg %p55
    %p62 = scmp.eq.s32.totalorder %s20, 1
    %p63 = por %p61, %p62
    %p64 = scmp.ne.s32.totalorder %s56, %s59
    %p65 = scmp.eq.s32.totalorder %s20, 0
    %p66 = por %p64, %p65
    %p67 = scmp.ne.s32.totalorder %s56, %s59
    %p68 = scmp.eq.s32.totalorder %s25, 1
    %p69 = por %p67, %p68
    %p70 = scmp.ne.s32.totalorder %s59, %s60
    %p71 = scmp.eq.s32.totalorder %s25, 0
    %p72 = por %p70, %p71
    %p73 = scmp.ne.s32.totalorder %s59, %s60
    %p74 = scmp.eq.s32.totalorder %s26, 1
    %p75 = por %p73, %p74
    %p77 = scmp.ne.s32.totalorder %s60, %s76
    %p78 = scmp.eq.s32.totalorder %s26, 0
    %p79 = por %p77, %p78
    %s81 = sadd.s32 %s80, 1
    %p84 = scmp.eq.s32.totalorder %s20, 1
    %p85 = scmp.ne.s32.totalorder %s80, %s82
    %p86 = scmp.eq.s32.totalorder %s20, 0
    %p87 = por %p85, %p86
    %p88 = scmp.ne.s32.totalorder %s80, %s82
    %p89 = scmp.eq.s32.totalorder %s25, 1
    %p90 = por %p88, %p89
    %p91 = scmp.ne.s32.totalorder %s82, %s83
    %p92 = scmp.eq.s32.totalorder %s25, 0
    %p93 = por %p91, %p92
    %p94 = scmp.ne.s32.totalorder %s82, %s83
    %p95 = scmp.eq.s32.totalorder %s26, 1
    %p96 = por %p94, %p95
    %p98 = scmp.ne.s32.totalorder %s83, %s97
    %p99 = scmp.eq.s32.totalorder %s26, 0
    %p100 = por %p98, %p99
    %s102 = sadd.s32 %s101, 1
    %p105 = scmp.eq.s32.totalorder %s20, 1
    %p106 = scmp.ne.s32.totalorder %s101, %s103
    %p107 = scmp.eq.s32.totalorder %s20, 0
    %p108 = por %p106, %p107
    %p109 = scmp.ne.s32.totalorder %s101, %s103
    %p110 = scmp.eq.s32.totalorder %s25, 1
    %p111 = por %p109, %p110
    %p112 = scmp.ne.s32.totalorder %s103, %s104
    %p113 = scmp.eq.s32.totalorder %s25, 0
    %p114 = por %p112, %p113
    %p115 = scmp.ne.s32.totalorder %s103, %s104
    %p116 = scmp.eq.s32.totalorder %s26, 1
    %p117 = por %p115, %p116
    %p119 = scmp.ne.s32.totalorder %s104, %s118
    %p120 = scmp.eq.s32.totalorder %s26, 0
    %p121 = por %p119, %p120
    %s123 = sadd.s32 %s122, 1
    %p126 = scmp.eq.s32.totalorder %s20, 1
    %p127 = scmp.ne.s32.totalorder %s122, %s124
    %p128 = scmp.eq.s32.totalorder %s20, 0
    %p129 = por %p127, %p128
    %p130 = scmp.ne.s32.totalorder %s122, %s124
    %p131 = scmp.eq.s32.totalorder %s25, 1
    %p132 = por %p130, %p131
    %p133 = scmp.ne.s32.totalorder %s124, %s125
    %p134 = scmp.eq.s32.totalorder %s25, 0
    %p135 = por %p133, %p134
    %p136 = scmp.ne.s32.totalorder %s124, %s125
    %p137 = scmp.eq.s32.totalorder %s26, 1
    %p138 = por %p136, %p137
    %p140 = scmp.ne.s32.totalorder %s125, %s139
    %p141 = scmp.eq.s32.totalorder %s26, 0
    %p142 = por %p140, %p141
    %s144 = sadd.s32 %s143, 1
    %p147 = scmp.eq.s32.totalorder %s20, 1
    %p148 = scmp.ne.s32.totalorder %s143, %s145
    %p149 = scmp.eq.s32.totalorder %s20, 0
    %p150 = por %p148, %p149
    %p151 = scmp.ne.s32.totalorder %s143, %s145
    %p152 = scmp.eq.s32.totalorder %s25, 1
    %p153 = por %p151, %p152
    %p154 = scmp.ne.s32.totalorder %s145, %s146
    %p155 = scmp.eq.s32.totalorder %s25, 0
    %p156 = por %p154, %p155
    %p157 = scmp.ne.s32.totalorder %s145, %s146
    %p158 = scmp.eq.s32.totalorder %s26, 1
    %p159 = por %p157, %p158
    %p161 = scmp.ne.s32.totalorder %s146, %s160
    %p162 = scmp.eq.s32.totalorder %s26, 0
    %p163 = por %p161, %p162
    %s165 = sadd.s32 %s164, 1
    %p168 = scmp.eq.s32.totalorder %s20, 1
    %p169 = scmp.ne.s32.totalorder %s164, %s166
    %p170 = scmp.eq.s32.totalorder %s20, 0
    %p171 = por %p169, %p170
    %p172 = scmp.ne.s32.totalorder %s164, %s166
    %p173 = scmp.eq.s32.totalorder %s25, 1
    %p174 = por %p172, %p173
    %p175 = scmp.ne.s32.totalorder %s166, %s167
    %p176 = scmp.eq.s32.totalorder %s25, 0
    %p177 = por %p175, %p176
    %p178 = scmp.ne.s32.totalorder %s166, %s167
    %p179 = scmp.eq.s32.totalorder %s26, 1
    %p180 = por %p178, %p179
    %p182 = scmp.ne.s32.totalorder %s167, %s181
    %p183 = scmp.eq.s32.totalorder %s26, 0
    %p184 = por %p182, %p183
    %s186 = sadd.s32 %s185, 1
    %p189 = scmp.eq.s32.totalorder %s20, 1
    %p190 = scmp.ne.s32.totalorder %s185, %s187
    %p191 = scmp.eq.s32.totalorder %s20, 0
    %p192 = por %p190, %p191
    %p193 = scmp.ne.s32.totalorder %s185, %s187
    %p194 = scmp.eq.s32.totalorder %s25, 1
    %p195 = por %p193, %p194
    %p196 = scmp.ne.s32.totalorder %s187, %s188
    %p197 = scmp.eq.s32.totalorder %s25, 0
    %p198 = por %p196, %p197
    %p199 = scmp.ne.s32.totalorder %s187, %s188
    %p200 = scmp.eq.s32.totalorder %s26, 1
    %p201 = por %p199, %p200
    %p203 = scmp.ne.s32.totalorder %s188, %s202
    %p204 = scmp.eq.s32.totalorder %s26, 0
    %p205 = por %p203, %p204
    %s207 = sadd.s32 %s206, 1
    %p210 = scmp.eq.s32.totalorder %s20, 1
    %p211 = scmp.ne.s32.totalorder %s206, %s208
    %p212 = scmp.eq.s32.totalorder %s20, 0
    %p213 = por %p211, %p212
    %p214 = scmp.ne.s32.totalorder %s206, %s208
    %p215 = scmp.eq.s32.totalorder %s25, 1
    %p216 = por %p214, %p215
    %p217 = scmp.ne.s32.totalorder %s208, %s209
    %p218 = scmp.eq.s32.totalorder %s25, 0
    %p219 = por %p217, %p218
    %p220 = scmp.ne.s32.totalorder %s208, %s209
    %p221 = scmp.eq.s32.totalorder %s26, 1
    %p222 = por %p220, %p221
    %p224 = scmp.ne.s32.totalorder %s209, %s223
    %p225 = scmp.eq.s32.totalorder %s26, 0
    %p226 = por %p224, %p225
    %s228 = sadd.s32 %s227, 1
    %p231 = scmp.eq.s32.totalorder %s20, 1
    %p232 = scmp.ne.s32.totalorder %s227, %s229
    %p233 = scmp.eq.s32.totalorder %s20, 0
    %p234 = por %p232, %p233
    %p235 = scmp.ne.s32.totalorder %s227, %s229
    %p236 = scmp.eq.s32.totalorder %s25, 1
    %p237 = por %p235, %p236
    %p238 = scmp.ne.s32.totalorder %s229, %s230
    %p239 = scmp.eq.s32.totalorder %s25, 0
    %p240 = por %p238, %p239
    %p241 = scmp.ne.s32.totalorder %s229, %s230
    %p242 = scmp.eq.s32.totalorder %s26, 1
    %p243 = por %p241, %p242
    %p245 = scmp.ne.s32.totalorder %s230, %s244
    %p246 = scmp.eq.s32.totalorder %s26, 0
    %p247 = por %p245, %p246
    %s249 = sadd.s32 %s248, 1
    %p252 = scmp.eq.s32.totalorder %s20, 1
    %p253 = scmp.ne.s32.totalorder %s248, %s250
    %p254 = scmp.eq.s32.totalorder %s20, 0
    %p255 = por %p253, %p254
    %p256 = scmp.ne.s32.totalorder %s248, %s250
    %p257 = scmp.eq.s32.totalorder %s25, 1
    %p258 = por %p256, %p257
    %p259 = scmp.ne.s32.totalorder %s250, %s251
    %p260 = scmp.eq.s32.totalorder %s25, 0
    %p261 = por %p259, %p260
    %p262 = scmp.ne.s32.totalorder %s250, %s251
    %p263 = scmp.eq.s32.totalorder %s26, 1
    %p264 = por %p262, %p263
    %p266 = scmp.ne.s32.totalorder %s251, %s265
    %p267 = scmp.eq.s32.totalorder %s26, 0
    %p268 = por %p266, %p267
    %s270 = sadd.s32 %s269, 1
    %p273 = scmp.eq.s32.totalorder %s20, 1
    %p274 = scmp.ne.s32.totalorder %s269, %s271
    %p275 = scmp.eq.s32.totalorder %s20, 0
    %p276 = por %p274, %p275
    %p277 = scmp.ne.s32.totalorder %s269, %s271
    %p278 = scmp.eq.s32.totalorder %s25, 1
    %p279 = por %p277, %p278
    %p280 = scmp.ne.s32.totalorder %s271, %s272
    %p281 = scmp.eq.s32.totalorder %s25, 0
    %p282 = por %p280, %p281
    %p283 = scmp.ne.s32.totalorder %s271, %s272
    %p284 = scmp.eq.s32.totalorder %s26, 1
    %p285 = por %p283, %p284
    %p287 = scmp.ne.s32.totalorder %s272, %s286
    %p288 = scmp.eq.s32.totalorder %s26, 0
    %p289 = por %p287, %p288
    %s291 = sadd.s32 %s290, 1
    %p294 = scmp.eq.s32.totalorder %s20, 1
    %p295 = scmp.ne.s32.totalorder %s290, %s292
    %p296 = scmp.eq.s32.totalorder %s20, 0
    %p297 = por %p295, %p296
    %p298 = scmp.ne.s32.totalorder %s290, %s292
    %p299 = scmp.eq.s32.totalorder %s25, 1
    %p300 = por %p298, %p299
    %p301 = scmp.ne.s32.totalorder %s292, %s293
    %p302 = scmp.eq.s32.totalorder %s25, 0
    %p303 = por %p301, %p302
    %p304 = scmp.ne.s32.totalorder %s292, %s293
    %p305 = scmp.eq.s32.totalorder %s26, 1
    %p306 = por %p304, %p305
    %p308 = scmp.ne.s32.totalorder %s293, %s307
    %p309 = scmp.eq.s32.totalorder %s26, 0
    %p310 = por %p308, %p309
    %s312 = sadd.s32 %s311, 1
    %p315 = scmp.eq.s32.totalorder %s20, 1
    %p316 = scmp.ne.s32.totalorder %s311, %s313
    %p317 = scmp.eq.s32.totalorder %s20, 0
    %p318 = por %p316, %p317
    %p319 = scmp.ne.s32.totalorder %s311, %s313
    %p320 = scmp.eq.s32.totalorder %s25, 1
    %p321 = por %p319, %p320
    %p322 = scmp.ne.s32.totalorder %s313, %s314
    %p323 = scmp.eq.s32.totalorder %s25, 0
    %p324 = por %p322, %p323
    %p325 = scmp.ne.s32.totalorder %s313, %s314
    %p326 = scmp.eq.s32.totalorder %s26, 1
    %p327 = por %p325, %p326
    %p329 = scmp.ne.s32.totalorder %s314, %s328
    %p330 = scmp.eq.s32.totalorder %s26, 0
    %p331 = por %p329, %p330
    %s332 = ssub.s32 %s20, %s27
    %p333 = scmp.eq.s32.totalorder %s332, 0
    %s335 = sadd.s32 %s334, 1
    %s336 = scalar_select %p333, %s334, %s335
    %p339 = pneg %p333
    %p340 = scmp.eq.s32.totalorder %s20, 1
    %p341 = por %p339, %p340
    %p342 = scmp.ne.s32.totalorder %s334, %s337
    %p343 = scmp.eq.s32.totalorder %s20, 0
    %p344 = por %p342, %p343
    %p345 = scmp.ne.s32.totalorder %s334, %s337
    %p346 = scmp.eq.s32.totalorder %s25, 1
    %p347 = por %p345, %p346
    %p348 = scmp.ne.s32.totalorder %s337, %s338
    %p349 = scmp.eq.s32.totalorder %s25, 0
    %p350 = por %p348, %p349
    %p351 = scmp.ne.s32.totalorder %s337, %s338
    %p352 = scmp.eq.s32.totalorder %s26, 1
    %p353 = por %p351, %p352
    %p355 = scmp.ne.s32.totalorder %s338, %s354
    %p356 = scmp.eq.s32.totalorder %s26, 0
    %p357 = por %p355, %p356
    %p358 = scmp.le.s32.totalorder 1, %s20
    %p359 = scmp.lt.s32.totalorder %s20, 3
    %p360 = pnand %p358, %p359
    %p361 = pneg %p360
    // Predicated region
    $region9: #{transformer_forward.5} parent=5 // pred_check
      _
    $region10: #{transformer_forward.5} parent=5 // pred_check_branch
      %363 = sbr.rel (%p360) target = $region12
    $region11: #{transformer_forward.5} parent=5 // pred_region
      %s364 = ssub.s32 %s20, 1
      // Predicated region
      $region13: #{transformer_forward.5} parent=11 // pred_check
        %p365 = pneg %p93
      $region14: #{transformer_forward.5} parent=11 // pred_check_branch
        %367 = sbr.rel (%p365) target = $region16
      $region15: #{transformer_forward.5} parent=11 // pred_region
        _
      $region16: #{transformer_forward.5} parent=11 // pred_fallthru
        _
      // Predicated region
      $region17: #{transformer_forward.5} parent=11 // pred_check
        %p368 = pneg %p114
      $region18: #{transformer_forward.5} parent=11 // pred_check_branch
        %370 = sbr.rel (%p368) target = $region20
      $region19: #{transformer_forward.5} parent=11 // pred_region
        _
      $region20: #{transformer_forward.5} parent=11 // pred_fallthru
        _
      // Predicated region
      $region21: #{transformer_forward.5} parent=11 // pred_check
        %p371 = pneg %p135
      $region22: #{transformer_forward.5} parent=11 // pred_check_branch
        %373 = sbr.rel (%p371) target = $region24
      $region23: #{transformer_forward.5} parent=11 // pred_region
        _
      $region24: #{transformer_forward.5} parent=11 // pred_fallthru
        _
      // Predicated region
      $region25: #{transformer_forward.5} parent=11 // pred_check
        %p374 = pneg %p156
      $region26: #{transformer_forward.5} parent=11 // pred_check_branch
        %376 = sbr.rel (%p374) target = $region28
      $region27: #{transformer_forward.5} parent=11 // pred_region
        _
      $region28: #{transformer_forward.5} parent=11 // pred_fallthru
        _
      // Predicated region
      $region29: #{transformer_forward.5} parent=11 // pred_check
        %p377 = pneg %p177
      $region30: #{transformer_forward.5} parent=11 // pred_check_branch
        %379 = sbr.rel (%p377) target = $region32
      $region31: #{transformer_forward.5} parent=11 // pred_region
        _
      $region32: #{transformer_forward.5} parent=11 // pred_fallthru
        _
      // Predicated region
      $region33: #{transformer_forward.5} parent=11 // pred_check
        %p380 = pneg %p198
      $region34: #{transformer_forward.5} parent=11 // pred_check_branch
        %382 = sbr.rel (%p380) target = $region36
      $region35: #{transformer_forward.5} parent=11 // pred_region
        _
      $region36: #{transformer_forward.5} parent=11 // pred_fallthru
        _
      // Predicated region
      $region37: #{transformer_forward.5} parent=11 // pred_check
        %p383 = pneg %p219
      $region38: #{transformer_forward.5} parent=11 // pred_check_branch
        %385 = sbr.rel (%p383) target = $region40
      $region39: #{transformer_forward.5} parent=11 // pred_region
        _
      $region40: #{transformer_forward.5} parent=11 // pred_fallthru
        _
      // Predicated region
      $region41: #{transformer_forward.5} parent=11 // pred_check
        %p386 = pneg %p240
      $region42: #{transformer_forward.5} parent=11 // pred_check_branch
        %388 = sbr.rel (%p386) target = $region44
      $region43: #{transformer_forward.5} parent=11 // pred_region
        _
      $region44: #{transformer_forward.5} parent=11 // pred_fallthru
        _
      // Predicated region
      $region45: #{transformer_forward.5} parent=11 // pred_check
        %p389 = pneg %p261
      $region46: #{transformer_forward.5} parent=11 // pred_check_branch
        %391 = sbr.rel (%p389) target = $region48
      $region47: #{transformer_forward.5} parent=11 // pred_region
        _
      $region48: #{transformer_forward.5} parent=11 // pred_fallthru
        _
      // Predicated region
      $region49: #{transformer_forward.5} parent=11 // pred_check
        %p392 = pneg %p282
      $region50: #{transformer_forward.5} parent=11 // pred_check_branch
        %394 = sbr.rel (%p392) target = $region52
      $region51: #{transformer_forward.5} parent=11 // pred_region
        _
      $region52: #{transformer_forward.5} parent=11 // pred_fallthru
        _
      // Predicated region
      $region53: #{transformer_forward.5} parent=11 // pred_check
        %p395 = pneg %p303
      $region54: #{transformer_forward.5} parent=11 // pred_check_branch
        %397 = sbr.rel (%p395) target = $region56
      $region55: #{transformer_forward.5} parent=11 // pred_region
        _
      $region56: #{transformer_forward.5} parent=11 // pred_fallthru
        _
      // Predicated region
      $region57: #{transformer_forward.5} parent=11 // pred_check
        %p398 = pneg %p324
      $region58: #{transformer_forward.5} parent=11 // pred_check_branch
        %400 = sbr.rel (%p398) target = $region60
      $region59: #{transformer_forward.5} parent=11 // pred_region
        _
      $region60: #{transformer_forward.5} parent=11 // pred_fallthru
        _
    $region12: #{transformer_forward.5} parent=5 // pred_fallthru
      _
    %p401 = scmp.lt.s32.totalorder %s20, 2
    // Predicated region
    $region61: #{transformer_forward.5} parent=5 // pred_check
      %p402 = pneg %p401
    $region62: #{transformer_forward.5} parent=5 // pred_check_branch
      %404 = sbr.rel (%p402) target = $region64
    $region63: #{transformer_forward.5} parent=5 // pred_region
      // Predicated region
      $region65: #{transformer_forward.5} parent=63 // pred_check
        %p405 = pneg %p40
      $region66: #{transformer_forward.5} parent=63 // pred_check_branch
        %407 = sbr.rel (%p405) target = $region68
      $region67: #{transformer_forward.5} parent=63 // pred_region
        %p408 = scmp.lt.s32.totalorder %s20, 1
        %s409 = scalar_select %p408, %s20, 1
        %s410 = smul.addr %s409, 8
        %s411 = scalar_lea.vmem %s0, %s410
      $region68: #{transformer_forward.5} parent=63 // pred_fallthru
        _
      // Predicated region
      $region69: #{transformer_forward.5} parent=63 // pred_check
        %p412 = pneg %p66
      $region70: #{transformer_forward.5} parent=63 // pred_check_branch
        %414 = sbr.rel (%p412) target = $region72
      $region71: #{transformer_forward.5} parent=63 // pred_region
        %p415 = scmp.lt.s32.totalorder %s20, 1
        %s416 = scalar_select %p415, %s20, 1
        %s417 = scalar_lea.vmem %s1, %s416
      $region72: #{transformer_forward.5} parent=63 // pred_fallthru
        _
    $region64: #{transformer_forward.5} parent=5 // pred_fallthru
      _
    %p418 = scmp.le.s32.totalorder 1, %s20
    %p419 = scmp.lt.s32.totalorder %s20, 3
    %p420 = pnand %p418, %p419
    %p421 = pneg %p420
    // Predicated region
    $region73: #{transformer_forward.5} parent=5 // pred_check
      _
    $region74: #{transformer_forward.5} parent=5 // pred_check_branch
      %423 = sbr.rel (%p420) target = $region76
    $region75: #{transformer_forward.5} parent=5 // pred_region
      %s424 = ssub.s32 %s20, 1
      %p425 = scmp.lt.s32.totalorder %s25, 1
      %s426 = scalar_select %p425, %s25, 1
      %s427 = smul.addr %s426, 8
      %s428 = scalar_lea.vmem %s0, %s427
      %p429 = pneg %p46
      %p430 = pneg %p43
      %p431 = scmp.lt.s32.totalorder %s25, 1
      %s432 = scalar_select %p431, %s25, 1
      %s433 = scalar_lea.vmem %s1, %s432
      %p434 = pneg %p72
      %p435 = pneg %p69
      %p436 = pneg %p93
      %p437 = pneg %p90
      %p438 = pneg %p114
      %p439 = pneg %p111
      %p440 = pneg %p135
      %p441 = pneg %p132
      %p442 = pneg %p156
      %p443 = pneg %p153
      %p444 = pneg %p177
      %p445 = pneg %p174
      %p446 = pneg %p198
      %p447 = pneg %p195
      %p448 = pneg %p219
      %p449 = pneg %p216
      %p450 = pneg %p240
      %p451 = pneg %p237
      %p452 = pneg %p261
      %p453 = pneg %p258
      %p454 = pneg %p282
      %p455 = pneg %p279
      %p456 = pneg %p303
      %p457 = pneg %p300
      %p458 = pneg %p324
      %p459 = pneg %p321
      %p460 = pneg %p350
      %p461 = pneg %p347
      %p462 = scmp.lt.s32.totalorder %s25, 1
      %s463 = scalar_select %p462, %s25, 1
      %s464 = smul.addr %s463, 8
      %s465 = scalar_lea.vmem %s14, %s464
      %p466 = scmp.lt.s32.totalorder %s25, 1
      %s467 = scalar_select %p466, %s25, 1
      %s468 = smul.addr %s467, 8
      %s469 = scalar_lea.vmem %s0, %s468
      %p470 = scmp.lt.s32.totalorder %s25, 1
      %s471 = scalar_select %p470, %s25, 1
      %s472 = scalar_lea.vmem %s1, %s471
      %p473 = scmp.lt.s32.totalorder %s25, 1
      %s474 = scalar_select %p473, %s25, 1
      %s475 = smul.addr %s474, 8
      %s476 = scalar_lea.vmem %s14, %s475
      %v478 = vld [vmem:[%s469] sm:$0xff]
      %v479 = vld [vmem:[%s472] sm:$0x1]
      %v480 = vpack.c.bf16 %v478, %v478
      %v481 = vld [vmem:[%s2] sm:$0xf]
      %v482 = vld [vmem:[%s2 + $0x4] sm:$0xf]
      %v483 = vld [vmem:[%s2 + $0x8] sm:$0xf]
      %v484 = vld [vmem:[%s2 + $0xc] sm:$0xf]
      %v485 = vld [vmem:[%s3] sm:$0x1]
      %v487 = vperm.slane %v485, 0
      %v493 = vunpack.c.l.b16 %v481
      %v494 = vunpack.c.l.b16 %v482
      %v495 = vunpack.c.l.b16 %v483
      %v496 = vunpack.c.l.b16 %v484
      %v497 = vpack.c.b16 %v494, %v493
      %v498 = vpack.c.b16 %v496, %v495
      %vm501 = vcmask 261120
      %v503 = vsel %vm501, %v480, 0
      %505 = vmatpush.bf16.msra.mxu0 0
      %506 = vmatpush.bf16.msra.mxu0 0
      %507 = vmatpush.bf16.msra.mxu0 0
      %508 = vmatpush.bf16.msra.mxu0 0
      %509 = vmatpush.bf16.msra.mxu0 0
      %510 = vmatpush.bf16.msra.mxu0 0
      %511 = vmatpush.bf16.msra.mxu0 %v498
      %512 = vmatpush.bf16.msra.mxu0 %v497
      %513 = vmatmul.bf16.gmra.mxu0 %v503
      %v514 = vpop.f32.mrf.mxu0
      %v515 = vadd.f32 %v487, %v514
      %v516 = vpop.f32.mrf.mxu0
      %517 = vdwg.mxu0
      %v518 = vmul.f32 %v515, 0.35355338
      %v519 = vpack.c.bf16 %v518, %v518
      %v520 = vpack.c.bf16 %v515, %v515
      %v522 = vperm.slane %v479, 0
      %525 = vrot.lane.b32.xlu0 %v520, 96
      %v526 = vpop.permute.xlu0 %525
      %vm527 = vcmask 64512
      %v529 = vsel %vm527, %v519, 0
      %v532 = vsel %vm527, %v526, 0
      %534 = vmatpush.bf16.xpose.msra.mxu0 0
      %535 = vmatpush.bf16.xpose.msra.mxu0 0
      %536 = vmatpush.bf16.xpose.msra.mxu0 0
      %537 = vmatpush.bf16.xpose.msra.mxu0 0
      %538 = vmatpush.bf16.xpose.msra.mxu0 0
      %539 = vmatpush.bf16.xpose.msra.mxu0 0
      %540 = vmatpush.bf16.xpose.msra.mxu0 0
      %541 = vmatpush.bf16.xpose.msra.mxu0 %v532
      %542 = vmatmul.bf16.gmra.mxu0 %v529
      %v543 = vpop.f32.mrf.mxu0
      %v544 = vadd.f32 %v522, %v543
      %v545 = vpop.f32.mrf.mxu0
      %546 = vdwg.mxu0
      %v547 = vsel %vm527, %v544, -inf
      %548 = vmax.xlane.f32.xlu0 %v547
      %v549 = vpop.xlane.xlu0 %548
      %v550 = vsub.f32 %v544, %v549
      %v551 = vmul.f32 %v550, 1.442695
      %v552 = vpow.pop %v551
      %v553 = vsel %vm527, %v552, 0.0
      %554 = vadd.xlane.f32.xlu0 %v553
      %v555 = vpop.xlane.xlu0 %554
      %v556 = vrcp.pop %v555
      %v557 = vmul.f32 %v552, %v556
      %v558 = vpack.c.bf16 %v557, %v557
      %559 = vrot.lane.b32.xlu0 %v520, 64
      %v560 = vpop.permute.xlu0 %559
      %v562 = vsel %vm527, %v558, 0
      %vm564 = vcmask 1043456
      %v566 = vsel %vm564, %v560, 0
      %568 = vmatpush.bf16.msra.mxu0 0
      %569 = vmatpush.bf16.msra.mxu0 0
      %570 = vmatpush.bf16.msra.mxu0 0
      %571 = vmatpush.bf16.msra.mxu0 0
      %572 = vmatpush.bf16.msra.mxu0 0
      %573 = vmatpush.bf16.msra.mxu0 0
      %574 = vmatpush.bf16.msra.mxu0 0
      %575 = vmatpush.bf16.msra.mxu0 %v566
      %576 = vmatmul.bf16.gmra.mxu0 %v562
      %v577 = vpop.f32.mrf.mxu0
      %v578 = vadd.f32 0.0, %v577
      %v579 = vpop.f32.mrf.mxu0
      %580 = vdwg.mxu0
      %v581 = vpack.c.bf16 %v578, %v578
      %v582 = vld [vmem:[%s4] sm:$0xf]
      %584 = vrot.lane.b32.xlu0 %v519, 120
      %v585 = vpop.permute.xlu0 %584
      %586 = vrot.lane.b32.xlu0 %v520, 88
      %v587 = vpop.permute.xlu0 %586
      %v589 = vsel %vm527, %v585, 0
      %v592 = vsel %vm527, %v587, 0
      %594 = vmatpush.bf16.xpose.msra.mxu0 0
      %595 = vmatpush.bf16.xpose.msra.mxu0 0
      %596 = vmatpush.bf16.xpose.msra.mxu0 0
      %597 = vmatpush.bf16.xpose.msra.mxu0 0
      %598 = vmatpush.bf16.xpose.msra.mxu0 0
      %599 = vmatpush.bf16.xpose.msra.mxu0 0
      %600 = vmatpush.bf16.xpose.msra.mxu0 0
      %601 = vmatpush.bf16.xpose.msra.mxu0 %v592
      %602 = vmatmul.bf16.gmra.mxu0 %v589
      %v603 = vpop.f32.mrf.mxu0
      %v604 = vadd.f32 %v522, %v603
      %v605 = vpop.f32.mrf.mxu0
      %606 = vdwg.mxu0
      %v607 = vsel %vm527, %v604, -inf
      %608 = vmax.xlane.f32.xlu0 %v607
      %v609 = vpop.xlane.xlu0 %608
      %v610 = vsub.f32 %v604, %v609
      %v611 = vmul.f32 %v610, 1.442695
      %v612 = vpow.pop %v611
      %v613 = vsel %vm527, %v612, 0.0
      %614 = vadd.xlane.f32.xlu0 %v613
      %v615 = vpop.xlane.xlu0 %614
      %v616 = vrcp.pop %v615
      %v617 = vmul.f32 %v612, %v616
      %v618 = vpack.c.bf16 %v617, %v617
      %619 = vrot.lane.b32.xlu0 %v520, 56
      %v620 = vpop.permute.xlu0 %619
      %v622 = vsel %vm527, %v618, 0
      %v625 = vsel %vm564, %v620, 0
      %627 = vmatpush.bf16.msra.mxu0 0
      %628 = vmatpush.bf16.msra.mxu0 0
      %629 = vmatpush.bf16.msra.mxu0 0
      %630 = vmatpush.bf16.msra.mxu0 0
      %631 = vmatpush.bf16.msra.mxu0 0
      %632 = vmatpush.bf16.msra.mxu0 0
      %633 = vmatpush.bf16.msra.mxu0 0
      %634 = vmatpush.bf16.msra.mxu0 %v625
      %635 = vmatmul.bf16.gmra.mxu0 %v622
      %v636 = vpop.f32.mrf.mxu0
      %v637 = vadd.f32 0.0, %v636
      %v638 = vpop.f32.mrf.mxu0
      %639 = vdwg.mxu0
      %v640 = vpack.c.bf16 %v637, %v637
      %s641 = scalar_lea.vmem %s4, 4
      %v642 = vld [vmem:[%s641] sm:$0xf]
      %v644 = vsel %vm527, %v640, 0
      %v647 = vsel %vm564, %v642, 0
      %649 = vmatpush.bf16.msra.mxu0 0
      %650 = vmatpush.bf16.msra.mxu0 0
      %651 = vmatpush.bf16.msra.mxu0 0
      %652 = vmatpush.bf16.msra.mxu0 0
      %653 = vmatpush.bf16.msra.mxu0 0
      %654 = vmatpush.bf16.msra.mxu0 0
      %655 = vmatpush.bf16.msra.mxu0 0
      %656 = vmatpush.bf16.msra.mxu0 %v647
      %657 = vmatmul.bf16.gmra.mxu0 %v644
      %v658 = vpop.f32.mrf.mxu0
      %v659 = vadd.f32 0.0, %v658
      %v660 = vpop.f32.mrf.mxu0
      %661 = vdwg.mxu0
      %v663 = vsel %vm527, %v581, 0
      %v666 = vsel %vm564, %v582, 0
      %668 = vmatpush.bf16.msra.mxu0 0
      %669 = vmatpush.bf16.msra.mxu0 0
      %670 = vmatpush.bf16.msra.mxu0 0
      %671 = vmatpush.bf16.msra.mxu0 0
      %672 = vmatpush.bf16.msra.mxu0 0
      %673 = vmatpush.bf16.msra.mxu0 0
      %674 = vmatpush.bf16.msra.mxu0 0
      %675 = vmatpush.bf16.msra.mxu0 %v666
      %676 = vmatmul.bf16.gmra.mxu0 %v663
      %v677 = vpop.f32.mrf.mxu0
      %v678 = vadd.f32 %v659, %v677
      %v679 = vpop.f32.mrf.mxu0
      %680 = vdwg.mxu0
      %681 = vrot.lane.b32.xlu0 %v519, 112
      %v682 = vpop.permute.xlu0 %681
      %683 = vrot.lane.b32.xlu0 %v520, 80
      %v684 = vpop.permute.xlu0 %683
      %v686 = vsel %vm527, %v682, 0
      %v689 = vsel %vm527, %v684, 0
      %691 = vmatpush.bf16.xpose.msra.mxu0 0
      %692 = vmatpush.bf16.xpose.msra.mxu0 0
      %693 = vmatpush.bf16.xpose.msra.mxu0 0
      %694 = vmatpush.bf16.xpose.msra.mxu0 0
      %695 = vmatpush.bf16.xpose.msra.mxu0 0
      %696 = vmatpush.bf16.xpose.msra.mxu0 0
      %697 = vmatpush.bf16.xpose.msra.mxu0 0
      %698 = vmatpush.bf16.xpose.msra.mxu0 %v689
      %699 = vmatmul.bf16.gmra.mxu0 %v686
      %v700 = vpop.f32.mrf.mxu0
      %v701 = vadd.f32 %v522, %v700
      %v702 = vpop.f32.mrf.mxu0
      %703 = vdwg.mxu0
      %v704 = vsel %vm527, %v701, -inf
      %705 = vmax.xlane.f32.xlu0 %v704
      %v706 = vpop.xlane.xlu0 %705
      %v707 = vsub.f32 %v701, %v706
      %v708 = vmul.f32 %v707, 1.442695
      %v709 = vpow.pop %v708
      %v710 = vsel %vm527, %v709, 0.0
      %711 = vadd.xlane.f32.xlu0 %v710
      %v712 = vpop.xlane.xlu0 %711
      %v713 = vrcp.pop %v712
      %v714 = vmul.f32 %v709, %v713
      %v715 = vpack.c.bf16 %v714, %v714
      %716 = vrot.lane.b32.xlu0 %v520, 48
      %v717 = vpop.permute.xlu0 %716
      %v719 = vsel %vm527, %v715, 0
      %v722 = vsel %vm564, %v717, 0
      %724 = vmatpush.bf16.msra.mxu0 0
      %725 = vmatpush.bf16.msra.mxu0 0
      %726 = vmatpush.bf16.msra.mxu0 0
      %727 = vmatpush.bf16.msra.mxu0 0
      %728 = vmatpush.bf16.msra.mxu0 0
      %729 = vmatpush.bf16.msra.mxu0 0
      %730 = vmatpush.bf16.msra.mxu0 0
      %731 = vmatpush.bf16.msra.mxu0 %v722
      %732 = vmatmul.bf16.gmra.mxu0 %v719
      %v733 = vpop.f32.mrf.mxu0
      %v734 = vadd.f32 0.0, %v733
      %v735 = vpop.f32.mrf.mxu0
      %736 = vdwg.mxu0
      %v737 = vpack.c.bf16 %v734, %v734
      %s738 = scalar_lea.vmem %s4, 8
      %v739 = vld [vmem:[%s738] sm:$0xf]
      %v741 = vsel %vm527, %v737, 0
      %v744 = vsel %vm564, %v739, 0
      %746 = vmatpush.bf16.msra.mxu0 0
      %747 = vmatpush.bf16.msra.mxu0 0
      %748 = vmatpush.bf16.msra.mxu0 0
      %749 = vmatpush.bf16.msra.mxu0 0
      %750 = vmatpush.bf16.msra.mxu0 0
      %751 = vmatpush.bf16.msra.mxu0 0
      %752 = vmatpush.bf16.msra.mxu0 0
      %753 = vmatpush.bf16.msra.mxu0 %v744
      %754 = vmatmul.bf16.gmra.mxu0 %v741
      %v755 = vpop.f32.mrf.mxu0
      %v756 = vadd.f32 0.0, %v755
      %v757 = vpop.f32.mrf.mxu0
      %758 = vdwg.mxu0
      %v759 = vadd.f32 %v678, %v756
      %760 = vrot.lane.b32.xlu0 %v519, 104
      %v761 = vpop.permute.xlu0 %760
      %762 = vrot.lane.b32.xlu0 %v520, 72
      %v763 = vpop.permute.xlu0 %762
      %v765 = vsel %vm527, %v761, 0
      %v768 = vsel %vm527, %v763, 0
      %770 = vmatpush.bf16.xpose.msra.mxu0 0
      %771 = vmatpush.bf16.xpose.msra.mxu0 0
      %772 = vmatpush.bf16.xpose.msra.mxu0 0
      %773 = vmatpush.bf16.xpose.msra.mxu0 0
      %774 = vmatpush.bf16.xpose.msra.mxu0 0
      %775 = vmatpush.bf16.xpose.msra.mxu0 0
      %776 = vmatpush.bf16.xpose.msra.mxu0 0
      %777 = vmatpush.bf16.xpose.msra.mxu0 %v768
      %778 = vmatmul.bf16.gmra.mxu0 %v765
      %v779 = vpop.f32.mrf.mxu0
      %v780 = vadd.f32 %v522, %v779
      %v781 = vpop.f32.mrf.mxu0
      %782 = vdwg.mxu0
      %v783 = vsel %vm527, %v780, -inf
      %784 = vmax.xlane.f32.xlu0 %v783
      %v785 = vpop.xlane.xlu0 %784
      %v786 = vsub.f32 %v780, %v785
      %v787 = vmul.f32 %v786, 1.442695
      %v788 = vpow.pop %v787
      %v789 = vsel %vm527, %v788, 0.0
      %790 = vadd.xlane.f32.xlu0 %v789
      %v791 = vpop.xlane.xlu0 %790
      %v792 = vrcp.pop %v791
      %v793 = vmul.f32 %v788, %v792
      %v794 = vpack.c.bf16 %v793, %v793
      %795 = vrot.lane.b32.xlu0 %v520, 40
      %v796 = vpop.permute.xlu0 %795
      %v798 = vsel %vm527, %v794, 0
      %v801 = vsel %vm564, %v796, 0
      %803 = vmatpush.bf16.msra.mxu0 0
      %804 = vmatpush.bf16.msra.mxu0 0
      %805 = vmatpush.bf16.msra.mxu0 0
      %806 = vmatpush.bf16.msra.mxu0 0
      %807 = vmatpush.bf16.msra.mxu0 0
      %808 = vmatpush.bf16.msra.mxu0 0
      %809 = vmatpush.bf16.msra.mxu0 0
      %810 = vmatpush.bf16.msra.mxu0 %v801
      %811 = vmatmul.bf16.gmra.mxu0 %v798
      %v812 = vpop.f32.mrf.mxu0
      %v813 = vadd.f32 0.0, %v812
      %v814 = vpop.f32.mrf.mxu0
      %815 = vdwg.mxu0
      %v816 = vpack.c.bf16 %v813, %v813
      %s817 = scalar_lea.vmem %s4, 12
      %v818 = vld [vmem:[%s817] sm:$0xf]
      %v820 = vsel %vm527, %v816, 0
      %v823 = vsel %vm564, %v818, 0
      %825 = vmatpush.bf16.msra.mxu0 0
      %826 = vmatpush.bf16.msra.mxu0 0
      %827 = vmatpush.bf16.msra.mxu0 0
      %828 = vmatpush.bf16.msra.mxu0 0
      %829 = vmatpush.bf16.msra.mxu0 0
      %830 = vmatpush.bf16.msra.mxu0 0
      %831 = vmatpush.bf16.msra.mxu0 0
      %832 = vmatpush.bf16.msra.mxu0 %v823
      %833 = vmatmul.bf16.gmra.mxu0 %v820
      %v834 = vpop.f32.mrf.mxu0
      %v835 = vadd.f32 0.0, %v834
      %v836 = vpop.f32.mrf.mxu0
      %837 = vdwg.mxu0
      %v838 = vadd.f32 %v759, %v835
      %v839 = vld [vmem:[%s5] sm:$0x1]
      %v841 = vperm.slane %v839, 0
      %v843 = vadd.f32 %v838, %v841
      %v844 = vadd.f32 %v478, %v843
      %v845 = vld [vmem:[%s6] sm:$0x1]
      %v846 = vld [vmem:[%s7] sm:$0x1]
      %v847 = vsel %vm501, %v844, 0.0
      %848 = vadd.xlane.f32.xlu0 %v847
      %v849 = vpop.xlane.xlu0 %848
      %v850 = vrcp.pop 32.0
      %v851 = vmul.f32 32.0, %v850
      %v852 = vsub.f32 1.0, %v851
      %v853 = vmul.f32 %v850, %v852
      %v854 = vadd.f32 %v850, %v853
      %vm855 = vweird.f32 %v850
      %v856 = vsel %vm855, %v850, %v854
      %v857 = vmul.f32 %v849, %v856
      %v858 = vsub.f32 %v844, %v857
      %v859 = vmul.f32 %v858, %v858
      %v860 = vsel %vm501, %v859, 0.0
      %861 = vadd.xlane.f32.xlu0 %v860
      %v862 = vpop.xlane.xlu0 %861
      %v863 = vmul.f32 %v862, %v856
      %v864 = vadd.f32 %v863, 1e-05
      %v865 = vrsqrt.pop %v864
      %v866 = vmul.f32 %v865, %v864
      %v867 = vmul.f32 %v866, %v865
      %v868 = vmul.f32 0.5, %v867
      %v869 = vsub.f32 1.5, %v868
      %v870 = vmul.f32 %v865, %v869
      %vm871 = vweird.f32 %v864
      %vm872 = vweird.f32 %v865
      %vm873 = vmor %vm871, %vm872
      %v874 = vsel %vm873, %v865, %v870
      %v875 = vmul.f32 %v858, %v874
      %v877 = vperm.slane %v845, 0
      %v879 = vmul.f32 %v875, %v877
      %v881 = vperm.slane %v846, 0
      %v883 = vadd.f32 %v879, %v881
      %v884 = vld [vmem:[%s8] sm:$0xf]
      %v885 = vld [vmem:[%s8 + $0x4] sm:$0xf]
      %v886 = vld [vmem:[%s8 + $0x8] sm:$0xf]
      %v887 = vld [vmem:[%s8 + $0xc] sm:$0xf]
      %v888 = vld [vmem:[%s9] sm:$0x1]
      %v889 = vld [vmem:[%s10] sm:$0xf]
      %v890 = vld [vmem:[%s10 + $0x4] sm:$0xf]
      %v891 = vld [vmem:[%s10 + $0x8] sm:$0xf]
      %v892 = vld [vmem:[%s10 + $0xc] sm:$0xf]
      %v893 = vld [vmem:[%s10 + $0x10] sm:$0xf]
      %v894 = vld [vmem:[%s10 + $0x14] sm:$0xf]
      %v895 = vld [vmem:[%s10 + $0x18] sm:$0xf]
      %v896 = vld [vmem:[%s10 + $0x1c] sm:$0xf]
      %v897 = vld [vmem:[%s10 + $0x20] sm:$0xf]
      %v898 = vld [vmem:[%s10 + $0x24] sm:$0xf]
      %v899 = vld [vmem:[%s10 + $0x28] sm:$0xf]
      %v900 = vld [vmem:[%s10 + $0x2c] sm:$0xf]
      %v901 = vld [vmem:[%s10 + $0x30] sm:$0xf]
      %v902 = vld [vmem:[%s10 + $0x34] sm:$0xf]
      %v903 = vld [vmem:[%s10 + $0x38] sm:$0xf]
      %v904 = vld [vmem:[%s10 + $0x3c] sm:$0xf]
      %v905 = vld [vmem:[%s11] sm:$0x1]
      %v906 = vpack.c.bf16 %v883, %v883
      %v908 = vperm.slane %v888, 0
      %v914 = vunpack.c.l.b16 %v884
      %v915 = vunpack.c.l.b16 %v885
      %v916 = vunpack.c.l.b16 %v886
      %v917 = vunpack.c.l.b16 %v887
      %v918 = vpack.c.b16 %v915, %v914
      %v919 = vpack.c.b16 %v917, %v916
      %v923 = vsel %vm501, %v906, 0
      %925 = vmatpush.bf16.msra.mxu0 0
      %926 = vmatpush.bf16.msra.mxu0 0
      %927 = vmatpush.bf16.msra.mxu0 0
      %928 = vmatpush.bf16.msra.mxu0 0
      %929 = vmatpush.bf16.msra.mxu0 0
      %930 = vmatpush.bf16.msra.mxu0 0
      %931 = vmatpush.bf16.msra.mxu0 %v919
      %932 = vmatpush.bf16.msra.mxu0 %v918
      %933 = vmatmul.bf16.gmra.mxu0 %v923
      %v934 = vpop.f32.mrf.mxu0
      %v935 = vadd.f32 %v908, %v934
      %v936 = vpop.f32.mrf.mxu0
      %937 = vdwg.mxu0
      %v938 = vmax.f32 %v935, 0.0
      %v939 = vpack.c.bf16 %v938, %v938
      %v941 = vperm.slane %v905, 0
      %v959 = vunpack.c.l.b16 %v889
      %v960 = vunpack.c.l.b16 %v890
      %v961 = vunpack.c.l.b16 %v891
      %v962 = vunpack.c.l.b16 %v892
      %v963 = vunpack.c.l.b16 %v893
      %v964 = vunpack.c.l.b16 %v894
      %v965 = vunpack.c.l.b16 %v895
      %v966 = vunpack.c.l.b16 %v896
      %v967 = vunpack.c.l.b16 %v897
      %v968 = vunpack.c.l.b16 %v898
      %v969 = vunpack.c.l.b16 %v899
      %v970 = vunpack.c.l.b16 %v900
      %v971 = vunpack.c.l.b16 %v901
      %v972 = vunpack.c.l.b16 %v902
      %v973 = vunpack.c.l.b16 %v903
      %v974 = vunpack.c.l.b16 %v904
      %v975 = vpack.c.b16 %v960, %v959
      %v976 = vpack.c.b16 %v962, %v961
      %v977 = vpack.c.b16 %v964, %v963
      %v978 = vpack.c.b16 %v966, %v965
      %v979 = vpack.c.b16 %v968, %v967
      %v980 = vpack.c.b16 %v970, %v969
      %v981 = vpack.c.b16 %v972, %v971
      %v982 = vpack.c.b16 %v974, %v973
      %991 = vmatpush.bf16.msra.mxu0 %v982
      %992 = vmatpush.bf16.msra.mxu0 %v981
      %993 = vmatpush.bf16.msra.mxu0 %v980
      %994 = vmatpush.bf16.msra.mxu0 %v979
      %995 = vmatpush.bf16.msra.mxu0 %v978
      %996 = vmatpush.bf16.msra.mxu0 %v977
      %997 = vmatpush.bf16.msra.mxu0 %v976
      %998 = vmatpush.bf16.msra.mxu0 %v975
      %999 = vmatmul.bf16.gmra.mxu0 %v939
      %v1000 = vpop.f32.mrf.mxu0
      %v1001 = vadd.f32 %v941, %v1000
      %v1002 = vpop.f32.mrf.mxu0
      %1003 = vdwg.mxu0
      %v1004 = vadd.f32 %v883, %v1001
      %v1005 = vld [vmem:[%s12] sm:$0x1]
      %v1006 = vld [vmem:[%s13] sm:$0x1]
      %v1007 = vsel %vm501, %v1004, 0.0
      %1008 = vadd.xlane.f32.xlu0 %v1007
      %v1009 = vpop.xlane.xlu0 %1008
      %v1010 = vmul.f32 %v1009, %v856
      %v1011 = vsub.f32 %v1004, %v1010
      %v1012 = vmul.f32 %v1011, %v1011
      %v1013 = vsel %vm501, %v1012, 0.0
      %1014 = vadd.xlane.f32.xlu0 %v1013
      %v1015 = vpop.xlane.xlu0 %1014
      %v1016 = vmul.f32 %v1015, %v856
      %v1017 = vadd.f32 %v1016, 1e-05
      %v1018 = vrsqrt.pop %v1017
      %v1019 = vmul.f32 %v1018, %v1017
      %v1020 = vmul.f32 %v1019, %v1018
      %v1021 = vmul.f32 0.5, %v1020
      %v1022 = vsub.f32 1.5, %v1021
      %v1023 = vmul.f32 %v1018, %v1022
      %vm1024 = vweird.f32 %v1017
      %vm1025 = vweird.f32 %v1018
      %vm1026 = vmor %vm1024, %vm1025
      %v1027 = vsel %vm1026, %v1018, %v1023
      %v1028 = vmul.f32 %v1011, %v1027
      %v1030 = vperm.slane %v1005, 0
      %v1032 = vmul.f32 %v1028, %v1030
      %v1034 = vperm.slane %v1006, 0
      %v1036 = vadd.f32 %v1032, %v1034
      %1037 = vst.msk [vmem:[%s476] sm:$0xff] %vm501, %v1036
      %p1038 = scmp.lt.s32.totalorder %s25, 1
      %s1039 = scalar_select %p1038, %s25, 1
      %s1040 = smul.addr %s1039, 8
      %s1041 = scalar_lea.vmem %s14, %s1040
      // Predicated region
      $region77: #{transformer_forward.5} parent=75 // pred_check
        %p1042 = pneg %p347
      $region78: #{transformer_forward.5} parent=75 // pred_check_branch
        %1044 = sbr.rel (%p1042) target = $region80
      $region79: #{transformer_forward.5} parent=75 // pred_region
        _
      $region80: #{transformer_forward.5} parent=75 // pred_fallthru
        _
    $region76: #{transformer_forward.5} parent=5 // pred_fallthru
      _
    %p1045 = scmp.le.s32.totalorder 2, %s20
    // Predicated region
    $region81: #{transformer_forward.5} parent=5 // pred_check
      %p1046 = pneg %p1045
    $region82: #{transformer_forward.5} parent=5 // pred_check_branch
      %1048 = sbr.rel (%p1046) target = $region84
    $region83: #{transformer_forward.5} parent=5 // pred_region
      %s1049 = ssub.s32 %s20, 2
      // Predicated region
      $region85: #{transformer_forward.5} parent=83 // pred_check
        %p1050 = pneg %p353
      $region86: #{transformer_forward.5} parent=83 // pred_check_branch
        %1052 = sbr.rel (%p1050) target = $region88
      $region87: #{transformer_forward.5} parent=83 // pred_region
        %p1053 = scmp.lt.s32.totalorder %s26, 1
        %s1054 = scalar_select %p1053, %s26, 1
        %s1055 = smul.addr %s1054, 8
        %s1056 = scalar_lea.vmem %s14, %s1055
      $region88: #{transformer_forward.5} parent=83 // pred_fallthru
        _
    $region84: #{transformer_forward.5} parent=5 // pred_fallthru
      _
  $region6: #{transformer_forward.5} parent=0 // loop_footer
    %s24 = sadd.s32 1, %s20
  $region7: #{transformer_forward.5} parent=0 // loop_footer_branch
    %19 = sbr.rel target = $region3
  $region8: #{transformer_forward.5} parent=0 // loop_exit
    _

// kernel: transformer_forward.8
$region0: #{transformer_forward.8}
  #allocation0 [shape = 'u32[]', space=smem, size = 0x4, offset = 0x4, fixed_abs, tag = 'smem constant byte address 0x4 - core index']
  #allocation1 [shape = 'u32[72,128]{1,0:T(1,128)}', space=vmem, size = 0x9000, scoped, tag = 'internal scratch']
  %s0 = inlined_call_operand.vmem [shape: f32[2,8,32], index: 0, kind: input, shape index: {}]
  %s1 = inlined_call_operand.vmem [shape: f32[2,8,32], index: 1, kind: input, shape index: {}]
  %s2 = inlined_call_operand.vmem [shape: f32[2,1,8], index: 2, kind: input, shape index: {}]
  %s3 = inlined_call_operand.vmem [shape: f32[2,1,8], index: 3, kind: input, shape index: {}]
  %s4 = inlined_call_operand.vmem [shape: bf16[32,96], index: 4, kind: input, shape index: {}]
  %s5 = inlined_call_operand.vmem [shape: f32[1,96], index: 5, kind: input, shape index: {}]
  %s6 = inlined_call_operand.vmem [shape: bf16[4,8,32], index: 6, kind: input, shape index: {}]
  %s7 = inlined_call_operand.vmem [shape: f32[1,32], index: 7, kind: input, shape index: {}]
  %s8 = inlined_call_operand.vmem [shape: f32[1,32], index: 8, kind: input, shape index: {}]
  %s9 = inlined_call_operand.vmem [shape: f32[1,32], index: 9, kind: input, shape index: {}]
  %s10 = inlined_call_operand.vmem [shape: bf16[32,32], index: 10, kind: input, shape index: {}]
  %s11 = inlined_call_operand.vmem [shape: f32[1,32], index: 11, kind: input, shape index: {}]
  %s12 = inlined_call_operand.vmem [shape: bf16[32,64], index: 12, kind: input, shape index: {}]
  %s13 = inlined_call_operand.vmem [shape: f32[1,64], index: 13, kind: input, shape index: {}]
  %s14 = inlined_call_operand.vmem [shape: bf16[4,8,32], index: 14, kind: input, shape index: {}]
  %s15 = inlined_call_operand.vmem [shape: f32[1,32], index: 15, kind: input, shape index: {}]
  %s16 = inlined_call_operand.vmem [shape: f32[1,32], index: 16, kind: input, shape index: {}]
  %s17 = inlined_call_operand.vmem [shape: f32[1,32], index: 17, kind: input, shape index: {}]
  %s18 = inlined_call_operand.vmem [shape: bf16[32,128], index: 18, kind: input, shape index: {}]
  %s19 = inlined_call_operand.vmem [shape: f32[1,128], index: 19, kind: input, shape index: {}]
  %s20 = inlined_call_operand.vmem [shape: bf16[128,32], index: 20, kind: input, shape index: {}]
  %s21 = inlined_call_operand.vmem [shape: f32[1,32], index: 21, kind: input, shape index: {}]
  %s22 = inlined_call_operand.hbm [shape: f32[1,32], index: 22, kind: input, shape index: {}]
  %s23 = inlined_call_operand.hbm [shape: f32[1,32], index: 23, kind: input, shape index: {}]
  %s24 = inlined_call_operand.vmem [shape: f32[2,8,32], index: 24, kind: output, shape index: {}]
  %s25 = sld [smem:[#allocation0]]
  $region137: #{transformer_forward.8} parent=0
    _
  %s27 = ssub.s32 1, %s25
  %s28 = scalar_select 0, %s27, %s25
  $region1: #{transformer_forward.8} parent=0
    #allocation2 [shape = 'u8[512]{0}', space=vmem, size = 0x400, scoped, tag = 'input window, operand 22, single buffered']
    #allocation3 [shape = 's32[2]{0}', space=sflag, size = 0x8, scoped, tag = 'scoped memory for transformer_forward.8']
    #allocation4 [shape = 'u8[512]{0}', space=vmem, size = 0x400, scoped, tag = 'input window, operand 23, single buffered']
    #allocation5 [shape = 's32[1]{0}', space=sflag, size = 0x4, scoped, tag = 'scoped memory for transformer_forward.8']
    %29 = vsyncpa [#allocation3], 0
    %30 = vsyncpa [#allocation5], 0
    loop: start=0, step=1, limit=4
    $region2: #{transformer_forward.8} parent=1 // loop_pre_header
      _
    $region3: #{transformer_forward.8} parent=1 // loop_header
      %s32 = sphi 0, %s36
      %p33 = scmp.ge.s32.totalorder %s32, 4
      %s42 = sphi 0, %s44
      %s45 = sphi 0, %s42
      %s46 = sphi 0, %s45
      %s62 = sphi 0, %s46
      %s68 = sphi 0, %s70
      %s71 = sphi 0, %s68
      %s72 = sphi 0, %s71
      %s88 = sphi 0, %s72
      %s94 = sphi 0, %s96
      %s97 = sphi 0, %s94
      %s98 = sphi 0, %s97
      %s114 = sphi 0, %s98
      %s120 = sphi 0, %s122
      %s123 = sphi 0, %s120
      %s124 = sphi 0, %s123
      %s140 = sphi 0, %s124
      %s144 = sphi 0, %s144
      %s146 = sphi 0, %s144
      %s147 = sphi 0, %s146
      %s161 = sphi 0, %s147
      %s165 = sphi 0, %s165
      %s167 = sphi 0, %s165
      %s168 = sphi 0, %s167
      %s182 = sphi 0, %s168
      %s186 = sphi 0, %s186
      %s188 = sphi 0, %s186
      %s189 = sphi 0, %s188
      %s203 = sphi 0, %s189
      %s207 = sphi 0, %s207
      %s209 = sphi 0, %s207
      %s210 = sphi 0, %s209
      %s224 = sphi 0, %s210
      %s228 = sphi 0, %s228
      %s230 = sphi 0, %s228
      %s231 = sphi 0, %s230
      %s245 = sphi 0, %s231
      %s249 = sphi 0, %s249
      %s251 = sphi 0, %s249
      %s252 = sphi 0, %s251
      %s266 = sphi 0, %s252
      %s270 = sphi 0, %s270
      %s272 = sphi 0, %s270
      %s273 = sphi 0, %s272
      %s287 = sphi 0, %s273
      %s291 = sphi 0, %s291
      %s293 = sphi 0, %s291
      %s294 = sphi 0, %s293
      %s308 = sphi 0, %s294
      %s312 = sphi 0, %s312
      %s314 = sphi 0, %s312
      %s315 = sphi 0, %s314
      %s329 = sphi 0, %s315
      %s333 = sphi 0, %s333
      %s335 = sphi 0, %s333
      %s336 = sphi 0, %s335
      %s350 = sphi 0, %s336
      %s354 = sphi 0, %s354
      %s356 = sphi 0, %s354
      %s357 = sphi 0, %s356
      %s371 = sphi 0, %s357
      %s375 = sphi 0, %s375
      %s377 = sphi 0, %s375
      %s378 = sphi 0, %s377
      %s392 = sphi 0, %s378
      %s396 = sphi 0, %s396
      %s398 = sphi 0, %s396
      %s399 = sphi 0, %s398
      %s413 = sphi 0, %s399
      %s417 = sphi 0, %s417
      %s419 = sphi 0, %s417
      %s420 = sphi 0, %s419
      %s434 = sphi 0, %s420
      %s438 = sphi 0, %s438
      %s440 = sphi 0, %s438
      %s441 = sphi 0, %s440
      %s455 = sphi 0, %s441
      %s459 = sphi 0, %s459
      %s461 = sphi 0, %s459
      %s462 = sphi 0, %s461
      %s476 = sphi 0, %s462
      %s480 = sphi 0, %s480
      %s482 = sphi 0, %s480
      %s483 = sphi 0, %s482
      %s497 = sphi 0, %s483
      %s501 = sphi 0, %s501
      %s503 = sphi 0, %s501
      %s504 = sphi 0, %s503
      %s518 = sphi 0, %s504
      %s522 = sphi 0, %s522
      %s524 = sphi 0, %s522
      %s525 = sphi 0, %s524
      %s539 = sphi 0, %s525
      %s543 = sphi 0, %s543
      %s545 = sphi 0, %s543
      %s546 = sphi 0, %s545
      %s560 = sphi 0, %s546
      %s566 = sphi 0, %s568
      %s569 = sphi 0, %s566
      %s570 = sphi 0, %s569
      %s586 = sphi 0, %s570
    $region4: #{transformer_forward.8} parent=1 // loop_header_branch
      %35 = sbr.rel (%p33) target = $region8
    $region5: #{transformer_forward.8} parent=1 // loop_body
      %s37 = ssub.s32 %s32, 1
      %s38 = ssub.s32 %s32, 2
      %s39 = sadd.s32 %s32, 1
      %s40 = ssub.s32 %s32, %s39
      %p41 = scmp.eq.s32.totalorder %s40, 0
      %s43 = sadd.s32 %s42, 1
      %s44 = scalar_select %p41, %s42, %s43
      %p47 = pneg %p41
      %p48 = scmp.eq.s32.totalorder %s32, 1
      %p49 = por %p47, %p48
      %p50 = scmp.ne.s32.totalorder %s42, %s45
      %p51 = scmp.eq.s32.totalorder %s32, 0
      %p52 = por %p50, %p51
      %p53 = scmp.ne.s32.totalorder %s42, %s45
      %p54 = scmp.eq.s32.totalorder %s37, 1
      %p55 = por %p53, %p54
      %p56 = scmp.ne.s32.totalorder %s45, %s46
      %p57 = scmp.eq.s32.totalorder %s37, 0
      %p58 = por %p56, %p57
      %p59 = scmp.ne.s32.totalorder %s45, %s46
      %p60 = scmp.eq.s32.totalorder %s38, 1
      %p61 = por %p59, %p60
      %p63 = scmp.ne.s32.totalorder %s46, %s62
      %p64 = scmp.eq.s32.totalorder %s38, 0
      %p65 = por %p63, %p64
      %s66 = ssub.s32 %s32, %s39
      %p67 = scmp.eq.s32.totalorder %s66, 0
      %s69 = sadd.s32 %s68, 1
      %s70 = scalar_select %p67, %s68, %s69
      %p73 = pneg %p67
      %p74 = scmp.eq.s32.totalorder %s32, 1
      %p75 = por %p73, %p74
      %p76 = scmp.ne.s32.totalorder %s68, %s71
      %p77 = scmp.eq.s32.totalorder %s32, 0
      %p78 = por %p76, %p77
      %p79 = scmp.ne.s32.totalorder %s68, %s71
      %p80 = scmp.eq.s32.totalorder %s37, 1
      %p81 = por %p79, %p80
      %p82 = scmp.ne.s32.totalorder %s71, %s72
      %p83 = scmp.eq.s32.totalorder %s37, 0
      %p84 = por %p82, %p83
      %p85 = scmp.ne.s32.totalorder %s71, %s72
      %p86 = scmp.eq.s32.totalorder %s38, 1
      %p87 = por %p85, %p86
      %p89 = scmp.ne.s32.totalorder %s72, %s88
      %p90 = scmp.eq.s32.totalorder %s38, 0
      %p91 = por %p89, %p90
      %s92 = ssub.s32 %s32, %s39
      %p93 = scmp.eq.s32.totalorder %s92, 0
      %s95 = sadd.s32 %s94, 1
      %s96 = scalar_select %p93, %s94, %s95
      %p99 = pneg %p93
      %p100 = scmp.eq.s32.totalorder %s32, 1
      %p101 = por %p99, %p100
      %p102 = scmp.ne.s32.totalorder %s94, %s97
      %p103 = scmp.eq.s32.totalorder %s32, 0
      %p104 = por %p102, %p103
      %p105 = scmp.ne.s32.totalorder %s94, %s97
      %p106 = scmp.eq.s32.totalorder %s37, 1
      %p107 = por %p105, %p106
      %p108 = scmp.ne.s32.totalorder %s97, %s98
      %p109 = scmp.eq.s32.totalorder %s37, 0
      %p110 = por %p108, %p109
      %p111 = scmp.ne.s32.totalorder %s97, %s98
      %p112 = scmp.eq.s32.totalorder %s38, 1
      %p113 = por %p111, %p112
      %p115 = scmp.ne.s32.totalorder %s98, %s114
      %p116 = scmp.eq.s32.totalorder %s38, 0
      %p117 = por %p115, %p116
      %s118 = ssub.s32 %s32, %s39
      %p119 = scmp.eq.s32.totalorder %s118, 0
      %s121 = sadd.s32 %s120, 1
      %s122 = scalar_select %p119, %s120, %s121
      %p125 = pneg %p119
      %p126 = scmp.eq.s32.totalorder %s32, 1
      %p127 = por %p125, %p126
      %p128 = scmp.ne.s32.totalorder %s120, %s123
      %p129 = scmp.eq.s32.totalorder %s32, 0
      %p130 = por %p128, %p129
      %p131 = scmp.ne.s32.totalorder %s120, %s123
      %p132 = scmp.eq.s32.totalorder %s37, 1
      %p133 = por %p131, %p132
      %p134 = scmp.ne.s32.totalorder %s123, %s124
      %p135 = scmp.eq.s32.totalorder %s37, 0
      %p136 = por %p134, %p135
      %p137 = scmp.ne.s32.totalorder %s123, %s124
      %p138 = scmp.eq.s32.totalorder %s38, 1
      %p139 = por %p137, %p138
      %p141 = scmp.ne.s32.totalorder %s124, %s140
      %p142 = scmp.eq.s32.totalorder %s38, 0
      %p143 = por %p141, %p142
      %s145 = sadd.s32 %s144, 1
      %p148 = scmp.eq.s32.totalorder %s32, 1
      %p149 = scmp.ne.s32.totalorder %s144, %s146
      %p150 = scmp.eq.s32.totalorder %s32, 0
      %p151 = por %p149, %p150
      %p152 = scmp.ne.s32.totalorder %s144, %s146
      %p153 = scmp.eq.s32.totalorder %s37, 1
      %p154 = por %p152, %p153
      %p155 = scmp.ne.s32.totalorder %s146, %s147
      %p156 = scmp.eq.s32.totalorder %s37, 0
      %p157 = por %p155, %p156
      %p158 = scmp.ne.s32.totalorder %s146, %s147
      %p159 = scmp.eq.s32.totalorder %s38, 1
      %p160 = por %p158, %p159
      %p162 = scmp.ne.s32.totalorder %s147, %s161
      %p163 = scmp.eq.s32.totalorder %s38, 0
      %p164 = por %p162, %p163
      %s166 = sadd.s32 %s165, 1
      %p169 = scmp.eq.s32.totalorder %s32, 1
      %p170 = scmp.ne.s32.totalorder %s165, %s167
      %p171 = scmp.eq.s32.totalorder %s32, 0
      %p172 = por %p170, %p171
      %p173 = scmp.ne.s32.totalorder %s165, %s167
      %p174 = scmp.eq.s32.totalorder %s37, 1
      %p175 = por %p173, %p174
      %p176 = scmp.ne.s32.totalorder %s167, %s168
      %p177 = scmp.eq.s32.totalorder %s37, 0
      %p178 = por %p176, %p177
      %p179 = scmp.ne.s32.totalorder %s167, %s168
      %p180 = scmp.eq.s32.totalorder %s38, 1
      %p181 = por %p179, %p180
      %p183 = scmp.ne.s32.totalorder %s168, %s182
      %p184 = scmp.eq.s32.totalorder %s38, 0
      %p185 = por %p183, %p184
      %s187 = sadd.s32 %s186, 1
      %p190 = scmp.eq.s32.totalorder %s32, 1
      %p191 = scmp.ne.s32.totalorder %s186, %s188
      %p192 = scmp.eq.s32.totalorder %s32, 0
      %p193 = por %p191, %p192
      %p194 = scmp.ne.s32.totalorder %s186, %s188
      %p195 = scmp.eq.s32.totalorder %s37, 1
      %p196 = por %p194, %p195
      %p197 = scmp.ne.s32.totalorder %s188, %s189
      %p198 = scmp.eq.s32.totalorder %s37, 0
      %p199 = por %p197, %p198
      %p200 = scmp.ne.s32.totalorder %s188, %s189
      %p201 = scmp.eq.s32.totalorder %s38, 1
      %p202 = por %p200, %p201
      %p204 = scmp.ne.s32.totalorder %s189, %s203
      %p205 = scmp.eq.s32.totalorder %s38, 0
      %p206 = por %p204, %p205
      %s208 = sadd.s32 %s207, 1
      %p211 = scmp.eq.s32.totalorder %s32, 1
      %p212 = scmp.ne.s32.totalorder %s207, %s209
      %p213 = scmp.eq.s32.totalorder %s32, 0
      %p214 = por %p212, %p213
      %p215 = scmp.ne.s32.totalorder %s207, %s209
      %p216 = scmp.eq.s32.totalorder %s37, 1
      %p217 = por %p215, %p216
      %p218 = scmp.ne.s32.totalorder %s209, %s210
      %p219 = scmp.eq.s32.totalorder %s37, 0
      %p220 = por %p218, %p219
      %p221 = scmp.ne.s32.totalorder %s209, %s210
      %p222 = scmp.eq.s32.totalorder %s38, 1
      %p223 = por %p221, %p222
      %p225 = scmp.ne.s32.totalorder %s210, %s224
      %p226 = scmp.eq.s32.totalorder %s38, 0
      %p227 = por %p225, %p226
      %s229 = sadd.s32 %s228, 1
      %p232 = scmp.eq.s32.totalorder %s32, 1
      %p233 = scmp.ne.s32.totalorder %s228, %s230
      %p234 = scmp.eq.s32.totalorder %s32, 0
      %p235 = por %p233, %p234
      %p236 = scmp.ne.s32.totalorder %s228, %s230
      %p237 = scmp.eq.s32.totalorder %s37, 1
      %p238 = por %p236, %p237
      %p239 = scmp.ne.s32.totalorder %s230, %s231
      %p240 = scmp.eq.s32.totalorder %s37, 0
      %p241 = por %p239, %p240
      %p242 = scmp.ne.s32.totalorder %s230, %s231
      %p243 = scmp.eq.s32.totalorder %s38, 1
      %p244 = por %p242, %p243
      %p246 = scmp.ne.s32.totalorder %s231, %s245
      %p247 = scmp.eq.s32.totalorder %s38, 0
      %p248 = por %p246, %p247
      %s250 = sadd.s32 %s249, 1
      %p253 = scmp.eq.s32.totalorder %s32, 1
      %p254 = scmp.ne.s32.totalorder %s249, %s251
      %p255 = scmp.eq.s32.totalorder %s32, 0
      %p256 = por %p254, %p255
      %p257 = scmp.ne.s32.totalorder %s249, %s251
      %p258 = scmp.eq.s32.totalorder %s37, 1
      %p259 = por %p257, %p258
      %p260 = scmp.ne.s32.totalorder %s251, %s252
      %p261 = scmp.eq.s32.totalorder %s37, 0
      %p262 = por %p260, %p261
      %p263 = scmp.ne.s32.totalorder %s251, %s252
      %p264 = scmp.eq.s32.totalorder %s38, 1
      %p265 = por %p263, %p264
      %p267 = scmp.ne.s32.totalorder %s252, %s266
      %p268 = scmp.eq.s32.totalorder %s38, 0
      %p269 = por %p267, %p268
      %s271 = sadd.s32 %s270, 1
      %p274 = scmp.eq.s32.totalorder %s32, 1
      %p275 = scmp.ne.s32.totalorder %s270, %s272
      %p276 = scmp.eq.s32.totalorder %s32, 0
      %p277 = por %p275, %p276
      %p278 = scmp.ne.s32.totalorder %s270, %s272
      %p279 = scmp.eq.s32.totalorder %s37, 1
      %p280 = por %p278, %p279
      %p281 = scmp.ne.s32.totalorder %s272, %s273
      %p282 = scmp.eq.s32.totalorder %s37, 0
      %p283 = por %p281, %p282
      %p284 = scmp.ne.s32.totalorder %s272, %s273
      %p285 = scmp.eq.s32.totalorder %s38, 1
      %p286 = por %p284, %p285
      %p288 = scmp.ne.s32.totalorder %s273, %s287
      %p289 = scmp.eq.s32.totalorder %s38, 0
      %p290 = por %p288, %p289
      %s292 = sadd.s32 %s291, 1
      %p295 = scmp.eq.s32.totalorder %s32, 1
      %p296 = scmp.ne.s32.totalorder %s291, %s293
      %p297 = scmp.eq.s32.totalorder %s32, 0
      %p298 = por %p296, %p297
      %p299 = scmp.ne.s32.totalorder %s291, %s293
      %p300 = scmp.eq.s32.totalorder %s37, 1
      %p301 = por %p299, %p300
      %p302 = scmp.ne.s32.totalorder %s293, %s294
      %p303 = scmp.eq.s32.totalorder %s37, 0
      %p304 = por %p302, %p303
      %p305 = scmp.ne.s32.totalorder %s293, %s294
      %p306 = scmp.eq.s32.totalorder %s38, 1
      %p307 = por %p305, %p306
      %p309 = scmp.ne.s32.totalorder %s294, %s308
      %p310 = scmp.eq.s32.totalorder %s38, 0
      %p311 = por %p309, %p310
      %s313 = sadd.s32 %s312, 1
      %p316 = scmp.eq.s32.totalorder %s32, 1
      %p317 = scmp.ne.s32.totalorder %s312, %s314
      %p318 = scmp.eq.s32.totalorder %s32, 0
      %p319 = por %p317, %p318
      %p320 = scmp.ne.s32.totalorder %s312, %s314
      %p321 = scmp.eq.s32.totalorder %s37, 1
      %p322 = por %p320, %p321
      %p323 = scmp.ne.s32.totalorder %s314, %s315
      %p324 = scmp.eq.s32.totalorder %s37, 0
      %p325 = por %p323, %p324
      %p326 = scmp.ne.s32.totalorder %s314, %s315
      %p327 = scmp.eq.s32.totalorder %s38, 1
      %p328 = por %p326, %p327
      %p330 = scmp.ne.s32.totalorder %s315, %s329
      %p331 = scmp.eq.s32.totalorder %s38, 0
      %p332 = por %p330, %p331
      %s334 = sadd.s32 %s333, 1
      %p337 = scmp.eq.s32.totalorder %s32, 1
      %p338 = scmp.ne.s32.totalorder %s333, %s335
      %p339 = scmp.eq.s32.totalorder %s32, 0
      %p340 = por %p338, %p339
      %p341 = scmp.ne.s32.totalorder %s333, %s335
      %p342 = scmp.eq.s32.totalorder %s37, 1
      %p343 = por %p341, %p342
      %p344 = scmp.ne.s32.totalorder %s335, %s336
      %p345 = scmp.eq.s32.totalorder %s37, 0
      %p346 = por %p344, %p345
      %p347 = scmp.ne.s32.totalorder %s335, %s336
      %p348 = scmp.eq.s32.totalorder %s38, 1
      %p349 = por %p347, %p348
      %p351 = scmp.ne.s32.totalorder %s336, %s350
      %p352 = scmp.eq.s32.totalorder %s38, 0
      %p353 = por %p351, %p352
      %s355 = sadd.s32 %s354, 1
      %p358 = scmp.eq.s32.totalorder %s32, 1
      %p359 = scmp.ne.s32.totalorder %s354, %s356
      %p360 = scmp.eq.s32.totalorder %s32, 0
      %p361 = por %p359, %p360
      %p362 = scmp.ne.s32.totalorder %s354, %s356
      %p363 = scmp.eq.s32.totalorder %s37, 1
      %p364 = por %p362, %p363
      %p365 = scmp.ne.s32.totalorder %s356, %s357
      %p366 = scmp.eq.s32.totalorder %s37, 0
      %p367 = por %p365, %p366
      %p368 = scmp.ne.s32.totalorder %s356, %s357
      %p369 = scmp.eq.s32.totalorder %s38, 1
      %p370 = por %p368, %p369
      %p372 = scmp.ne.s32.totalorder %s357, %s371
      %p373 = scmp.eq.s32.totalorder %s38, 0
      %p374 = por %p372, %p373
      %s376 = sadd.s32 %s375, 1
      %p379 = scmp.eq.s32.totalorder %s32, 1
      %p380 = scmp.ne.s32.totalorder %s375, %s377
      %p381 = scmp.eq.s32.totalorder %s32, 0
      %p382 = por %p380, %p381
      %p383 = scmp.ne.s32.totalorder %s375, %s377
      %p384 = scmp.eq.s32.totalorder %s37, 1
      %p385 = por %p383, %p384
      %p386 = scmp.ne.s32.totalorder %s377, %s378
      %p387 = scmp.eq.s32.totalorder %s37, 0
      %p388 = por %p386, %p387
      %p389 = scmp.ne.s32.totalorder %s377, %s378
      %p390 = scmp.eq.s32.totalorder %s38, 1
      %p391 = por %p389, %p390
      %p393 = scmp.ne.s32.totalorder %s378, %s392
      %p394 = scmp.eq.s32.totalorder %s38, 0
      %p395 = por %p393, %p394
      %s397 = sadd.s32 %s396, 1
      %p400 = scmp.eq.s32.totalorder %s32, 1
      %p401 = scmp.ne.s32.totalorder %s396, %s398
      %p402 = scmp.eq.s32.totalorder %s32, 0
      %p403 = por %p401, %p402
      %p404 = scmp.ne.s32.totalorder %s396, %s398
      %p405 = scmp.eq.s32.totalorder %s37, 1
      %p406 = por %p404, %p405
      %p407 = scmp.ne.s32.totalorder %s398, %s399
      %p408 = scmp.eq.s32.totalorder %s37, 0
      %p409 = por %p407, %p408
      %p410 = scmp.ne.s32.totalorder %s398, %s399
      %p411 = scmp.eq.s32.totalorder %s38, 1
      %p412 = por %p410, %p411
      %p414 = scmp.ne.s32.totalorder %s399, %s413
      %p415 = scmp.eq.s32.totalorder %s38, 0
      %p416 = por %p414, %p415
      %s418 = sadd.s32 %s417, 1
      %p421 = scmp.eq.s32.totalorder %s32, 1
      %p422 = scmp.ne.s32.totalorder %s417, %s419
      %p423 = scmp.eq.s32.totalorder %s32, 0
      %p424 = por %p422, %p423
      %p425 = scmp.ne.s32.totalorder %s417, %s419
      %p426 = scmp.eq.s32.totalorder %s37, 1
      %p427 = por %p425, %p426
      %p428 = scmp.ne.s32.totalorder %s419, %s420
      %p429 = scmp.eq.s32.totalorder %s37, 0
      %p430 = por %p428, %p429
      %p431 = scmp.ne.s32.totalorder %s419, %s420
      %p432 = scmp.eq.s32.totalorder %s38, 1
      %p433 = por %p431, %p432
      %p435 = scmp.ne.s32.totalorder %s420, %s434
      %p436 = scmp.eq.s32.totalorder %s38, 0
      %p437 = por %p435, %p436
      %s439 = sadd.s32 %s438, 1
      %p442 = scmp.eq.s32.totalorder %s32, 1
      %p443 = scmp.ne.s32.totalorder %s438, %s440
      %p444 = scmp.eq.s32.totalorder %s32, 0
      %p445 = por %p443, %p444
      %p446 = scmp.ne.s32.totalorder %s438, %s440
      %p447 = scmp.eq.s32.totalorder %s37, 1
      %p448 = por %p446, %p447
      %p449 = scmp.ne.s32.totalorder %s440, %s441
      %p450 = scmp.eq.s32.totalorder %s37, 0
      %p451 = por %p449, %p450
      %p452 = scmp.ne.s32.totalorder %s440, %s441
      %p453 = scmp.eq.s32.totalorder %s38, 1
      %p454 = por %p452, %p453
      %p456 = scmp.ne.s32.totalorder %s441, %s455
      %p457 = scmp.eq.s32.totalorder %s38, 0
      %p458 = por %p456, %p457
      %s460 = sadd.s32 %s459, 1
      %p463 = scmp.eq.s32.totalorder %s32, 1
      %p464 = scmp.ne.s32.totalorder %s459, %s461
      %p465 = scmp.eq.s32.totalorder %s32, 0
      %p466 = por %p464, %p465
      %p467 = scmp.ne.s32.totalorder %s459, %s461
      %p468 = scmp.eq.s32.totalorder %s37, 1
      %p469 = por %p467, %p468
      %p470 = scmp.ne.s32.totalorder %s461, %s462
      %p471 = scmp.eq.s32.totalorder %s37, 0
      %p472 = por %p470, %p471
      %p473 = scmp.ne.s32.totalorder %s461, %s462
      %p474 = scmp.eq.s32.totalorder %s38, 1
      %p475 = por %p473, %p474
      %p477 = scmp.ne.s32.totalorder %s462, %s476
      %p478 = scmp.eq.s32.totalorder %s38, 0
      %p479 = por %p477, %p478
      %s481 = sadd.s32 %s480, 1
      %p484 = scmp.eq.s32.totalorder %s32, 1
      %p485 = scmp.ne.s32.totalorder %s480, %s482
      %p486 = scmp.eq.s32.totalorder %s32, 0
      %p487 = por %p485, %p486
      %p488 = scmp.ne.s32.totalorder %s480, %s482
      %p489 = scmp.eq.s32.totalorder %s37, 1
      %p490 = por %p488, %p489
      %p491 = scmp.ne.s32.totalorder %s482, %s483
      %p492 = scmp.eq.s32.totalorder %s37, 0
      %p493 = por %p491, %p492
      %p494 = scmp.ne.s32.totalorder %s482, %s483
      %p495 = scmp.eq.s32.totalorder %s38, 1
      %p496 = por %p494, %p495
      %p498 = scmp.ne.s32.totalorder %s483, %s497
      %p499 = scmp.eq.s32.totalorder %s38, 0
      %p500 = por %p498, %p499
      %s502 = sadd.s32 %s501, 1
      %p505 = scmp.eq.s32.totalorder %s32, 1
      %p506 = scmp.ne.s32.totalorder %s501, %s503
      %p507 = scmp.eq.s32.totalorder %s32, 0
      %p508 = por %p506, %p507
      %p509 = scmp.ne.s32.totalorder %s501, %s503
      %p510 = scmp.eq.s32.totalorder %s37, 1
      %p511 = por %p509, %p510
      %p512 = scmp.ne.s32.totalorder %s503, %s504
      %p513 = scmp.eq.s32.totalorder %s37, 0
      %p514 = por %p512, %p513
      %p515 = scmp.ne.s32.totalorder %s503, %s504
      %p516 = scmp.eq.s32.totalorder %s38, 1
      %p517 = por %p515, %p516
      %p519 = scmp.ne.s32.totalorder %s504, %s518
      %p520 = scmp.eq.s32.totalorder %s38, 0
      %p521 = por %p519, %p520
      %s523 = sadd.s32 %s522, 1
      %p526 = scmp.eq.s32.totalorder %s32, 1
      %p527 = scmp.ne.s32.totalorder %s522, %s524
      %p528 = scmp.eq.s32.totalorder %s32, 0
      %p529 = por %p527, %p528
      %p530 = scmp.ne.s32.totalorder %s522, %s524
      %p531 = scmp.eq.s32.totalorder %s37, 1
      %p532 = por %p530, %p531
      %p533 = scmp.ne.s32.totalorder %s524, %s525
      %p534 = scmp.eq.s32.totalorder %s37, 0
      %p535 = por %p533, %p534
      %p536 = scmp.ne.s32.totalorder %s524, %s525
      %p537 = scmp.eq.s32.totalorder %s38, 1
      %p538 = por %p536, %p537
      %p540 = scmp.ne.s32.totalorder %s525, %s539
      %p541 = scmp.eq.s32.totalorder %s38, 0
      %p542 = por %p540, %p541
      %s544 = sadd.s32 %s543, 1
      %p547 = scmp.eq.s32.totalorder %s32, 1
      %p548 = scmp.ne.s32.totalorder %s543, %s545
      %p549 = scmp.eq.s32.totalorder %s32, 0
      %p550 = por %p548, %p549
      %p551 = scmp.ne.s32.totalorder %s543, %s545
      %p552 = scmp.eq.s32.totalorder %s37, 1
      %p553 = por %p551, %p552
      %p554 = scmp.ne.s32.totalorder %s545, %s546
      %p555 = scmp.eq.s32.totalorder %s37, 0
      %p556 = por %p554, %p555
      %p557 = scmp.ne.s32.totalorder %s545, %s546
      %p558 = scmp.eq.s32.totalorder %s38, 1
      %p559 = por %p557, %p558
      %p561 = scmp.ne.s32.totalorder %s546, %s560
      %p562 = scmp.eq.s32.totalorder %s38, 0
      %p563 = por %p561, %p562
      %s564 = ssub.s32 %s32, %s39
      %p565 = scmp.eq.s32.totalorder %s564, 0
      %s567 = sadd.s32 %s566, 1
      %s568 = scalar_select %p565, %s566, %s567
      %p571 = pneg %p565
      %p572 = scmp.eq.s32.totalorder %s32, 1
      %p573 = por %p571, %p572
      %p574 = scmp.ne.s32.totalorder %s566, %s569
      %p575 = scmp.eq.s32.totalorder %s32, 0
      %p576 = por %p574, %p575
      %p577 = scmp.ne.s32.totalorder %s566, %s569
      %p578 = scmp.eq.s32.totalorder %s37, 1
      %p579 = por %p577, %p578
      %p580 = scmp.ne.s32.totalorder %s569, %s570
      %p581 = scmp.eq.s32.totalorder %s37, 0
      %p582 = por %p580, %p581
      %p583 = scmp.ne.s32.totalorder %s569, %s570
      %p584 = scmp.eq.s32.totalorder %s38, 1
      %p585 = por %p583, %p584
      %p587 = scmp.ne.s32.totalorder %s570, %s586
      %p588 = scmp.eq.s32.totalorder %s38, 0
      %p589 = por %p587, %p588
      %p590 = scmp.le.s32.totalorder 1, %s32
      %p591 = scmp.lt.s32.totalorder %s32, 3
      %p592 = pnand %p590, %p591
      %p593 = pneg %p592
      // Predicated region
      $region9: #{transformer_forward.8} parent=5 // pred_check
        _
      $region10: #{transformer_forward.8} parent=5 // pred_check_branch
        %595 = sbr.rel (%p592) target = $region12
      $region11: #{transformer_forward.8} parent=5 // pred_region
        %s596 = ssub.s32 %s32, 1
        // Predicated region
        $region13: #{transformer_forward.8} parent=11 // pred_check
          %p597 = pneg %p157
        $region14: #{transformer_forward.8} parent=11 // pred_check_branch
          %599 = sbr.rel (%p597) target = $region16
        $region15: #{transformer_forward.8} parent=11 // pred_region
          _
        $region16: #{transformer_forward.8} parent=11 // pred_fallthru
          _
        // Predicated region
        $region17: #{transformer_forward.8} parent=11 // pred_check
          %p600 = pneg %p178
        $region18: #{transformer_forward.8} parent=11 // pred_check_branch
          %602 = sbr.rel (%p600) target = $region20
        $region19: #{transformer_forward.8} parent=11 // pred_region
          _
        $region20: #{transformer_forward.8} parent=11 // pred_fallthru
          _
        // Predicated region
        $region21: #{transformer_forward.8} parent=11 // pred_check
          %p603 = pneg %p199
        $region22: #{transformer_forward.8} parent=11 // pred_check_branch
          %605 = sbr.rel (%p603) target = $region24
        $region23: #{transformer_forward.8} parent=11 // pred_region
          _
        $region24: #{transformer_forward.8} parent=11 // pred_fallthru
          _
        // Predicated region
        $region25: #{transformer_forward.8} parent=11 // pred_check
          %p606 = pneg %p220
        $region26: #{transformer_forward.8} parent=11 // pred_check_branch
          %608 = sbr.rel (%p606) target = $region28
        $region27: #{transformer_forward.8} parent=11 // pred_region
          _
        $region28: #{transformer_forward.8} parent=11 // pred_fallthru
          _
        // Predicated region
        $region29: #{transformer_forward.8} parent=11 // pred_check
          %p609 = pneg %p241
        $region30: #{transformer_forward.8} parent=11 // pred_check_branch
          %611 = sbr.rel (%p609) target = $region32
        $region31: #{transformer_forward.8} parent=11 // pred_region
          _
        $region32: #{transformer_forward.8} parent=11 // pred_fallthru
          _
        // Predicated region
        $region33: #{transformer_forward.8} parent=11 // pred_check
          %p612 = pneg %p262
        $region34: #{transformer_forward.8} parent=11 // pred_check_branch
          %614 = sbr.rel (%p612) target = $region36
        $region35: #{transformer_forward.8} parent=11 // pred_region
          _
        $region36: #{transformer_forward.8} parent=11 // pred_fallthru
          _
        // Predicated region
        $region37: #{transformer_forward.8} parent=11 // pred_check
          %p615 = pneg %p283
        $region38: #{transformer_forward.8} parent=11 // pred_check_branch
          %617 = sbr.rel (%p615) target = $region40
        $region39: #{transformer_forward.8} parent=11 // pred_region
          _
        $region40: #{transformer_forward.8} parent=11 // pred_fallthru
          _
        // Predicated region
        $region41: #{transformer_forward.8} parent=11 // pred_check
          %p618 = pneg %p304
        $region42: #{transformer_forward.8} parent=11 // pred_check_branch
          %620 = sbr.rel (%p618) target = $region44
        $region43: #{transformer_forward.8} parent=11 // pred_region
          _
        $region44: #{transformer_forward.8} parent=11 // pred_fallthru
          _
        // Predicated region
        $region45: #{transformer_forward.8} parent=11 // pred_check
          %p621 = pneg %p325
        $region46: #{transformer_forward.8} parent=11 // pred_check_branch
          %623 = sbr.rel (%p621) target = $region48
        $region47: #{transformer_forward.8} parent=11 // pred_region
          _
        $region48: #{transformer_forward.8} parent=11 // pred_fallthru
          _
        // Predicated region
        $region49: #{transformer_forward.8} parent=11 // pred_check
          %p624 = pneg %p346
        $region50: #{transformer_forward.8} parent=11 // pred_check_branch
          %626 = sbr.rel (%p624) target = $region52
        $region51: #{transformer_forward.8} parent=11 // pred_region
          _
        $region52: #{transformer_forward.8} parent=11 // pred_fallthru
          _
        // Predicated region
        $region53: #{transformer_forward.8} parent=11 // pred_check
          %p627 = pneg %p367
        $region54: #{transformer_forward.8} parent=11 // pred_check_branch
          %629 = sbr.rel (%p627) target = $region56
        $region55: #{transformer_forward.8} parent=11 // pred_region
          _
        $region56: #{transformer_forward.8} parent=11 // pred_fallthru
          _
        // Predicated region
        $region57: #{transformer_forward.8} parent=11 // pred_check
          %p630 = pneg %p388
        $region58: #{transformer_forward.8} parent=11 // pred_check_branch
          %632 = sbr.rel (%p630) target = $region60
        $region59: #{transformer_forward.8} parent=11 // pred_region
          _
        $region60: #{transformer_forward.8} parent=11 // pred_fallthru
          _
        // Predicated region
        $region61: #{transformer_forward.8} parent=11 // pred_check
          %p633 = pneg %p409
        $region62: #{transformer_forward.8} parent=11 // pred_check_branch
          %635 = sbr.rel (%p633) target = $region64
        $region63: #{transformer_forward.8} parent=11 // pred_region
          _
        $region64: #{transformer_forward.8} parent=11 // pred_fallthru
          _
        // Predicated region
        $region65: #{transformer_forward.8} parent=11 // pred_check
          %p636 = pneg %p430
        $region66: #{transformer_forward.8} parent=11 // pred_check_branch
          %638 = sbr.rel (%p636) target = $region68
        $region67: #{transformer_forward.8} parent=11 // pred_region
          _
        $region68: #{transformer_forward.8} parent=11 // pred_fallthru
          _
        // Predicated region
        $region69: #{transformer_forward.8} parent=11 // pred_check
          %p639 = pneg %p451
        $region70: #{transformer_forward.8} parent=11 // pred_check_branch
          %641 = sbr.rel (%p639) target = $region72
        $region71: #{transformer_forward.8} parent=11 // pred_region
          _
        $region72: #{transformer_forward.8} parent=11 // pred_fallthru
          _
        // Predicated region
        $region73: #{transformer_forward.8} parent=11 // pred_check
          %p642 = pneg %p472
        $region74: #{transformer_forward.8} parent=11 // pred_check_branch
          %644 = sbr.rel (%p642) target = $region76
        $region75: #{transformer_forward.8} parent=11 // pred_region
          _
        $region76: #{transformer_forward.8} parent=11 // pred_fallthru
          _
        // Predicated region
        $region77: #{transformer_forward.8} parent=11 // pred_check
          %p645 = pneg %p493
        $region78: #{transformer_forward.8} parent=11 // pred_check_branch
          %647 = sbr.rel (%p645) target = $region80
        $region79: #{transformer_forward.8} parent=11 // pred_region
          _
        $region80: #{transformer_forward.8} parent=11 // pred_fallthru
          _
        // Predicated region
        $region81: #{transformer_forward.8} parent=11 // pred_check
          %p648 = pneg %p514
        $region82: #{transformer_forward.8} parent=11 // pred_check_branch
          %650 = sbr.rel (%p648) target = $region84
        $region83: #{transformer_forward.8} parent=11 // pred_region
          _
        $region84: #{transformer_forward.8} parent=11 // pred_fallthru
          _
        // Predicated region
        $region85: #{transformer_forward.8} parent=11 // pred_check
          %p651 = pneg %p535
        $region86: #{transformer_forward.8} parent=11 // pred_check_branch
          %653 = sbr.rel (%p651) target = $region88
        $region87: #{transformer_forward.8} parent=11 // pred_region
          %655 = vsyncadd [#allocation3], 0
          %s657 = sshll.u32 %s22, 4
          %s658 = int_to_ptr.hbm [resolvable:$true] %s657
          %s659 = sshll.u32 [#allocation2], 4
          %s660 = int_to_ptr.vmem [resolvable:$true] %s659
          %662 = dma.hbm_to_vmem [thread:$0]  %s658, 16, %s660, [#allocation3]
        $region88: #{transformer_forward.8} parent=11 // pred_fallthru
          _
        // Predicated region
        $region89: #{transformer_forward.8} parent=11 // pred_check
          %p663 = pneg %p556
        $region90: #{transformer_forward.8} parent=11 // pred_check_branch
          %665 = sbr.rel (%p663) target = $region92
        $region91: #{transformer_forward.8} parent=11 // pred_region
          %667 = vsyncadd [#allocation5], 0
          %s669 = sshll.u32 %s23, 4
          %s670 = int_to_ptr.hbm [resolvable:$true] %s669
          %s671 = sshll.u32 [#allocation4], 4
          %s672 = int_to_ptr.vmem [resolvable:$true] %s671
          %674 = dma.hbm_to_vmem [thread:$0]  %s670, 16, %s672, [#allocation5]
        $region92: #{transformer_forward.8} parent=11 // pred_fallthru
          _
      $region12: #{transformer_forward.8} parent=5 // pred_fallthru
        _
      %p675 = scmp.lt.s32.totalorder %s32, 2
      // Predicated region
      $region93: #{transformer_forward.8} parent=5 // pred_check
        %p676 = pneg %p675
      $region94: #{transformer_forward.8} parent=5 // pred_check_branch
        %678 = sbr.rel (%p676) target = $region96
      $region95: #{transformer_forward.8} parent=5 // pred_region
        // Predicated region
        $region97: #{transformer_forward.8} parent=95 // pred_check
          %p679 = pneg %p52
        $region98: #{transformer_forward.8} parent=95 // pred_check_branch
          %681 = sbr.rel (%p679) target = $region100
        $region99: #{transformer_forward.8} parent=95 // pred_region
          %p682 = scmp.lt.s32.totalorder %s32, 1
          %s683 = scalar_select %p682, %s32, 1
          %s684 = smul.addr %s683, 8
          %s685 = scalar_lea.vmem %s0, %s684
        $region100: #{transformer_forward.8} parent=95 // pred_fallthru
          _
        // Predicated region
        $region101: #{transformer_forward.8} parent=95 // pred_check
          %p686 = pneg %p78
        $region102: #{transformer_forward.8} parent=95 // pred_check_branch
          %688 = sbr.rel (%p686) target = $region104
        $region103: #{transformer_forward.8} parent=95 // pred_region
          %p689 = scmp.lt.s32.totalorder %s32, 1
          %s690 = scalar_select %p689, %s32, 1
          %s691 = smul.addr %s690, 8
          %s692 = scalar_lea.vmem %s1, %s691
        $region104: #{transformer_forward.8} parent=95 // pred_fallthru
          _
        // Predicated region
        $region105: #{transformer_forward.8} parent=95 // pred_check
          %p693 = pneg %p104
        $region106: #{transformer_forward.8} parent=95 // pred_check_branch
          %695 = sbr.rel (%p693) target = $region108
        $region107: #{transformer_forward.8} parent=95 // pred_region
          %p696 = scmp.lt.s32.totalorder %s32, 1
          %s697 = scalar_select %p696, %s32, 1
          %s698 = scalar_lea.vmem %s2, %s697
        $region108: #{transformer_forward.8} parent=95 // pred_fallthru
          _
        // Predicated region
        $region109: #{transformer_forward.8} parent=95 // pred_check
          %p699 = pneg %p130
        $region110: #{transformer_forward.8} parent=95 // pred_check_branch
          %701 = sbr.rel (%p699) target = $region112
        $region111: #{transformer_forward.8} parent=95 // pred_region
          %p702 = scmp.lt.s32.totalorder %s32, 1
          %s703 = scalar_select %p702, %s32, 1
          %s704 = scalar_lea.vmem %s3, %s703
        $region112: #{transformer_forward.8} parent=95 // pred_fallthru
          _
      $region96: #{transformer_forward.8} parent=5 // pred_fallthru
        _
      %p705 = scmp.le.s32.totalorder 1, %s32
      %p706 = scmp.lt.s32.totalorder %s32, 3
      %p707 = pnand %p705, %p706
      %p708 = pneg %p707
      // Predicated region
      $region113: #{transformer_forward.8} parent=5 // pred_check
        _
      $region114: #{transformer_forward.8} parent=5 // pred_check_branch
        %710 = sbr.rel (%p707) target = $region116
      $region115: #{transformer_forward.8} parent=5 // pred_region
        %s711 = ssub.s32 %s32, 1
        // Predicated region
        $region117: #{transformer_forward.8} parent=115 // pred_check
          %p712 = pneg %p535
        $region118: #{transformer_forward.8} parent=115 // pred_check_branch
          %714 = sbr.rel (%p712) target = $region120
        $region119: #{transformer_forward.8} parent=115 // pred_region
          %716 = dma.done [#allocation3], 16
        $region120: #{transformer_forward.8} parent=115 // pred_fallthru
          _
        // Predicated region
        $region121: #{transformer_forward.8} parent=115 // pred_check
          %p717 = pneg %p556
        $region122: #{transformer_forward.8} parent=115 // pred_check_branch
          %719 = sbr.rel (%p717) target = $region124
        $region123: #{transformer_forward.8} parent=115 // pred_region
          %721 = dma.done [#allocation5], 16
        $region124: #{transformer_forward.8} parent=115 // pred_fallthru
          _
        %p722 = scmp.lt.s32.totalorder %s37, 1
        %s723 = scalar_select %p722, %s37, 1
        %s724 = smul.addr %s723, 8
        %s725 = scalar_lea.vmem %s0, %s724
        %p726 = pneg %p58
        %p727 = pneg %p55
        %p728 = scmp.lt.s32.totalorder %s37, 1
        %s729 = scalar_select %p728, %s37, 1
        %s730 = smul.addr %s729, 8
        %s731 = scalar_lea.vmem %s1, %s730
        %p732 = pneg %p84
        %p733 = pneg %p81
        %p734 = scmp.lt.s32.totalorder %s37, 1
        %s735 = scalar_select %p734, %s37, 1
        %s736 = scalar_lea.vmem %s2, %s735
        %p737 = pneg %p110
        %p738 = pneg %p107
        %p739 = scmp.lt.s32.totalorder %s37, 1
        %s740 = scalar_select %p739, %s37, 1
        %s741 = scalar_lea.vmem %s3, %s740
        %p742 = pneg %p136
        %p743 = pneg %p133
        %p744 = pneg %p157
        %p745 = pneg %p154
        %p746 = pneg %p178
        %p747 = pneg %p175
        %p748 = pneg %p199
        %p749 = pneg %p196
        %p750 = pneg %p220
        %p751 = pneg %p217
        %p752 = pneg %p241
        %p753 = pneg %p238
        %p754 = pneg %p262
        %p755 = pneg %p259
        %p756 = pneg %p283
        %p757 = pneg %p280
        %p758 = pneg %p304
        %p759 = pneg %p301
        %p760 = pneg %p325
        %p761 = pneg %p322
        %p762 = pneg %p346
        %p763 = pneg %p343
        %p764 = pneg %p367
        %p765 = pneg %p364
        %p766 = pneg %p388
        %p767 = pneg %p385
        %p768 = pneg %p409
        %p769 = pneg %p406
        %p770 = pneg %p430
        %p771 = pneg %p427
        %p772 = pneg %p451
        %p773 = pneg %p448
        %p774 = pneg %p472
        %p775 = pneg %p469
        %p776 = pneg %p493
        %p777 = pneg %p490
        %p778 = pneg %p514
        %p779 = pneg %p511
        %p780 = pneg %p535
        %p781 = pneg %p532
        %p782 = pneg %p556
        %p783 = pneg %p553
        %p784 = pneg %p582
        %p785 = pneg %p579
        %p786 = scmp.lt.s32.totalorder %s37, 1
        %s787 = scalar_select %p786, %s37, 1
        %s788 = smul.addr %s787, 8
        %s789 = scalar_lea.vmem %s24, %s788
        %p790 = scmp.lt.s32.totalorder %s37, 1
        %s791 = scalar_select %p790, %s37, 1
        %s792 = smul.addr %s791, 8
        %s793 = scalar_lea.vmem %s0, %s792
        %p794 = scmp.lt.s32.totalorder %s37, 1
        %s795 = scalar_select %p794, %s37, 1
        %s796 = smul.addr %s795, 8
        %s797 = scalar_lea.vmem %s1, %s796
        %p798 = scmp.lt.s32.totalorder %s37, 1
        %s799 = scalar_select %p798, %s37, 1
        %s800 = scalar_lea.vmem %s2, %s799
        %p801 = scmp.lt.s32.totalorder %s37, 1
        %s802 = scalar_select %p801, %s37, 1
        %s803 = scalar_lea.vmem %s3, %s802
        %p804 = scmp.lt.s32.totalorder %s37, 1
        %s805 = scalar_select %p804, %s37, 1
        %s806 = smul.addr %s805, 8
        %s807 = scalar_lea.vmem %s24, %s806
        %v809 = vld [vmem:[%s793] sm:$0xff]
        %v810 = vld [vmem:[%s797] sm:$0xff]
        %v811 = vld [vmem:[%s800] sm:$0x1]
        %v812 = vld [vmem:[%s803] sm:$0x1]
        %v813 = vlaneseq
        %v814 = vshrl.u32 %v813, 7
        %v815 = vlaneseq
        %v816 = vand.u32 %v815, 127
        %vm817 = vcmp.le.s32.totalorder %v816, %v814
        %v818 = vsel %vm817, 0.0, -1e+09
        %v819 = vpack.c.bf16 %v809, %v809
        %v820 = vld [vmem:[%s4] sm:$0xf]
        %v821 = vld [vmem:[%s4 + $0x4] sm:$0xf]
        %v822 = vld [vmem:[%s4 + $0x8] sm:$0xf]
        %v823 = vld [vmem:[%s4 + $0xc] sm:$0xf]
        %v824 = vld [vmem:[%s5] sm:$0x1]
        %v826 = vperm.slane %v824, 0
        %v832 = vunpack.c.l.b16 %v820
        %v833 = vunpack.c.l.b16 %v821
        %v834 = vunpack.c.l.b16 %v822
        %v835 = vunpack.c.l.b16 %v823
        %v836 = vpack.c.b16 %v833, %v832
        %v837 = vpack.c.b16 %v835, %v834
        %vm840 = vcmask 261120
        %v842 = vsel %vm840, %v819, 0
        %844 = vmatpush.bf16.msra.mxu0 0
        %845 = vmatpush.bf16.msra.mxu0 0
        %846 = vmatpush.bf16.msra.mxu0 0
        %847 = vmatpush.bf16.msra.mxu0 0
        %848 = vmatpush.bf16.msra.mxu0 0
        %849 = vmatpush.bf16.msra.mxu0 0
        %850 = vmatpush.bf16.msra.mxu0 %v837
        %851 = vmatpush.bf16.msra.mxu0 %v836
        %852 = vmatmul.bf16.gmra.mxu0 %v842
        %v853 = vpop.f32.mrf.mxu0
        %v854 = vadd.f32 %v826, %v853
        %v855 = vpop.f32.mrf.mxu0
        %856 = vdwg.mxu0
        %v857 = vmul.f32 %v854, 0.35355338
        %v858 = vpack.c.bf16 %v857, %v857
        %v859 = vpack.c.bf16 %v854, %v854
        %v861 = vperm.slane %v811, 0
        %864 = vrot.lane.b32.xlu0 %v859, 96
        %v865 = vpop.permute.xlu0 %864
        %vm866 = vcmask 64512
        %v868 = vsel %vm866, %v858, 0
        %v871 = vsel %vm866, %v865, 0
        %873 = vmatpush.bf16.xpose.msra.mxu0 0
        %874 = vmatpush.bf16.xpose.msra.mxu0 0
        %875 = vmatpush.bf16.xpose.msra.mxu0 0
        %876 = vmatpush.bf16.xpose.msra.mxu0 0
        %877 = vmatpush.bf16.xpose.msra.mxu0 0
        %878 = vmatpush.bf16.xpose.msra.mxu0 0
        %879 = vmatpush.bf16.xpose.msra.mxu0 0
        %880 = vmatpush.bf16.xpose.msra.mxu0 %v871
        %881 = vmatmul.bf16.gmra.mxu0 %v868
        %v882 = vpop.f32.mrf.mxu0
        %v883 = vadd.f32 %v861, %v882
        %v884 = vpop.f32.mrf.mxu0
        %885 = vdwg.mxu0
        %v886 = vadd.f32 %v883, %v818
        %v887 = vsel %vm866, %v886, -inf
        %888 = vmax.xlane.f32.xlu0 %v887
        %v889 = vpop.xlane.xlu0 %888
        %v890 = vsub.f32 %v886, %v889
        %v891 = vmul.f32 %v890, 1.442695
        %v892 = vpow.pop %v891
        %v893 = vsel %vm866, %v892, 0.0
        %894 = vadd.xlane.f32.xlu0 %v893
        %v895 = vpop.xlane.xlu0 %894
        %v896 = vrcp.pop %v895
        %v897 = vmul.f32 %v892, %v896
        %v898 = vpack.c.bf16 %v897, %v897
        %899 = vrot.lane.b32.xlu0 %v859, 64
        %v900 = vpop.permute.xlu0 %899
        %v902 = vsel %vm866, %v898, 0
        %vm904 = vcmask 1043456
        %v906 = vsel %vm904, %v900, 0
        %908 = vmatpush.bf16.msra.mxu0 0
        %909 = vmatpush.bf16.msra.mxu0 0
        %910 = vmatpush.bf16.msra.mxu0 0
        %911 = vmatpush.bf16.msra.mxu0 0
        %912 = vmatpush.bf16.msra.mxu0 0
        %913 = vmatpush.bf16.msra.mxu0 0
        %914 = vmatpush.bf16.msra.mxu0 0
        %915 = vmatpush.bf16.msra.mxu0 %v906
        %916 = vmatmul.bf16.gmra.mxu0 %v902
        %v917 = vpop.f32.mrf.mxu0
        %v918 = vadd.f32 0.0, %v917
        %v919 = vpop.f32.mrf.mxu0
        %920 = vdwg.mxu0
        %v921 = vpack.c.bf16 %v918, %v918
        %v922 = vld [vmem:[%s6] sm:$0xf]
        %924 = vrot.lane.b32.xlu0 %v858, 120
        %v925 = vpop.permute.xlu0 %924
        %926 = vrot.lane.b32.xlu0 %v859, 88
        %v927 = vpop.permute.xlu0 %926
        %v929 = vsel %vm866, %v925, 0
        %v932 = vsel %vm866, %v927, 0
        %934 = vmatpush.bf16.xpose.msra.mxu0 0
        %935 = vmatpush.bf16.xpose.msra.mxu0 0
        %936 = vmatpush.bf16.xpose.msra.mxu0 0
        %937 = vmatpush.bf16.xpose.msra.mxu0 0
        %938 = vmatpush.bf16.xpose.msra.mxu0 0
        %939 = vmatpush.bf16.xpose.msra.mxu0 0
        %940 = vmatpush.bf16.xpose.msra.mxu0 0
        %941 = vmatpush.bf16.xpose.msra.mxu0 %v932
        %942 = vmatmul.bf16.gmra.mxu0 %v929
        %v943 = vpop.f32.mrf.mxu0
        %v944 = vadd.f32 %v861, %v943
        %v945 = vpop.f32.mrf.mxu0
        %946 = vdwg.mxu0
        %v947 = vadd.f32 %v944, %v818
        %v948 = vsel %vm866, %v947, -inf
        %949 = vmax.xlane.f32.xlu0 %v948
        %v950 = vpop.xlane.xlu0 %949
        %v951 = vsub.f32 %v947, %v950
        %v952 = vmul.f32 %v951, 1.442695
        %v953 = vpow.pop %v952
        %v954 = vsel %vm866, %v953, 0.0
        %955 = vadd.xlane.f32.xlu0 %v954
        %v956 = vpop.xlane.xlu0 %955
        %v957 = vrcp.pop %v956
        %v958 = vmul.f32 %v953, %v957
        %v959 = vpack.c.bf16 %v958, %v958
        %960 = vrot.lane.b32.xlu0 %v859, 56
        %v961 = vpop.permute.xlu0 %960
        %v963 = vsel %vm866, %v959, 0
        %v966 = vsel %vm904, %v961, 0
        %968 = vmatpush.bf16.msra.mxu0 0
        %969 = vmatpush.bf16.msra.mxu0 0
        %970 = vmatpush.bf16.msra.mxu0 0
        %971 = vmatpush.bf16.msra.mxu0 0
        %972 = vmatpush.bf16.msra.mxu0 0
        %973 = vmatpush.bf16.msra.mxu0 0
        %974 = vmatpush.bf16.msra.mxu0 0
        %975 = vmatpush.bf16.msra.mxu0 %v966
        %976 = vmatmul.bf16.gmra.mxu0 %v963
        %v977 = vpop.f32.mrf.mxu0
        %v978 = vadd.f32 0.0, %v977
        %v979 = vpop.f32.mrf.mxu0
        %980 = vdwg.mxu0
        %v981 = vpack.c.bf16 %v978, %v978
        %s982 = scalar_lea.vmem %s6, 4
        %v983 = vld [vmem:[%s982] sm:$0xf]
        %v985 = vsel %vm866, %v981, 0
        %v988 = vsel %vm904, %v983, 0
        %990 = vmatpush.bf16.msra.mxu0 0
        %991 = vmatpush.bf16.msra.mxu0 0
        %992 = vmatpush.bf16.msra.mxu0 0
        %993 = vmatpush.bf16.msra.mxu0 0
        %994 = vmatpush.bf16.msra.mxu0 0
        %995 = vmatpush.bf16.msra.mxu0 0
        %996 = vmatpush.bf16.msra.mxu0 0
        %997 = vmatpush.bf16.msra.mxu0 %v988
        %998 = vmatmul.bf16.gmra.mxu0 %v985
        %v999 = vpop.f32.mrf.mxu0
        %v1000 = vadd.f32 0.0, %v999
        %v1001 = vpop.f32.mrf.mxu0
        %1002 = vdwg.mxu0
        %v1004 = vsel %vm866, %v921, 0
        %v1007 = vsel %vm904, %v922, 0
        %1009 = vmatpush.bf16.msra.mxu0 0
        %1010 = vmatpush.bf16.msra.mxu0 0
        %1011 = vmatpush.bf16.msra.mxu0 0
        %1012 = vmatpush.bf16.msra.mxu0 0
        %1013 = vmatpush.bf16.msra.mxu0 0
        %1014 = vmatpush.bf16.msra.mxu0 0
        %1015 = vmatpush.bf16.msra.mxu0 0
        %1016 = vmatpush.bf16.msra.mxu0 %v1007
        %1017 = vmatmul.bf16.gmra.mxu0 %v1004
        %v1018 = vpop.f32.mrf.mxu0
        %v1019 = vadd.f32 %v1000, %v1018
        %v1020 = vpop.f32.mrf.mxu0
        %1021 = vdwg.mxu0
        %1022 = vrot.lane.b32.xlu0 %v858, 112
        %v1023 = vpop.permute.xlu0 %1022
        %1024 = vrot.lane.b32.xlu0 %v859, 80
        %v1025 = vpop.permute.xlu0 %1024
        %v1027 = vsel %vm866, %v1023, 0
        %v1030 = vsel %vm866, %v1025, 0
        %1032 = vmatpush.bf16.xpose.msra.mxu0 0
        %1033 = vmatpush.bf16.xpose.msra.mxu0 0
        %1034 = vmatpush.bf16.xpose.msra.mxu0 0
        %1035 = vmatpush.bf16.xpose.msra.mxu0 0
        %1036 = vmatpush.bf16.xpose.msra.mxu0 0
        %1037 = vmatpush.bf16.xpose.msra.mxu0 0
        %1038 = vmatpush.bf16.xpose.msra.mxu0 0
        %1039 = vmatpush.bf16.xpose.msra.mxu0 %v1030
        %1040 = vmatmul.bf16.gmra.mxu0 %v1027
        %v1041 = vpop.f32.mrf.mxu0
        %v1042 = vadd.f32 %v861, %v1041
        %v1043 = vpop.f32.mrf.mxu0
        %1044 = vdwg.mxu0
        %v1045 = vadd.f32 %v1042, %v818
        %v1046 = vsel %vm866, %v1045, -inf
        %1047 = vmax.xlane.f32.xlu0 %v1046
        %v1048 = vpop.xlane.xlu0 %1047
        %v1049 = vsub.f32 %v1045, %v1048
        %v1050 = vmul.f32 %v1049, 1.442695
        %v1051 = vpow.pop %v1050
        %v1052 = vsel %vm866, %v1051, 0.0
        %1053 = vadd.xlane.f32.xlu0 %v1052
        %v1054 = vpop.xlane.xlu0 %1053
        %v1055 = vrcp.pop %v1054
        %v1056 = vmul.f32 %v1051, %v1055
        %v1057 = vpack.c.bf16 %v1056, %v1056
        %1058 = vrot.lane.b32.xlu0 %v859, 48
        %v1059 = vpop.permute.xlu0 %1058
        %v1061 = vsel %vm866, %v1057, 0
        %v1064 = vsel %vm904, %v1059, 0
        %1066 = vmatpush.bf16.msra.mxu0 0
        %1067 = vmatpush.bf16.msra.mxu0 0
        %1068 = vmatpush.bf16.msra.mxu0 0
        %1069 = vmatpush.bf16.msra.mxu0 0
        %1070 = vmatpush.bf16.msra.mxu0 0
        %1071 = vmatpush.bf16.msra.mxu0 0
        %1072 = vmatpush.bf16.msra.mxu0 0
        %1073 = vmatpush.bf16.msra.mxu0 %v1064
        %1074 = vmatmul.bf16.gmra.mxu0 %v1061
        %v1075 = vpop.f32.mrf.mxu0
        %v1076 = vadd.f32 0.0, %v1075
        %v1077 = vpop.f32.mrf.mxu0
        %1078 = vdwg.mxu0
        %v1079 = vpack.c.bf16 %v1076, %v1076
        %s1080 = scalar_lea.vmem %s6, 8
        %v1081 = vld [vmem:[%s1080] sm:$0xf]
        %v1083 = vsel %vm866, %v1079, 0
        %v1086 = vsel %vm904, %v1081, 0
        %1088 = vmatpush.bf16.msra.mxu0 0
        %1089 = vmatpush.bf16.msra.mxu0 0
        %1090 = vmatpush.bf16.msra.mxu0 0
        %1091 = vmatpush.bf16.msra.mxu0 0
        %1092 = vmatpush.bf16.msra.mxu0 0
        %1093 = vmatpush.bf16.msra.mxu0 0
        %1094 = vmatpush.bf16.msra.mxu0 0
        %1095 = vmatpush.bf16.msra.mxu0 %v1086
        %1096 = vmatmul.bf16.gmra.mxu0 %v1083
        %v1097 = vpop.f32.mrf.mxu0
        %v1098 = vadd.f32 0.0, %v1097
        %v1099 = vpop.f32.mrf.mxu0
        %1100 = vdwg.mxu0
        %v1101 = vadd.f32 %v1019, %v1098
        %1102 = vrot.lane.b32.xlu0 %v858, 104
        %v1103 = vpop.permute.xlu0 %1102
        %1104 = vrot.lane.b32.xlu0 %v859, 72
        %v1105 = vpop.permute.xlu0 %1104
        %v1107 = vsel %vm866, %v1103, 0
        %v1110 = vsel %vm866, %v1105, 0
        %1112 = vmatpush.bf16.xpose.msra.mxu0 0
        %1113 = vmatpush.bf16.xpose.msra.mxu0 0
        %1114 = vmatpush.bf16.xpose.msra.mxu0 0
        %1115 = vmatpush.bf16.xpose.msra.mxu0 0
        %1116 = vmatpush.bf16.xpose.msra.mxu0 0
        %1117 = vmatpush.bf16.xpose.msra.mxu0 0
        %1118 = vmatpush.bf16.xpose.msra.mxu0 0
        %1119 = vmatpush.bf16.xpose.msra.mxu0 %v1110
        %1120 = vmatmul.bf16.gmra.mxu0 %v1107
        %v1121 = vpop.f32.mrf.mxu0
        %v1122 = vadd.f32 %v861, %v1121
        %v1123 = vpop.f32.mrf.mxu0
        %1124 = vdwg.mxu0
        %v1125 = vadd.f32 %v1122, %v818
        %v1126 = vsel %vm866, %v1125, -inf
        %1127 = vmax.xlane.f32.xlu0 %v1126
        %v1128 = vpop.xlane.xlu0 %1127
        %v1129 = vsub.f32 %v1125, %v1128
        %v1130 = vmul.f32 %v1129, 1.442695
        %v1131 = vpow.pop %v1130
        %v1132 = vsel %vm866, %v1131, 0.0
        %1133 = vadd.xlane.f32.xlu0 %v1132
        %v1134 = vpop.xlane.xlu0 %1133
        %v1135 = vrcp.pop %v1134
        %v1136 = vmul.f32 %v1131, %v1135
        %v1137 = vpack.c.bf16 %v1136, %v1136
        %1138 = vrot.lane.b32.xlu0 %v859, 40
        %v1139 = vpop.permute.xlu0 %1138
        %v1141 = vsel %vm866, %v1137, 0
        %v1144 = vsel %vm904, %v1139, 0
        %1146 = vmatpush.bf16.msra.mxu0 0
        %1147 = vmatpush.bf16.msra.mxu0 0
        %1148 = vmatpush.bf16.msra.mxu0 0
        %1149 = vmatpush.bf16.msra.mxu0 0
        %1150 = vmatpush.bf16.msra.mxu0 0
        %1151 = vmatpush.bf16.msra.mxu0 0
        %1152 = vmatpush.bf16.msra.mxu0 0
        %1153 = vmatpush.bf16.msra.mxu0 %v1144
        %1154 = vmatmul.bf16.gmra.mxu0 %v1141
        %v1155 = vpop.f32.mrf.mxu0
        %v1156 = vadd.f32 0.0, %v1155
        %v1157 = vpop.f32.mrf.mxu0
        %1158 = vdwg.mxu0
        %v1159 = vpack.c.bf16 %v1156, %v1156
        %s1160 = scalar_lea.vmem %s6, 12
        %v1161 = vld [vmem:[%s1160] sm:$0xf]
        %v1163 = vsel %vm866, %v1159, 0
        %v1166 = vsel %vm904, %v1161, 0
        %1168 = vmatpush.bf16.msra.mxu0 0
        %1169 = vmatpush.bf16.msra.mxu0 0
        %1170 = vmatpush.bf16.msra.mxu0 0
        %1171 = vmatpush.bf16.msra.mxu0 0
        %1172 = vmatpush.bf16.msra.mxu0 0
        %1173 = vmatpush.bf16.msra.mxu0 0
        %1174 = vmatpush.bf16.msra.mxu0 0
        %1175 = vmatpush.bf16.msra.mxu0 %v1166
        %1176 = vmatmul.bf16.gmra.mxu0 %v1163
        %v1177 = vpop.f32.mrf.mxu0
        %v1178 = vadd.f32 0.0, %v1177
        %v1179 = vpop.f32.mrf.mxu0
        %1180 = vdwg.mxu0
        %v1181 = vadd.f32 %v1101, %v1178
        %v1182 = vld [vmem:[%s7] sm:$0x1]
        %v1184 = vperm.slane %v1182, 0
        %v1186 = vadd.f32 %v1181, %v1184
        %v1187 = vadd.f32 %v809, %v1186
        %v1188 = vld [vmem:[%s8] sm:$0x1]
        %v1189 = vld [vmem:[%s9] sm:$0x1]
        %v1190 = vsel %vm840, %v1187, 0.0
        %1191 = vadd.xlane.f32.xlu0 %v1190
        %v1192 = vpop.xlane.xlu0 %1191
        %v1193 = vrcp.pop 32.0
        %v1194 = vmul.f32 32.0, %v1193
        %v1195 = vsub.f32 1.0, %v1194
        %v1196 = vmul.f32 %v1193, %v1195
        %v1197 = vadd.f32 %v1193, %v1196
        %vm1198 = vweird.f32 %v1193
        %v1199 = vsel %vm1198, %v1193, %v1197
        %v1200 = vmul.f32 %v1192, %v1199
        %v1201 = vsub.f32 %v1187, %v1200
        %v1202 = vmul.f32 %v1201, %v1201
        %v1203 = vsel %vm840, %v1202, 0.0
        %1204 = vadd.xlane.f32.xlu0 %v1203
        %v1205 = vpop.xlane.xlu0 %1204
        %v1206 = vmul.f32 %v1205, %v1199
        %v1207 = vadd.f32 %v1206, 1e-05
        %v1208 = vrsqrt.pop %v1207
        %v1209 = vmul.f32 %v1208, %v1207
        %v1210 = vmul.f32 %v1209, %v1208
        %v1211 = vmul.f32 0.5, %v1210
        %v1212 = vsub.f32 1.5, %v1211
        %v1213 = vmul.f32 %v1208, %v1212
        %vm1214 = vweird.f32 %v1207
        %vm1215 = vweird.f32 %v1208
        %vm1216 = vmor %vm1214, %vm1215
        %v1217 = vsel %vm1216, %v1208, %v1213
        %v1218 = vmul.f32 %v1201, %v1217
        %v1220 = vperm.slane %v1188, 0
        %v1222 = vmul.f32 %v1218, %v1220
        %v1224 = vperm.slane %v1189, 0
        %v1226 = vadd.f32 %v1222, %v1224
        %v1227 = vpack.c.bf16 %v1226, %v1226
        %v1228 = vld [vmem:[%s10] sm:$0xf]
        %v1229 = vld [vmem:[%s10 + $0x4] sm:$0xf]
        %v1230 = vld [vmem:[%s10 + $0x8] sm:$0xf]
        %v1231 = vld [vmem:[%s10 + $0xc] sm:$0xf]
        %v1232 = vld [vmem:[%s11] sm:$0x1]
        %v1234 = vperm.slane %v1232, 0
        %v1240 = vunpack.c.l.b16 %v1228
        %v1241 = vunpack.c.l.b16 %v1229
        %v1242 = vunpack.c.l.b16 %v1230
        %v1243 = vunpack.c.l.b16 %v1231
        %v1244 = vpack.c.b16 %v1241, %v1240
        %v1245 = vpack.c.b16 %v1243, %v1242
        %v1249 = vsel %vm840, %v1227, 0
        %1251 = vmatpush.bf16.msra.mxu0 0
        %1252 = vmatpush.bf16.msra.mxu0 0
        %1253 = vmatpush.bf16.msra.mxu0 0
        %1254 = vmatpush.bf16.msra.mxu0 0
        %1255 = vmatpush.bf16.msra.mxu0 0
        %1256 = vmatpush.bf16.msra.mxu0 0
        %1257 = vmatpush.bf16.msra.mxu0 %v1245
        %1258 = vmatpush.bf16.msra.mxu0 %v1244
        %1259 = vmatmul.bf16.gmra.mxu0 %v1249
        %v1260 = vpop.f32.mrf.mxu0
        %v1261 = vadd.f32 %v1234, %v1260
        %v1262 = vpop.f32.mrf.mxu0
        %1263 = vdwg.mxu0
        %v1264 = vpack.c.bf16 %v810, %v810
        %v1265 = vld [vmem:[%s12] sm:$0xf]
        %v1266 = vld [vmem:[%s12 + $0x4] sm:$0xf]
        %v1267 = vld [vmem:[%s12 + $0x8] sm:$0xf]
        %v1268 = vld [vmem:[%s12 + $0xc] sm:$0xf]
        %v1269 = vld [vmem:[%s13] sm:$0x1]
        %v1271 = vperm.slane %v1269, 0
        %v1277 = vunpack.c.l.b16 %v1265
        %v1278 = vunpack.c.l.b16 %v1266
        %v1279 = vunpack.c.l.b16 %v1267
        %v1280 = vunpack.c.l.b16 %v1268
        %v1281 = vpack.c.b16 %v1278, %v1277
        %v1282 = vpack.c.b16 %v1280, %v1279
        %v1286 = vsel %vm840, %v1264, 0
        %1288 = vmatpush.bf16.msra.mxu0 0
        %1289 = vmatpush.bf16.msra.mxu0 0
        %1290 = vmatpush.bf16.msra.mxu0 0
        %1291 = vmatpush.bf16.msra.mxu0 0
        %1292 = vmatpush.bf16.msra.mxu0 0
        %1293 = vmatpush.bf16.msra.mxu0 0
        %1294 = vmatpush.bf16.msra.mxu0 %v1282
        %1295 = vmatpush.bf16.msra.mxu0 %v1281
        %1296 = vmatmul.bf16.gmra.mxu0 %v1286
        %v1297 = vpop.f32.mrf.mxu0
        %v1298 = vadd.f32 %v1271, %v1297
        %v1299 = vpop.f32.mrf.mxu0
        %1300 = vdwg.mxu0
        %v1301 = vmul.f32 %v1261, 0.35355338
        %v1302 = vpack.c.bf16 %v1301, %v1301
        %v1303 = vpack.c.bf16 %v1298, %v1298
        %v1305 = vperm.slane %v812, 0
        %v1308 = vsel %vm866, %v1302, 0
        %v1311 = vsel %vm866, %v1303, 0
        %1313 = vmatpush.bf16.xpose.msra.mxu0 0
        %1314 = vmatpush.bf16.xpose.msra.mxu0 0
        %1315 = vmatpush.bf16.xpose.msra.mxu0 0
        %1316 = vmatpush.bf16.xpose.msra.mxu0 0
        %1317 = vmatpush.bf16.xpose.msra.mxu0 0
        %1318 = vmatpush.bf16.xpose.msra.mxu0 0
        %1319 = vmatpush.bf16.xpose.msra.mxu0 0
        %1320 = vmatpush.bf16.xpose.msra.mxu0 %v1311
        %1321 = vmatmul.bf16.gmra.mxu0 %v1308
        %v1322 = vpop.f32.mrf.mxu0
        %v1323 = vadd.f32 %v1305, %v1322
        %v1324 = vpop.f32.mrf.mxu0
        %1325 = vdwg.mxu0
        %v1326 = vsel %vm866, %v1323, -inf
        %1327 = vmax.xlane.f32.xlu0 %v1326
        %v1328 = vpop.xlane.xlu0 %1327
        %v1329 = vsub.f32 %v1323, %v1328
        %v1330 = vmul.f32 %v1329, 1.442695
        %v1331 = vpow.pop %v1330
        %v1332 = vsel %vm866, %v1331, 0.0
        %1333 = vadd.xlane.f32.xlu0 %v1332
        %v1334 = vpop.xlane.xlu0 %1333
        %v1335 = vrcp.pop %v1334
        %v1336 = vmul.f32 %v1331, %v1335
        %v1337 = vpack.c.bf16 %v1336, %v1336
        %1339 = vrot.lane.b32.xlu0 %v1303, 96
        %v1340 = vpop.permute.xlu0 %1339
        %v1342 = vsel %vm866, %v1337, 0
        %v1345 = vsel %vm904, %v1340, 0
        %1347 = vmatpush.bf16.msra.mxu0 0
        %1348 = vmatpush.bf16.msra.mxu0 0
        %1349 = vmatpush.bf16.msra.mxu0 0
        %1350 = vmatpush.bf16.msra.mxu0 0
        %1351 = vmatpush.bf16.msra.mxu0 0
        %1352 = vmatpush.bf16.msra.mxu0 0
        %1353 = vmatpush.bf16.msra.mxu0 0
        %1354 = vmatpush.bf16.msra.mxu0 %v1345
        %1355 = vmatmul.bf16.gmra.mxu0 %v1342
        %v1356 = vpop.f32.mrf.mxu0
        %v1357 = vadd.f32 0.0, %v1356
        %v1358 = vpop.f32.mrf.mxu0
        %1359 = vdwg.mxu0
        %v1360 = vpack.c.bf16 %v1357, %v1357
        %v1361 = vld [vmem:[%s14] sm:$0xf]
        %1363 = vrot.lane.b32.xlu0 %v1302, 120
        %v1364 = vpop.permute.xlu0 %1363
        %1365 = vrot.lane.b32.xlu0 %v1303, 120
        %v1366 = vpop.permute.xlu0 %1365
        %v1368 = vsel %vm866, %v1364, 0
        %v1371 = vsel %vm866, %v1366, 0
        %1373 = vmatpush.bf16.xpose.msra.mxu0 0
        %1374 = vmatpush.bf16.xpose.msra.mxu0 0
        %1375 = vmatpush.bf16.xpose.msra.mxu0 0
        %1376 = vmatpush.bf16.xpose.msra.mxu0 0
        %1377 = vmatpush.bf16.xpose.msra.mxu0 0
        %1378 = vmatpush.bf16.xpose.msra.mxu0 0
        %1379 = vmatpush.bf16.xpose.msra.mxu0 0
        %1380 = vmatpush.bf16.xpose.msra.mxu0 %v1371
        %1381 = vmatmul.bf16.gmra.mxu0 %v1368
        %v1382 = vpop.f32.mrf.mxu0
        %v1383 = vadd.f32 %v1305, %v1382
        %v1384 = vpop.f32.mrf.mxu0
        %1385 = vdwg.mxu0
        %v1386 = vsel %vm866, %v1383, -inf
        %1387 = vmax.xlane.f32.xlu0 %v1386
        %v1388 = vpop.xlane.xlu0 %1387
        %v1389 = vsub.f32 %v1383, %v1388
        %v1390 = vmul.f32 %v1389, 1.442695
        %v1391 = vpow.pop %v1390
        %v1392 = vsel %vm866, %v1391, 0.0
        %1393 = vadd.xlane.f32.xlu0 %v1392
        %v1394 = vpop.xlane.xlu0 %1393
        %v1395 = vrcp.pop %v1394
        %v1396 = vmul.f32 %v1391, %v1395
        %v1397 = vpack.c.bf16 %v1396, %v1396
        %1398 = vrot.lane.b32.xlu0 %v1303, 88
        %v1399 = vpop.permute.xlu0 %1398
        %v1401 = vsel %vm866, %v1397, 0
        %v1404 = vsel %vm904, %v1399, 0
        %1406 = vmatpush.bf16.msra.mxu0 0
        %1407 = vmatpush.bf16.msra.mxu0 0
        %1408 = vmatpush.bf16.msra.mxu0 0
        %1409 = vmatpush.bf16.msra.mxu0 0
        %1410 = vmatpush.bf16.msra.mxu0 0
        %1411 = vmatpush.bf16.msra.mxu0 0
        %1412 = vmatpush.bf16.msra.mxu0 0
        %1413 = vmatpush.bf16.msra.mxu0 %v1404
        %1414 = vmatmul.bf16.gmra.mxu0 %v1401
        %v1415 = vpop.f32.mrf.mxu0
        %v1416 = vadd.f32 0.0, %v1415
        %v1417 = vpop.f32.mrf.mxu0
        %1418 = vdwg.mxu0
        %v1419 = vpack.c.bf16 %v1416, %v1416
        %s1420 = scalar_lea.vmem %s14, 4
        %v1421 = vld [vmem:[%s1420] sm:$0xf]
        %v1423 = vsel %vm866, %v1419, 0
        %v1426 = vsel %vm904, %v1421, 0
        %1428 = vmatpush.bf16.msra.mxu0 0
        %1429 = vmatpush.bf16.msra.mxu0 0
        %1430 = vmatpush.bf16.msra.mxu0 0
        %1431 = vmatpush.bf16.msra.mxu0 0
        %1432 = vmatpush.bf16.msra.mxu0 0
        %1433 = vmatpush.bf16.msra.mxu0 0
        %1434 = vmatpush.bf16.msra.mxu0 0
        %1435 = vmatpush.bf16.msra.mxu0 %v1426
        %1436 = vmatmul.bf16.gmra.mxu0 %v1423
        %v1437 = vpop.f32.mrf.mxu0
        %v1438 = vadd.f32 0.0, %v1437
        %v1439 = vpop.f32.mrf.mxu0
        %1440 = vdwg.mxu0
        %v1442 = vsel %vm866, %v1360, 0
        %v1445 = vsel %vm904, %v1361, 0
        %1447 = vmatpush.bf16.msra.mxu0 0
        %1448 = vmatpush.bf16.msra.mxu0 0
        %1449 = vmatpush.bf16.msra.mxu0 0
        %1450 = vmatpush.bf16.msra.mxu0 0
        %1451 = vmatpush.bf16.msra.mxu0 0
        %1452 = vmatpush.bf16.msra.mxu0 0
        %1453 = vmatpush.bf16.msra.mxu0 0
        %1454 = vmatpush.bf16.msra.mxu0 %v1445
        %1455 = vmatmul.bf16.gmra.mxu0 %v1442
        %v1456 = vpop.f32.mrf.mxu0
        %v1457 = vadd.f32 %v1438, %v1456
        %v1458 = vpop.f32.mrf.mxu0
        %1459 = vdwg.mxu0
        %1460 = vrot.lane.b32.xlu0 %v1302, 112
        %v1461 = vpop.permute.xlu0 %1460
        %1462 = vrot.lane.b32.xlu0 %v1303, 112
        %v1463 = vpop.permute.xlu0 %1462
        %v1465 = vsel %vm866, %v1461, 0
        %v1468 = vsel %vm866, %v1463, 0
        %1470 = vmatpush.bf16.xpose.msra.mxu0 0
        %1471 = vmatpush.bf16.xpose.msra.mxu0 0
        %1472 = vmatpush.bf16.xpose.msra.mxu0 0
        %1473 = vmatpush.bf16.xpose.msra.mxu0 0
        %1474 = vmatpush.bf16.xpose.msra.mxu0 0
        %1475 = vmatpush.bf16.xpose.msra.mxu0 0
        %1476 = vmatpush.bf16.xpose.msra.mxu0 0
        %1477 = vmatpush.bf16.xpose.msra.mxu0 %v1468
        %1478 = vmatmul.bf16.gmra.mxu0 %v1465
        %v1479 = vpop.f32.mrf.mxu0
        %v1480 = vadd.f32 %v1305, %v1479
        %v1481 = vpop.f32.mrf.mxu0
        %1482 = vdwg.mxu0
        %v1483 = vsel %vm866, %v1480, -inf
        %1484 = vmax.xlane.f32.xlu0 %v1483
        %v1485 = vpop.xlane.xlu0 %1484
        %v1486 = vsub.f32 %v1480, %v1485
        %v1487 = vmul.f32 %v1486, 1.442695
        %v1488 = vpow.pop %v1487
        %v1489 = vsel %vm866, %v1488, 0.0
        %1490 = vadd.xlane.f32.xlu0 %v1489
        %v1491 = vpop.xlane.xlu0 %1490
        %v1492 = vrcp.pop %v1491
        %v1493 = vmul.f32 %v1488, %v1492
        %v1494 = vpack.c.bf16 %v1493, %v1493
        %1495 = vrot.lane.b32.xlu0 %v1303, 80
        %v1496 = vpop.permute.xlu0 %1495
        %v1498 = vsel %vm866, %v1494, 0
        %v1501 = vsel %vm904, %v1496, 0
        %1503 = vmatpush.bf16.msra.mxu0 0
        %1504 = vmatpush.bf16.msra.mxu0 0
        %1505 = vmatpush.bf16.msra.mxu0 0
        %1506 = vmatpush.bf16.msra.mxu0 0
        %1507 = vmatpush.bf16.msra.mxu0 0
        %1508 = vmatpush.bf16.msra.mxu0 0
        %1509 = vmatpush.bf16.msra.mxu0 0
        %1510 = vmatpush.bf16.msra.mxu0 %v1501
        %1511 = vmatmul.bf16.gmra.mxu0 %v1498
        %v1512 = vpop.f32.mrf.mxu0
        %v1513 = vadd.f32 0.0, %v1512
        %v1514 = vpop.f32.mrf.mxu0
        %1515 = vdwg.mxu0
        %v1516 = vpack.c.bf16 %v1513, %v1513
        %s1517 = scalar_lea.vmem %s14, 8
        %v1518 = vld [vmem:[%s1517] sm:$0xf]
        %v1520 = vsel %vm866, %v1516, 0
        %v1523 = vsel %vm904, %v1518, 0
        %1525 = vmatpush.bf16.msra.mxu0 0
        %1526 = vmatpush.bf16.msra.mxu0 0
        %1527 = vmatpush.bf16.msra.mxu0 0
        %1528 = vmatpush.bf16.msra.mxu0 0
        %1529 = vmatpush.bf16.msra.mxu0 0
        %1530 = vmatpush.bf16.msra.mxu0 0
        %1531 = vmatpush.bf16.msra.mxu0 0
        %1532 = vmatpush.bf16.msra.mxu0 %v1523
        %1533 = vmatmul.bf16.gmra.mxu0 %v1520
        %v1534 = vpop.f32.mrf.mxu0
        %v1535 = vadd.f32 0.0, %v1534
        %v1536 = vpop.f32.mrf.mxu0
        %1537 = vdwg.mxu0
        %v1538 = vadd.f32 %v1457, %v1535
        %1539 = vrot.lane.b32.xlu0 %v1302, 104
        %v1540 = vpop.permute.xlu0 %1539
        %1541 = vrot.lane.b32.xlu0 %v1303, 104
        %v1542 = vpop.permute.xlu0 %1541
        %v1544 = vsel %vm866, %v1540, 0
        %v1547 = vsel %vm866, %v1542, 0
        %1549 = vmatpush.bf16.xpose.msra.mxu0 0
        %1550 = vmatpush.bf16.xpose.msra.mxu0 0
        %1551 = vmatpush.bf16.xpose.msra.mxu0 0
        %1552 = vmatpush.bf16.xpose.msra.mxu0 0
        %1553 = vmatpush.bf16.xpose.msra.mxu0 0
        %1554 = vmatpush.bf16.xpose.msra.mxu0 0
        %1555 = vmatpush.bf16.xpose.msra.mxu0 0
        %1556 = vmatpush.bf16.xpose.msra.mxu0 %v1547
        %1557 = vmatmul.bf16.gmra.mxu0 %v1544
        %v1558 = vpop.f32.mrf.mxu0
        %v1559 = vadd.f32 %v1305, %v1558
        %v1560 = vpop.f32.mrf.mxu0
        %1561 = vdwg.mxu0
        %v1562 = vsel %vm866, %v1559, -inf
        %1563 = vmax.xlane.f32.xlu0 %v1562
        %v1564 = vpop.xlane.xlu0 %1563
        %v1565 = vsub.f32 %v1559, %v1564
        %v1566 = vmul.f32 %v1565, 1.442695
        %v1567 = vpow.pop %v1566
        %v1568 = vsel %vm866, %v1567, 0.0
        %1569 = vadd.xlane.f32.xlu0 %v1568
        %v1570 = vpop.xlane.xlu0 %1569
        %v1571 = vrcp.pop %v1570
        %v1572 = vmul.f32 %v1567, %v1571
        %v1573 = vpack.c.bf16 %v1572, %v1572
        %1574 = vrot.lane.b32.xlu0 %v1303, 72
        %v1575 = vpop.permute.xlu0 %1574
        %v1577 = vsel %vm866, %v1573, 0
        %v1580 = vsel %vm904, %v1575, 0
        %1582 = vmatpush.bf16.msra.mxu0 0
        %1583 = vmatpush.bf16.msra.mxu0 0
        %1584 = vmatpush.bf16.msra.mxu0 0
        %1585 = vmatpush.bf16.msra.mxu0 0
        %1586 = vmatpush.bf16.msra.mxu0 0
        %1587 = vmatpush.bf16.msra.mxu0 0
        %1588 = vmatpush.bf16.msra.mxu0 0
        %1589 = vmatpush.bf16.msra.mxu0 %v1580
        %1590 = vmatmul.bf16.gmra.mxu0 %v1577
        %v1591 = vpop.f32.mrf.mxu0
        %v1592 = vadd.f32 0.0, %v1591
        %v1593 = vpop.f32.mrf.mxu0
        %1594 = vdwg.mxu0
        %v1595 = vpack.c.bf16 %v1592, %v1592
        %s1596 = scalar_lea.vmem %s14, 12
        %v1597 = vld [vmem:[%s1596] sm:$0xf]
        %v1599 = vsel %vm866, %v1595, 0
        %v1602 = vsel %vm904, %v1597, 0
        %1604 = vmatpush.bf16.msra.mxu0 0
        %1605 = vmatpush.bf16.msra.mxu0 0
        %1606 = vmatpush.bf16.msra.mxu0 0
        %1607 = vmatpush.bf16.msra.mxu0 0
        %1608 = vmatpush.bf16.msra.mxu0 0
        %1609 = vmatpush.bf16.msra.mxu0 0
        %1610 = vmatpush.bf16.msra.mxu0 0
        %1611 = vmatpush.bf16.msra.mxu0 %v1602
        %1612 = vmatmul.bf16.gmra.mxu0 %v1599
        %v1613 = vpop.f32.mrf.mxu0
        %v1614 = vadd.f32 0.0, %v1613
        %v1615 = vpop.f32.mrf.mxu0
        %1616 = vdwg.mxu0
        %v1617 = vadd.f32 %v1538, %v1614
        %v1618 = vld [vmem:[%s15] sm:$0x1]
        %v1620 = vperm.slane %v1618, 0
        %v1622 = vadd.f32 %v1617, %v1620
        %v1623 = vadd.f32 %v1226, %v1622
        %v1624 = vld [vmem:[%s16] sm:$0x1]
        %v1625 = vld [vmem:[%s17] sm:$0x1]
        %v1626 = vsel %vm840, %v1623, 0.0
        %1627 = vadd.xlane.f32.xlu0 %v1626
        %v1628 = vpop.xlane.xlu0 %1627
        %v1629 = vmul.f32 %v1628, %v1199
        %v1630 = vsub.f32 %v1623, %v1629
        %v1631 = vmul.f32 %v1630, %v1630
        %v1632 = vsel %vm840, %v1631, 0.0
        %1633 = vadd.xlane.f32.xlu0 %v1632
        %v1634 = vpop.xlane.xlu0 %1633
        %v1635 = vmul.f32 %v1634, %v1199
        %v1636 = vadd.f32 %v1635, 1e-05
        %v1637 = vrsqrt.pop %v1636
        %v1638 = vmul.f32 %v1637, %v1636
        %v1639 = vmul.f32 %v1638, %v1637
        %v1640 = vmul.f32 0.5, %v1639
        %v1641 = vsub.f32 1.5, %v1640
        %v1642 = vmul.f32 %v1637, %v1641
        %vm1643 = vweird.f32 %v1636
        %vm1644 = vweird.f32 %v1637
        %vm1645 = vmor %vm1643, %vm1644
        %v1646 = vsel %vm1645, %v1637, %v1642
        %v1647 = vmul.f32 %v1630, %v1646
        %v1649 = vperm.slane %v1624, 0
        %v1651 = vmul.f32 %v1647, %v1649
        %v1653 = vperm.slane %v1625, 0
        %v1655 = vadd.f32 %v1651, %v1653
        %v1656 = vld [vmem:[%s18] sm:$0xf]
        %v1657 = vld [vmem:[%s18 + $0x4] sm:$0xf]
        %v1658 = vld [vmem:[%s18 + $0x8] sm:$0xf]
        %v1659 = vld [vmem:[%s18 + $0xc] sm:$0xf]
        %v1660 = vld [vmem:[%s19] sm:$0x1]
        %v1661 = vld [vmem:[%s20] sm:$0xf]
        %v1662 = vld [vmem:[%s20 + $0x4] sm:$0xf]
        %v1663 = vld [vmem:[%s20 + $0x8] sm:$0xf]
        %v1664 = vld [vmem:[%s20 + $0xc] sm:$0xf]
        %v1665 = vld [vmem:[%s20 + $0x10] sm:$0xf]
        %v1666 = vld [vmem:[%s20 + $0x14] sm:$0xf]
        %v1667 = vld [vmem:[%s20 + $0x18] sm:$0xf]
        %v1668 = vld [vmem:[%s20 + $0x1c] sm:$0xf]
        %v1669 = vld [vmem:[%s20 + $0x20] sm:$0xf]
        %v1670 = vld [vmem:[%s20 + $0x24] sm:$0xf]
        %v1671 = vld [vmem:[%s20 + $0x28] sm:$0xf]
        %v1672 = vld [vmem:[%s20 + $0x2c] sm:$0xf]
        %v1673 = vld [vmem:[%s20 + $0x30] sm:$0xf]
        %v1674 = vld [vmem:[%s20 + $0x34] sm:$0xf]
        %v1675 = vld [vmem:[%s20 + $0x38] sm:$0xf]
        %v1676 = vld [vmem:[%s20 + $0x3c] sm:$0xf]
        %v1677 = vld [vmem:[%s21] sm:$0x1]
        %v1678 = vpack.c.bf16 %v1655, %v1655
        %v1680 = vperm.slane %v1660, 0
        %v1686 = vunpack.c.l.b16 %v1656
        %v1687 = vunpack.c.l.b16 %v1657
        %v1688 = vunpack.c.l.b16 %v1658
        %v1689 = vunpack.c.l.b16 %v1659
        %v1690 = vpack.c.b16 %v1687, %v1686
        %v1691 = vpack.c.b16 %v1689, %v1688
        %v1695 = vsel %vm840, %v1678, 0
        %1697 = vmatpush.bf16.msra.mxu0 0
        %1698 = vmatpush.bf16.msra.mxu0 0
        %1699 = vmatpush.bf16.msra.mxu0 0
        %1700 = vmatpush.bf16.msra.mxu0 0
        %1701 = vmatpush.bf16.msra.mxu0 0
        %1702 = vmatpush.bf16.msra.mxu0 0
        %1703 = vmatpush.bf16.msra.mxu0 %v1691
        %1704 = vmatpush.bf16.msra.mxu0 %v1690
        %1705 = vmatmul.bf16.gmra.mxu0 %v1695
        %v1706 = vpop.f32.mrf.mxu0
        %v1707 = vadd.f32 %v1680, %v1706
        %v1708 = vpop.f32.mrf.mxu0
        %1709 = vdwg.mxu0
        %v1710 = vmax.f32 %v1707, 0.0
        %v1711 = vpack.c.bf16 %v1710, %v1710
        %v1713 = vperm.slane %v1677, 0
        %v1731 = vunpack.c.l.b16 %v1661
        %v1732 = vunpack.c.l.b16 %v1662
        %v1733 = vunpack.c.l.b16 %v1663
        %v1734 = vunpack.c.l.b16 %v1664
        %v1735 = vunpack.c.l.b16 %v1665
        %v1736 = vunpack.c.l.b16 %v1666
        %v1737 = vunpack.c.l.b16 %v1667
        %v1738 = vunpack.c.l.b16 %v1668
        %v1739 = vunpack.c.l.b16 %v1669
        %v1740 = vunpack.c.l.b16 %v1670
        %v1741 = vunpack.c.l.b16 %v1671
        %v1742 = vunpack.c.l.b16 %v1672
        %v1743 = vunpack.c.l.b16 %v1673
        %v1744 = vunpack.c.l.b16 %v1674
        %v1745 = vunpack.c.l.b16 %v1675
        %v1746 = vunpack.c.l.b16 %v1676
        %v1747 = vpack.c.b16 %v1732, %v1731
        %v1748 = vpack.c.b16 %v1734, %v1733
        %v1749 = vpack.c.b16 %v1736, %v1735
        %v1750 = vpack.c.b16 %v1738, %v1737
        %v1751 = vpack.c.b16 %v1740, %v1739
        %v1752 = vpack.c.b16 %v1742, %v1741
        %v1753 = vpack.c.b16 %v1744, %v1743
        %v1754 = vpack.c.b16 %v1746, %v1745
        %1763 = vmatpush.bf16.msra.mxu0 %v1754
        %1764 = vmatpush.bf16.msra.mxu0 %v1753
        %1765 = vmatpush.bf16.msra.mxu0 %v1752
        %1766 = vmatpush.bf16.msra.mxu0 %v1751
        %1767 = vmatpush.bf16.msra.mxu0 %v1750
        %1768 = vmatpush.bf16.msra.mxu0 %v1749
        %1769 = vmatpush.bf16.msra.mxu0 %v1748
        %1770 = vmatpush.bf16.msra.mxu0 %v1747
        %1771 = vmatmul.bf16.gmra.mxu0 %v1711
        %v1772 = vpop.f32.mrf.mxu0
        %v1773 = vadd.f32 %v1713, %v1772
        %v1774 = vpop.f32.mrf.mxu0
        %1775 = vdwg.mxu0
        %v1776 = vadd.f32 %v1655, %v1773
        %v1777 = vld [vmem:[#allocation2] sm:$0x1]
        %v1778 = vld [vmem:[#allocation4] sm:$0x1]
        %v1779 = vsel %vm840, %v1776, 0.0
        %1780 = vadd.xlane.f32.xlu0 %v1779
        %v1781 = vpop.xlane.xlu0 %1780
        %v1782 = vmul.f32 %v1781, %v1199
        %v1783 = vsub.f32 %v1776, %v1782
        %v1784 = vmul.f32 %v1783, %v1783
        %v1785 = vsel %vm840, %v1784, 0.0
        %1786 = vadd.xlane.f32.xlu0 %v1785
        %v1787 = vpop.xlane.xlu0 %1786
        %v1788 = vmul.f32 %v1787, %v1199
        %v1789 = vadd.f32 %v1788, 1e-05
        %v1790 = vrsqrt.pop %v1789
        %v1791 = vmul.f32 %v1790, %v1789
        %v1792 = vmul.f32 %v1791, %v1790
        %v1793 = vmul.f32 0.5, %v1792
        %v1794 = vsub.f32 1.5, %v1793
        %v1795 = vmul.f32 %v1790, %v1794
        %vm1796 = vweird.f32 %v1789
        %vm1797 = vweird.f32 %v1790
        %vm1798 = vmor %vm1796, %vm1797
        %v1799 = vsel %vm1798, %v1790, %v1795
        %v1800 = vmul.f32 %v1783, %v1799
        %v1802 = vperm.slane %v1777, 0
        %v1804 = vmul.f32 %v1800, %v1802
        %v1806 = vperm.slane %v1778, 0
        %v1808 = vadd.f32 %v1804, %v1806
        %1809 = vst.msk [vmem:[%s807] sm:$0xff] %vm840, %v1808
        %p1810 = scmp.lt.s32.totalorder %s37, 1
        %s1811 = scalar_select %p1810, %s37, 1
        %s1812 = smul.addr %s1811, 8
        %s1813 = scalar_lea.vmem %s24, %s1812
        // Predicated region
        $region125: #{transformer_forward.8} parent=115 // pred_check
          %p1814 = pneg %p579
        $region126: #{transformer_forward.8} parent=115 // pred_check_branch
          %1816 = sbr.rel (%p1814) target = $region128
        $region127: #{transformer_forward.8} parent=115 // pred_region
          _
        $region128: #{transformer_forward.8} parent=115 // pred_fallthru
          _
      $region116: #{transformer_forward.8} parent=5 // pred_fallthru
        _
      %p1817 = scmp.le.s32.totalorder 2, %s32
      // Predicated region
      $region129: #{transformer_forward.8} parent=5 // pred_check
        %p1818 = pneg %p1817
      $region130: #{transformer_forward.8} parent=5 // pred_check_branch
        %1820 = sbr.rel (%p1818) target = $region132
      $region131: #{transformer_forward.8} parent=5 // pred_region
        %s1821 = ssub.s32 %s32, 2
        // Predicated region
        $region133: #{transformer_forward.8} parent=131 // pred_check
          %p1822 = pneg %p585
        $region134: #{transformer_forward.8} parent=131 // pred_check_branch
          %1824 = sbr.rel (%p1822) target = $region136
        $region135: #{transformer_forward.8} parent=131 // pred_region
          %p1825 = scmp.lt.s32.totalorder %s38, 1
          %s1826 = scalar_select %p1825, %s38, 1
          %s1827 = smul.addr %s1826, 8
          %s1828 = scalar_lea.vmem %s24, %s1827
        $region136: #{transformer_forward.8} parent=131 // pred_fallthru
          _
      $region132: #{transformer_forward.8} parent=5 // pred_fallthru
        _
    $region6: #{transformer_forward.8} parent=1 // loop_footer
      %s36 = sadd.s32 1, %s32
    $region7: #{transformer_forward.8} parent=1 // loop_footer_branch
      %31 = sbr.rel target = $region3
    $region8: #{transformer_forward.8} parent=1 // loop_exit
      _
    %1829 = vsyncpa [#allocation3], 1
    %s1830 = scalar_lea.sflag [#allocation3], 1
    %1831 = vsyncpa %s1830, 1
    %1832 = vsyncpa [#allocation5], 1

// kernel: transformer_forward.7
$region0: #{transformer_forward.7}
  #allocation0 [shape = 'u32[]', space=smem, size = 0x4, offset = 0x4, fixed_abs, tag = 'smem constant byte address 0x4 - core index']
  #allocation1 [shape = 'u32[72,128]{1,0:T(1,128)}', space=vmem, size = 0x9000, scoped, tag = 'internal scratch']
  %s0 = inlined_call_operand.vmem [shape: f32[2,8,32], index: 0, kind: input, shape index: {}]
  %s1 = inlined_call_operand.vmem [shape: f32[2,8,32], index: 1, kind: input, shape index: {}]
  %s2 = inlined_call_operand.vmem [shape: f32[2,1,8], index: 2, kind: input, shape index: {}]
  %s3 = inlined_call_operand.vmem [shape: f32[2,1,8], index: 3, kind: input, shape index: {}]
  %s4 = inlined_call_operand.vmem [shape: bf16[32,96], index: 4, kind: input, shape index: {}]
  %s5 = inlined_call_operand.vmem [shape: f32[1,96], index: 5, kind: input, shape index: {}]
  %s6 = inlined_call_operand.vmem [shape: bf16[4,8,32], index: 6, kind: input, shape index: {}]
  %s7 = inlined_call_operand.vmem [shape: f32[1,32], index: 7, kind: input, shape index: {}]
  %s8 = inlined_call_operand.vmem [shape: f32[1,32], index: 8, kind: input, shape index: {}]
  %s9 = inlined_call_operand.vmem [shape: f32[1,32], index: 9, kind: input, shape index: {}]
  %s10 = inlined_call_operand.vmem [shape: bf16[32,32], index: 10, kind: input, shape index: {}]
  %s11 = inlined_call_operand.vmem [shape: f32[1,32], index: 11, kind: input, shape index: {}]
  %s12 = inlined_call_operand.vmem [shape: bf16[32,64], index: 12, kind: input, shape index: {}]
  %s13 = inlined_call_operand.vmem [shape: f32[1,64], index: 13, kind: input, shape index: {}]
  %s14 = inlined_call_operand.vmem [shape: bf16[4,8,32], index: 14, kind: input, shape index: {}]
  %s15 = inlined_call_operand.vmem [shape: f32[1,32], index: 15, kind: input, shape index: {}]
  %s16 = inlined_call_operand.vmem [shape: f32[1,32], index: 16, kind: input, shape index: {}]
  %s17 = inlined_call_operand.vmem [shape: f32[1,32], index: 17, kind: input, shape index: {}]
  %s18 = inlined_call_operand.vmem [shape: bf16[32,128], index: 18, kind: input, shape index: {}]
  %s19 = inlined_call_operand.vmem [shape: f32[1,128], index: 19, kind: input, shape index: {}]
  %s20 = inlined_call_operand.vmem [shape: bf16[128,32], index: 20, kind: input, shape index: {}]
  %s21 = inlined_call_operand.vmem [shape: f32[1,32], index: 21, kind: input, shape index: {}]
  %s22 = inlined_call_operand.vmem [shape: f32[1,32], index: 22, kind: input, shape index: {}]
  %s23 = inlined_call_operand.vmem [shape: f32[1,32], index: 23, kind: input, shape index: {}]
  %s24 = inlined_call_operand.vmem [shape: f32[2,8,32], index: 24, kind: output, shape index: {}]
  %s25 = sld [smem:[#allocation0]]
  $region129: #{transformer_forward.7} parent=0
    _
  %s27 = ssub.s32 1, %s25
  %s28 = scalar_select 0, %s27, %s25
  loop: start=0, step=1, limit=4
  $region2: #{transformer_forward.7} parent=0 // loop_pre_header
    _
  $region3: #{transformer_forward.7} parent=0 // loop_header
    %s30 = sphi 0, %s34
    %p31 = scmp.ge.s32.totalorder %s30, 4
    %s40 = sphi 0, %s42
    %s43 = sphi 0, %s40
    %s44 = sphi 0, %s43
    %s60 = sphi 0, %s44
    %s66 = sphi 0, %s68
    %s69 = sphi 0, %s66
    %s70 = sphi 0, %s69
    %s86 = sphi 0, %s70
    %s92 = sphi 0, %s94
    %s95 = sphi 0, %s92
    %s96 = sphi 0, %s95
    %s112 = sphi 0, %s96
    %s118 = sphi 0, %s120
    %s121 = sphi 0, %s118
    %s122 = sphi 0, %s121
    %s138 = sphi 0, %s122
    %s142 = sphi 0, %s142
    %s144 = sphi 0, %s142
    %s145 = sphi 0, %s144
    %s159 = sphi 0, %s145
    %s163 = sphi 0, %s163
    %s165 = sphi 0, %s163
    %s166 = sphi 0, %s165
    %s180 = sphi 0, %s166
    %s184 = sphi 0, %s184
    %s186 = sphi 0, %s184
    %s187 = sphi 0, %s186
    %s201 = sphi 0, %s187
    %s205 = sphi 0, %s205
    %s207 = sphi 0, %s205
    %s208 = sphi 0, %s207
    %s222 = sphi 0, %s208
    %s226 = sphi 0, %s226
    %s228 = sphi 0, %s226
    %s229 = sphi 0, %s228
    %s243 = sphi 0, %s229
    %s247 = sphi 0, %s247
    %s249 = sphi 0, %s247
    %s250 = sphi 0, %s249
    %s264 = sphi 0, %s250
    %s268 = sphi 0, %s268
    %s270 = sphi 0, %s268
    %s271 = sphi 0, %s270
    %s285 = sphi 0, %s271
    %s289 = sphi 0, %s289
    %s291 = sphi 0, %s289
    %s292 = sphi 0, %s291
    %s306 = sphi 0, %s292
    %s310 = sphi 0, %s310
    %s312 = sphi 0, %s310
    %s313 = sphi 0, %s312
    %s327 = sphi 0, %s313
    %s331 = sphi 0, %s331
    %s333 = sphi 0, %s331
    %s334 = sphi 0, %s333
    %s348 = sphi 0, %s334
    %s352 = sphi 0, %s352
    %s354 = sphi 0, %s352
    %s355 = sphi 0, %s354
    %s369 = sphi 0, %s355
    %s373 = sphi 0, %s373
    %s375 = sphi 0, %s373
    %s376 = sphi 0, %s375
    %s390 = sphi 0, %s376
    %s394 = sphi 0, %s394
    %s396 = sphi 0, %s394
    %s397 = sphi 0, %s396
    %s411 = sphi 0, %s397
    %s415 = sphi 0, %s415
    %s417 = sphi 0, %s415
    %s418 = sphi 0, %s417
    %s432 = sphi 0, %s418
    %s436 = sphi 0, %s436
    %s438 = sphi 0, %s436
    %s439 = sphi 0, %s438
    %s453 = sphi 0, %s439
    %s457 = sphi 0, %s457
    %s459 = sphi 0, %s457
    %s460 = sphi 0, %s459
    %s474 = sphi 0, %s460
    %s478 = sphi 0, %s478
    %s480 = sphi 0, %s478
    %s481 = sphi 0, %s480
    %s495 = sphi 0, %s481
    %s499 = sphi 0, %s499
    %s501 = sphi 0, %s499
    %s502 = sphi 0, %s501
    %s516 = sphi 0, %s502
    %s520 = sphi 0, %s520
    %s522 = sphi 0, %s520
    %s523 = sphi 0, %s522
    %s537 = sphi 0, %s523
    %s541 = sphi 0, %s541
    %s543 = sphi 0, %s541
    %s544 = sphi 0, %s543
    %s558 = sphi 0, %s544
    %s564 = sphi 0, %s566
    %s567 = sphi 0, %s564
    %s568 = sphi 0, %s567
    %s584 = sphi 0, %s568
  $region4: #{transformer_forward.7} parent=0 // loop_header_branch
    %33 = sbr.rel (%p31) target = $region8
  $region5: #{transformer_forward.7} parent=0 // loop_body
    %s35 = ssub.s32 %s30, 1
    %s36 = ssub.s32 %s30, 2
    %s37 = sadd.s32 %s30, 1
    %s38 = ssub.s32 %s30, %s37
    %p39 = scmp.eq.s32.totalorder %s38, 0
    %s41 = sadd.s32 %s40, 1
    %s42 = scalar_select %p39, %s40, %s41
    %p45 = pneg %p39
    %p46 = scmp.eq.s32.totalorder %s30, 1
    %p47 = por %p45, %p46
    %p48 = scmp.ne.s32.totalorder %s40, %s43
    %p49 = scmp.eq.s32.totalorder %s30, 0
    %p50 = por %p48, %p49
    %p51 = scmp.ne.s32.totalorder %s40, %s43
    %p52 = scmp.eq.s32.totalorder %s35, 1
    %p53 = por %p51, %p52
    %p54 = scmp.ne.s32.totalorder %s43, %s44
    %p55 = scmp.eq.s32.totalorder %s35, 0
    %p56 = por %p54, %p55
    %p57 = scmp.ne.s32.totalorder %s43, %s44
    %p58 = scmp.eq.s32.totalorder %s36, 1
    %p59 = por %p57, %p58
    %p61 = scmp.ne.s32.totalorder %s44, %s60
    %p62 = scmp.eq.s32.totalorder %s36, 0
    %p63 = por %p61, %p62
    %s64 = ssub.s32 %s30, %s37
    %p65 = scmp.eq.s32.totalorder %s64, 0
    %s67 = sadd.s32 %s66, 1
    %s68 = scalar_select %p65, %s66, %s67
    %p71 = pneg %p65
    %p72 = scmp.eq.s32.totalorder %s30, 1
    %p73 = por %p71, %p72
    %p74 = scmp.ne.s32.totalorder %s66, %s69
    %p75 = scmp.eq.s32.totalorder %s30, 0
    %p76 = por %p74, %p75
    %p77 = scmp.ne.s32.totalorder %s66, %s69
    %p78 = scmp.eq.s32.totalorder %s35, 1
    %p79 = por %p77, %p78
    %p80 = scmp.ne.s32.totalorder %s69, %s70
    %p81 = scmp.eq.s32.totalorder %s35, 0
    %p82 = por %p80, %p81
    %p83 = scmp.ne.s32.totalorder %s69, %s70
    %p84 = scmp.eq.s32.totalorder %s36, 1
    %p85 = por %p83, %p84
    %p87 = scmp.ne.s32.totalorder %s70, %s86
    %p88 = scmp.eq.s32.totalorder %s36, 0
    %p89 = por %p87, %p88
    %s90 = ssub.s32 %s30, %s37
    %p91 = scmp.eq.s32.totalorder %s90, 0
    %s93 = sadd.s32 %s92, 1
    %s94 = scalar_select %p91, %s92, %s93
    %p97 = pneg %p91
    %p98 = scmp.eq.s32.totalorder %s30, 1
    %p99 = por %p97, %p98
    %p100 = scmp.ne.s32.totalorder %s92, %s95
    %p101 = scmp.eq.s32.totalorder %s30, 0
    %p102 = por %p100, %p101
    %p103 = scmp.ne.s32.totalorder %s92, %s95
    %p104 = scmp.eq.s32.totalorder %s35, 1
    %p105 = por %p103, %p104
    %p106 = scmp.ne.s32.totalorder %s95, %s96
    %p107 = scmp.eq.s32.totalorder %s35, 0
    %p108 = por %p106, %p107
    %p109 = scmp.ne.s32.totalorder %s95, %s96
    %p110 = scmp.eq.s32.totalorder %s36, 1
    %p111 = por %p109, %p110
    %p113 = scmp.ne.s32.totalorder %s96, %s112
    %p114 = scmp.eq.s32.totalorder %s36, 0
    %p115 = por %p113, %p114
    %s116 = ssub.s32 %s30, %s37
    %p117 = scmp.eq.s32.totalorder %s116, 0
    %s119 = sadd.s32 %s118, 1
    %s120 = scalar_select %p117, %s118, %s119
    %p123 = pneg %p117
    %p124 = scmp.eq.s32.totalorder %s30, 1
    %p125 = por %p123, %p124
    %p126 = scmp.ne.s32.totalorder %s118, %s121
    %p127 = scmp.eq.s32.totalorder %s30, 0
    %p128 = por %p126, %p127
    %p129 = scmp.ne.s32.totalorder %s118, %s121
    %p130 = scmp.eq.s32.totalorder %s35, 1
    %p131 = por %p129, %p130
    %p132 = scmp.ne.s32.totalorder %s121, %s122
    %p133 = scmp.eq.s32.totalorder %s35, 0
    %p134 = por %p132, %p133
    %p135 = scmp.ne.s32.totalorder %s121, %s122
    %p136 = scmp.eq.s32.totalorder %s36, 1
    %p137 = por %p135, %p136
    %p139 = scmp.ne.s32.totalorder %s122, %s138
    %p140 = scmp.eq.s32.totalorder %s36, 0
    %p141 = por %p139, %p140
    %s143 = sadd.s32 %s142, 1
    %p146 = scmp.eq.s32.totalorder %s30, 1
    %p147 = scmp.ne.s32.totalorder %s142, %s144
    %p148 = scmp.eq.s32.totalorder %s30, 0
    %p149 = por %p147, %p148
    %p150 = scmp.ne.s32.totalorder %s142, %s144
    %p151 = scmp.eq.s32.totalorder %s35, 1
    %p152 = por %p150, %p151
    %p153 = scmp.ne.s32.totalorder %s144, %s145
    %p154 = scmp.eq.s32.totalorder %s35, 0
    %p155 = por %p153, %p154
    %p156 = scmp.ne.s32.totalorder %s144, %s145
    %p157 = scmp.eq.s32.totalorder %s36, 1
    %p158 = por %p156, %p157
    %p160 = scmp.ne.s32.totalorder %s145, %s159
    %p161 = scmp.eq.s32.totalorder %s36, 0
    %p162 = por %p160, %p161
    %s164 = sadd.s32 %s163, 1
    %p167 = scmp.eq.s32.totalorder %s30, 1
    %p168 = scmp.ne.s32.totalorder %s163, %s165
    %p169 = scmp.eq.s32.totalorder %s30, 0
    %p170 = por %p168, %p169
    %p171 = scmp.ne.s32.totalorder %s163, %s165
    %p172 = scmp.eq.s32.totalorder %s35, 1
    %p173 = por %p171, %p172
    %p174 = scmp.ne.s32.totalorder %s165, %s166
    %p175 = scmp.eq.s32.totalorder %s35, 0
    %p176 = por %p174, %p175
    %p177 = scmp.ne.s32.totalorder %s165, %s166
    %p178 = scmp.eq.s32.totalorder %s36, 1
    %p179 = por %p177, %p178
    %p181 = scmp.ne.s32.totalorder %s166, %s180
    %p182 = scmp.eq.s32.totalorder %s36, 0
    %p183 = por %p181, %p182
    %s185 = sadd.s32 %s184, 1
    %p188 = scmp.eq.s32.totalorder %s30, 1
    %p189 = scmp.ne.s32.totalorder %s184, %s186
    %p190 = scmp.eq.s32.totalorder %s30, 0
    %p191 = por %p189, %p190
    %p192 = scmp.ne.s32.totalorder %s184, %s186
    %p193 = scmp.eq.s32.totalorder %s35, 1
    %p194 = por %p192, %p193
    %p195 = scmp.ne.s32.totalorder %s186, %s187
    %p196 = scmp.eq.s32.totalorder %s35, 0
    %p197 = por %p195, %p196
    %p198 = scmp.ne.s32.totalorder %s186, %s187
    %p199 = scmp.eq.s32.totalorder %s36, 1
    %p200 = por %p198, %p199
    %p202 = scmp.ne.s32.totalorder %s187, %s201
    %p203 = scmp.eq.s32.totalorder %s36, 0
    %p204 = por %p202, %p203
    %s206 = sadd.s32 %s205, 1
    %p209 = scmp.eq.s32.totalorder %s30, 1
    %p210 = scmp.ne.s32.totalorder %s205, %s207
    %p211 = scmp.eq.s32.totalorder %s30, 0
    %p212 = por %p210, %p211
    %p213 = scmp.ne.s32.totalorder %s205, %s207
    %p214 = scmp.eq.s32.totalorder %s35, 1
    %p215 = por %p213, %p214
    %p216 = scmp.ne.s32.totalorder %s207, %s208
    %p217 = scmp.eq.s32.totalorder %s35, 0
    %p218 = por %p216, %p217
    %p219 = scmp.ne.s32.totalorder %s207, %s208
    %p220 = scmp.eq.s32.totalorder %s36, 1
    %p221 = por %p219, %p220
    %p223 = scmp.ne.s32.totalorder %s208, %s222
    %p224 = scmp.eq.s32.totalorder %s36, 0
    %p225 = por %p223, %p224
    %s227 = sadd.s32 %s226, 1
    %p230 = scmp.eq.s32.totalorder %s30, 1
    %p231 = scmp.ne.s32.totalorder %s226, %s228
    %p232 = scmp.eq.s32.totalorder %s30, 0
    %p233 = por %p231, %p232
    %p234 = scmp.ne.s32.totalorder %s226, %s228
    %p235 = scmp.eq.s32.totalorder %s35, 1
    %p236 = por %p234, %p235
    %p237 = scmp.ne.s32.totalorder %s228, %s229
    %p238 = scmp.eq.s32.totalorder %s35, 0
    %p239 = por %p237, %p238
    %p240 = scmp.ne.s32.totalorder %s228, %s229
    %p241 = scmp.eq.s32.totalorder %s36, 1
    %p242 = por %p240, %p241
    %p244 = scmp.ne.s32.totalorder %s229, %s243
    %p245 = scmp.eq.s32.totalorder %s36, 0
    %p246 = por %p244, %p245
    %s248 = sadd.s32 %s247, 1
    %p251 = scmp.eq.s32.totalorder %s30, 1
    %p252 = scmp.ne.s32.totalorder %s247, %s249
    %p253 = scmp.eq.s32.totalorder %s30, 0
    %p254 = por %p252, %p253
    %p255 = scmp.ne.s32.totalorder %s247, %s249
    %p256 = scmp.eq.s32.totalorder %s35, 1
    %p257 = por %p255, %p256
    %p258 = scmp.ne.s32.totalorder %s249, %s250
    %p259 = scmp.eq.s32.totalorder %s35, 0
    %p260 = por %p258, %p259
    %p261 = scmp.ne.s32.totalorder %s249, %s250
    %p262 = scmp.eq.s32.totalorder %s36, 1
    %p263 = por %p261, %p262
    %p265 = scmp.ne.s32.totalorder %s250, %s264
    %p266 = scmp.eq.s32.totalorder %s36, 0
    %p267 = por %p265, %p266
    %s269 = sadd.s32 %s268, 1
    %p272 = scmp.eq.s32.totalorder %s30, 1
    %p273 = scmp.ne.s32.totalorder %s268, %s270
    %p274 = scmp.eq.s32.totalorder %s30, 0
    %p275 = por %p273, %p274
    %p276 = scmp.ne.s32.totalorder %s268, %s270
    %p277 = scmp.eq.s32.totalorder %s35, 1
    %p278 = por %p276, %p277
    %p279 = scmp.ne.s32.totalorder %s270, %s271
    %p280 = scmp.eq.s32.totalorder %s35, 0
    %p281 = por %p279, %p280
    %p282 = scmp.ne.s32.totalorder %s270, %s271
    %p283 = scmp.eq.s32.totalorder %s36, 1
    %p284 = por %p282, %p283
    %p286 = scmp.ne.s32.totalorder %s271, %s285
    %p287 = scmp.eq.s32.totalorder %s36, 0
    %p288 = por %p286, %p287
    %s290 = sadd.s32 %s289, 1
    %p293 = scmp.eq.s32.totalorder %s30, 1
    %p294 = scmp.ne.s32.totalorder %s289, %s291
    %p295 = scmp.eq.s32.totalorder %s30, 0
    %p296 = por %p294, %p295
    %p297 = scmp.ne.s32.totalorder %s289, %s291
    %p298 = scmp.eq.s32.totalorder %s35, 1
    %p299 = por %p297, %p298
    %p300 = scmp.ne.s32.totalorder %s291, %s292
    %p301 = scmp.eq.s32.totalorder %s35, 0
    %p302 = por %p300, %p301
    %p303 = scmp.ne.s32.totalorder %s291, %s292
    %p304 = scmp.eq.s32.totalorder %s36, 1
    %p305 = por %p303, %p304
    %p307 = scmp.ne.s32.totalorder %s292, %s306
    %p308 = scmp.eq.s32.totalorder %s36, 0
    %p309 = por %p307, %p308
    %s311 = sadd.s32 %s310, 1
    %p314 = scmp.eq.s32.totalorder %s30, 1
    %p315 = scmp.ne.s32.totalorder %s310, %s312
    %p316 = scmp.eq.s32.totalorder %s30, 0
    %p317 = por %p315, %p316
    %p318 = scmp.ne.s32.totalorder %s310, %s312
    %p319 = scmp.eq.s32.totalorder %s35, 1
    %p320 = por %p318, %p319
    %p321 = scmp.ne.s32.totalorder %s312, %s313
    %p322 = scmp.eq.s32.totalorder %s35, 0
    %p323 = por %p321, %p322
    %p324 = scmp.ne.s32.totalorder %s312, %s313
    %p325 = scmp.eq.s32.totalorder %s36, 1
    %p326 = por %p324, %p325
    %p328 = scmp.ne.s32.totalorder %s313, %s327
    %p329 = scmp.eq.s32.totalorder %s36, 0
    %p330 = por %p328, %p329
    %s332 = sadd.s32 %s331, 1
    %p335 = scmp.eq.s32.totalorder %s30, 1
    %p336 = scmp.ne.s32.totalorder %s331, %s333
    %p337 = scmp.eq.s32.totalorder %s30, 0
    %p338 = por %p336, %p337
    %p339 = scmp.ne.s32.totalorder %s331, %s333
    %p340 = scmp.eq.s32.totalorder %s35, 1
    %p341 = por %p339, %p340
    %p342 = scmp.ne.s32.totalorder %s333, %s334
    %p343 = scmp.eq.s32.totalorder %s35, 0
    %p344 = por %p342, %p343
    %p345 = scmp.ne.s32.totalorder %s333, %s334
    %p346 = scmp.eq.s32.totalorder %s36, 1
    %p347 = por %p345, %p346
    %p349 = scmp.ne.s32.totalorder %s334, %s348
    %p350 = scmp.eq.s32.totalorder %s36, 0
    %p351 = por %p349, %p350
    %s353 = sadd.s32 %s352, 1
    %p356 = scmp.eq.s32.totalorder %s30, 1
    %p357 = scmp.ne.s32.totalorder %s352, %s354
    %p358 = scmp.eq.s32.totalorder %s30, 0
    %p359 = por %p357, %p358
    %p360 = scmp.ne.s32.totalorder %s352, %s354
    %p361 = scmp.eq.s32.totalorder %s35, 1
    %p362 = por %p360, %p361
    %p363 = scmp.ne.s32.totalorder %s354, %s355
    %p364 = scmp.eq.s32.totalorder %s35, 0
    %p365 = por %p363, %p364
    %p366 = scmp.ne.s32.totalorder %s354, %s355
    %p367 = scmp.eq.s32.totalorder %s36, 1
    %p368 = por %p366, %p367
    %p370 = scmp.ne.s32.totalorder %s355, %s369
    %p371 = scmp.eq.s32.totalorder %s36, 0
    %p372 = por %p370, %p371
    %s374 = sadd.s32 %s373, 1
    %p377 = scmp.eq.s32.totalorder %s30, 1
    %p378 = scmp.ne.s32.totalorder %s373, %s375
    %p379 = scmp.eq.s32.totalorder %s30, 0
    %p380 = por %p378, %p379
    %p381 = scmp.ne.s32.totalorder %s373, %s375
    %p382 = scmp.eq.s32.totalorder %s35, 1
    %p383 = por %p381, %p382
    %p384 = scmp.ne.s32.totalorder %s375, %s376
    %p385 = scmp.eq.s32.totalorder %s35, 0
    %p386 = por %p384, %p385
    %p387 = scmp.ne.s32.totalorder %s375, %s376
    %p388 = scmp.eq.s32.totalorder %s36, 1
    %p389 = por %p387, %p388
    %p391 = scmp.ne.s32.totalorder %s376, %s390
    %p392 = scmp.eq.s32.totalorder %s36, 0
    %p393 = por %p391, %p392
    %s395 = sadd.s32 %s394, 1
    %p398 = scmp.eq.s32.totalorder %s30, 1
    %p399 = scmp.ne.s32.totalorder %s394, %s396
    %p400 = scmp.eq.s32.totalorder %s30, 0
    %p401 = por %p399, %p400
    %p402 = scmp.ne.s32.totalorder %s394, %s396
    %p403 = scmp.eq.s32.totalorder %s35, 1
    %p404 = por %p402, %p403
    %p405 = scmp.ne.s32.totalorder %s396, %s397
    %p406 = scmp.eq.s32.totalorder %s35, 0
    %p407 = por %p405, %p406
    %p408 = scmp.ne.s32.totalorder %s396, %s397
    %p409 = scmp.eq.s32.totalorder %s36, 1
    %p410 = por %p408, %p409
    %p412 = scmp.ne.s32.totalorder %s397, %s411
    %p413 = scmp.eq.s32.totalorder %s36, 0
    %p414 = por %p412, %p413
    %s416 = sadd.s32 %s415, 1
    %p419 = scmp.eq.s32.totalorder %s30, 1
    %p420 = scmp.ne.s32.totalorder %s415, %s417
    %p421 = scmp.eq.s32.totalorder %s30, 0
    %p422 = por %p420, %p421
    %p423 = scmp.ne.s32.totalorder %s415, %s417
    %p424 = scmp.eq.s32.totalorder %s35, 1
    %p425 = por %p423, %p424
    %p426 = scmp.ne.s32.totalorder %s417, %s418
    %p427 = scmp.eq.s32.totalorder %s35, 0
    %p428 = por %p426, %p427
    %p429 = scmp.ne.s32.totalorder %s417, %s418
    %p430 = scmp.eq.s32.totalorder %s36, 1
    %p431 = por %p429, %p430
    %p433 = scmp.ne.s32.totalorder %s418, %s432
    %p434 = scmp.eq.s32.totalorder %s36, 0
    %p435 = por %p433, %p434
    %s437 = sadd.s32 %s436, 1
    %p440 = scmp.eq.s32.totalorder %s30, 1
    %p441 = scmp.ne.s32.totalorder %s436, %s438
    %p442 = scmp.eq.s32.totalorder %s30, 0
    %p443 = por %p441, %p442
    %p444 = scmp.ne.s32.totalorder %s436, %s438
    %p445 = scmp.eq.s32.totalorder %s35, 1
    %p446 = por %p444, %p445
    %p447 = scmp.ne.s32.totalorder %s438, %s439
    %p448 = scmp.eq.s32.totalorder %s35, 0
    %p449 = por %p447, %p448
    %p450 = scmp.ne.s32.totalorder %s438, %s439
    %p451 = scmp.eq.s32.totalorder %s36, 1
    %p452 = por %p450, %p451
    %p454 = scmp.ne.s32.totalorder %s439, %s453
    %p455 = scmp.eq.s32.totalorder %s36, 0
    %p456 = por %p454, %p455
    %s458 = sadd.s32 %s457, 1
    %p461 = scmp.eq.s32.totalorder %s30, 1
    %p462 = scmp.ne.s32.totalorder %s457, %s459
    %p463 = scmp.eq.s32.totalorder %s30, 0
    %p464 = por %p462, %p463
    %p465 = scmp.ne.s32.totalorder %s457, %s459
    %p466 = scmp.eq.s32.totalorder %s35, 1
    %p467 = por %p465, %p466
    %p468 = scmp.ne.s32.totalorder %s459, %s460
    %p469 = scmp.eq.s32.totalorder %s35, 0
    %p470 = por %p468, %p469
    %p471 = scmp.ne.s32.totalorder %s459, %s460
    %p472 = scmp.eq.s32.totalorder %s36, 1
    %p473 = por %p471, %p472
    %p475 = scmp.ne.s32.totalorder %s460, %s474
    %p476 = scmp.eq.s32.totalorder %s36, 0
    %p477 = por %p475, %p476
    %s479 = sadd.s32 %s478, 1
    %p482 = scmp.eq.s32.totalorder %s30, 1
    %p483 = scmp.ne.s32.totalorder %s478, %s480
    %p484 = scmp.eq.s32.totalorder %s30, 0
    %p485 = por %p483, %p484
    %p486 = scmp.ne.s32.totalorder %s478, %s480
    %p487 = scmp.eq.s32.totalorder %s35, 1
    %p488 = por %p486, %p487
    %p489 = scmp.ne.s32.totalorder %s480, %s481
    %p490 = scmp.eq.s32.totalorder %s35, 0
    %p491 = por %p489, %p490
    %p492 = scmp.ne.s32.totalorder %s480, %s481
    %p493 = scmp.eq.s32.totalorder %s36, 1
    %p494 = por %p492, %p493
    %p496 = scmp.ne.s32.totalorder %s481, %s495
    %p497 = scmp.eq.s32.totalorder %s36, 0
    %p498 = por %p496, %p497
    %s500 = sadd.s32 %s499, 1
    %p503 = scmp.eq.s32.totalorder %s30, 1
    %p504 = scmp.ne.s32.totalorder %s499, %s501
    %p505 = scmp.eq.s32.totalorder %s30, 0
    %p506 = por %p504, %p505
    %p507 = scmp.ne.s32.totalorder %s499, %s501
    %p508 = scmp.eq.s32.totalorder %s35, 1
    %p509 = por %p507, %p508
    %p510 = scmp.ne.s32.totalorder %s501, %s502
    %p511 = scmp.eq.s32.totalorder %s35, 0
    %p512 = por %p510, %p511
    %p513 = scmp.ne.s32.totalorder %s501, %s502
    %p514 = scmp.eq.s32.totalorder %s36, 1
    %p515 = por %p513, %p514
    %p517 = scmp.ne.s32.totalorder %s502, %s516
    %p518 = scmp.eq.s32.totalorder %s36, 0
    %p519 = por %p517, %p518
    %s521 = sadd.s32 %s520, 1
    %p524 = scmp.eq.s32.totalorder %s30, 1
    %p525 = scmp.ne.s32.totalorder %s520, %s522
    %p526 = scmp.eq.s32.totalorder %s30, 0
    %p527 = por %p525, %p526
    %p528 = scmp.ne.s32.totalorder %s520, %s522
    %p529 = scmp.eq.s32.totalorder %s35, 1
    %p530 = por %p528, %p529
    %p531 = scmp.ne.s32.totalorder %s522, %s523
    %p532 = scmp.eq.s32.totalorder %s35, 0
    %p533 = por %p531, %p532
    %p534 = scmp.ne.s32.totalorder %s522, %s523
    %p535 = scmp.eq.s32.totalorder %s36, 1
    %p536 = por %p534, %p535
    %p538 = scmp.ne.s32.totalorder %s523, %s537
    %p539 = scmp.eq.s32.totalorder %s36, 0
    %p540 = por %p538, %p539
    %s542 = sadd.s32 %s541, 1
    %p545 = scmp.eq.s32.totalorder %s30, 1
    %p546 = scmp.ne.s32.totalorder %s541, %s543
    %p547 = scmp.eq.s32.totalorder %s30, 0
    %p548 = por %p546, %p547
    %p549 = scmp.ne.s32.totalorder %s541, %s543
    %p550 = scmp.eq.s32.totalorder %s35, 1
    %p551 = por %p549, %p550
    %p552 = scmp.ne.s32.totalorder %s543, %s544
    %p553 = scmp.eq.s32.totalorder %s35, 0
    %p554 = por %p552, %p553
    %p555 = scmp.ne.s32.totalorder %s543, %s544
    %p556 = scmp.eq.s32.totalorder %s36, 1
    %p557 = por %p555, %p556
    %p559 = scmp.ne.s32.totalorder %s544, %s558
    %p560 = scmp.eq.s32.totalorder %s36, 0
    %p561 = por %p559, %p560
    %s562 = ssub.s32 %s30, %s37
    %p563 = scmp.eq.s32.totalorder %s562, 0
    %s565 = sadd.s32 %s564, 1
    %s566 = scalar_select %p563, %s564, %s565
    %p569 = pneg %p563
    %p570 = scmp.eq.s32.totalorder %s30, 1
    %p571 = por %p569, %p570
    %p572 = scmp.ne.s32.totalorder %s564, %s567
    %p573 = scmp.eq.s32.totalorder %s30, 0
    %p574 = por %p572, %p573
    %p575 = scmp.ne.s32.totalorder %s564, %s567
    %p576 = scmp.eq.s32.totalorder %s35, 1
    %p577 = por %p575, %p576
    %p578 = scmp.ne.s32.totalorder %s567, %s568
    %p579 = scmp.eq.s32.totalorder %s35, 0
    %p580 = por %p578, %p579
    %p581 = scmp.ne.s32.totalorder %s567, %s568
    %p582 = scmp.eq.s32.totalorder %s36, 1
    %p583 = por %p581, %p582
    %p585 = scmp.ne.s32.totalorder %s568, %s584
    %p586 = scmp.eq.s32.totalorder %s36, 0
    %p587 = por %p585, %p586
    %p588 = scmp.le.s32.totalorder 1, %s30
    %p589 = scmp.lt.s32.totalorder %s30, 3
    %p590 = pnand %p588, %p589
    %p591 = pneg %p590
    // Predicated region
    $region9: #{transformer_forward.7} parent=5 // pred_check
      _
    $region10: #{transformer_forward.7} parent=5 // pred_check_branch
      %593 = sbr.rel (%p590) target = $region12
    $region11: #{transformer_forward.7} parent=5 // pred_region
      %s594 = ssub.s32 %s30, 1
      // Predicated region
      $region13: #{transformer_forward.7} parent=11 // pred_check
        %p595 = pneg %p155
      $region14: #{transformer_forward.7} parent=11 // pred_check_branch
        %597 = sbr.rel (%p595) target = $region16
      $region15: #{transformer_forward.7} parent=11 // pred_region
        _
      $region16: #{transformer_forward.7} parent=11 // pred_fallthru
        _
      // Predicated region
      $region17: #{transformer_forward.7} parent=11 // pred_check
        %p598 = pneg %p176
      $region18: #{transformer_forward.7} parent=11 // pred_check_branch
        %600 = sbr.rel (%p598) target = $region20
      $region19: #{transformer_forward.7} parent=11 // pred_region
        _
      $region20: #{transformer_forward.7} parent=11 // pred_fallthru
        _
      // Predicated region
      $region21: #{transformer_forward.7} parent=11 // pred_check
        %p601 = pneg %p197
      $region22: #{transformer_forward.7} parent=11 // pred_check_branch
        %603 = sbr.rel (%p601) target = $region24
      $region23: #{transformer_forward.7} parent=11 // pred_region
        _
      $region24: #{transformer_forward.7} parent=11 // pred_fallthru
        _
      // Predicated region
      $region25: #{transformer_forward.7} parent=11 // pred_check
        %p604 = pneg %p218
      $region26: #{transformer_forward.7} parent=11 // pred_check_branch
        %606 = sbr.rel (%p604) target = $region28
      $region27: #{transformer_forward.7} parent=11 // pred_region
        _
      $region28: #{transformer_forward.7} parent=11 // pred_fallthru
        _
      // Predicated region
      $region29: #{transformer_forward.7} parent=11 // pred_check
        %p607 = pneg %p239
      $region30: #{transformer_forward.7} parent=11 // pred_check_branch
        %609 = sbr.rel (%p607) target = $region32
      $region31: #{transformer_forward.7} parent=11 // pred_region
        _
      $region32: #{transformer_forward.7} parent=11 // pred_fallthru
        _
      // Predicated region
      $region33: #{transformer_forward.7} parent=11 // pred_check
        %p610 = pneg %p260
      $region34: #{transformer_forward.7} parent=11 // pred_check_branch
        %612 = sbr.rel (%p610) target = $region36
      $region35: #{transformer_forward.7} parent=11 // pred_region
        _
      $region36: #{transformer_forward.7} parent=11 // pred_fallthru
        _
      // Predicated region
      $region37: #{transformer_forward.7} parent=11 // pred_check
        %p613 = pneg %p281
      $region38: #{transformer_forward.7} parent=11 // pred_check_branch
        %615 = sbr.rel (%p613) target = $region40
      $region39: #{transformer_forward.7} parent=11 // pred_region
        _
      $region40: #{transformer_forward.7} parent=11 // pred_fallthru
        _
      // Predicated region
      $region41: #{transformer_forward.7} parent=11 // pred_check
        %p616 = pneg %p302
      $region42: #{transformer_forward.7} parent=11 // pred_check_branch
        %618 = sbr.rel (%p616) target = $region44
      $region43: #{transformer_forward.7} parent=11 // pred_region
        _
      $region44: #{transformer_forward.7} parent=11 // pred_fallthru
        _
      // Predicated region
      $region45: #{transformer_forward.7} parent=11 // pred_check
        %p619 = pneg %p323
      $region46: #{transformer_forward.7} parent=11 // pred_check_branch
        %621 = sbr.rel (%p619) target = $region48
      $region47: #{transformer_forward.7} parent=11 // pred_region
        _
      $region48: #{transformer_forward.7} parent=11 // pred_fallthru
        _
      // Predicated region
      $region49: #{transformer_forward.7} parent=11 // pred_check
        %p622 = pneg %p344
      $region50: #{transformer_forward.7} parent=11 // pred_check_branch
        %624 = sbr.rel (%p622) target = $region52
      $region51: #{transformer_forward.7} parent=11 // pred_region
        _
      $region52: #{transformer_forward.7} parent=11 // pred_fallthru
        _
      // Predicated region
      $region53: #{transformer_forward.7} parent=11 // pred_check
        %p625 = pneg %p365
      $region54: #{transformer_forward.7} parent=11 // pred_check_branch
        %627 = sbr.rel (%p625) target = $region56
      $region55: #{transformer_forward.7} parent=11 // pred_region
        _
      $region56: #{transformer_forward.7} parent=11 // pred_fallthru
        _
      // Predicated region
      $region57: #{transformer_forward.7} parent=11 // pred_check
        %p628 = pneg %p386
      $region58: #{transformer_forward.7} parent=11 // pred_check_branch
        %630 = sbr.rel (%p628) target = $region60
      $region59: #{transformer_forward.7} parent=11 // pred_region
        _
      $region60: #{transformer_forward.7} parent=11 // pred_fallthru
        _
      // Predicated region
      $region61: #{transformer_forward.7} parent=11 // pred_check
        %p631 = pneg %p407
      $region62: #{transformer_forward.7} parent=11 // pred_check_branch
        %633 = sbr.rel (%p631) target = $region64
      $region63: #{transformer_forward.7} parent=11 // pred_region
        _
      $region64: #{transformer_forward.7} parent=11 // pred_fallthru
        _
      // Predicated region
      $region65: #{transformer_forward.7} parent=11 // pred_check
        %p634 = pneg %p428
      $region66: #{transformer_forward.7} parent=11 // pred_check_branch
        %636 = sbr.rel (%p634) target = $region68
      $region67: #{transformer_forward.7} parent=11 // pred_region
        _
      $region68: #{transformer_forward.7} parent=11 // pred_fallthru
        _
      // Predicated region
      $region69: #{transformer_forward.7} parent=11 // pred_check
        %p637 = pneg %p449
      $region70: #{transformer_forward.7} parent=11 // pred_check_branch
        %639 = sbr.rel (%p637) target = $region72
      $region71: #{transformer_forward.7} parent=11 // pred_region
        _
      $region72: #{transformer_forward.7} parent=11 // pred_fallthru
        _
      // Predicated region
      $region73: #{transformer_forward.7} parent=11 // pred_check
        %p640 = pneg %p470
      $region74: #{transformer_forward.7} parent=11 // pred_check_branch
        %642 = sbr.rel (%p640) target = $region76
      $region75: #{transformer_forward.7} parent=11 // pred_region
        _
      $region76: #{transformer_forward.7} parent=11 // pred_fallthru
        _
      // Predicated region
      $region77: #{transformer_forward.7} parent=11 // pred_check
        %p643 = pneg %p491
      $region78: #{transformer_forward.7} parent=11 // pred_check_branch
        %645 = sbr.rel (%p643) target = $region80
      $region79: #{transformer_forward.7} parent=11 // pred_region
        _
      $region80: #{transformer_forward.7} parent=11 // pred_fallthru
        _
      // Predicated region
      $region81: #{transformer_forward.7} parent=11 // pred_check
        %p646 = pneg %p512
      $region82: #{transformer_forward.7} parent=11 // pred_check_branch
        %648 = sbr.rel (%p646) target = $region84
      $region83: #{transformer_forward.7} parent=11 // pred_region
        _
      $region84: #{transformer_forward.7} parent=11 // pred_fallthru
        _
      // Predicated region
      $region85: #{transformer_forward.7} parent=11 // pred_check
        %p649 = pneg %p533
      $region86: #{transformer_forward.7} parent=11 // pred_check_branch
        %651 = sbr.rel (%p649) target = $region88
      $region87: #{transformer_forward.7} parent=11 // pred_region
        _
      $region88: #{transformer_forward.7} parent=11 // pred_fallthru
        _
      // Predicated region
      $region89: #{transformer_forward.7} parent=11 // pred_check
        %p652 = pneg %p554
      $region90: #{transformer_forward.7} parent=11 // pred_check_branch
        %654 = sbr.rel (%p652) target = $region92
      $region91: #{transformer_forward.7} parent=11 // pred_region
        _
      $region92: #{transformer_forward.7} parent=11 // pred_fallthru
        _
    $region12: #{transformer_forward.7} parent=5 // pred_fallthru
      _
    %p655 = scmp.lt.s32.totalorder %s30, 2
    // Predicated region
    $region93: #{transformer_forward.7} parent=5 // pred_check
      %p656 = pneg %p655
    $region94: #{transformer_forward.7} parent=5 // pred_check_branch
      %658 = sbr.rel (%p656) target = $region96
    $region95: #{transformer_forward.7} parent=5 // pred_region
      // Predicated region
      $region97: #{transformer_forward.7} parent=95 // pred_check
        %p659 = pneg %p50
      $region98: #{transformer_forward.7} parent=95 // pred_check_branch
        %661 = sbr.rel (%p659) target = $region100
      $region99: #{transformer_forward.7} parent=95 // pred_region
        %p662 = scmp.lt.s32.totalorder %s30, 1
        %s663 = scalar_select %p662, %s30, 1
        %s664 = smul.addr %s663, 8
        %s665 = scalar_lea.vmem %s0, %s664
      $region100: #{transformer_forward.7} parent=95 // pred_fallthru
        _
      // Predicated region
      $region101: #{transformer_forward.7} parent=95 // pred_check
        %p666 = pneg %p76
      $region102: #{transformer_forward.7} parent=95 // pred_check_branch
        %668 = sbr.rel (%p666) target = $region104
      $region103: #{transformer_forward.7} parent=95 // pred_region
        %p669 = scmp.lt.s32.totalorder %s30, 1
        %s670 = scalar_select %p669, %s30, 1
        %s671 = smul.addr %s670, 8
        %s672 = scalar_lea.vmem %s1, %s671
      $region104: #{transformer_forward.7} parent=95 // pred_fallthru
        _
      // Predicated region
      $region105: #{transformer_forward.7} parent=95 // pred_check
        %p673 = pneg %p102
      $region106: #{transformer_forward.7} parent=95 // pred_check_branch
        %675 = sbr.rel (%p673) target = $region108
      $region107: #{transformer_forward.7} parent=95 // pred_region
        %p676 = scmp.lt.s32.totalorder %s30, 1
        %s677 = scalar_select %p676, %s30, 1
        %s678 = scalar_lea.vmem %s2, %s677
      $region108: #{transformer_forward.7} parent=95 // pred_fallthru
        _
      // Predicated region
      $region109: #{transformer_forward.7} parent=95 // pred_check
        %p679 = pneg %p128
      $region110: #{transformer_forward.7} parent=95 // pred_check_branch
        %681 = sbr.rel (%p679) target = $region112
      $region111: #{transformer_forward.7} parent=95 // pred_region
        %p682 = scmp.lt.s32.totalorder %s30, 1
        %s683 = scalar_select %p682, %s30, 1
        %s684 = scalar_lea.vmem %s3, %s683
      $region112: #{transformer_forward.7} parent=95 // pred_fallthru
        _
    $region96: #{transformer_forward.7} parent=5 // pred_fallthru
      _
    %p685 = scmp.le.s32.totalorder 1, %s30
    %p686 = scmp.lt.s32.totalorder %s30, 3
    %p687 = pnand %p685, %p686
    %p688 = pneg %p687
    // Predicated region
    $region113: #{transformer_forward.7} parent=5 // pred_check
      _
    $region114: #{transformer_forward.7} parent=5 // pred_check_branch
      %690 = sbr.rel (%p687) target = $region116
    $region115: #{transformer_forward.7} parent=5 // pred_region
      %s691 = ssub.s32 %s30, 1
      %p692 = scmp.lt.s32.totalorder %s35, 1
      %s693 = scalar_select %p692, %s35, 1
      %s694 = smul.addr %s693, 8
      %s695 = scalar_lea.vmem %s0, %s694
      %p696 = pneg %p56
      %p697 = pneg %p53
      %p698 = scmp.lt.s32.totalorder %s35, 1
      %s699 = scalar_select %p698, %s35, 1
      %s700 = smul.addr %s699, 8
      %s701 = scalar_lea.vmem %s1, %s700
      %p702 = pneg %p82
      %p703 = pneg %p79
      %p704 = scmp.lt.s32.totalorder %s35, 1
      %s705 = scalar_select %p704, %s35, 1
      %s706 = scalar_lea.vmem %s2, %s705
      %p707 = pneg %p108
      %p708 = pneg %p105
      %p709 = scmp.lt.s32.totalorder %s35, 1
      %s710 = scalar_select %p709, %s35, 1
      %s711 = scalar_lea.vmem %s3, %s710
      %p712 = pneg %p134
      %p713 = pneg %p131
      %p714 = pneg %p155
      %p715 = pneg %p152
      %p716 = pneg %p176
      %p717 = pneg %p173
      %p718 = pneg %p197
      %p719 = pneg %p194
      %p720 = pneg %p218
      %p721 = pneg %p215
      %p722 = pneg %p239
      %p723 = pneg %p236
      %p724 = pneg %p260
      %p725 = pneg %p257
      %p726 = pneg %p281
      %p727 = pneg %p278
      %p728 = pneg %p302
      %p729 = pneg %p299
      %p730 = pneg %p323
      %p731 = pneg %p320
      %p732 = pneg %p344
      %p733 = pneg %p341
      %p734 = pneg %p365
      %p735 = pneg %p362
      %p736 = pneg %p386
      %p737 = pneg %p383
      %p738 = pneg %p407
      %p739 = pneg %p404
      %p740 = pneg %p428
      %p741 = pneg %p425
      %p742 = pneg %p449
      %p743 = pneg %p446
      %p744 = pneg %p470
      %p745 = pneg %p467
      %p746 = pneg %p491
      %p747 = pneg %p488
      %p748 = pneg %p512
      %p749 = pneg %p509
      %p750 = pneg %p533
      %p751 = pneg %p530
      %p752 = pneg %p554
      %p753 = pneg %p551
      %p754 = pneg %p580
      %p755 = pneg %p577
      %p756 = scmp.lt.s32.totalorder %s35, 1
      %s757 = scalar_select %p756, %s35, 1
      %s758 = smul.addr %s757, 8
      %s759 = scalar_lea.vmem %s24, %s758
      %p760 = scmp.lt.s32.totalorder %s35, 1
      %s761 = scalar_select %p760, %s35, 1
      %s762 = smul.addr %s761, 8
      %s763 = scalar_lea.vmem %s0, %s762
      %p764 = scmp.lt.s32.totalorder %s35, 1
      %s765 = scalar_select %p764, %s35, 1
      %s766 = smul.addr %s765, 8
      %s767 = scalar_lea.vmem %s1, %s766
      %p768 = scmp.lt.s32.totalorder %s35, 1
      %s769 = scalar_select %p768, %s35, 1
      %s770 = scalar_lea.vmem %s2, %s769
      %p771 = scmp.lt.s32.totalorder %s35, 1
      %s772 = scalar_select %p771, %s35, 1
      %s773 = scalar_lea.vmem %s3, %s772
      %p774 = scmp.lt.s32.totalorder %s35, 1
      %s775 = scalar_select %p774, %s35, 1
      %s776 = smul.addr %s775, 8
      %s777 = scalar_lea.vmem %s24, %s776
      %v779 = vld [vmem:[%s763] sm:$0xff]
      %v780 = vld [vmem:[%s767] sm:$0xff]
      %v781 = vld [vmem:[%s770] sm:$0x1]
      %v782 = vld [vmem:[%s773] sm:$0x1]
      %v783 = vlaneseq
      %v784 = vshrl.u32 %v783, 7
      %v785 = vlaneseq
      %v786 = vand.u32 %v785, 127
      %vm787 = vcmp.le.s32.totalorder %v786, %v784
      %v788 = vsel %vm787, 0.0, -1e+09
      %v789 = vpack.c.bf16 %v779, %v779
      %v790 = vld [vmem:[%s4] sm:$0xf]
      %v791 = vld [vmem:[%s4 + $0x4] sm:$0xf]
      %v792 = vld [vmem:[%s4 + $0x8] sm:$0xf]
      %v793 = vld [vmem:[%s4 + $0xc] sm:$0xf]
      %v794 = vld [vmem:[%s5] sm:$0x1]
      %v796 = vperm.slane %v794, 0
      %v802 = vunpack.c.l.b16 %v790
      %v803 = vunpack.c.l.b16 %v791
      %v804 = vunpack.c.l.b16 %v792
      %v805 = vunpack.c.l.b16 %v793
      %v806 = vpack.c.b16 %v803, %v802
      %v807 = vpack.c.b16 %v805, %v804
      %vm810 = vcmask 261120
      %v812 = vsel %vm810, %v789, 0
      %814 = vmatpush.bf16.msra.mxu0 0
      %815 = vmatpush.bf16.msra.mxu0 0
      %816 = vmatpush.bf16.msra.mxu0 0
      %817 = vmatpush.bf16.msra.mxu0 0
      %818 = vmatpush.bf16.msra.mxu0 0
      %819 = vmatpush.bf16.msra.mxu0 0
      %820 = vmatpush.bf16.msra.mxu0 %v807
      %821 = vmatpush.bf16.msra.mxu0 %v806
      %822 = vmatmul.bf16.gmra.mxu0 %v812
      %v823 = vpop.f32.mrf.mxu0
      %v824 = vadd.f32 %v796, %v823
      %v825 = vpop.f32.mrf.mxu0
      %826 = vdwg.mxu0
      %v827 = vmul.f32 %v824, 0.35355338
      %v828 = vpack.c.bf16 %v827, %v827
      %v829 = vpack.c.bf16 %v824, %v824
      %v831 = vperm.slane %v781, 0
      %834 = vrot.lane.b32.xlu0 %v829, 96
      %v835 = vpop.permute.xlu0 %834
      %vm836 = vcmask 64512
      %v838 = vsel %vm836, %v828, 0
      %v841 = vsel %vm836, %v835, 0
      %843 = vmatpush.bf16.xpose.msra.mxu0 0
      %844 = vmatpush.bf16.xpose.msra.mxu0 0
      %845 = vmatpush.bf16.xpose.msra.mxu0 0
      %846 = vmatpush.bf16.xpose.msra.mxu0 0
      %847 = vmatpush.bf16.xpose.msra.mxu0 0
      %848 = vmatpush.bf16.xpose.msra.mxu0 0
      %849 = vmatpush.bf16.xpose.msra.mxu0 0
      %850 = vmatpush.bf16.xpose.msra.mxu0 %v841
      %851 = vmatmul.bf16.gmra.mxu0 %v838
      %v852 = vpop.f32.mrf.mxu0
      %v853 = vadd.f32 %v831, %v852
      %v854 = vpop.f32.mrf.mxu0
      %855 = vdwg.mxu0
      %v856 = vadd.f32 %v853, %v788
      %v857 = vsel %vm836, %v856, -inf
      %858 = vmax.xlane.f32.xlu0 %v857
      %v859 = vpop.xlane.xlu0 %858
      %v860 = vsub.f32 %v856, %v859
      %v861 = vmul.f32 %v860, 1.442695
      %v862 = vpow.pop %v861
      %v863 = vsel %vm836, %v862, 0.0
      %864 = vadd.xlane.f32.xlu0 %v863
      %v865 = vpop.xlane.xlu0 %864
      %v866 = vrcp.pop %v865
      %v867 = vmul.f32 %v862, %v866
      %v868 = vpack.c.bf16 %v867, %v867
      %869 = vrot.lane.b32.xlu0 %v829, 64
      %v870 = vpop.permute.xlu0 %869
      %v872 = vsel %vm836, %v868, 0
      %vm874 = vcmask 1043456
      %v876 = vsel %vm874, %v870, 0
      %878 = vmatpush.bf16.msra.mxu0 0
      %879 = vmatpush.bf16.msra.mxu0 0
      %880 = vmatpush.bf16.msra.mxu0 0
      %881 = vmatpush.bf16.msra.mxu0 0
      %882 = vmatpush.bf16.msra.mxu0 0
      %883 = vmatpush.bf16.msra.mxu0 0
      %884 = vmatpush.bf16.msra.mxu0 0
      %885 = vmatpush.bf16.msra.mxu0 %v876
      %886 = vmatmul.bf16.gmra.mxu0 %v872
      %v887 = vpop.f32.mrf.mxu0
      %v888 = vadd.f32 0.0, %v887
      %v889 = vpop.f32.mrf.mxu0
      %890 = vdwg.mxu0
      %v891 = vpack.c.bf16 %v888, %v888
      %v892 = vld [vmem:[%s6] sm:$0xf]
      %894 = vrot.lane.b32.xlu0 %v828, 120
      %v895 = vpop.permute.xlu0 %894
      %896 = vrot.lane.b32.xlu0 %v829, 88
      %v897 = vpop.permute.xlu0 %896
      %v899 = vsel %vm836, %v895, 0
      %v902 = vsel %vm836, %v897, 0
      %904 = vmatpush.bf16.xpose.msra.mxu0 0
      %905 = vmatpush.bf16.xpose.msra.mxu0 0
      %906 = vmatpush.bf16.xpose.msra.mxu0 0
      %907 = vmatpush.bf16.xpose.msra.mxu0 0
      %908 = vmatpush.bf16.xpose.msra.mxu0 0
      %909 = vmatpush.bf16.xpose.msra.mxu0 0
      %910 = vmatpush.bf16.xpose.msra.mxu0 0
      %911 = vmatpush.bf16.xpose.msra.mxu0 %v902
      %912 = vmatmul.bf16.gmra.mxu0 %v899
      %v913 = vpop.f32.mrf.mxu0
      %v914 = vadd.f32 %v831, %v913
      %v915 = vpop.f32.mrf.mxu0
      %916 = vdwg.mxu0
      %v917 = vadd.f32 %v914, %v788
      %v918 = vsel %vm836, %v917, -inf
      %919 = vmax.xlane.f32.xlu0 %v918
      %v920 = vpop.xlane.xlu0 %919
      %v921 = vsub.f32 %v917, %v920
      %v922 = vmul.f32 %v921, 1.442695
      %v923 = vpow.pop %v922
      %v924 = vsel %vm836, %v923, 0.0
      %925 = vadd.xlane.f32.xlu0 %v924
      %v926 = vpop.xlane.xlu0 %925
      %v927 = vrcp.pop %v926
      %v928 = vmul.f32 %v923, %v927
      %v929 = vpack.c.bf16 %v928, %v928
      %930 = vrot.lane.b32.xlu0 %v829, 56
      %v931 = vpop.permute.xlu0 %930
      %v933 = vsel %vm836, %v929, 0
      %v936 = vsel %vm874, %v931, 0
      %938 = vmatpush.bf16.msra.mxu0 0
      %939 = vmatpush.bf16.msra.mxu0 0
      %940 = vmatpush.bf16.msra.mxu0 0
      %941 = vmatpush.bf16.msra.mxu0 0
      %942 = vmatpush.bf16.msra.mxu0 0
      %943 = vmatpush.bf16.msra.mxu0 0
      %944 = vmatpush.bf16.msra.mxu0 0
      %945 = vmatpush.bf16.msra.mxu0 %v936
      %946 = vmatmul.bf16.gmra.mxu0 %v933
      %v947 = vpop.f32.mrf.mxu0
      %v948 = vadd.f32 0.0, %v947
      %v949 = vpop.f32.mrf.mxu0
      %950 = vdwg.mxu0
      %v951 = vpack.c.bf16 %v948, %v948
      %s952 = scalar_lea.vmem %s6, 4
      %v953 = vld [vmem:[%s952] sm:$0xf]
      %v955 = vsel %vm836, %v951, 0
      %v958 = vsel %vm874, %v953, 0
      %960 = vmatpush.bf16.msra.mxu0 0
      %961 = vmatpush.bf16.msra.mxu0 0
      %962 = vmatpush.bf16.msra.mxu0 0
      %963 = vmatpush.bf16.msra.mxu0 0
      %964 = vmatpush.bf16.msra.mxu0 0
      %965 = vmatpush.bf16.msra.mxu0 0
      %966 = vmatpush.bf16.msra.mxu0 0
      %967 = vmatpush.bf16.msra.mxu0 %v958
      %968 = vmatmul.bf16.gmra.mxu0 %v955
      %v969 = vpop.f32.mrf.mxu0
      %v970 = vadd.f32 0.0, %v969
      %v971 = vpop.f32.mrf.mxu0
      %972 = vdwg.mxu0
      %v974 = vsel %vm836, %v891, 0
      %v977 = vsel %vm874, %v892, 0
      %979 = vmatpush.bf16.msra.mxu0 0
      %980 = vmatpush.bf16.msra.mxu0 0
      %981 = vmatpush.bf16.msra.mxu0 0
      %982 = vmatpush.bf16.msra.mxu0 0
      %983 = vmatpush.bf16.msra.mxu0 0
      %984 = vmatpush.bf16.msra.mxu0 0
      %985 = vmatpush.bf16.msra.mxu0 0
      %986 = vmatpush.bf16.msra.mxu0 %v977
      %987 = vmatmul.bf16.gmra.mxu0 %v974
      %v988 = vpop.f32.mrf.mxu0
      %v989 = vadd.f32 %v970, %v988
      %v990 = vpop.f32.mrf.mxu0
      %991 = vdwg.mxu0
      %992 = vrot.lane.b32.xlu0 %v828, 112
      %v993 = vpop.permute.xlu0 %992
      %994 = vrot.lane.b32.xlu0 %v829, 80
      %v995 = vpop.permute.xlu0 %994
      %v997 = vsel %vm836, %v993, 0
      %v1000 = vsel %vm836, %v995, 0
      %1002 = vmatpush.bf16.xpose.msra.mxu0 0
      %1003 = vmatpush.bf16.xpose.msra.mxu0 0
      %1004 = vmatpush.bf16.xpose.msra.mxu0 0
      %1005 = vmatpush.bf16.xpose.msra.mxu0 0
      %1006 = vmatpush.bf16.xpose.msra.mxu0 0
      %1007 = vmatpush.bf16.xpose.msra.mxu0 0
      %1008 = vmatpush.bf16.xpose.msra.mxu0 0
      %1009 = vmatpush.bf16.xpose.msra.mxu0 %v1000
      %1010 = vmatmul.bf16.gmra.mxu0 %v997
      %v1011 = vpop.f32.mrf.mxu0
      %v1012 = vadd.f32 %v831, %v1011
      %v1013 = vpop.f32.mrf.mxu0
      %1014 = vdwg.mxu0
      %v1015 = vadd.f32 %v1012, %v788
      %v1016 = vsel %vm836, %v1015, -inf
      %1017 = vmax.xlane.f32.xlu0 %v1016
      %v1018 = vpop.xlane.xlu0 %1017
      %v1019 = vsub.f32 %v1015, %v1018
      %v1020 = vmul.f32 %v1019, 1.442695
      %v1021 = vpow.pop %v1020
      %v1022 = vsel %vm836, %v1021, 0.0
      %1023 = vadd.xlane.f32.xlu0 %v1022
      %v1024 = vpop.xlane.xlu0 %1023
      %v1025 = vrcp.pop %v1024
      %v1026 = vmul.f32 %v1021, %v1025
      %v1027 = vpack.c.bf16 %v1026, %v1026
      %1028 = vrot.lane.b32.xlu0 %v829, 48
      %v1029 = vpop.permute.xlu0 %1028
      %v1031 = vsel %vm836, %v1027, 0
      %v1034 = vsel %vm874, %v1029, 0
      %1036 = vmatpush.bf16.msra.mxu0 0
      %1037 = vmatpush.bf16.msra.mxu0 0
      %1038 = vmatpush.bf16.msra.mxu0 0
      %1039 = vmatpush.bf16.msra.mxu0 0
      %1040 = vmatpush.bf16.msra.mxu0 0
      %1041 = vmatpush.bf16.msra.mxu0 0
      %1042 = vmatpush.bf16.msra.mxu0 0
      %1043 = vmatpush.bf16.msra.mxu0 %v1034
      %1044 = vmatmul.bf16.gmra.mxu0 %v1031
      %v1045 = vpop.f32.mrf.mxu0
      %v1046 = vadd.f32 0.0, %v1045
      %v1047 = vpop.f32.mrf.mxu0
      %1048 = vdwg.mxu0
      %v1049 = vpack.c.bf16 %v1046, %v1046
      %s1050 = scalar_lea.vmem %s6, 8
      %v1051 = vld [vmem:[%s1050] sm:$0xf]
      %v1053 = vsel %vm836, %v1049, 0
      %v1056 = vsel %vm874, %v1051, 0
      %1058 = vmatpush.bf16.msra.mxu0 0
      %1059 = vmatpush.bf16.msra.mxu0 0
      %1060 = vmatpush.bf16.msra.mxu0 0
      %1061 = vmatpush.bf16.msra.mxu0 0
      %1062 = vmatpush.bf16.msra.mxu0 0
      %1063 = vmatpush.bf16.msra.mxu0 0
      %1064 = vmatpush.bf16.msra.mxu0 0
      %1065 = vmatpush.bf16.msra.mxu0 %v1056
      %1066 = vmatmul.bf16.gmra.mxu0 %v1053
      %v1067 = vpop.f32.mrf.mxu0
      %v1068 = vadd.f32 0.0, %v1067
      %v1069 = vpop.f32.mrf.mxu0
      %1070 = vdwg.mxu0
      %v1071 = vadd.f32 %v989, %v1068
      %1072 = vrot.lane.b32.xlu0 %v828, 104
      %v1073 = vpop.permute.xlu0 %1072
      %1074 = vrot.lane.b32.xlu0 %v829, 72
      %v1075 = vpop.permute.xlu0 %1074
      %v1077 = vsel %vm836, %v1073, 0
      %v1080 = vsel %vm836, %v1075, 0
      %1082 = vmatpush.bf16.xpose.msra.mxu0 0
      %1083 = vmatpush.bf16.xpose.msra.mxu0 0
      %1084 = vmatpush.bf16.xpose.msra.mxu0 0
      %1085 = vmatpush.bf16.xpose.msra.mxu0 0
      %1086 = vmatpush.bf16.xpose.msra.mxu0 0
      %1087 = vmatpush.bf16.xpose.msra.mxu0 0
      %1088 = vmatpush.bf16.xpose.msra.mxu0 0
      %1089 = vmatpush.bf16.xpose.msra.mxu0 %v1080
      %1090 = vmatmul.bf16.gmra.mxu0 %v1077
      %v1091 = vpop.f32.mrf.mxu0
      %v1092 = vadd.f32 %v831, %v1091
      %v1093 = vpop.f32.mrf.mxu0
      %1094 = vdwg.mxu0
      %v1095 = vadd.f32 %v1092, %v788
      %v1096 = vsel %vm836, %v1095, -inf
      %1097 = vmax.xlane.f32.xlu0 %v1096
      %v1098 = vpop.xlane.xlu0 %1097
      %v1099 = vsub.f32 %v1095, %v1098
      %v1100 = vmul.f32 %v1099, 1.442695
      %v1101 = vpow.pop %v1100
      %v1102 = vsel %vm836, %v1101, 0.0
      %1103 = vadd.xlane.f32.xlu0 %v1102
      %v1104 = vpop.xlane.xlu0 %1103
      %v1105 = vrcp.pop %v1104
      %v1106 = vmul.f32 %v1101, %v1105
      %v1107 = vpack.c.bf16 %v1106, %v1106
      %1108 = vrot.lane.b32.xlu0 %v829, 40
      %v1109 = vpop.permute.xlu0 %1108
      %v1111 = vsel %vm836, %v1107, 0
      %v1114 = vsel %vm874, %v1109, 0
      %1116 = vmatpush.bf16.msra.mxu0 0
      %1117 = vmatpush.bf16.msra.mxu0 0
      %1118 = vmatpush.bf16.msra.mxu0 0
      %1119 = vmatpush.bf16.msra.mxu0 0
      %1120 = vmatpush.bf16.msra.mxu0 0
      %1121 = vmatpush.bf16.msra.mxu0 0
      %1122 = vmatpush.bf16.msra.mxu0 0
      %1123 = vmatpush.bf16.msra.mxu0 %v1114
      %1124 = vmatmul.bf16.gmra.mxu0 %v1111
      %v1125 = vpop.f32.mrf.mxu0
      %v1126 = vadd.f32 0.0, %v1125
      %v1127 = vpop.f32.mrf.mxu0
      %1128 = vdwg.mxu0
      %v1129 = vpack.c.bf16 %v1126, %v1126
      %s1130 = scalar_lea.vmem %s6, 12
      %v1131 = vld [vmem:[%s1130] sm:$0xf]
      %v1133 = vsel %vm836, %v1129, 0
      %v1136 = vsel %vm874, %v1131, 0
      %1138 = vmatpush.bf16.msra.mxu0 0
      %1139 = vmatpush.bf16.msra.mxu0 0
      %1140 = vmatpush.bf16.msra.mxu0 0
      %1141 = vmatpush.bf16.msra.mxu0 0
      %1142 = vmatpush.bf16.msra.mxu0 0
      %1143 = vmatpush.bf16.msra.mxu0 0
      %1144 = vmatpush.bf16.msra.mxu0 0
      %1145 = vmatpush.bf16.msra.mxu0 %v1136
      %1146 = vmatmul.bf16.gmra.mxu0 %v1133
      %v1147 = vpop.f32.mrf.mxu0
      %v1148 = vadd.f32 0.0, %v1147
      %v1149 = vpop.f32.mrf.mxu0
      %1150 = vdwg.mxu0
      %v1151 = vadd.f32 %v1071, %v1148
      %v1152 = vld [vmem:[%s7] sm:$0x1]
      %v1154 = vperm.slane %v1152, 0
      %v1156 = vadd.f32 %v1151, %v1154
      %v1157 = vadd.f32 %v779, %v1156
      %v1158 = vld [vmem:[%s8] sm:$0x1]
      %v1159 = vld [vmem:[%s9] sm:$0x1]
      %v1160 = vsel %vm810, %v1157, 0.0
      %1161 = vadd.xlane.f32.xlu0 %v1160
      %v1162 = vpop.xlane.xlu0 %1161
      %v1163 = vrcp.pop 32.0
      %v1164 = vmul.f32 32.0, %v1163
      %v1165 = vsub.f32 1.0, %v1164
      %v1166 = vmul.f32 %v1163, %v1165
      %v1167 = vadd.f32 %v1163, %v1166
      %vm1168 = vweird.f32 %v1163
      %v1169 = vsel %vm1168, %v1163, %v1167
      %v1170 = vmul.f32 %v1162, %v1169
      %v1171 = vsub.f32 %v1157, %v1170
      %v1172 = vmul.f32 %v1171, %v1171
      %v1173 = vsel %vm810, %v1172, 0.0
      %1174 = vadd.xlane.f32.xlu0 %v1173
      %v1175 = vpop.xlane.xlu0 %1174
      %v1176 = vmul.f32 %v1175, %v1169
      %v1177 = vadd.f32 %v1176, 1e-05
      %v1178 = vrsqrt.pop %v1177
      %v1179 = vmul.f32 %v1178, %v1177
      %v1180 = vmul.f32 %v1179, %v1178
      %v1181 = vmul.f32 0.5, %v1180
      %v1182 = vsub.f32 1.5, %v1181
      %v1183 = vmul.f32 %v1178, %v1182
      %vm1184 = vweird.f32 %v1177
      %vm1185 = vweird.f32 %v1178
      %vm1186 = vmor %vm1184, %vm1185
      %v1187 = vsel %vm1186, %v1178, %v1183
      %v1188 = vmul.f32 %v1171, %v1187
      %v1190 = vperm.slane %v1158, 0
      %v1192 = vmul.f32 %v1188, %v1190
      %v1194 = vperm.slane %v1159, 0
      %v1196 = vadd.f32 %v1192, %v1194
      %v1197 = vpack.c.bf16 %v1196, %v1196
      %v1198 = vld [vmem:[%s10] sm:$0xf]
      %v1199 = vld [vmem:[%s10 + $0x4] sm:$0xf]
      %v1200 = vld [vmem:[%s10 + $0x8] sm:$0xf]
      %v1201 = vld [vmem:[%s10 + $0xc] sm:$0xf]
      %v1202 = vld [vmem:[%s11] sm:$0x1]
      %v1204 = vperm.slane %v1202, 0
      %v1210 = vunpack.c.l.b16 %v1198
      %v1211 = vunpack.c.l.b16 %v1199
      %v1212 = vunpack.c.l.b16 %v1200
      %v1213 = vunpack.c.l.b16 %v1201
      %v1214 = vpack.c.b16 %v1211, %v1210
      %v1215 = vpack.c.b16 %v1213, %v1212
      %v1219 = vsel %vm810, %v1197, 0
      %1221 = vmatpush.bf16.msra.mxu0 0
      %1222 = vmatpush.bf16.msra.mxu0 0
      %1223 = vmatpush.bf16.msra.mxu0 0
      %1224 = vmatpush.bf16.msra.mxu0 0
      %1225 = vmatpush.bf16.msra.mxu0 0
      %1226 = vmatpush.bf16.msra.mxu0 0
      %1227 = vmatpush.bf16.msra.mxu0 %v1215
      %1228 = vmatpush.bf16.msra.mxu0 %v1214
      %1229 = vmatmul.bf16.gmra.mxu0 %v1219
      %v1230 = vpop.f32.mrf.mxu0
      %v1231 = vadd.f32 %v1204, %v1230
      %v1232 = vpop.f32.mrf.mxu0
      %1233 = vdwg.mxu0
      %v1234 = vpack.c.bf16 %v780, %v780
      %v1235 = vld [vmem:[%s12] sm:$0xf]
      %v1236 = vld [vmem:[%s12 + $0x4] sm:$0xf]
      %v1237 = vld [vmem:[%s12 + $0x8] sm:$0xf]
      %v1238 = vld [vmem:[%s12 + $0xc] sm:$0xf]
      %v1239 = vld [vmem:[%s13] sm:$0x1]
      %v1241 = vperm.slane %v1239, 0
      %v1247 = vunpack.c.l.b16 %v1235
      %v1248 = vunpack.c.l.b16 %v1236
      %v1249 = vunpack.c.l.b16 %v1237
      %v1250 = vunpack.c.l.b16 %v1238
      %v1251 = vpack.c.b16 %v1248, %v1247
      %v1252 = vpack.c.b16 %v1250, %v1249
      %v1256 = vsel %vm810, %v1234, 0
      %1258 = vmatpush.bf16.msra.mxu0 0
      %1259 = vmatpush.bf16.msra.mxu0 0
      %1260 = vmatpush.bf16.msra.mxu0 0
      %1261 = vmatpush.bf16.msra.mxu0 0
      %1262 = vmatpush.bf16.msra.mxu0 0
      %1263 = vmatpush.bf16.msra.mxu0 0
      %1264 = vmatpush.bf16.msra.mxu0 %v1252
      %1265 = vmatpush.bf16.msra.mxu0 %v1251
      %1266 = vmatmul.bf16.gmra.mxu0 %v1256
      %v1267 = vpop.f32.mrf.mxu0
      %v1268 = vadd.f32 %v1241, %v1267
      %v1269 = vpop.f32.mrf.mxu0
      %1270 = vdwg.mxu0
      %v1271 = vmul.f32 %v1231, 0.35355338
      %v1272 = vpack.c.bf16 %v1271, %v1271
      %v1273 = vpack.c.bf16 %v1268, %v1268
      %v1275 = vperm.slane %v782, 0
      %v1278 = vsel %vm836, %v1272, 0
      %v1281 = vsel %vm836, %v1273, 0
      %1283 = vmatpush.bf16.xpose.msra.mxu0 0
      %1284 = vmatpush.bf16.xpose.msra.mxu0 0
      %1285 = vmatpush.bf16.xpose.msra.mxu0 0
      %1286 = vmatpush.bf16.xpose.msra.mxu0 0
      %1287 = vmatpush.bf16.xpose.msra.mxu0 0
      %1288 = vmatpush.bf16.xpose.msra.mxu0 0
      %1289 = vmatpush.bf16.xpose.msra.mxu0 0
      %1290 = vmatpush.bf16.xpose.msra.mxu0 %v1281
      %1291 = vmatmul.bf16.gmra.mxu0 %v1278
      %v1292 = vpop.f32.mrf.mxu0
      %v1293 = vadd.f32 %v1275, %v1292
      %v1294 = vpop.f32.mrf.mxu0
      %1295 = vdwg.mxu0
      %v1296 = vsel %vm836, %v1293, -inf
      %1297 = vmax.xlane.f32.xlu0 %v1296
      %v1298 = vpop.xlane.xlu0 %1297
      %v1299 = vsub.f32 %v1293, %v1298
      %v1300 = vmul.f32 %v1299, 1.442695
      %v1301 = vpow.pop %v1300
      %v1302 = vsel %vm836, %v1301, 0.0
      %1303 = vadd.xlane.f32.xlu0 %v1302
      %v1304 = vpop.xlane.xlu0 %1303
      %v1305 = vrcp.pop %v1304
      %v1306 = vmul.f32 %v1301, %v1305
      %v1307 = vpack.c.bf16 %v1306, %v1306
      %1309 = vrot.lane.b32.xlu0 %v1273, 96
      %v1310 = vpop.permute.xlu0 %1309
      %v1312 = vsel %vm836, %v1307, 0
      %v1315 = vsel %vm874, %v1310, 0
      %1317 = vmatpush.bf16.msra.mxu0 0
      %1318 = vmatpush.bf16.msra.mxu0 0
      %1319 = vmatpush.bf16.msra.mxu0 0
      %1320 = vmatpush.bf16.msra.mxu0 0
      %1321 = vmatpush.bf16.msra.mxu0 0
      %1322 = vmatpush.bf16.msra.mxu0 0
      %1323 = vmatpush.bf16.msra.mxu0 0
      %1324 = vmatpush.bf16.msra.mxu0 %v1315
      %1325 = vmatmul.bf16.gmra.mxu0 %v1312
      %v1326 = vpop.f32.mrf.mxu0
      %v1327 = vadd.f32 0.0, %v1326
      %v1328 = vpop.f32.mrf.mxu0
      %1329 = vdwg.mxu0
      %v1330 = vpack.c.bf16 %v1327, %v1327
      %v1331 = vld [vmem:[%s14] sm:$0xf]
      %1333 = vrot.lane.b32.xlu0 %v1272, 120
      %v1334 = vpop.permute.xlu0 %1333
      %1335 = vrot.lane.b32.xlu0 %v1273, 120
      %v1336 = vpop.permute.xlu0 %1335
      %v1338 = vsel %vm836, %v1334, 0
      %v1341 = vsel %vm836, %v1336, 0
      %1343 = vmatpush.bf16.xpose.msra.mxu0 0
      %1344 = vmatpush.bf16.xpose.msra.mxu0 0
      %1345 = vmatpush.bf16.xpose.msra.mxu0 0
      %1346 = vmatpush.bf16.xpose.msra.mxu0 0
      %1347 = vmatpush.bf16.xpose.msra.mxu0 0
      %1348 = vmatpush.bf16.xpose.msra.mxu0 0
      %1349 = vmatpush.bf16.xpose.msra.mxu0 0
      %1350 = vmatpush.bf16.xpose.msra.mxu0 %v1341
      %1351 = vmatmul.bf16.gmra.mxu0 %v1338
      %v1352 = vpop.f32.mrf.mxu0
      %v1353 = vadd.f32 %v1275, %v1352
      %v1354 = vpop.f32.mrf.mxu0
      %1355 = vdwg.mxu0
      %v1356 = vsel %vm836, %v1353, -inf
      %1357 = vmax.xlane.f32.xlu0 %v1356
      %v1358 = vpop.xlane.xlu0 %1357
      %v1359 = vsub.f32 %v1353, %v1358
      %v1360 = vmul.f32 %v1359, 1.442695
      %v1361 = vpow.pop %v1360
      %v1362 = vsel %vm836, %v1361, 0.0
      %1363 = vadd.xlane.f32.xlu0 %v1362
      %v1364 = vpop.xlane.xlu0 %1363
      %v1365 = vrcp.pop %v1364
      %v1366 = vmul.f32 %v1361, %v1365
      %v1367 = vpack.c.bf16 %v1366, %v1366
      %1368 = vrot.lane.b32.xlu0 %v1273, 88
      %v1369 = vpop.permute.xlu0 %1368
      %v1371 = vsel %vm836, %v1367, 0
      %v1374 = vsel %vm874, %v1369, 0
      %1376 = vmatpush.bf16.msra.mxu0 0
      %1377 = vmatpush.bf16.msra.mxu0 0
      %1378 = vmatpush.bf16.msra.mxu0 0
      %1379 = vmatpush.bf16.msra.mxu0 0
      %1380 = vmatpush.bf16.msra.mxu0 0
      %1381 = vmatpush.bf16.msra.mxu0 0
      %1382 = vmatpush.bf16.msra.mxu0 0
      %1383 = vmatpush.bf16.msra.mxu0 %v1374
      %1384 = vmatmul.bf16.gmra.mxu0 %v1371
      %v1385 = vpop.f32.mrf.mxu0
      %v1386 = vadd.f32 0.0, %v1385
      %v1387 = vpop.f32.mrf.mxu0
      %1388 = vdwg.mxu0
      %v1389 = vpack.c.bf16 %v1386, %v1386
      %s1390 = scalar_lea.vmem %s14, 4
      %v1391 = vld [vmem:[%s1390] sm:$0xf]
      %v1393 = vsel %vm836, %v1389, 0
      %v1396 = vsel %vm874, %v1391, 0
      %1398 = vmatpush.bf16.msra.mxu0 0
      %1399 = vmatpush.bf16.msra.mxu0 0
      %1400 = vmatpush.bf16.msra.mxu0 0
      %1401 = vmatpush.bf16.msra.mxu0 0
      %1402 = vmatpush.bf16.msra.mxu0 0
      %1403 = vmatpush.bf16.msra.mxu0 0
      %1404 = vmatpush.bf16.msra.mxu0 0
      %1405 = vmatpush.bf16.msra.mxu0 %v1396
      %1406 = vmatmul.bf16.gmra.mxu0 %v1393
      %v1407 = vpop.f32.mrf.mxu0
      %v1408 = vadd.f32 0.0, %v1407
      %v1409 = vpop.f32.mrf.mxu0
      %1410 = vdwg.mxu0
      %v1412 = vsel %vm836, %v1330, 0
      %v1415 = vsel %vm874, %v1331, 0
      %1417 = vmatpush.bf16.msra.mxu0 0
      %1418 = vmatpush.bf16.msra.mxu0 0
      %1419 = vmatpush.bf16.msra.mxu0 0
      %1420 = vmatpush.bf16.msra.mxu0 0
      %1421 = vmatpush.bf16.msra.mxu0 0
      %1422 = vmatpush.bf16.msra.mxu0 0
      %1423 = vmatpush.bf16.msra.mxu0 0
      %1424 = vmatpush.bf16.msra.mxu0 %v1415
      %1425 = vmatmul.bf16.gmra.mxu0 %v1412
      %v1426 = vpop.f32.mrf.mxu0
      %v1427 = vadd.f32 %v1408, %v1426
      %v1428 = vpop.f32.mrf.mxu0
      %1429 = vdwg.mxu0
      %1430 = vrot.lane.b32.xlu0 %v1272, 112
      %v1431 = vpop.permute.xlu0 %1430
      %1432 = vrot.lane.b32.xlu0 %v1273, 112
      %v1433 = vpop.permute.xlu0 %1432
      %v1435 = vsel %vm836, %v1431, 0
      %v1438 = vsel %vm836, %v1433, 0
      %1440 = vmatpush.bf16.xpose.msra.mxu0 0
      %1441 = vmatpush.bf16.xpose.msra.mxu0 0
      %1442 = vmatpush.bf16.xpose.msra.mxu0 0
      %1443 = vmatpush.bf16.xpose.msra.mxu0 0
      %1444 = vmatpush.bf16.xpose.msra.mxu0 0
      %1445 = vmatpush.bf16.xpose.msra.mxu0 0
      %1446 = vmatpush.bf16.xpose.msra.mxu0 0
      %1447 = vmatpush.bf16.xpose.msra.mxu0 %v1438
      %1448 = vmatmul.bf16.gmra.mxu0 %v1435
      %v1449 = vpop.f32.mrf.mxu0
      %v1450 = vadd.f32 %v1275, %v1449
      %v1451 = vpop.f32.mrf.mxu0
      %1452 = vdwg.mxu0
      %v1453 = vsel %vm836, %v1450, -inf
      %1454 = vmax.xlane.f32.xlu0 %v1453
      %v1455 = vpop.xlane.xlu0 %1454
      %v1456 = vsub.f32 %v1450, %v1455
      %v1457 = vmul.f32 %v1456, 1.442695
      %v1458 = vpow.pop %v1457
      %v1459 = vsel %vm836, %v1458, 0.0
      %1460 = vadd.xlane.f32.xlu0 %v1459
      %v1461 = vpop.xlane.xlu0 %1460
      %v1462 = vrcp.pop %v1461
      %v1463 = vmul.f32 %v1458, %v1462
      %v1464 = vpack.c.bf16 %v1463, %v1463
      %1465 = vrot.lane.b32.xlu0 %v1273, 80
      %v1466 = vpop.permute.xlu0 %1465
      %v1468 = vsel %vm836, %v1464, 0
      %v1471 = vsel %vm874, %v1466, 0
      %1473 = vmatpush.bf16.msra.mxu0 0
      %1474 = vmatpush.bf16.msra.mxu0 0
      %1475 = vmatpush.bf16.msra.mxu0 0
      %1476 = vmatpush.bf16.msra.mxu0 0
      %1477 = vmatpush.bf16.msra.mxu0 0
      %1478 = vmatpush.bf16.msra.mxu0 0
      %1479 = vmatpush.bf16.msra.mxu0 0
      %1480 = vmatpush.bf16.msra.mxu0 %v1471
      %1481 = vmatmul.bf16.gmra.mxu0 %v1468
      %v1482 = vpop.f32.mrf.mxu0
      %v1483 = vadd.f32 0.0, %v1482
      %v1484 = vpop.f32.mrf.mxu0
      %1485 = vdwg.mxu0
      %v1486 = vpack.c.bf16 %v1483, %v1483
      %s1487 = scalar_lea.vmem %s14, 8
      %v1488 = vld [vmem:[%s1487] sm:$0xf]
      %v1490 = vsel %vm836, %v1486, 0
      %v1493 = vsel %vm874, %v1488, 0
      %1495 = vmatpush.bf16.msra.mxu0 0
      %1496 = vmatpush.bf16.msra.mxu0 0
      %1497 = vmatpush.bf16.msra.mxu0 0
      %1498 = vmatpush.bf16.msra.mxu0 0
      %1499 = vmatpush.bf16.msra.mxu0 0
      %1500 = vmatpush.bf16.msra.mxu0 0
      %1501 = vmatpush.bf16.msra.mxu0 0
      %1502 = vmatpush.bf16.msra.mxu0 %v1493
      %1503 = vmatmul.bf16.gmra.mxu0 %v1490
      %v1504 = vpop.f32.mrf.mxu0
      %v1505 = vadd.f32 0.0, %v1504
      %v1506 = vpop.f32.mrf.mxu0
      %1507 = vdwg.mxu0
      %v1508 = vadd.f32 %v1427, %v1505
      %1509 = vrot.lane.b32.xlu0 %v1272, 104
      %v1510 = vpop.permute.xlu0 %1509
      %1511 = vrot.lane.b32.xlu0 %v1273, 104
      %v1512 = vpop.permute.xlu0 %1511
      %v1514 = vsel %vm836, %v1510, 0
      %v1517 = vsel %vm836, %v1512, 0
      %1519 = vmatpush.bf16.xpose.msra.mxu0 0
      %1520 = vmatpush.bf16.xpose.msra.mxu0 0
      %1521 = vmatpush.bf16.xpose.msra.mxu0 0
      %1522 = vmatpush.bf16.xpose.msra.mxu0 0
      %1523 = vmatpush.bf16.xpose.msra.mxu0 0
      %1524 = vmatpush.bf16.xpose.msra.mxu0 0
      %1525 = vmatpush.bf16.xpose.msra.mxu0 0
      %1526 = vmatpush.bf16.xpose.msra.mxu0 %v1517
      %1527 = vmatmul.bf16.gmra.mxu0 %v1514
      %v1528 = vpop.f32.mrf.mxu0
      %v1529 = vadd.f32 %v1275, %v1528
      %v1530 = vpop.f32.mrf.mxu0
      %1531 = vdwg.mxu0
      %v1532 = vsel %vm836, %v1529, -inf
      %1533 = vmax.xlane.f32.xlu0 %v1532
      %v1534 = vpop.xlane.xlu0 %1533
      %v1535 = vsub.f32 %v1529, %v1534
      %v1536 = vmul.f32 %v1535, 1.442695
      %v1537 = vpow.pop %v1536
      %v1538 = vsel %vm836, %v1537, 0.0
      %1539 = vadd.xlane.f32.xlu0 %v1538
      %v1540 = vpop.xlane.xlu0 %1539
      %v1541 = vrcp.pop %v1540
      %v1542 = vmul.f32 %v1537, %v1541
      %v1543 = vpack.c.bf16 %v1542, %v1542
      %1544 = vrot.lane.b32.xlu0 %v1273, 72
      %v1545 = vpop.permute.xlu0 %1544
      %v1547 = vsel %vm836, %v1543, 0
      %v1550 = vsel %vm874, %v1545, 0
      %1552 = vmatpush.bf16.msra.mxu0 0
      %1553 = vmatpush.bf16.msra.mxu0 0
      %1554 = vmatpush.bf16.msra.mxu0 0
      %1555 = vmatpush.bf16.msra.mxu0 0
      %1556 = vmatpush.bf16.msra.mxu0 0
      %1557 = vmatpush.bf16.msra.mxu0 0
      %1558 = vmatpush.bf16.msra.mxu0 0
      %1559 = vmatpush.bf16.msra.mxu0 %v1550
      %1560 = vmatmul.bf16.gmra.mxu0 %v1547
      %v1561 = vpop.f32.mrf.mxu0
      %v1562 = vadd.f32 0.0, %v1561
      %v1563 = vpop.f32.mrf.mxu0
      %1564 = vdwg.mxu0
      %v1565 = vpack.c.bf16 %v1562, %v1562
      %s1566 = scalar_lea.vmem %s14, 12
      %v1567 = vld [vmem:[%s1566] sm:$0xf]
      %v1569 = vsel %vm836, %v1565, 0
      %v1572 = vsel %vm874, %v1567, 0
      %1574 = vmatpush.bf16.msra.mxu0 0
      %1575 = vmatpush.bf16.msra.mxu0 0
      %1576 = vmatpush.bf16.msra.mxu0 0
      %1577 = vmatpush.bf16.msra.mxu0 0
      %1578 = vmatpush.bf16.msra.mxu0 0
      %1579 = vmatpush.bf16.msra.mxu0 0
      %1580 = vmatpush.bf16.msra.mxu0 0
      %1581 = vmatpush.bf16.msra.mxu0 %v1572
      %1582 = vmatmul.bf16.gmra.mxu0 %v1569
      %v1583 = vpop.f32.mrf.mxu0
      %v1584 = vadd.f32 0.0, %v1583
      %v1585 = vpop.f32.mrf.mxu0
      %1586 = vdwg.mxu0
      %v1587 = vadd.f32 %v1508, %v1584
      %v1588 = vld [vmem:[%s15] sm:$0x1]
      %v1590 = vperm.slane %v1588, 0
      %v1592 = vadd.f32 %v1587, %v1590
      %v1593 = vadd.f32 %v1196, %v1592
      %v1594 = vld [vmem:[%s16] sm:$0x1]
      %v1595 = vld [vmem:[%s17] sm:$0x1]
      %v1596 = vsel %vm810, %v1593, 0.0
      %1597 = vadd.xlane.f32.xlu0 %v1596
      %v1598 = vpop.xlane.xlu0 %1597
      %v1599 = vmul.f32 %v1598, %v1169
      %v1600 = vsub.f32 %v1593, %v1599
      %v1601 = vmul.f32 %v1600, %v1600
      %v1602 = vsel %vm810, %v1601, 0.0
      %1603 = vadd.xlane.f32.xlu0 %v1602
      %v1604 = vpop.xlane.xlu0 %1603
      %v1605 = vmul.f32 %v1604, %v1169
      %v1606 = vadd.f32 %v1605, 1e-05
      %v1607 = vrsqrt.pop %v1606
      %v1608 = vmul.f32 %v1607, %v1606
      %v1609 = vmul.f32 %v1608, %v1607
      %v1610 = vmul.f32 0.5, %v1609
      %v1611 = vsub.f32 1.5, %v1610
      %v1612 = vmul.f32 %v1607, %v1611
      %vm1613 = vweird.f32 %v1606
      %vm1614 = vweird.f32 %v1607
      %vm1615 = vmor %vm1613, %vm1614
      %v1616 = vsel %vm1615, %v1607, %v1612
      %v1617 = vmul.f32 %v1600, %v1616
      %v1619 = vperm.slane %v1594, 0
      %v1621 = vmul.f32 %v1617, %v1619
      %v1623 = vperm.slane %v1595, 0
      %v1625 = vadd.f32 %v1621, %v1623
      %v1626 = vld [vmem:[%s18] sm:$0xf]
      %v1627 = vld [vmem:[%s18 + $0x4] sm:$0xf]
      %v1628 = vld [vmem:[%s18 + $0x8] sm:$0xf]
      %v1629 = vld [vmem:[%s18 + $0xc] sm:$0xf]
      %v1630 = vld [vmem:[%s19] sm:$0x1]
      %v1631 = vld [vmem:[%s20] sm:$0xf]
      %v1632 = vld [vmem:[%s20 + $0x4] sm:$0xf]
      %v1633 = vld [vmem:[%s20 + $0x8] sm:$0xf]
      %v1634 = vld [vmem:[%s20 + $0xc] sm:$0xf]
      %v1635 = vld [vmem:[%s20 + $0x10] sm:$0xf]
      %v1636 = vld [vmem:[%s20 + $0x14] sm:$0xf]
      %v1637 = vld [vmem:[%s20 + $0x18] sm:$0xf]
      %v1638 = vld [vmem:[%s20 + $0x1c] sm:$0xf]
      %v1639 = vld [vmem:[%s20 + $0x20] sm:$0xf]
      %v1640 = vld [vmem:[%s20 + $0x24] sm:$0xf]
      %v1641 = vld [vmem:[%s20 + $0x28] sm:$0xf]
      %v1642 = vld [vmem:[%s20 + $0x2c] sm:$0xf]
      %v1643 = vld [vmem:[%s20 + $0x30] sm:$0xf]
      %v1644 = vld [vmem:[%s20 + $0x34] sm:$0xf]
      %v1645 = vld [vmem:[%s20 + $0x38] sm:$0xf]
      %v1646 = vld [vmem:[%s20 + $0x3c] sm:$0xf]
      %v1647 = vld [vmem:[%s21] sm:$0x1]
      %v1648 = vpack.c.bf16 %v1625, %v1625
      %v1650 = vperm.slane %v1630, 0
      %v1656 = vunpack.c.l.b16 %v1626
      %v1657 = vunpack.c.l.b16 %v1627
      %v1658 = vunpack.c.l.b16 %v1628
      %v1659 = vunpack.c.l.b16 %v1629
      %v1660 = vpack.c.b16 %v1657, %v1656
      %v1661 = vpack.c.b16 %v1659, %v1658
      %v1665 = vsel %vm810, %v1648, 0
      %1667 = vmatpush.bf16.msra.mxu0 0
      %1668 = vmatpush.bf16.msra.mxu0 0
      %1669 = vmatpush.bf16.msra.mxu0 0
      %1670 = vmatpush.bf16.msra.mxu0 0
      %1671 = vmatpush.bf16.msra.mxu0 0
      %1672 = vmatpush.bf16.msra.mxu0 0
      %1673 = vmatpush.bf16.msra.mxu0 %v1661
      %1674 = vmatpush.bf16.msra.mxu0 %v1660
      %1675 = vmatmul.bf16.gmra.mxu0 %v1665
      %v1676 = vpop.f32.mrf.mxu0
      %v1677 = vadd.f32 %v1650, %v1676
      %v1678 = vpop.f32.mrf.mxu0
      %1679 = vdwg.mxu0
      %v1680 = vmax.f32 %v1677, 0.0
      %v1681 = vpack.c.bf16 %v1680, %v1680
      %v1683 = vperm.slane %v1647, 0
      %v1701 = vunpack.c.l.b16 %v1631
      %v1702 = vunpack.c.l.b16 %v1632
      %v1703 = vunpack.c.l.b16 %v1633
      %v1704 = vunpack.c.l.b16 %v1634
      %v1705 = vunpack.c.l.b16 %v1635
      %v1706 = vunpack.c.l.b16 %v1636
      %v1707 = vunpack.c.l.b16 %v1637
      %v1708 = vunpack.c.l.b16 %v1638
      %v1709 = vunpack.c.l.b16 %v1639
      %v1710 = vunpack.c.l.b16 %v1640
      %v1711 = vunpack.c.l.b16 %v1641
      %v1712 = vunpack.c.l.b16 %v1642
      %v1713 = vunpack.c.l.b16 %v1643
      %v1714 = vunpack.c.l.b16 %v1644
      %v1715 = vunpack.c.l.b16 %v1645
      %v1716 = vunpack.c.l.b16 %v1646
      %v1717 = vpack.c.b16 %v1702, %v1701
      %v1718 = vpack.c.b16 %v1704, %v1703
      %v1719 = vpack.c.b16 %v1706, %v1705
      %v1720 = vpack.c.b16 %v1708, %v1707
      %v1721 = vpack.c.b16 %v1710, %v1709
      %v1722 = vpack.c.b16 %v1712, %v1711
      %v1723 = vpack.c.b16 %v1714, %v1713
      %v1724 = vpack.c.b16 %v1716, %v1715
      %1733 = vmatpush.bf16.msra.mxu0 %v1724
      %1734 = vmatpush.bf16.msra.mxu0 %v1723
      %1735 = vmatpush.bf16.msra.mxu0 %v1722
      %1736 = vmatpush.bf16.msra.mxu0 %v1721
      %1737 = vmatpush.bf16.msra.mxu0 %v1720
      %1738 = vmatpush.bf16.msra.mxu0 %v1719
      %1739 = vmatpush.bf16.msra.mxu0 %v1718
      %1740 = vmatpush.bf16.msra.mxu0 %v1717
      %1741 = vmatmul.bf16.gmra.mxu0 %v1681
      %v1742 = vpop.f32.mrf.mxu0
      %v1743 = vadd.f32 %v1683, %v1742
      %v1744 = vpop.f32.mrf.mxu0
      %1745 = vdwg.mxu0
      %v1746 = vadd.f32 %v1625, %v1743
      %v1747 = vld [vmem:[%s22] sm:$0x1]
      %v1748 = vld [vmem:[%s23] sm:$0x1]
      %v1749 = vsel %vm810, %v1746, 0.0
      %1750 = vadd.xlane.f32.xlu0 %v1749
      %v1751 = vpop.xlane.xlu0 %1750
      %v1752 = vmul.f32 %v1751, %v1169
      %v1753 = vsub.f32 %v1746, %v1752
      %v1754 = vmul.f32 %v1753, %v1753
      %v1755 = vsel %vm810, %v1754, 0.0
      %1756 = vadd.xlane.f32.xlu0 %v1755
      %v1757 = vpop.xlane.xlu0 %1756
      %v1758 = vmul.f32 %v1757, %v1169
      %v1759 = vadd.f32 %v1758, 1e-05
      %v1760 = vrsqrt.pop %v1759
      %v1761 = vmul.f32 %v1760, %v1759
      %v1762 = vmul.f32 %v1761, %v1760
      %v1763 = vmul.f32 0.5, %v1762
      %v1764 = vsub.f32 1.5, %v1763
      %v1765 = vmul.f32 %v1760, %v1764
      %vm1766 = vweird.f32 %v1759
      %vm1767 = vweird.f32 %v1760
      %vm1768 = vmor %vm1766, %vm1767
      %v1769 = vsel %vm1768, %v1760, %v1765
      %v1770 = vmul.f32 %v1753, %v1769
      %v1772 = vperm.slane %v1747, 0
      %v1774 = vmul.f32 %v1770, %v1772
      %v1776 = vperm.slane %v1748, 0
      %v1778 = vadd.f32 %v1774, %v1776
      %1779 = vst.msk [vmem:[%s777] sm:$0xff] %vm810, %v1778
      %p1780 = scmp.lt.s32.totalorder %s35, 1
      %s1781 = scalar_select %p1780, %s35, 1
      %s1782 = smul.addr %s1781, 8
      %s1783 = scalar_lea.vmem %s24, %s1782
      // Predicated region
      $region117: #{transformer_forward.7} parent=115 // pred_check
        %p1784 = pneg %p577
      $region118: #{transformer_forward.7} parent=115 // pred_check_branch
        %1786 = sbr.rel (%p1784) target = $region120
      $region119: #{transformer_forward.7} parent=115 // pred_region
        _
      $region120: #{transformer_forward.7} parent=115 // pred_fallthru
        _
    $region116: #{transformer_forward.7} parent=5 // pred_fallthru
      _
    %p1787 = scmp.le.s32.totalorder 2, %s30
    // Predicated region
    $region121: #{transformer_forward.7} parent=5 // pred_check
      %p1788 = pneg %p1787
    $region122: #{transformer_forward.7} parent=5 // pred_check_branch
      %1790 = sbr.rel (%p1788) target = $region124
    $region123: #{transformer_forward.7} parent=5 // pred_region
      %s1791 = ssub.s32 %s30, 2
      // Predicated region
      $region125: #{transformer_forward.7} parent=123 // pred_check
        %p1792 = pneg %p583
      $region126: #{transformer_forward.7} parent=123 // pred_check_branch
        %1794 = sbr.rel (%p1792) target = $region128
      $region127: #{transformer_forward.7} parent=123 // pred_region
        %p1795 = scmp.lt.s32.totalorder %s36, 1
        %s1796 = scalar_select %p1795, %s36, 1
        %s1797 = smul.addr %s1796, 8
        %s1798 = scalar_lea.vmem %s24, %s1797
      $region128: #{transformer_forward.7} parent=123 // pred_fallthru
        _
    $region124: #{transformer_forward.7} parent=5 // pred_fallthru
      _
  $region6: #{transformer_forward.7} parent=0 // loop_footer
    %s34 = sadd.s32 1, %s30
  $region7: #{transformer_forward.7} parent=0 // loop_footer_branch
    %29 = sbr.rel target = $region3
  $region8: #{transformer_forward.7} parent=0 // loop_exit
    _

</llo_original>
